<compile_context>
chip_gen: v7x
topology: tpu7x:2x2x1
jax: 0.10.0
libtpu: 0.0.40
codegen_flags: <defaults>
</compile_context>

<pallas_src>
import functools

import jax
import jax.numpy as jnp
from jax.experimental import pallas as pl
from jax.experimental.pallas import tpu as pltpu


# -----------------------------------------------------------------------------
# The single fused encoder kernel (one grid step == one batch sample)
# -----------------------------------------------------------------------------
def _encoder_kernel(*refs, treedef, n_leaves, num_groups, eps=1e-6):
    x_ref = refs[0]                                   # (1, L, Cin)
    p = jax.tree_util.tree_unflatten(treedef, list(refs[1:1 + n_leaves]))
    h_ref = refs[1 + n_leaves]                        # (1, Lf, Cq)
    d_ref = refs[2 + n_leaves]                        # (1, Lf-1, Cq)
    pad_ref = refs[3 + n_leaves]                      # VMEM scratch (Lmax+2, Cmax)

    f32 = jnp.float32

    def _zero_pad_buf():
        pad_ref[...] = jnp.zeros_like(pad_ref)

    def conv_k3_s1(x, w_ref, b_ref):
        # Conv1d(k=3, stride=1, padding=1) as 3 tap-wise matmuls on the MXU.
        L, cin = x.shape
        _zero_pad_buf()
        pad_ref[1:L + 1, :cin] = x                    # rows 0 and L+1 stay zero (the pad)
        y = jnp.dot(pad_ref[0:L, :cin], w_ref[0], preferred_element_type=f32)
        y = y + jnp.dot(x, w_ref[1], preferred_element_type=f32)
        y = y + jnp.dot(pad_ref[2:L + 2, :cin], w_ref[2], preferred_element_type=f32)
        return y + b_ref[...]

    def conv_k1(x, w_ref, b_ref):
        # 1x1 conv == plain matmul over channels.
        return jnp.dot(x, w_ref[0], preferred_element_type=f32) + b_ref[...]

    def conv_k3_s2(x, w_ref, b_ref):
        # Downsample1d: F.pad(x, (1,1)) then Conv1d(k=3, stride=2, padding=0).
        # Compute the stride-1 valid conv over the padded sequence, then keep the
        # even output rows via an exact 0/1 selection matmul (avoids strided loads).
        L, cin = x.shape
        lout = L // 2
        _zero_pad_buf()
        pad_ref[1:L + 1, :cin] = x
        y = jnp.dot(pad_ref[0:L, :cin], w_ref[0], preferred_element_type=f32)
        y = y + jnp.dot(x, w_ref[1], preferred_element_type=f32)
        y = y + jnp.dot(pad_ref[2:L + 2, :cin], w_ref[2], preferred_element_type=f32)
        r = jax.lax.broadcasted_iota(jnp.int32, (lout, L), 0)
        c = jax.lax.broadcasted_iota(jnp.int32, (lout, L), 1)
        sel = (c == 2 * r).astype(f32)                # one-hot -> exact row selection
        return jnp.dot(sel, y, preferred_element_type=f32) + b_ref[...]

    def gn_swish(x, g_ref, b_ref):
        # GroupNorm(eps=1e-6, affine) fused with swish, per sample.
        L, C = x.shape
        G = num_groups
        cg = C // G
        inv_n = 1.0 / (L * cg)
        # One-hot group-membership matrices built in-kernel (no constant DMAs).
        cid = jax.lax.broadcasted_iota(jnp.int32, (C, G), 0)
        gid = jax.lax.broadcasted_iota(jnp.int32, (C, G), 1)
        M = jnp.logical_and(cid >= gid * cg, cid < (gid + 1) * cg).astype(f32)   # (C, G)
        gidT = jax.lax.broadcasted_iota(jnp.int32, (G, C), 0)
        cidT = jax.lax.broadcasted_iota(jnp.int32, (G, C), 1)
        MT = jnp.logical_and(cidT >= gidT * cg, cidT < (gidT + 1) * cg).astype(f32)  # (G, C)

        s = jnp.sum(x, axis=0, keepdims=True)                                   # (1, C)
        mean_g = jnp.dot(s, M, preferred_element_type=f32) * inv_n              # (1, G)
        mean_c = jnp.dot(mean_g, MT, preferred_element_type=f32)                # (1, C)
        xc = x - mean_c
        s2 = jnp.sum(xc * xc, axis=0, keepdims=True)                            # centered
        var_g = jnp.maximum(jnp.dot(s2, M, preferred_element_type=f32) * inv_n, 0.0)
        var_c = jnp.dot(var_g, MT, preferred_element_type=f32)                  # (1, C)
        y = xc * jax.lax.rsqrt(var_c + eps)
        y = y * g_ref[...] + b_ref[...]
        return y * jax.nn.sigmoid(y)                                            # swish

    def resnet_block(x, bp):
        h = gn_swish(x, bp["norm1"]["g"], bp["norm1"]["b"])
        h = conv_k3_s1(h, bp["conv1"]["w"], bp["conv1"]["b"])
        h = gn_swish(h, bp["norm2"]["g"], bp["norm2"]["b"])
        # dropout(p=0.0) == identity; temb_channels == 0 so no temb projection.
        h = conv_k3_s1(h, bp["conv2"]["w"], bp["conv2"]["b"])
        sc = x
        if "nin_shortcut" in bp:
            sc = conv_k1(x, bp["nin_shortcut"]["w"], bp["nin_shortcut"]["b"])
        return sc + h

    # ----- forward pass (entirely VMEM-resident) -----
    h = conv_k3_s1(x_ref[0], p["conv_in"]["w"], p["conv_in"]["b"])
    for lvl in p["down"]:
        for bp in lvl["blocks"]:
            h = resnet_block(h, bp)
        if "downsample" in lvl:
            h = conv_k3_s2(h, lvl["downsample"]["w"], lvl["downsample"]["b"])

    h = conv_k1(h, p["conv_out"]["w"], p["conv_out"]["b"])          # (Lf, Cq)
    Lf, Cq = h.shape

    # h_diff = h[..., 1:] - h[..., :-1] along the length axis; go through the VMEM
    # scratch so only ref slices (no value relayouts) are needed.
    pad_ref[0:Lf, :Cq] = h
    hd = pad_ref[1:Lf, :Cq] - pad_ref[0:Lf - 1, :Cq]                # (Lf-1, Cq)

    h_ref[0] = conv_k1(h, p["quant_conv"]["w"], p["quant_conv"]["b"])
    d_ref[0] = conv_k1(hd, p["quant_conv_diff"]["w"], p["quant_conv_diff"]["b"])


# -----------------------------------------------------------------------------
# Wrapper: one pallas_call for the whole encoder
# -----------------------------------------------------------------------------
def encoder1diff_forward(x_ncl, params, *, num_groups):
    """x_ncl: (B, Cin, L) like PyTorch.  Returns (h, h_diff) in NCL layout."""
    x = jnp.transpose(x_ncl, (0, 2, 1)).astype(jnp.float32)         # (B, L, Cin)
    B, L, Cin = x.shape

    leaves, treedef = jax.tree_util.tree_flatten(params)

    # Output geometry from the parameter structure (one halving per downsample).
    Lf = L
    for lvl in params["down"]:
        if "downsample" in lvl:
            Lf //= 2
    Cq = params["quant_conv"]["w"].shape[2]

    # Scratch sized for the widest channel count seen by any conv.
    c_max = Cin
    for leaf in leaves:
        if leaf.ndim == 3:
            c_max = max(c_max, leaf.shape[1], leaf.shape[2])

    kernel = functools.partial(_encoder_kernel, treedef=treedef,
                               n_leaves=len(leaves), num_groups=num_groups)

    def _const_spec(shape):
        # Whole-array block whose index never changes -> DMA'd once, kept in VMEM.
        return pl.BlockSpec(shape, lambda i, _z=(0,) * len(shape): _z)

    in_specs = [pl.BlockSpec((1, L, Cin), lambda i: (i, 0, 0))]
    in_specs += [_const_spec(leaf.shape) for leaf in leaves]

    h, h_diff = pl.pallas_call(
        kernel,
        out_shape=(jax.ShapeDtypeStruct((B, Lf, Cq), jnp.float32),
                   jax.ShapeDtypeStruct((B, Lf - 1, Cq), jnp.float32)),
        grid=(B,),
        in_specs=in_specs,
        out_specs=(pl.BlockSpec((1, Lf, Cq), lambda i: (i, 0, 0)),
                   pl.BlockSpec((1, Lf - 1, Cq), lambda i: (i, 0, 0))),
        scratch_shapes=[pltpu.VMEM((L + 2, c_max), jnp.float32)],
        compiler_params=pltpu.CompilerParams(dimension_semantics=("parallel",)),
    )(x, *leaves)

    return jnp.transpose(h, (0, 2, 1)), jnp.transpose(h_diff, (0, 2, 1))


# -----------------------------------------------------------------------------
# Deterministic parameter init (shapes mirror the PyTorch __init__)
#   conv weight stored as (K, Cin, Cout); biases / GN affine stored as (1, C).
# -----------------------------------------------------------------------------
def _init_conv(key, cin, cout, k):
    kw, kb = jax.random.split(key)
    scale = 1.0 / (cin * k) ** 0.5
    w = jax.random.uniform(kw, (k, cin, cout), jnp.float32, -scale, scale)
    b = jax.random.uniform(kb, (1, cout), jnp.float32, -scale, scale)
    return {"w": w, "b": b}


def _init_gn(c):
    return {"g": jnp.ones((1, c), jnp.float32), "b": jnp.zeros((1, c), jnp.float32)}


def init_encoder_params(key, *, in_channels, out_ch, ch, ch_mult, num_res_blocks):
    keys = iter(jax.random.split(key, 64))
    params = {"conv_in": _init_conv(next(keys), in_channels, ch, 3)}
    in_ch_mult = (1,) + tuple(ch_mult)
    downs = []
    block_in = ch
    for i_level in range(len(ch_mult)):
        block_in = ch * in_ch_mult[i_level]
        block_out = ch * ch_mult[i_level]
        blocks = []
        for _ in range(num_res_blocks):
            bp = {
                "norm1": _init_gn(block_in),
                "conv1": _init_conv(next(keys), block_in, block_out, 3),
                "norm2": _init_gn(block_out),
                "conv2": _init_conv(next(keys), block_out, block_out, 3),
            }
            if block_in != block_out:
                bp["nin_shortcut"] = _init_conv(next(keys), block_in, block_out, 1)
            blocks.append(bp)
            block_in = block_out
        lvl = {"blocks": blocks}
        if i_level != len(ch_mult) - 1:
            lvl["downsample"] = _init_conv(next(keys), block_in, block_in, 3)
        downs.append(lvl)
    params["down"] = downs
    params["conv_out"] = _init_conv(next(keys), block_in, out_ch, 1)
    params["quant_conv"] = _init_conv(next(keys), out_ch, out_ch, 1)
    params["quant_conv_diff"] = _init_conv(next(keys), out_ch, out_ch, 1)
    return params


# -----------------------------------------------------------------------------
if __name__ == "__main__":
    # Small config consistent with the module: act='swish', gn=num_groups=4,
    # quant_conv=True, two resolutions (one downsample).
    in_channels = 4
    ch = 16
    ch_mult = (1, 2)
    num_res_blocks = 2
    num_groups = 4
    out_ch = ch * ch_mult[-1]          # 32
    B, L = 2, 16

    key = jax.random.PRNGKey(0)
    kx, kp = jax.random.split(key)
    x = jax.random.normal(kx, (B, in_channels, L), jnp.float32)     # NCL, like PyTorch

    params = init_encoder_params(
        kp, in_channels=in_channels, out_ch=out_ch, ch=ch,
        ch_mult=ch_mult, num_res_blocks=num_res_blocks,
    )

    fwd = jax.jit(functools.partial(encoder1diff_forward, num_groups=num_groups))
    h, h_diff = fwd(x, params)
    jax.block_until_ready((h, h_diff))

    assert h.shape == (B, out_ch, L // 2), h.shape              # (2, 32, 8)
    assert h_diff.shape == (B, out_ch, L // 2 - 1), h_diff.shape  # (2, 32, 7)
    assert bool(jnp.all(jnp.isfinite(h))) and bool(jnp.all(jnp.isfinite(h_diff)))
    print("KERNEL_OK")
</pallas_src>

<mosaic_0001>
module attributes {stable_mosaic.version = 11 : i64} {
  func.func @_encoder_kernel(%arg0: i32, %arg1: memref<1x16x4xf32, #tpu.memory_space<vmem>>, %arg2: memref<1x16xf32, #tpu.memory_space<vmem>>, %arg3: memref<3x4x16xf32, #tpu.memory_space<vmem>>, %arg4: memref<1x32xf32, #tpu.memory_space<vmem>>, %arg5: memref<1x32x32xf32, #tpu.memory_space<vmem>>, %arg6: memref<1x16xf32, #tpu.memory_space<vmem>>, %arg7: memref<3x16x16xf32, #tpu.memory_space<vmem>>, %arg8: memref<1x16xf32, #tpu.memory_space<vmem>>, %arg9: memref<3x16x16xf32, #tpu.memory_space<vmem>>, %arg10: memref<1x16xf32, #tpu.memory_space<vmem>>, %arg11: memref<1x16xf32, #tpu.memory_space<vmem>>, %arg12: memref<1x16xf32, #tpu.memory_space<vmem>>, %arg13: memref<1x16xf32, #tpu.memory_space<vmem>>, %arg14: memref<1x16xf32, #tpu.memory_space<vmem>>, %arg15: memref<3x16x16xf32, #tpu.memory_space<vmem>>, %arg16: memref<1x16xf32, #tpu.memory_space<vmem>>, %arg17: memref<3x16x16xf32, #tpu.memory_space<vmem>>, %arg18: memref<1x16xf32, #tpu.memory_space<vmem>>, %arg19: memref<1x16xf32, #tpu.memory_space<vmem>>, %arg20: memref<1x16xf32, #tpu.memory_space<vmem>>, %arg21: memref<1x16xf32, #tpu.memory_space<vmem>>, %arg22: memref<1x16xf32, #tpu.memory_space<vmem>>, %arg23: memref<3x16x16xf32, #tpu.memory_space<vmem>>, %arg24: memref<1x32xf32, #tpu.memory_space<vmem>>, %arg25: memref<3x16x32xf32, #tpu.memory_space<vmem>>, %arg26: memref<1x32xf32, #tpu.memory_space<vmem>>, %arg27: memref<3x32x32xf32, #tpu.memory_space<vmem>>, %arg28: memref<1x32xf32, #tpu.memory_space<vmem>>, %arg29: memref<1x16x32xf32, #tpu.memory_space<vmem>>, %arg30: memref<1x16xf32, #tpu.memory_space<vmem>>, %arg31: memref<1x16xf32, #tpu.memory_space<vmem>>, %arg32: memref<1x32xf32, #tpu.memory_space<vmem>>, %arg33: memref<1x32xf32, #tpu.memory_space<vmem>>, %arg34: memref<1x32xf32, #tpu.memory_space<vmem>>, %arg35: memref<3x32x32xf32, #tpu.memory_space<vmem>>, %arg36: memref<1x32xf32, #tpu.memory_space<vmem>>, %arg37: memref<3x32x32xf32, #tpu.memory_space<vmem>>, %arg38: memref<1x32xf32, #tpu.memory_space<vmem>>, %arg39: memref<1x32xf32, #tpu.memory_space<vmem>>, %arg40: memref<1x32xf32, #tpu.memory_space<vmem>>, %arg41: memref<1x32xf32, #tpu.memory_space<vmem>>, %arg42: memref<1x32xf32, #tpu.memory_space<vmem>>, %arg43: memref<1x32x32xf32, #tpu.memory_space<vmem>>, %arg44: memref<1x32xf32, #tpu.memory_space<vmem>>, %arg45: memref<1x32x32xf32, #tpu.memory_space<vmem>>, %arg46: memref<1x8x32xf32, #tpu.memory_space<vmem>>, %arg47: memref<1x7x32xf32, #tpu.memory_space<vmem>>, %arg48: memref<18x32xf32, #tpu.memory_space<vmem>>) attributes {dimension_semantics = [#tpu.dimension_semantics<parallel>], iteration_bounds = array<i64: 2>, scalar_prefetch = 0 : i64, scratch_operands = 1 : i64, tpu.core_type = #tpu.core_type<tc>, window_params = [{transform_indices = @transform_0, window_bounds = array<i64: 1, 16, 4>}, {pipeline_mode = #tpu.pipeline_mode<synchronous>, transform_indices = @transform_1, window_bounds = array<i64: 1, 16>}, {pipeline_mode = #tpu.pipeline_mode<synchronous>, transform_indices = @transform_2, window_bounds = array<i64: 3, 4, 16>}, {pipeline_mode = #tpu.pipeline_mode<synchronous>, transform_indices = @transform_3, window_bounds = array<i64: 1, 32>}, {pipeline_mode = #tpu.pipeline_mode<synchronous>, transform_indices = @transform_4, window_bounds = array<i64: 1, 32, 32>}, {pipeline_mode = #tpu.pipeline_mode<synchronous>, transform_indices = @transform_5, window_bounds = array<i64: 1, 16>}, {pipeline_mode = #tpu.pipeline_mode<synchronous>, transform_indices = @transform_6, window_bounds = array<i64: 3, 16, 16>}, {pipeline_mode = #tpu.pipeline_mode<synchronous>, transform_indices = @transform_7, window_bounds = array<i64: 1, 16>}, {pipeline_mode = #tpu.pipeline_mode<synchronous>, transform_indices = @transform_8, window_bounds = array<i64: 3, 16, 16>}, {pipeline_mode = #tpu.pipeline_mode<synchronous>, transform_indices = @transform_9, window_bounds = array<i64: 1, 16>}, {pipeline_mode = #tpu.pipeline_mode<synchronous>, transform_indices = @transform_10, window_bounds = array<i64: 1, 16>}, {pipeline_mode = #tpu.pipeline_mode<synchronous>, transform_indices = @transform_11, window_bounds = array<i64: 1, 16>}, {pipeline_mode = #tpu.pipeline_mode<synchronous>, transform_indices = @transform_12, window_bounds = array<i64: 1, 16>}, {pipeline_mode = #tpu.pipeline_mode<synchronous>, transform_indices = @transform_13, window_bounds = array<i64: 1, 16>}, {pipeline_mode = #tpu.pipeline_mode<synchronous>, transform_indices = @transform_14, window_bounds = array<i64: 3, 16, 16>}, {pipeline_mode = #tpu.pipeline_mode<synchronous>, transform_indices = @transform_15, window_bounds = array<i64: 1, 16>}, {pipeline_mode = #tpu.pipeline_mode<synchronous>, transform_indices = @transform_16, window_bounds = array<i64: 3, 16, 16>}, {pipeline_mode = #tpu.pipeline_mode<synchronous>, transform_indices = @transform_17, window_bounds = array<i64: 1, 16>}, {pipeline_mode = #tpu.pipeline_mode<synchronous>, transform_indices = @transform_18, window_bounds = array<i64: 1, 16>}, {pipeline_mode = #tpu.pipeline_mode<synchronous>, transform_indices = @transform_19, window_bounds = array<i64: 1, 16>}, {pipeline_mode = #tpu.pipeline_mode<synchronous>, transform_indices = @transform_20, window_bounds = array<i64: 1, 16>}, {pipeline_mode = #tpu.pipeline_mode<synchronous>, transform_indices = @transform_21, window_bounds = array<i64: 1, 16>}, {pipeline_mode = #tpu.pipeline_mode<synchronous>, transform_indices = @transform_22, window_bounds = array<i64: 3, 16, 16>}, {pipeline_mode = #tpu.pipeline_mode<synchronous>, transform_indices = @transform_23, window_bounds = array<i64: 1, 32>}, {pipeline_mode = #tpu.pipeline_mode<synchronous>, transform_indices = @transform_24, window_bounds = array<i64: 3, 16, 32>}, {pipeline_mode = #tpu.pipeline_mode<synchronous>, transform_indices = @transform_25, window_bounds = array<i64: 1, 32>}, {pipeline_mode = #tpu.pipeline_mode<synchronous>, transform_indices = @transform_26, window_bounds = array<i64: 3, 32, 32>}, {pipeline_mode = #tpu.pipeline_mode<synchronous>, transform_indices = @transform_27, window_bounds = array<i64: 1, 32>}, {pipeline_mode = #tpu.pipeline_mode<synchronous>, transform_indices = @transform_28, window_bounds = array<i64: 1, 16, 32>}, {pipeline_mode = #tpu.pipeline_mode<synchronous>, transform_indices = @transform_29, window_bounds = array<i64: 1, 16>}, {pipeline_mode = #tpu.pipeline_mode<synchronous>, transform_indices = @transform_30, window_bounds = array<i64: 1, 16>}, {pipeline_mode = #tpu.pipeline_mode<synchronous>, transform_indices = @transform_31, window_bounds = array<i64: 1, 32>}, {pipeline_mode = #tpu.pipeline_mode<synchronous>, transform_indices = @transform_32, window_bounds = array<i64: 1, 32>}, {pipeline_mode = #tpu.pipeline_mode<synchronous>, transform_indices = @transform_33, window_bounds = array<i64: 1, 32>}, {pipeline_mode = #tpu.pipeline_mode<synchronous>, transform_indices = @transform_34, window_bounds = array<i64: 3, 32, 32>}, {pipeline_mode = #tpu.pipeline_mode<synchronous>, transform_indices = @transform_35, window_bounds = array<i64: 1, 32>}, {pipeline_mode = #tpu.pipeline_mode<synchronous>, transform_indices = @transform_36, window_bounds = array<i64: 3, 32, 32>}, {pipeline_mode = #tpu.pipeline_mode<synchronous>, transform_indices = @transform_37, window_bounds = array<i64: 1, 32>}, {pipeline_mode = #tpu.pipeline_mode<synchronous>, transform_indices = @transform_38, window_bounds = array<i64: 1, 32>}, {pipeline_mode = #tpu.pipeline_mode<synchronous>, transform_indices = @transform_39, window_bounds = array<i64: 1, 32>}, {pipeline_mode = #tpu.pipeline_mode<synchronous>, transform_indices = @transform_40, window_bounds = array<i64: 1, 32>}, {pipeline_mode = #tpu.pipeline_mode<synchronous>, transform_indices = @transform_41, window_bounds = array<i64: 1, 32>}, {pipeline_mode = #tpu.pipeline_mode<synchronous>, transform_indices = @transform_42, window_bounds = array<i64: 1, 32, 32>}, {pipeline_mode = #tpu.pipeline_mode<synchronous>, transform_indices = @transform_43, window_bounds = array<i64: 1, 32>}, {pipeline_mode = #tpu.pipeline_mode<synchronous>, transform_indices = @transform_44, window_bounds = array<i64: 1, 32, 32>}, {transform_indices = @transform_45, window_bounds = array<i64: 1, 8, 32>}, {transform_indices = @transform_46, window_bounds = array<i64: 1, 7, 32>}]} {
    %c0 = arith.constant 0 : index
    %c0_0 = arith.constant 0 : index
    %c0_1 = arith.constant 0 : index
    %0 = vector.load %arg1[%c0, %c0_0, %c0_1] : memref<1x16x4xf32, #tpu.memory_space<vmem>>, vector<1x16x4xf32>
    %1 = vector.shape_cast %0 : vector<1x16x4xf32> to vector<16x4xf32>
    %cst = arith.constant 0.000000e+00 : f32
    %2 = vector.broadcast %cst : f32 to vector<18x32xf32>
    %c0_2 = arith.constant 0 : index
    %c0_3 = arith.constant 0 : index
    %3 = vector.load %arg48[%c0_2, %c0_3] : memref<18x32xf32, #tpu.memory_space<vmem>>, vector<18x32xf32>
    tpu.vector_store %arg48[%c0_2, %c0_3], %2 {strides = array<i32>} : memref<18x32xf32, #tpu.memory_space<vmem>>, vector<18x32xf32>,
    %c1 = arith.constant 1 : index
    %c0_4 = arith.constant 0 : index
    %4 = vector.load %arg48[%c1, %c0_4] : memref<18x32xf32, #tpu.memory_space<vmem>>, vector<16x4xf32>
    tpu.vector_store %arg48[%c1, %c0_4], %1 {strides = array<i32>} : memref<18x32xf32, #tpu.memory_space<vmem>>, vector<16x4xf32>,
    %c0_5 = arith.constant 0 : index
    %c0_6 = arith.constant 0 : index
    %5 = vector.load %arg48[%c0_5, %c0_6] : memref<18x32xf32, #tpu.memory_space<vmem>>, vector<16x4xf32>
    %c0_7 = arith.constant 0 : index
    %c0_8 = arith.constant 0 : index
    %c0_9 = arith.constant 0 : index
    %6 = vector.load %arg3[%c0_7, %c0_8, %c0_9] : memref<3x4x16xf32, #tpu.memory_space<vmem>>, vector<1x4x16xf32>
    %7 = vector.shape_cast %6 : vector<1x4x16xf32> to vector<4x16xf32>
    %cst_10 = arith.constant dense<0.000000e+00> : vector<16x16xf32>
    %8 = tpu.matmul %5, %7, %cst_10 {dimension_numbers = #tpu.dot_dimension_numbers<[1], [0], [0], [1], [0, 0, 1, 1], [], []>} : vector<16x4xf32>, vector<4x16xf32>, vector<16x16xf32> -> vector<16x16xf32>
    %c1_11 = arith.constant 1 : index
    %c0_12 = arith.constant 0 : index
    %c0_13 = arith.constant 0 : index
    %9 = vector.load %arg3[%c1_11, %c0_12, %c0_13] : memref<3x4x16xf32, #tpu.memory_space<vmem>>, vector<1x4x16xf32>
    %10 = vector.shape_cast %9 : vector<1x4x16xf32> to vector<4x16xf32>
    %cst_14 = arith.constant dense<0.000000e+00> : vector<16x16xf32>
    %11 = tpu.matmul %1, %10, %cst_14 {dimension_numbers = #tpu.dot_dimension_numbers<[1], [0], [0], [1], [0, 0, 1, 1], [], []>} : vector<16x4xf32>, vector<4x16xf32>, vector<16x16xf32> -> vector<16x16xf32>
    %12 = arith.addf %8, %11 : vector<16x16xf32>
    %c2 = arith.constant 2 : index
    %c0_15 = arith.constant 0 : index
    %13 = vector.load %arg48[%c2, %c0_15] : memref<18x32xf32, #tpu.memory_space<vmem>>, vector<16x4xf32>
    %c2_16 = arith.constant 2 : index
    %c0_17 = arith.constant 0 : index
    %c0_18 = arith.constant 0 : index
    %14 = vector.load %arg3[%c2_16, %c0_17, %c0_18] : memref<3x4x16xf32, #tpu.memory_space<vmem>>, vector<1x4x16xf32>
    %15 = vector.shape_cast %14 : vector<1x4x16xf32> to vector<4x16xf32>
    %cst_19 = arith.constant dense<0.000000e+00> : vector<16x16xf32>
    %16 = tpu.matmul %13, %15, %cst_19 {dimension_numbers = #tpu.dot_dimension_numbers<[1], [0], [0], [1], [0, 0, 1, 1], [], []>} : vector<16x4xf32>, vector<4x16xf32>, vector<16x16xf32> -> vector<16x16xf32>
    %17 = arith.addf %12, %16 : vector<16x16xf32>
    %c0_20 = arith.constant 0 : index
    %c0_21 = arith.constant 0 : index
    %18 = vector.load %arg2[%c0_20, %c0_21] : memref<1x16xf32, #tpu.memory_space<vmem>>, vector<1x16xf32>
    %19 = vector.broadcast %18 : vector<1x16xf32> to vector<16x16xf32>
    %20 = arith.addf %17, %19 : vector<16x16xf32>
    %21 = tpu.iota {dimensions = array<i32: 0>} : vector<16x4xi32>
    %22 = tpu.iota {dimensions = array<i32: 1>} : vector<16x4xi32>
    %c4_i32 = arith.constant 4 : i32
    %23 = vector.broadcast %c4_i32 : i32 to vector<16x4xi32>
    %24 = arith.muli %22, %23 : vector<16x4xi32>
    %25 = arith.cmpi sge, %21, %24 : vector<16x4xi32>
    %c1_i32 = arith.constant 1 : i32
    %26 = vector.broadcast %c1_i32 : i32 to vector<16x4xi32>
    %27 = arith.addi %22, %26 : vector<16x4xi32>
    %c4_i32_22 = arith.constant 4 : i32
    %28 = vector.broadcast %c4_i32_22 : i32 to vector<16x4xi32>
    %29 = arith.muli %27, %28 : vector<16x4xi32>
    %30 = arith.cmpi slt, %21, %29 : vector<16x4xi32>
    %31 = arith.andi %25, %30 : vector<16x4xi1>
    %32 = arith.extui %31 : vector<16x4xi1> to vector<16x4xi32>
    %33 = arith.sitofp %32 : vector<16x4xi32> to vector<16x4xf32>
    %34 = tpu.iota {dimensions = array<i32: 0>} : vector<4x16xi32>
    %35 = tpu.iota {dimensions = array<i32: 1>} : vector<4x16xi32>
    %c4_i32_23 = arith.constant 4 : i32
    %36 = vector.broadcast %c4_i32_23 : i32 to vector<4x16xi32>
    %37 = arith.muli %34, %36 : vector<4x16xi32>
    %38 = arith.cmpi sge, %35, %37 : vector<4x16xi32>
    %c1_i32_24 = arith.constant 1 : i32
    %39 = vector.broadcast %c1_i32_24 : i32 to vector<4x16xi32>
    %40 = arith.addi %34, %39 : vector<4x16xi32>
    %c4_i32_25 = arith.constant 4 : i32
    %41 = vector.broadcast %c4_i32_25 : i32 to vector<4x16xi32>
    %42 = arith.muli %40, %41 : vector<4x16xi32>
    %43 = arith.cmpi slt, %35, %42 : vector<4x16xi32>
    %44 = arith.andi %38, %43 : vector<4x16xi1>
    %45 = arith.extui %44 : vector<4x16xi1> to vector<4x16xi32>
    %46 = arith.sitofp %45 : vector<4x16xi32> to vector<4x16xf32>
    %cst_26 = arith.constant dense<0.000000e+00> : vector<16xf32>
    %47 = vector.multi_reduction <add>, %20, %cst_26 [0] : vector<16x16xf32> to vector<16xf32>
    %48 = vector.shape_cast %47 : vector<16xf32> to vector<1x16xf32>
    %cst_27 = arith.constant dense<0.000000e+00> : vector<1x4xf32>
    %49 = tpu.matmul %48, %33, %cst_27 {dimension_numbers = #tpu.dot_dimension_numbers<[1], [0], [0], [1], [0, 0, 1, 1], [], []>} : vector<1x16xf32>, vector<16x4xf32>, vector<1x4xf32> -> vector<1x4xf32>
    %cst_28 = arith.constant 1.562500e-02 : f32
    %50 = vector.broadcast %cst_28 : f32 to vector<1x4xf32>
    %51 = arith.mulf %49, %50 : vector<1x4xf32>
    %cst_29 = arith.constant dense<0.000000e+00> : vector<1x16xf32>
    %52 = tpu.matmul %51, %46, %cst_29 {dimension_numbers = #tpu.dot_dimension_numbers<[1], [0], [0], [1], [0, 0, 1, 1], [], []>} : vector<1x4xf32>, vector<4x16xf32>, vector<1x16xf32> -> vector<1x16xf32>
    %53 = vector.broadcast %52 : vector<1x16xf32> to vector<16x16xf32>
    %54 = arith.subf %20, %53 : vector<16x16xf32>
    %55 = arith.mulf %54, %54 : vector<16x16xf32>
    %cst_30 = arith.constant dense<0.000000e+00> : vector<16xf32>
    %56 = vector.multi_reduction <add>, %55, %cst_30 [0] : vector<16x16xf32> to vector<16xf32>
    %57 = vector.shape_cast %56 : vector<16xf32> to vector<1x16xf32>
    %cst_31 = arith.constant dense<0.000000e+00> : vector<1x4xf32>
    %58 = tpu.matmul %57, %33, %cst_31 {dimension_numbers = #tpu.dot_dimension_numbers<[1], [0], [0], [1], [0, 0, 1, 1], [], []>} : vector<1x16xf32>, vector<16x4xf32>, vector<1x4xf32> -> vector<1x4xf32>
    %cst_32 = arith.constant 1.562500e-02 : f32
    %59 = vector.broadcast %cst_32 : f32 to vector<1x4xf32>
    %60 = arith.mulf %58, %59 : vector<1x4xf32>
    %cst_33 = arith.constant 0.000000e+00 : f32
    %61 = vector.broadcast %cst_33 : f32 to vector<1x4xf32>
    %62 = arith.maximumf %60, %61 : vector<1x4xf32>
    %cst_34 = arith.constant dense<0.000000e+00> : vector<1x16xf32>
    %63 = tpu.matmul %62, %46, %cst_34 {dimension_numbers = #tpu.dot_dimension_numbers<[1], [0], [0], [1], [0, 0, 1, 1], [], []>} : vector<1x4xf32>, vector<4x16xf32>, vector<1x16xf32> -> vector<1x16xf32>
    %cst_35 = arith.constant 9.99999997E-7 : f32
    %64 = vector.broadcast %cst_35 : f32 to vector<1x16xf32>
    %65 = arith.addf %63, %64 : vector<1x16xf32>
    %66 = math.rsqrt %65 : vector<1x16xf32>
    %67 = vector.broadcast %66 : vector<1x16xf32> to vector<16x16xf32>
    %68 = arith.mulf %54, %67 : vector<16x16xf32>
    %c0_36 = arith.constant 0 : index
    %c0_37 = arith.constant 0 : index
    %69 = vector.load %arg11[%c0_36, %c0_37] : memref<1x16xf32, #tpu.memory_space<vmem>>, vector<1x16xf32>
    %70 = vector.broadcast %69 : vector<1x16xf32> to vector<16x16xf32>
    %71 = arith.mulf %68, %70 : vector<16x16xf32>
    %c0_38 = arith.constant 0 : index
    %c0_39 = arith.constant 0 : index
    %72 = vector.load %arg10[%c0_38, %c0_39] : memref<1x16xf32, #tpu.memory_space<vmem>>, vector<1x16xf32>
    %73 = vector.broadcast %72 : vector<1x16xf32> to vector<16x16xf32>
    %74 = arith.addf %71, %73 : vector<16x16xf32>
    %75 = arith.negf %74 : vector<16x16xf32>
    %76 = math.exp %75 : vector<16x16xf32>
    %cst_40 = arith.constant 1.000000e+00 : f32
    %77 = vector.broadcast %cst_40 : f32 to vector<16x16xf32>
    %78 = arith.addf %77, %76 : vector<16x16xf32>
    %79 = arith.divf %77, %78 : vector<16x16xf32>
    %80 = arith.mulf %74, %79 : vector<16x16xf32>
    %cst_41 = arith.constant 0.000000e+00 : f32
    %81 = vector.broadcast %cst_41 : f32 to vector<18x32xf32>
    %c0_42 = arith.constant 0 : index
    %c0_43 = arith.constant 0 : index
    %82 = vector.load %arg48[%c0_42, %c0_43] : memref<18x32xf32, #tpu.memory_space<vmem>>, vector<18x32xf32>
    tpu.vector_store %arg48[%c0_42, %c0_43], %81 {strides = array<i32>} : memref<18x32xf32, #tpu.memory_space<vmem>>, vector<18x32xf32>,
    %c1_44 = arith.constant 1 : index
    %c0_45 = arith.constant 0 : index
    %83 = vector.load %arg48[%c1_44, %c0_45] : memref<18x32xf32, #tpu.memory_space<vmem>>, vector<16x16xf32>
    tpu.vector_store %arg48[%c1_44, %c0_45], %80 {strides = array<i32>} : memref<18x32xf32, #tpu.memory_space<vmem>>, vector<16x16xf32>,
    %c0_46 = arith.constant 0 : index
    %c0_47 = arith.constant 0 : index
    %84 = vector.load %arg48[%c0_46, %c0_47] : memref<18x32xf32, #tpu.memory_space<vmem>>, vector<16x16xf32>
    %c0_48 = arith.constant 0 : index
    %c0_49 = arith.constant 0 : index
    %c0_50 = arith.constant 0 : index
    %85 = vector.load %arg7[%c0_48, %c0_49, %c0_50] : memref<3x16x16xf32, #tpu.memory_space<vmem>>, vector<1x16x16xf32>
    %86 = vector.shape_cast %85 : vector<1x16x16xf32> to vector<16x16xf32>
    %cst_51 = arith.constant dense<0.000000e+00> : vector<16x16xf32>
    %87 = tpu.matmul %84, %86, %cst_51 {dimension_numbers = #tpu.dot_dimension_numbers<[1], [0], [0], [1], [0, 0, 1, 1], [], []>} : vector<16x16xf32>, vector<16x16xf32>, vector<16x16xf32> -> vector<16x16xf32>
    %c1_52 = arith.constant 1 : index
    %c0_53 = arith.constant 0 : index
    %c0_54 = arith.constant 0 : index
    %88 = vector.load %arg7[%c1_52, %c0_53, %c0_54] : memref<3x16x16xf32, #tpu.memory_space<vmem>>, vector<1x16x16xf32>
    %89 = vector.shape_cast %88 : vector<1x16x16xf32> to vector<16x16xf32>
    %cst_55 = arith.constant dense<0.000000e+00> : vector<16x16xf32>
    %90 = tpu.matmul %80, %89, %cst_55 {dimension_numbers = #tpu.dot_dimension_numbers<[1], [0], [0], [1], [0, 0, 1, 1], [], []>} : vector<16x16xf32>, vector<16x16xf32>, vector<16x16xf32> -> vector<16x16xf32>
    %91 = arith.addf %87, %90 : vector<16x16xf32>
    %c2_56 = arith.constant 2 : index
    %c0_57 = arith.constant 0 : index
    %92 = vector.load %arg48[%c2_56, %c0_57] : memref<18x32xf32, #tpu.memory_space<vmem>>, vector<16x16xf32>
    %c2_58 = arith.constant 2 : index
    %c0_59 = arith.constant 0 : index
    %c0_60 = arith.constant 0 : index
    %93 = vector.load %arg7[%c2_58, %c0_59, %c0_60] : memref<3x16x16xf32, #tpu.memory_space<vmem>>, vector<1x16x16xf32>
    %94 = vector.shape_cast %93 : vector<1x16x16xf32> to vector<16x16xf32>
    %cst_61 = arith.constant dense<0.000000e+00> : vector<16x16xf32>
    %95 = tpu.matmul %92, %94, %cst_61 {dimension_numbers = #tpu.dot_dimension_numbers<[1], [0], [0], [1], [0, 0, 1, 1], [], []>} : vector<16x16xf32>, vector<16x16xf32>, vector<16x16xf32> -> vector<16x16xf32>
    %96 = arith.addf %91, %95 : vector<16x16xf32>
    %c0_62 = arith.constant 0 : index
    %c0_63 = arith.constant 0 : index
    %97 = vector.load %arg6[%c0_62, %c0_63] : memref<1x16xf32, #tpu.memory_space<vmem>>, vector<1x16xf32>
    %98 = vector.broadcast %97 : vector<1x16xf32> to vector<16x16xf32>
    %99 = arith.addf %96, %98 : vector<16x16xf32>
    %100 = tpu.iota {dimensions = array<i32: 0>} : vector<16x4xi32>
    %101 = tpu.iota {dimensions = array<i32: 1>} : vector<16x4xi32>
    %c4_i32_64 = arith.constant 4 : i32
    %102 = vector.broadcast %c4_i32_64 : i32 to vector<16x4xi32>
    %103 = arith.muli %101, %102 : vector<16x4xi32>
    %104 = arith.cmpi sge, %100, %103 : vector<16x4xi32>
    %c1_i32_65 = arith.constant 1 : i32
    %105 = vector.broadcast %c1_i32_65 : i32 to vector<16x4xi32>
    %106 = arith.addi %101, %105 : vector<16x4xi32>
    %c4_i32_66 = arith.constant 4 : i32
    %107 = vector.broadcast %c4_i32_66 : i32 to vector<16x4xi32>
    %108 = arith.muli %106, %107 : vector<16x4xi32>
    %109 = arith.cmpi slt, %100, %108 : vector<16x4xi32>
    %110 = arith.andi %104, %109 : vector<16x4xi1>
    %111 = arith.extui %110 : vector<16x4xi1> to vector<16x4xi32>
    %112 = arith.sitofp %111 : vector<16x4xi32> to vector<16x4xf32>
    %113 = tpu.iota {dimensions = array<i32: 0>} : vector<4x16xi32>
    %114 = tpu.iota {dimensions = array<i32: 1>} : vector<4x16xi32>
    %c4_i32_67 = arith.constant 4 : i32
    %115 = vector.broadcast %c4_i32_67 : i32 to vector<4x16xi32>
    %116 = arith.muli %113, %115 : vector<4x16xi32>
    %117 = arith.cmpi sge, %114, %116 : vector<4x16xi32>
    %c1_i32_68 = arith.constant 1 : i32
    %118 = vector.broadcast %c1_i32_68 : i32 to vector<4x16xi32>
    %119 = arith.addi %113, %118 : vector<4x16xi32>
    %c4_i32_69 = arith.constant 4 : i32
    %120 = vector.broadcast %c4_i32_69 : i32 to vector<4x16xi32>
    %121 = arith.muli %119, %120 : vector<4x16xi32>
    %122 = arith.cmpi slt, %114, %121 : vector<4x16xi32>
    %123 = arith.andi %117, %122 : vector<4x16xi1>
    %124 = arith.extui %123 : vector<4x16xi1> to vector<4x16xi32>
    %125 = arith.sitofp %124 : vector<4x16xi32> to vector<4x16xf32>
    %cst_70 = arith.constant dense<0.000000e+00> : vector<16xf32>
    %126 = vector.multi_reduction <add>, %99, %cst_70 [0] : vector<16x16xf32> to vector<16xf32>
    %127 = vector.shape_cast %126 : vector<16xf32> to vector<1x16xf32>
    %cst_71 = arith.constant dense<0.000000e+00> : vector<1x4xf32>
    %128 = tpu.matmul %127, %112, %cst_71 {dimension_numbers = #tpu.dot_dimension_numbers<[1], [0], [0], [1], [0, 0, 1, 1], [], []>} : vector<1x16xf32>, vector<16x4xf32>, vector<1x4xf32> -> vector<1x4xf32>
    %cst_72 = arith.constant 1.562500e-02 : f32
    %129 = vector.broadcast %cst_72 : f32 to vector<1x4xf32>
    %130 = arith.mulf %128, %129 : vector<1x4xf32>
    %cst_73 = arith.constant dense<0.000000e+00> : vector<1x16xf32>
    %131 = tpu.matmul %130, %125, %cst_73 {dimension_numbers = #tpu.dot_dimension_numbers<[1], [0], [0], [1], [0, 0, 1, 1], [], []>} : vector<1x4xf32>, vector<4x16xf32>, vector<1x16xf32> -> vector<1x16xf32>
    %132 = vector.broadcast %131 : vector<1x16xf32> to vector<16x16xf32>
    %133 = arith.subf %99, %132 : vector<16x16xf32>
    %134 = arith.mulf %133, %133 : vector<16x16xf32>
    %cst_74 = arith.constant dense<0.000000e+00> : vector<16xf32>
    %135 = vector.multi_reduction <add>, %134, %cst_74 [0] : vector<16x16xf32> to vector<16xf32>
    %136 = vector.shape_cast %135 : vector<16xf32> to vector<1x16xf32>
    %cst_75 = arith.constant dense<0.000000e+00> : vector<1x4xf32>
    %137 = tpu.matmul %136, %112, %cst_75 {dimension_numbers = #tpu.dot_dimension_numbers<[1], [0], [0], [1], [0, 0, 1, 1], [], []>} : vector<1x16xf32>, vector<16x4xf32>, vector<1x4xf32> -> vector<1x4xf32>
    %cst_76 = arith.constant 1.562500e-02 : f32
    %138 = vector.broadcast %cst_76 : f32 to vector<1x4xf32>
    %139 = arith.mulf %137, %138 : vector<1x4xf32>
    %cst_77 = arith.constant 0.000000e+00 : f32
    %140 = vector.broadcast %cst_77 : f32 to vector<1x4xf32>
    %141 = arith.maximumf %139, %140 : vector<1x4xf32>
    %cst_78 = arith.constant dense<0.000000e+00> : vector<1x16xf32>
    %142 = tpu.matmul %141, %125, %cst_78 {dimension_numbers = #tpu.dot_dimension_numbers<[1], [0], [0], [1], [0, 0, 1, 1], [], []>} : vector<1x4xf32>, vector<4x16xf32>, vector<1x16xf32> -> vector<1x16xf32>
    %cst_79 = arith.constant 9.99999997E-7 : f32
    %143 = vector.broadcast %cst_79 : f32 to vector<1x16xf32>
    %144 = arith.addf %142, %143 : vector<1x16xf32>
    %145 = math.rsqrt %144 : vector<1x16xf32>
    %146 = vector.broadcast %145 : vector<1x16xf32> to vector<16x16xf32>
    %147 = arith.mulf %133, %146 : vector<16x16xf32>
    %c0_80 = arith.constant 0 : index
    %c0_81 = arith.constant 0 : index
    %148 = vector.load %arg13[%c0_80, %c0_81] : memref<1x16xf32, #tpu.memory_space<vmem>>, vector<1x16xf32>
    %149 = vector.broadcast %148 : vector<1x16xf32> to vector<16x16xf32>
    %150 = arith.mulf %147, %149 : vector<16x16xf32>
    %c0_82 = arith.constant 0 : index
    %c0_83 = arith.constant 0 : index
    %151 = vector.load %arg12[%c0_82, %c0_83] : memref<1x16xf32, #tpu.memory_space<vmem>>, vector<1x16xf32>
    %152 = vector.broadcast %151 : vector<1x16xf32> to vector<16x16xf32>
    %153 = arith.addf %150, %152 : vector<16x16xf32>
    %154 = arith.negf %153 : vector<16x16xf32>
    %155 = math.exp %154 : vector<16x16xf32>
    %cst_84 = arith.constant 1.000000e+00 : f32
    %156 = vector.broadcast %cst_84 : f32 to vector<16x16xf32>
    %157 = arith.addf %156, %155 : vector<16x16xf32>
    %158 = arith.divf %156, %157 : vector<16x16xf32>
    %159 = arith.mulf %153, %158 : vector<16x16xf32>
    %cst_85 = arith.constant 0.000000e+00 : f32
    %160 = vector.broadcast %cst_85 : f32 to vector<18x32xf32>
    %c0_86 = arith.constant 0 : index
    %c0_87 = arith.constant 0 : index
    %161 = vector.load %arg48[%c0_86, %c0_87] : memref<18x32xf32, #tpu.memory_space<vmem>>, vector<18x32xf32>
    tpu.vector_store %arg48[%c0_86, %c0_87], %160 {strides = array<i32>} : memref<18x32xf32, #tpu.memory_space<vmem>>, vector<18x32xf32>,
    %c1_88 = arith.constant 1 : index
    %c0_89 = arith.constant 0 : index
    %162 = vector.load %arg48[%c1_88, %c0_89] : memref<18x32xf32, #tpu.memory_space<vmem>>, vector<16x16xf32>
    tpu.vector_store %arg48[%c1_88, %c0_89], %159 {strides = array<i32>} : memref<18x32xf32, #tpu.memory_space<vmem>>, vector<16x16xf32>,
    %c0_90 = arith.constant 0 : index
    %c0_91 = arith.constant 0 : index
    %163 = vector.load %arg48[%c0_90, %c0_91] : memref<18x32xf32, #tpu.memory_space<vmem>>, vector<16x16xf32>
    %c0_92 = arith.constant 0 : index
    %c0_93 = arith.constant 0 : index
    %c0_94 = arith.constant 0 : index
    %164 = vector.load %arg9[%c0_92, %c0_93, %c0_94] : memref<3x16x16xf32, #tpu.memory_space<vmem>>, vector<1x16x16xf32>
    %165 = vector.shape_cast %164 : vector<1x16x16xf32> to vector<16x16xf32>
    %cst_95 = arith.constant dense<0.000000e+00> : vector<16x16xf32>
    %166 = tpu.matmul %163, %165, %cst_95 {dimension_numbers = #tpu.dot_dimension_numbers<[1], [0], [0], [1], [0, 0, 1, 1], [], []>} : vector<16x16xf32>, vector<16x16xf32>, vector<16x16xf32> -> vector<16x16xf32>
    %c1_96 = arith.constant 1 : index
    %c0_97 = arith.constant 0 : index
    %c0_98 = arith.constant 0 : index
    %167 = vector.load %arg9[%c1_96, %c0_97, %c0_98] : memref<3x16x16xf32, #tpu.memory_space<vmem>>, vector<1x16x16xf32>
    %168 = vector.shape_cast %167 : vector<1x16x16xf32> to vector<16x16xf32>
    %cst_99 = arith.constant dense<0.000000e+00> : vector<16x16xf32>
    %169 = tpu.matmul %159, %168, %cst_99 {dimension_numbers = #tpu.dot_dimension_numbers<[1], [0], [0], [1], [0, 0, 1, 1], [], []>} : vector<16x16xf32>, vector<16x16xf32>, vector<16x16xf32> -> vector<16x16xf32>
    %170 = arith.addf %166, %169 : vector<16x16xf32>
    %c2_100 = arith.constant 2 : index
    %c0_101 = arith.constant 0 : index
    %171 = vector.load %arg48[%c2_100, %c0_101] : memref<18x32xf32, #tpu.memory_space<vmem>>, vector<16x16xf32>
    %c2_102 = arith.constant 2 : index
    %c0_103 = arith.constant 0 : index
    %c0_104 = arith.constant 0 : index
    %172 = vector.load %arg9[%c2_102, %c0_103, %c0_104] : memref<3x16x16xf32, #tpu.memory_space<vmem>>, vector<1x16x16xf32>
    %173 = vector.shape_cast %172 : vector<1x16x16xf32> to vector<16x16xf32>
    %cst_105 = arith.constant dense<0.000000e+00> : vector<16x16xf32>
    %174 = tpu.matmul %171, %173, %cst_105 {dimension_numbers = #tpu.dot_dimension_numbers<[1], [0], [0], [1], [0, 0, 1, 1], [], []>} : vector<16x16xf32>, vector<16x16xf32>, vector<16x16xf32> -> vector<16x16xf32>
    %175 = arith.addf %170, %174 : vector<16x16xf32>
    %c0_106 = arith.constant 0 : index
    %c0_107 = arith.constant 0 : index
    %176 = vector.load %arg8[%c0_106, %c0_107] : memref<1x16xf32, #tpu.memory_space<vmem>>, vector<1x16xf32>
    %177 = vector.broadcast %176 : vector<1x16xf32> to vector<16x16xf32>
    %178 = arith.addf %175, %177 : vector<16x16xf32>
    %179 = arith.addf %20, %178 : vector<16x16xf32>
    %180 = tpu.iota {dimensions = array<i32: 0>} : vector<16x4xi32>
    %181 = tpu.iota {dimensions = array<i32: 1>} : vector<16x4xi32>
    %c4_i32_108 = arith.constant 4 : i32
    %182 = vector.broadcast %c4_i32_108 : i32 to vector<16x4xi32>
    %183 = arith.muli %181, %182 : vector<16x4xi32>
    %184 = arith.cmpi sge, %180, %183 : vector<16x4xi32>
    %c1_i32_109 = arith.constant 1 : i32
    %185 = vector.broadcast %c1_i32_109 : i32 to vector<16x4xi32>
    %186 = arith.addi %181, %185 : vector<16x4xi32>
    %c4_i32_110 = arith.constant 4 : i32
    %187 = vector.broadcast %c4_i32_110 : i32 to vector<16x4xi32>
    %188 = arith.muli %186, %187 : vector<16x4xi32>
    %189 = arith.cmpi slt, %180, %188 : vector<16x4xi32>
    %190 = arith.andi %184, %189 : vector<16x4xi1>
    %191 = arith.extui %190 : vector<16x4xi1> to vector<16x4xi32>
    %192 = arith.sitofp %191 : vector<16x4xi32> to vector<16x4xf32>
    %193 = tpu.iota {dimensions = array<i32: 0>} : vector<4x16xi32>
    %194 = tpu.iota {dimensions = array<i32: 1>} : vector<4x16xi32>
    %c4_i32_111 = arith.constant 4 : i32
    %195 = vector.broadcast %c4_i32_111 : i32 to vector<4x16xi32>
    %196 = arith.muli %193, %195 : vector<4x16xi32>
    %197 = arith.cmpi sge, %194, %196 : vector<4x16xi32>
    %c1_i32_112 = arith.constant 1 : i32
    %198 = vector.broadcast %c1_i32_112 : i32 to vector<4x16xi32>
    %199 = arith.addi %193, %198 : vector<4x16xi32>
    %c4_i32_113 = arith.constant 4 : i32
    %200 = vector.broadcast %c4_i32_113 : i32 to vector<4x16xi32>
    %201 = arith.muli %199, %200 : vector<4x16xi32>
    %202 = arith.cmpi slt, %194, %201 : vector<4x16xi32>
    %203 = arith.andi %197, %202 : vector<4x16xi1>
    %204 = arith.extui %203 : vector<4x16xi1> to vector<4x16xi32>
    %205 = arith.sitofp %204 : vector<4x16xi32> to vector<4x16xf32>
    %cst_114 = arith.constant dense<0.000000e+00> : vector<16xf32>
    %206 = vector.multi_reduction <add>, %179, %cst_114 [0] : vector<16x16xf32> to vector<16xf32>
    %207 = vector.shape_cast %206 : vector<16xf32> to vector<1x16xf32>
    %cst_115 = arith.constant dense<0.000000e+00> : vector<1x4xf32>
    %208 = tpu.matmul %207, %192, %cst_115 {dimension_numbers = #tpu.dot_dimension_numbers<[1], [0], [0], [1], [0, 0, 1, 1], [], []>} : vector<1x16xf32>, vector<16x4xf32>, vector<1x4xf32> -> vector<1x4xf32>
    %cst_116 = arith.constant 1.562500e-02 : f32
    %209 = vector.broadcast %cst_116 : f32 to vector<1x4xf32>
    %210 = arith.mulf %208, %209 : vector<1x4xf32>
    %cst_117 = arith.constant dense<0.000000e+00> : vector<1x16xf32>
    %211 = tpu.matmul %210, %205, %cst_117 {dimension_numbers = #tpu.dot_dimension_numbers<[1], [0], [0], [1], [0, 0, 1, 1], [], []>} : vector<1x4xf32>, vector<4x16xf32>, vector<1x16xf32> -> vector<1x16xf32>
    %212 = vector.broadcast %211 : vector<1x16xf32> to vector<16x16xf32>
    %213 = arith.subf %179, %212 : vector<16x16xf32>
    %214 = arith.mulf %213, %213 : vector<16x16xf32>
    %cst_118 = arith.constant dense<0.000000e+00> : vector<16xf32>
    %215 = vector.multi_reduction <add>, %214, %cst_118 [0] : vector<16x16xf32> to vector<16xf32>
    %216 = vector.shape_cast %215 : vector<16xf32> to vector<1x16xf32>
    %cst_119 = arith.constant dense<0.000000e+00> : vector<1x4xf32>
    %217 = tpu.matmul %216, %192, %cst_119 {dimension_numbers = #tpu.dot_dimension_numbers<[1], [0], [0], [1], [0, 0, 1, 1], [], []>} : vector<1x16xf32>, vector<16x4xf32>, vector<1x4xf32> -> vector<1x4xf32>
    %cst_120 = arith.constant 1.562500e-02 : f32
    %218 = vector.broadcast %cst_120 : f32 to vector<1x4xf32>
    %219 = arith.mulf %217, %218 : vector<1x4xf32>
    %cst_121 = arith.constant 0.000000e+00 : f32
    %220 = vector.broadcast %cst_121 : f32 to vector<1x4xf32>
    %221 = arith.maximumf %219, %220 : vector<1x4xf32>
    %cst_122 = arith.constant dense<0.000000e+00> : vector<1x16xf32>
    %222 = tpu.matmul %221, %205, %cst_122 {dimension_numbers = #tpu.dot_dimension_numbers<[1], [0], [0], [1], [0, 0, 1, 1], [], []>} : vector<1x4xf32>, vector<4x16xf32>, vector<1x16xf32> -> vector<1x16xf32>
    %cst_123 = arith.constant 9.99999997E-7 : f32
    %223 = vector.broadcast %cst_123 : f32 to vector<1x16xf32>
    %224 = arith.addf %222, %223 : vector<1x16xf32>
    %225 = math.rsqrt %224 : vector<1x16xf32>
    %226 = vector.broadcast %225 : vector<1x16xf32> to vector<16x16xf32>
    %227 = arith.mulf %213, %226 : vector<16x16xf32>
    %c0_124 = arith.constant 0 : index
    %c0_125 = arith.constant 0 : index
    %228 = vector.load %arg19[%c0_124, %c0_125] : memref<1x16xf32, #tpu.memory_space<vmem>>, vector<1x16xf32>
    %229 = vector.broadcast %228 : vector<1x16xf32> to vector<16x16xf32>
    %230 = arith.mulf %227, %229 : vector<16x16xf32>
    %c0_126 = arith.constant 0 : index
    %c0_127 = arith.constant 0 : index
    %231 = vector.load %arg18[%c0_126, %c0_127] : memref<1x16xf32, #tpu.memory_space<vmem>>, vector<1x16xf32>
    %232 = vector.broadcast %231 : vector<1x16xf32> to vector<16x16xf32>
    %233 = arith.addf %230, %232 : vector<16x16xf32>
    %234 = arith.negf %233 : vector<16x16xf32>
    %235 = math.exp %234 : vector<16x16xf32>
    %cst_128 = arith.constant 1.000000e+00 : f32
    %236 = vector.broadcast %cst_128 : f32 to vector<16x16xf32>
    %237 = arith.addf %236, %235 : vector<16x16xf32>
    %238 = arith.divf %236, %237 : vector<16x16xf32>
    %239 = arith.mulf %233, %238 : vector<16x16xf32>
    %cst_129 = arith.constant 0.000000e+00 : f32
    %240 = vector.broadcast %cst_129 : f32 to vector<18x32xf32>
    %c0_130 = arith.constant 0 : index
    %c0_131 = arith.constant 0 : index
    %241 = vector.load %arg48[%c0_130, %c0_131] : memref<18x32xf32, #tpu.memory_space<vmem>>, vector<18x32xf32>
    tpu.vector_store %arg48[%c0_130, %c0_131], %240 {strides = array<i32>} : memref<18x32xf32, #tpu.memory_space<vmem>>, vector<18x32xf32>,
    %c1_132 = arith.constant 1 : index
    %c0_133 = arith.constant 0 : index
    %242 = vector.load %arg48[%c1_132, %c0_133] : memref<18x32xf32, #tpu.memory_space<vmem>>, vector<16x16xf32>
    tpu.vector_store %arg48[%c1_132, %c0_133], %239 {strides = array<i32>} : memref<18x32xf32, #tpu.memory_space<vmem>>, vector<16x16xf32>,
    %c0_134 = arith.constant 0 : index
    %c0_135 = arith.constant 0 : index
    %243 = vector.load %arg48[%c0_134, %c0_135] : memref<18x32xf32, #tpu.memory_space<vmem>>, vector<16x16xf32>
    %c0_136 = arith.constant 0 : index
    %c0_137 = arith.constant 0 : index
    %c0_138 = arith.constant 0 : index
    %244 = vector.load %arg15[%c0_136, %c0_137, %c0_138] : memref<3x16x16xf32, #tpu.memory_space<vmem>>, vector<1x16x16xf32>
    %245 = vector.shape_cast %244 : vector<1x16x16xf32> to vector<16x16xf32>
    %cst_139 = arith.constant dense<0.000000e+00> : vector<16x16xf32>
    %246 = tpu.matmul %243, %245, %cst_139 {dimension_numbers = #tpu.dot_dimension_numbers<[1], [0], [0], [1], [0, 0, 1, 1], [], []>} : vector<16x16xf32>, vector<16x16xf32>, vector<16x16xf32> -> vector<16x16xf32>
    %c1_140 = arith.constant 1 : index
    %c0_141 = arith.constant 0 : index
    %c0_142 = arith.constant 0 : index
    %247 = vector.load %arg15[%c1_140, %c0_141, %c0_142] : memref<3x16x16xf32, #tpu.memory_space<vmem>>, vector<1x16x16xf32>
    %248 = vector.shape_cast %247 : vector<1x16x16xf32> to vector<16x16xf32>
    %cst_143 = arith.constant dense<0.000000e+00> : vector<16x16xf32>
    %249 = tpu.matmul %239, %248, %cst_143 {dimension_numbers = #tpu.dot_dimension_numbers<[1], [0], [0], [1], [0, 0, 1, 1], [], []>} : vector<16x16xf32>, vector<16x16xf32>, vector<16x16xf32> -> vector<16x16xf32>
    %250 = arith.addf %246, %249 : vector<16x16xf32>
    %c2_144 = arith.constant 2 : index
    %c0_145 = arith.constant 0 : index
    %251 = vector.load %arg48[%c2_144, %c0_145] : memref<18x32xf32, #tpu.memory_space<vmem>>, vector<16x16xf32>
    %c2_146 = arith.constant 2 : index
    %c0_147 = arith.constant 0 : index
    %c0_148 = arith.constant 0 : index
    %252 = vector.load %arg15[%c2_146, %c0_147, %c0_148] : memref<3x16x16xf32, #tpu.memory_space<vmem>>, vector<1x16x16xf32>
    %253 = vector.shape_cast %252 : vector<1x16x16xf32> to vector<16x16xf32>
    %cst_149 = arith.constant dense<0.000000e+00> : vector<16x16xf32>
    %254 = tpu.matmul %251, %253, %cst_149 {dimension_numbers = #tpu.dot_dimension_numbers<[1], [0], [0], [1], [0, 0, 1, 1], [], []>} : vector<16x16xf32>, vector<16x16xf32>, vector<16x16xf32> -> vector<16x16xf32>
    %255 = arith.addf %250, %254 : vector<16x16xf32>
    %c0_150 = arith.constant 0 : index
    %c0_151 = arith.constant 0 : index
    %256 = vector.load %arg14[%c0_150, %c0_151] : memref<1x16xf32, #tpu.memory_space<vmem>>, vector<1x16xf32>
    %257 = vector.broadcast %256 : vector<1x16xf32> to vector<16x16xf32>
    %258 = arith.addf %255, %257 : vector<16x16xf32>
    %259 = tpu.iota {dimensions = array<i32: 0>} : vector<16x4xi32>
    %260 = tpu.iota {dimensions = array<i32: 1>} : vector<16x4xi32>
    %c4_i32_152 = arith.constant 4 : i32
    %261 = vector.broadcast %c4_i32_152 : i32 to vector<16x4xi32>
    %262 = arith.muli %260, %261 : vector<16x4xi32>
    %263 = arith.cmpi sge, %259, %262 : vector<16x4xi32>
    %c1_i32_153 = arith.constant 1 : i32
    %264 = vector.broadcast %c1_i32_153 : i32 to vector<16x4xi32>
    %265 = arith.addi %260, %264 : vector<16x4xi32>
    %c4_i32_154 = arith.constant 4 : i32
    %266 = vector.broadcast %c4_i32_154 : i32 to vector<16x4xi32>
    %267 = arith.muli %265, %266 : vector<16x4xi32>
    %268 = arith.cmpi slt, %259, %267 : vector<16x4xi32>
    %269 = arith.andi %263, %268 : vector<16x4xi1>
    %270 = arith.extui %269 : vector<16x4xi1> to vector<16x4xi32>
    %271 = arith.sitofp %270 : vector<16x4xi32> to vector<16x4xf32>
    %272 = tpu.iota {dimensions = array<i32: 0>} : vector<4x16xi32>
    %273 = tpu.iota {dimensions = array<i32: 1>} : vector<4x16xi32>
    %c4_i32_155 = arith.constant 4 : i32
    %274 = vector.broadcast %c4_i32_155 : i32 to vector<4x16xi32>
    %275 = arith.muli %272, %274 : vector<4x16xi32>
    %276 = arith.cmpi sge, %273, %275 : vector<4x16xi32>
    %c1_i32_156 = arith.constant 1 : i32
    %277 = vector.broadcast %c1_i32_156 : i32 to vector<4x16xi32>
    %278 = arith.addi %272, %277 : vector<4x16xi32>
    %c4_i32_157 = arith.constant 4 : i32
    %279 = vector.broadcast %c4_i32_157 : i32 to vector<4x16xi32>
    %280 = arith.muli %278, %279 : vector<4x16xi32>
    %281 = arith.cmpi slt, %273, %280 : vector<4x16xi32>
    %282 = arith.andi %276, %281 : vector<4x16xi1>
    %283 = arith.extui %282 : vector<4x16xi1> to vector<4x16xi32>
    %284 = arith.sitofp %283 : vector<4x16xi32> to vector<4x16xf32>
    %cst_158 = arith.constant dense<0.000000e+00> : vector<16xf32>
    %285 = vector.multi_reduction <add>, %258, %cst_158 [0] : vector<16x16xf32> to vector<16xf32>
    %286 = vector.shape_cast %285 : vector<16xf32> to vector<1x16xf32>
    %cst_159 = arith.constant dense<0.000000e+00> : vector<1x4xf32>
    %287 = tpu.matmul %286, %271, %cst_159 {dimension_numbers = #tpu.dot_dimension_numbers<[1], [0], [0], [1], [0, 0, 1, 1], [], []>} : vector<1x16xf32>, vector<16x4xf32>, vector<1x4xf32> -> vector<1x4xf32>
    %cst_160 = arith.constant 1.562500e-02 : f32
    %288 = vector.broadcast %cst_160 : f32 to vector<1x4xf32>
    %289 = arith.mulf %287, %288 : vector<1x4xf32>
    %cst_161 = arith.constant dense<0.000000e+00> : vector<1x16xf32>
    %290 = tpu.matmul %289, %284, %cst_161 {dimension_numbers = #tpu.dot_dimension_numbers<[1], [0], [0], [1], [0, 0, 1, 1], [], []>} : vector<1x4xf32>, vector<4x16xf32>, vector<1x16xf32> -> vector<1x16xf32>
    %291 = vector.broadcast %290 : vector<1x16xf32> to vector<16x16xf32>
    %292 = arith.subf %258, %291 : vector<16x16xf32>
    %293 = arith.mulf %292, %292 : vector<16x16xf32>
    %cst_162 = arith.constant dense<0.000000e+00> : vector<16xf32>
    %294 = vector.multi_reduction <add>, %293, %cst_162 [0] : vector<16x16xf32> to vector<16xf32>
    %295 = vector.shape_cast %294 : vector<16xf32> to vector<1x16xf32>
    %cst_163 = arith.constant dense<0.000000e+00> : vector<1x4xf32>
    %296 = tpu.matmul %295, %271, %cst_163 {dimension_numbers = #tpu.dot_dimension_numbers<[1], [0], [0], [1], [0, 0, 1, 1], [], []>} : vector<1x16xf32>, vector<16x4xf32>, vector<1x4xf32> -> vector<1x4xf32>
    %cst_164 = arith.constant 1.562500e-02 : f32
    %297 = vector.broadcast %cst_164 : f32 to vector<1x4xf32>
    %298 = arith.mulf %296, %297 : vector<1x4xf32>
    %cst_165 = arith.constant 0.000000e+00 : f32
    %299 = vector.broadcast %cst_165 : f32 to vector<1x4xf32>
    %300 = arith.maximumf %298, %299 : vector<1x4xf32>
    %cst_166 = arith.constant dense<0.000000e+00> : vector<1x16xf32>
    %301 = tpu.matmul %300, %284, %cst_166 {dimension_numbers = #tpu.dot_dimension_numbers<[1], [0], [0], [1], [0, 0, 1, 1], [], []>} : vector<1x4xf32>, vector<4x16xf32>, vector<1x16xf32> -> vector<1x16xf32>
    %cst_167 = arith.constant 9.99999997E-7 : f32
    %302 = vector.broadcast %cst_167 : f32 to vector<1x16xf32>
    %303 = arith.addf %301, %302 : vector<1x16xf32>
    %304 = math.rsqrt %303 : vector<1x16xf32>
    %305 = vector.broadcast %304 : vector<1x16xf32> to vector<16x16xf32>
    %306 = arith.mulf %292, %305 : vector<16x16xf32>
    %c0_168 = arith.constant 0 : index
    %c0_169 = arith.constant 0 : index
    %307 = vector.load %arg21[%c0_168, %c0_169] : memref<1x16xf32, #tpu.memory_space<vmem>>, vector<1x16xf32>
    %308 = vector.broadcast %307 : vector<1x16xf32> to vector<16x16xf32>
    %309 = arith.mulf %306, %308 : vector<16x16xf32>
    %c0_170 = arith.constant 0 : index
    %c0_171 = arith.constant 0 : index
    %310 = vector.load %arg20[%c0_170, %c0_171] : memref<1x16xf32, #tpu.memory_space<vmem>>, vector<1x16xf32>
    %311 = vector.broadcast %310 : vector<1x16xf32> to vector<16x16xf32>
    %312 = arith.addf %309, %311 : vector<16x16xf32>
    %313 = arith.negf %312 : vector<16x16xf32>
    %314 = math.exp %313 : vector<16x16xf32>
    %cst_172 = arith.constant 1.000000e+00 : f32
    %315 = vector.broadcast %cst_172 : f32 to vector<16x16xf32>
    %316 = arith.addf %315, %314 : vector<16x16xf32>
    %317 = arith.divf %315, %316 : vector<16x16xf32>
    %318 = arith.mulf %312, %317 : vector<16x16xf32>
    %cst_173 = arith.constant 0.000000e+00 : f32
    %319 = vector.broadcast %cst_173 : f32 to vector<18x32xf32>
    %c0_174 = arith.constant 0 : index
    %c0_175 = arith.constant 0 : index
    %320 = vector.load %arg48[%c0_174, %c0_175] : memref<18x32xf32, #tpu.memory_space<vmem>>, vector<18x32xf32>
    tpu.vector_store %arg48[%c0_174, %c0_175], %319 {strides = array<i32>} : memref<18x32xf32, #tpu.memory_space<vmem>>, vector<18x32xf32>,
    %c1_176 = arith.constant 1 : index
    %c0_177 = arith.constant 0 : index
    %321 = vector.load %arg48[%c1_176, %c0_177] : memref<18x32xf32, #tpu.memory_space<vmem>>, vector<16x16xf32>
    tpu.vector_store %arg48[%c1_176, %c0_177], %318 {strides = array<i32>} : memref<18x32xf32, #tpu.memory_space<vmem>>, vector<16x16xf32>,
    %c0_178 = arith.constant 0 : index
    %c0_179 = arith.constant 0 : index
    %322 = vector.load %arg48[%c0_178, %c0_179] : memref<18x32xf32, #tpu.memory_space<vmem>>, vector<16x16xf32>
    %c0_180 = arith.constant 0 : index
    %c0_181 = arith.constant 0 : index
    %c0_182 = arith.constant 0 : index
    %323 = vector.load %arg17[%c0_180, %c0_181, %c0_182] : memref<3x16x16xf32, #tpu.memory_space<vmem>>, vector<1x16x16xf32>
    %324 = vector.shape_cast %323 : vector<1x16x16xf32> to vector<16x16xf32>
    %cst_183 = arith.constant dense<0.000000e+00> : vector<16x16xf32>
    %325 = tpu.matmul %322, %324, %cst_183 {dimension_numbers = #tpu.dot_dimension_numbers<[1], [0], [0], [1], [0, 0, 1, 1], [], []>} : vector<16x16xf32>, vector<16x16xf32>, vector<16x16xf32> -> vector<16x16xf32>
    %c1_184 = arith.constant 1 : index
    %c0_185 = arith.constant 0 : index
    %c0_186 = arith.constant 0 : index
    %326 = vector.load %arg17[%c1_184, %c0_185, %c0_186] : memref<3x16x16xf32, #tpu.memory_space<vmem>>, vector<1x16x16xf32>
    %327 = vector.shape_cast %326 : vector<1x16x16xf32> to vector<16x16xf32>
    %cst_187 = arith.constant dense<0.000000e+00> : vector<16x16xf32>
    %328 = tpu.matmul %318, %327, %cst_187 {dimension_numbers = #tpu.dot_dimension_numbers<[1], [0], [0], [1], [0, 0, 1, 1], [], []>} : vector<16x16xf32>, vector<16x16xf32>, vector<16x16xf32> -> vector<16x16xf32>
    %329 = arith.addf %325, %328 : vector<16x16xf32>
    %c2_188 = arith.constant 2 : index
    %c0_189 = arith.constant 0 : index
    %330 = vector.load %arg48[%c2_188, %c0_189] : memref<18x32xf32, #tpu.memory_space<vmem>>, vector<16x16xf32>
    %c2_190 = arith.constant 2 : index
    %c0_191 = arith.constant 0 : index
    %c0_192 = arith.constant 0 : index
    %331 = vector.load %arg17[%c2_190, %c0_191, %c0_192] : memref<3x16x16xf32, #tpu.memory_space<vmem>>, vector<1x16x16xf32>
    %332 = vector.shape_cast %331 : vector<1x16x16xf32> to vector<16x16xf32>
    %cst_193 = arith.constant dense<0.000000e+00> : vector<16x16xf32>
    %333 = tpu.matmul %330, %332, %cst_193 {dimension_numbers = #tpu.dot_dimension_numbers<[1], [0], [0], [1], [0, 0, 1, 1], [], []>} : vector<16x16xf32>, vector<16x16xf32>, vector<16x16xf32> -> vector<16x16xf32>
    %334 = arith.addf %329, %333 : vector<16x16xf32>
    %c0_194 = arith.constant 0 : index
    %c0_195 = arith.constant 0 : index
    %335 = vector.load %arg16[%c0_194, %c0_195] : memref<1x16xf32, #tpu.memory_space<vmem>>, vector<1x16xf32>
    %336 = vector.broadcast %335 : vector<1x16xf32> to vector<16x16xf32>
    %337 = arith.addf %334, %336 : vector<16x16xf32>
    %338 = arith.addf %179, %337 : vector<16x16xf32>
    %cst_196 = arith.constant 0.000000e+00 : f32
    %339 = vector.broadcast %cst_196 : f32 to vector<18x32xf32>
    %c0_197 = arith.constant 0 : index
    %c0_198 = arith.constant 0 : index
    %340 = vector.load %arg48[%c0_197, %c0_198] : memref<18x32xf32, #tpu.memory_space<vmem>>, vector<18x32xf32>
    tpu.vector_store %arg48[%c0_197, %c0_198], %339 {strides = array<i32>} : memref<18x32xf32, #tpu.memory_space<vmem>>, vector<18x32xf32>,
    %c1_199 = arith.constant 1 : index
    %c0_200 = arith.constant 0 : index
    %341 = vector.load %arg48[%c1_199, %c0_200] : memref<18x32xf32, #tpu.memory_space<vmem>>, vector<16x16xf32>
    tpu.vector_store %arg48[%c1_199, %c0_200], %338 {strides = array<i32>} : memref<18x32xf32, #tpu.memory_space<vmem>>, vector<16x16xf32>,
    %c0_201 = arith.constant 0 : index
    %c0_202 = arith.constant 0 : index
    %342 = vector.load %arg48[%c0_201, %c0_202] : memref<18x32xf32, #tpu.memory_space<vmem>>, vector<16x16xf32>
    %c0_203 = arith.constant 0 : index
    %c0_204 = arith.constant 0 : index
    %c0_205 = arith.constant 0 : index
    %343 = vector.load %arg23[%c0_203, %c0_204, %c0_205] : memref<3x16x16xf32, #tpu.memory_space<vmem>>, vector<1x16x16xf32>
    %344 = vector.shape_cast %343 : vector<1x16x16xf32> to vector<16x16xf32>
    %cst_206 = arith.constant dense<0.000000e+00> : vector<16x16xf32>
    %345 = tpu.matmul %342, %344, %cst_206 {dimension_numbers = #tpu.dot_dimension_numbers<[1], [0], [0], [1], [0, 0, 1, 1], [], []>} : vector<16x16xf32>, vector<16x16xf32>, vector<16x16xf32> -> vector<16x16xf32>
    %c1_207 = arith.constant 1 : index
    %c0_208 = arith.constant 0 : index
    %c0_209 = arith.constant 0 : index
    %346 = vector.load %arg23[%c1_207, %c0_208, %c0_209] : memref<3x16x16xf32, #tpu.memory_space<vmem>>, vector<1x16x16xf32>
    %347 = vector.shape_cast %346 : vector<1x16x16xf32> to vector<16x16xf32>
    %cst_210 = arith.constant dense<0.000000e+00> : vector<16x16xf32>
    %348 = tpu.matmul %338, %347, %cst_210 {dimension_numbers = #tpu.dot_dimension_numbers<[1], [0], [0], [1], [0, 0, 1, 1], [], []>} : vector<16x16xf32>, vector<16x16xf32>, vector<16x16xf32> -> vector<16x16xf32>
    %349 = arith.addf %345, %348 : vector<16x16xf32>
    %c2_211 = arith.constant 2 : index
    %c0_212 = arith.constant 0 : index
    %350 = vector.load %arg48[%c2_211, %c0_212] : memref<18x32xf32, #tpu.memory_space<vmem>>, vector<16x16xf32>
    %c2_213 = arith.constant 2 : index
    %c0_214 = arith.constant 0 : index
    %c0_215 = arith.constant 0 : index
    %351 = vector.load %arg23[%c2_213, %c0_214, %c0_215] : memref<3x16x16xf32, #tpu.memory_space<vmem>>, vector<1x16x16xf32>
    %352 = vector.shape_cast %351 : vector<1x16x16xf32> to vector<16x16xf32>
    %cst_216 = arith.constant dense<0.000000e+00> : vector<16x16xf32>
    %353 = tpu.matmul %350, %352, %cst_216 {dimension_numbers = #tpu.dot_dimension_numbers<[1], [0], [0], [1], [0, 0, 1, 1], [], []>} : vector<16x16xf32>, vector<16x16xf32>, vector<16x16xf32> -> vector<16x16xf32>
    %354 = arith.addf %349, %353 : vector<16x16xf32>
    %355 = tpu.iota {dimensions = array<i32: 0>} : vector<8x16xi32>
    %356 = tpu.iota {dimensions = array<i32: 1>} : vector<8x16xi32>
    %c2_i32 = arith.constant 2 : i32
    %357 = vector.broadcast %c2_i32 : i32 to vector<8x16xi32>
    %358 = arith.muli %357, %355 : vector<8x16xi32>
    %359 = arith.cmpi eq, %356, %358 : vector<8x16xi32>
    %360 = arith.extui %359 : vector<8x16xi1> to vector<8x16xi32>
    %361 = arith.sitofp %360 : vector<8x16xi32> to vector<8x16xf32>
    %cst_217 = arith.constant dense<0.000000e+00> : vector<8x16xf32>
    %362 = tpu.matmul %361, %354, %cst_217 {dimension_numbers = #tpu.dot_dimension_numbers<[1], [0], [0], [1], [0, 0, 1, 1], [], []>} : vector<8x16xf32>, vector<16x16xf32>, vector<8x16xf32> -> vector<8x16xf32>
    %c0_218 = arith.constant 0 : index
    %c0_219 = arith.constant 0 : index
    %363 = vector.load %arg22[%c0_218, %c0_219] : memref<1x16xf32, #tpu.memory_space<vmem>>, vector<1x16xf32>
    %364 = vector.broadcast %363 : vector<1x16xf32> to vector<8x16xf32>
    %365 = arith.addf %362, %364 : vector<8x16xf32>
    %366 = tpu.iota {dimensions = array<i32: 0>} : vector<16x4xi32>
    %367 = tpu.iota {dimensions = array<i32: 1>} : vector<16x4xi32>
    %c4_i32_220 = arith.constant 4 : i32
    %368 = vector.broadcast %c4_i32_220 : i32 to vector<16x4xi32>
    %369 = arith.muli %367, %368 : vector<16x4xi32>
    %370 = arith.cmpi sge, %366, %369 : vector<16x4xi32>
    %c1_i32_221 = arith.constant 1 : i32
    %371 = vector.broadcast %c1_i32_221 : i32 to vector<16x4xi32>
    %372 = arith.addi %367, %371 : vector<16x4xi32>
    %c4_i32_222 = arith.constant 4 : i32
    %373 = vector.broadcast %c4_i32_222 : i32 to vector<16x4xi32>
    %374 = arith.muli %372, %373 : vector<16x4xi32>
    %375 = arith.cmpi slt, %366, %374 : vector<16x4xi32>
    %376 = arith.andi %370, %375 : vector<16x4xi1>
    %377 = arith.extui %376 : vector<16x4xi1> to vector<16x4xi32>
    %378 = arith.sitofp %377 : vector<16x4xi32> to vector<16x4xf32>
    %379 = tpu.iota {dimensions = array<i32: 0>} : vector<4x16xi32>
    %380 = tpu.iota {dimensions = array<i32: 1>} : vector<4x16xi32>
    %c4_i32_223 = arith.constant 4 : i32
    %381 = vector.broadcast %c4_i32_223 : i32 to vector<4x16xi32>
    %382 = arith.muli %379, %381 : vector<4x16xi32>
    %383 = arith.cmpi sge, %380, %382 : vector<4x16xi32>
    %c1_i32_224 = arith.constant 1 : i32
    %384 = vector.broadcast %c1_i32_224 : i32 to vector<4x16xi32>
    %385 = arith.addi %379, %384 : vector<4x16xi32>
    %c4_i32_225 = arith.constant 4 : i32
    %386 = vector.broadcast %c4_i32_225 : i32 to vector<4x16xi32>
    %387 = arith.muli %385, %386 : vector<4x16xi32>
    %388 = arith.cmpi slt, %380, %387 : vector<4x16xi32>
    %389 = arith.andi %383, %388 : vector<4x16xi1>
    %390 = arith.extui %389 : vector<4x16xi1> to vector<4x16xi32>
    %391 = arith.sitofp %390 : vector<4x16xi32> to vector<4x16xf32>
    %cst_226 = arith.constant dense<0.000000e+00> : vector<16xf32>
    %392 = vector.multi_reduction <add>, %365, %cst_226 [0] : vector<8x16xf32> to vector<16xf32>
    %393 = vector.shape_cast %392 : vector<16xf32> to vector<1x16xf32>
    %cst_227 = arith.constant dense<0.000000e+00> : vector<1x4xf32>
    %394 = tpu.matmul %393, %378, %cst_227 {dimension_numbers = #tpu.dot_dimension_numbers<[1], [0], [0], [1], [0, 0, 1, 1], [], []>} : vector<1x16xf32>, vector<16x4xf32>, vector<1x4xf32> -> vector<1x4xf32>
    %cst_228 = arith.constant 3.125000e-02 : f32
    %395 = vector.broadcast %cst_228 : f32 to vector<1x4xf32>
    %396 = arith.mulf %394, %395 : vector<1x4xf32>
    %cst_229 = arith.constant dense<0.000000e+00> : vector<1x16xf32>
    %397 = tpu.matmul %396, %391, %cst_229 {dimension_numbers = #tpu.dot_dimension_numbers<[1], [0], [0], [1], [0, 0, 1, 1], [], []>} : vector<1x4xf32>, vector<4x16xf32>, vector<1x16xf32> -> vector<1x16xf32>
    %398 = vector.broadcast %397 : vector<1x16xf32> to vector<8x16xf32>
    %399 = arith.subf %365, %398 : vector<8x16xf32>
    %400 = arith.mulf %399, %399 : vector<8x16xf32>
    %cst_230 = arith.constant dense<0.000000e+00> : vector<16xf32>
    %401 = vector.multi_reduction <add>, %400, %cst_230 [0] : vector<8x16xf32> to vector<16xf32>
    %402 = vector.shape_cast %401 : vector<16xf32> to vector<1x16xf32>
    %cst_231 = arith.constant dense<0.000000e+00> : vector<1x4xf32>
    %403 = tpu.matmul %402, %378, %cst_231 {dimension_numbers = #tpu.dot_dimension_numbers<[1], [0], [0], [1], [0, 0, 1, 1], [], []>} : vector<1x16xf32>, vector<16x4xf32>, vector<1x4xf32> -> vector<1x4xf32>
    %cst_232 = arith.constant 3.125000e-02 : f32
    %404 = vector.broadcast %cst_232 : f32 to vector<1x4xf32>
    %405 = arith.mulf %403, %404 : vector<1x4xf32>
    %cst_233 = arith.constant 0.000000e+00 : f32
    %406 = vector.broadcast %cst_233 : f32 to vector<1x4xf32>
    %407 = arith.maximumf %405, %406 : vector<1x4xf32>
    %cst_234 = arith.constant dense<0.000000e+00> : vector<1x16xf32>
    %408 = tpu.matmul %407, %391, %cst_234 {dimension_numbers = #tpu.dot_dimension_numbers<[1], [0], [0], [1], [0, 0, 1, 1], [], []>} : vector<1x4xf32>, vector<4x16xf32>, vector<1x16xf32> -> vector<1x16xf32>
    %cst_235 = arith.constant 9.99999997E-7 : f32
    %409 = vector.broadcast %cst_235 : f32 to vector<1x16xf32>
    %410 = arith.addf %408, %409 : vector<1x16xf32>
    %411 = math.rsqrt %410 : vector<1x16xf32>
    %412 = vector.broadcast %411 : vector<1x16xf32> to vector<8x16xf32>
    %413 = arith.mulf %399, %412 : vector<8x16xf32>
    %c0_236 = arith.constant 0 : index
    %c0_237 = arith.constant 0 : index
    %414 = vector.load %arg31[%c0_236, %c0_237] : memref<1x16xf32, #tpu.memory_space<vmem>>, vector<1x16xf32>
    %415 = vector.broadcast %414 : vector<1x16xf32> to vector<8x16xf32>
    %416 = arith.mulf %413, %415 : vector<8x16xf32>
    %c0_238 = arith.constant 0 : index
    %c0_239 = arith.constant 0 : index
    %417 = vector.load %arg30[%c0_238, %c0_239] : memref<1x16xf32, #tpu.memory_space<vmem>>, vector<1x16xf32>
    %418 = vector.broadcast %417 : vector<1x16xf32> to vector<8x16xf32>
    %419 = arith.addf %416, %418 : vector<8x16xf32>
    %420 = arith.negf %419 : vector<8x16xf32>
    %421 = math.exp %420 : vector<8x16xf32>
    %cst_240 = arith.constant 1.000000e+00 : f32
    %422 = vector.broadcast %cst_240 : f32 to vector<8x16xf32>
    %423 = arith.addf %422, %421 : vector<8x16xf32>
    %424 = arith.divf %422, %423 : vector<8x16xf32>
    %425 = arith.mulf %419, %424 : vector<8x16xf32>
    %cst_241 = arith.constant 0.000000e+00 : f32
    %426 = vector.broadcast %cst_241 : f32 to vector<18x32xf32>
    %c0_242 = arith.constant 0 : index
    %c0_243 = arith.constant 0 : index
    %427 = vector.load %arg48[%c0_242, %c0_243] : memref<18x32xf32, #tpu.memory_space<vmem>>, vector<18x32xf32>
    tpu.vector_store %arg48[%c0_242, %c0_243], %426 {strides = array<i32>} : memref<18x32xf32, #tpu.memory_space<vmem>>, vector<18x32xf32>,
    %c1_244 = arith.constant 1 : index
    %c0_245 = arith.constant 0 : index
    %428 = vector.load %arg48[%c1_244, %c0_245] : memref<18x32xf32, #tpu.memory_space<vmem>>, vector<8x16xf32>
    tpu.vector_store %arg48[%c1_244, %c0_245], %425 {strides = array<i32>} : memref<18x32xf32, #tpu.memory_space<vmem>>, vector<8x16xf32>,
    %c0_246 = arith.constant 0 : index
    %c0_247 = arith.constant 0 : index
    %429 = vector.load %arg48[%c0_246, %c0_247] : memref<18x32xf32, #tpu.memory_space<vmem>>, vector<8x16xf32>
    %c0_248 = arith.constant 0 : index
    %c0_249 = arith.constant 0 : index
    %c0_250 = arith.constant 0 : index
    %430 = vector.load %arg25[%c0_248, %c0_249, %c0_250] : memref<3x16x32xf32, #tpu.memory_space<vmem>>, vector<1x16x32xf32>
    %431 = vector.shape_cast %430 : vector<1x16x32xf32> to vector<16x32xf32>
    %cst_251 = arith.constant dense<0.000000e+00> : vector<8x32xf32>
    %432 = tpu.matmul %429, %431, %cst_251 {dimension_numbers = #tpu.dot_dimension_numbers<[1], [0], [0], [1], [0, 0, 1, 1], [], []>} : vector<8x16xf32>, vector<16x32xf32>, vector<8x32xf32> -> vector<8x32xf32>
    %c1_252 = arith.constant 1 : index
    %c0_253 = arith.constant 0 : index
    %c0_254 = arith.constant 0 : index
    %433 = vector.load %arg25[%c1_252, %c0_253, %c0_254] : memref<3x16x32xf32, #tpu.memory_space<vmem>>, vector<1x16x32xf32>
    %434 = vector.shape_cast %433 : vector<1x16x32xf32> to vector<16x32xf32>
    %cst_255 = arith.constant dense<0.000000e+00> : vector<8x32xf32>
    %435 = tpu.matmul %425, %434, %cst_255 {dimension_numbers = #tpu.dot_dimension_numbers<[1], [0], [0], [1], [0, 0, 1, 1], [], []>} : vector<8x16xf32>, vector<16x32xf32>, vector<8x32xf32> -> vector<8x32xf32>
    %436 = arith.addf %432, %435 : vector<8x32xf32>
    %c2_256 = arith.constant 2 : index
    %c0_257 = arith.constant 0 : index
    %437 = vector.load %arg48[%c2_256, %c0_257] : memref<18x32xf32, #tpu.memory_space<vmem>>, vector<8x16xf32>
    %c2_258 = arith.constant 2 : index
    %c0_259 = arith.constant 0 : index
    %c0_260 = arith.constant 0 : index
    %438 = vector.load %arg25[%c2_258, %c0_259, %c0_260] : memref<3x16x32xf32, #tpu.memory_space<vmem>>, vector<1x16x32xf32>
    %439 = vector.shape_cast %438 : vector<1x16x32xf32> to vector<16x32xf32>
    %cst_261 = arith.constant dense<0.000000e+00> : vector<8x32xf32>
    %440 = tpu.matmul %437, %439, %cst_261 {dimension_numbers = #tpu.dot_dimension_numbers<[1], [0], [0], [1], [0, 0, 1, 1], [], []>} : vector<8x16xf32>, vector<16x32xf32>, vector<8x32xf32> -> vector<8x32xf32>
    %441 = arith.addf %436, %440 : vector<8x32xf32>
    %c0_262 = arith.constant 0 : index
    %c0_263 = arith.constant 0 : index
    %442 = vector.load %arg24[%c0_262, %c0_263] : memref<1x32xf32, #tpu.memory_space<vmem>>, vector<1x32xf32>
    %443 = vector.broadcast %442 : vector<1x32xf32> to vector<8x32xf32>
    %444 = arith.addf %441, %443 : vector<8x32xf32>
    %445 = tpu.iota {dimensions = array<i32: 0>} : vector<32x4xi32>
    %446 = tpu.iota {dimensions = array<i32: 1>} : vector<32x4xi32>
    %c8_i32 = arith.constant 8 : i32
    %447 = vector.broadcast %c8_i32 : i32 to vector<32x4xi32>
    %448 = arith.muli %446, %447 : vector<32x4xi32>
    %449 = arith.cmpi sge, %445, %448 : vector<32x4xi32>
    %c1_i32_264 = arith.constant 1 : i32
    %450 = vector.broadcast %c1_i32_264 : i32 to vector<32x4xi32>
    %451 = arith.addi %446, %450 : vector<32x4xi32>
    %c8_i32_265 = arith.constant 8 : i32
    %452 = vector.broadcast %c8_i32_265 : i32 to vector<32x4xi32>
    %453 = arith.muli %451, %452 : vector<32x4xi32>
    %454 = arith.cmpi slt, %445, %453 : vector<32x4xi32>
    %455 = arith.andi %449, %454 : vector<32x4xi1>
    %456 = arith.extui %455 : vector<32x4xi1> to vector<32x4xi32>
    %457 = arith.sitofp %456 : vector<32x4xi32> to vector<32x4xf32>
    %458 = tpu.iota {dimensions = array<i32: 0>} : vector<4x32xi32>
    %459 = tpu.iota {dimensions = array<i32: 1>} : vector<4x32xi32>
    %c8_i32_266 = arith.constant 8 : i32
    %460 = vector.broadcast %c8_i32_266 : i32 to vector<4x32xi32>
    %461 = arith.muli %458, %460 : vector<4x32xi32>
    %462 = arith.cmpi sge, %459, %461 : vector<4x32xi32>
    %c1_i32_267 = arith.constant 1 : i32
    %463 = vector.broadcast %c1_i32_267 : i32 to vector<4x32xi32>
    %464 = arith.addi %458, %463 : vector<4x32xi32>
    %c8_i32_268 = arith.constant 8 : i32
    %465 = vector.broadcast %c8_i32_268 : i32 to vector<4x32xi32>
    %466 = arith.muli %464, %465 : vector<4x32xi32>
    %467 = arith.cmpi slt, %459, %466 : vector<4x32xi32>
    %468 = arith.andi %462, %467 : vector<4x32xi1>
    %469 = arith.extui %468 : vector<4x32xi1> to vector<4x32xi32>
    %470 = arith.sitofp %469 : vector<4x32xi32> to vector<4x32xf32>
    %cst_269 = arith.constant dense<0.000000e+00> : vector<32xf32>
    %471 = vector.multi_reduction <add>, %444, %cst_269 [0] : vector<8x32xf32> to vector<32xf32>
    %472 = vector.shape_cast %471 : vector<32xf32> to vector<1x32xf32>
    %cst_270 = arith.constant dense<0.000000e+00> : vector<1x4xf32>
    %473 = tpu.matmul %472, %457, %cst_270 {dimension_numbers = #tpu.dot_dimension_numbers<[1], [0], [0], [1], [0, 0, 1, 1], [], []>} : vector<1x32xf32>, vector<32x4xf32>, vector<1x4xf32> -> vector<1x4xf32>
    %cst_271 = arith.constant 1.562500e-02 : f32
    %474 = vector.broadcast %cst_271 : f32 to vector<1x4xf32>
    %475 = arith.mulf %473, %474 : vector<1x4xf32>
    %cst_272 = arith.constant dense<0.000000e+00> : vector<1x32xf32>
    %476 = tpu.matmul %475, %470, %cst_272 {dimension_numbers = #tpu.dot_dimension_numbers<[1], [0], [0], [1], [0, 0, 1, 1], [], []>} : vector<1x4xf32>, vector<4x32xf32>, vector<1x32xf32> -> vector<1x32xf32>
    %477 = vector.broadcast %476 : vector<1x32xf32> to vector<8x32xf32>
    %478 = arith.subf %444, %477 : vector<8x32xf32>
    %479 = arith.mulf %478, %478 : vector<8x32xf32>
    %cst_273 = arith.constant dense<0.000000e+00> : vector<32xf32>
    %480 = vector.multi_reduction <add>, %479, %cst_273 [0] : vector<8x32xf32> to vector<32xf32>
    %481 = vector.shape_cast %480 : vector<32xf32> to vector<1x32xf32>
    %cst_274 = arith.constant dense<0.000000e+00> : vector<1x4xf32>
    %482 = tpu.matmul %481, %457, %cst_274 {dimension_numbers = #tpu.dot_dimension_numbers<[1], [0], [0], [1], [0, 0, 1, 1], [], []>} : vector<1x32xf32>, vector<32x4xf32>, vector<1x4xf32> -> vector<1x4xf32>
    %cst_275 = arith.constant 1.562500e-02 : f32
    %483 = vector.broadcast %cst_275 : f32 to vector<1x4xf32>
    %484 = arith.mulf %482, %483 : vector<1x4xf32>
    %cst_276 = arith.constant 0.000000e+00 : f32
    %485 = vector.broadcast %cst_276 : f32 to vector<1x4xf32>
    %486 = arith.maximumf %484, %485 : vector<1x4xf32>
    %cst_277 = arith.constant dense<0.000000e+00> : vector<1x32xf32>
    %487 = tpu.matmul %486, %470, %cst_277 {dimension_numbers = #tpu.dot_dimension_numbers<[1], [0], [0], [1], [0, 0, 1, 1], [], []>} : vector<1x4xf32>, vector<4x32xf32>, vector<1x32xf32> -> vector<1x32xf32>
    %cst_278 = arith.constant 9.99999997E-7 : f32
    %488 = vector.broadcast %cst_278 : f32 to vector<1x32xf32>
    %489 = arith.addf %487, %488 : vector<1x32xf32>
    %490 = math.rsqrt %489 : vector<1x32xf32>
    %491 = vector.broadcast %490 : vector<1x32xf32> to vector<8x32xf32>
    %492 = arith.mulf %478, %491 : vector<8x32xf32>
    %c0_279 = arith.constant 0 : index
    %c0_280 = arith.constant 0 : index
    %493 = vector.load %arg33[%c0_279, %c0_280] : memref<1x32xf32, #tpu.memory_space<vmem>>, vector<1x32xf32>
    %494 = vector.broadcast %493 : vector<1x32xf32> to vector<8x32xf32>
    %495 = arith.mulf %492, %494 : vector<8x32xf32>
    %c0_281 = arith.constant 0 : index
    %c0_282 = arith.constant 0 : index
    %496 = vector.load %arg32[%c0_281, %c0_282] : memref<1x32xf32, #tpu.memory_space<vmem>>, vector<1x32xf32>
    %497 = vector.broadcast %496 : vector<1x32xf32> to vector<8x32xf32>
    %498 = arith.addf %495, %497 : vector<8x32xf32>
    %499 = arith.negf %498 : vector<8x32xf32>
    %500 = math.exp %499 : vector<8x32xf32>
    %cst_283 = arith.constant 1.000000e+00 : f32
    %501 = vector.broadcast %cst_283 : f32 to vector<8x32xf32>
    %502 = arith.addf %501, %500 : vector<8x32xf32>
    %503 = arith.divf %501, %502 : vector<8x32xf32>
    %504 = arith.mulf %498, %503 : vector<8x32xf32>
    %cst_284 = arith.constant 0.000000e+00 : f32
    %505 = vector.broadcast %cst_284 : f32 to vector<18x32xf32>
    %c0_285 = arith.constant 0 : index
    %c0_286 = arith.constant 0 : index
    %506 = vector.load %arg48[%c0_285, %c0_286] : memref<18x32xf32, #tpu.memory_space<vmem>>, vector<18x32xf32>
    tpu.vector_store %arg48[%c0_285, %c0_286], %505 {strides = array<i32>} : memref<18x32xf32, #tpu.memory_space<vmem>>, vector<18x32xf32>,
    %c1_287 = arith.constant 1 : index
    %c0_288 = arith.constant 0 : index
    %507 = vector.load %arg48[%c1_287, %c0_288] : memref<18x32xf32, #tpu.memory_space<vmem>>, vector<8x32xf32>
    tpu.vector_store %arg48[%c1_287, %c0_288], %504 {strides = array<i32>} : memref<18x32xf32, #tpu.memory_space<vmem>>, vector<8x32xf32>,
    %c0_289 = arith.constant 0 : index
    %c0_290 = arith.constant 0 : index
    %508 = vector.load %arg48[%c0_289, %c0_290] : memref<18x32xf32, #tpu.memory_space<vmem>>, vector<8x32xf32>
    %c0_291 = arith.constant 0 : index
    %c0_292 = arith.constant 0 : index
    %c0_293 = arith.constant 0 : index
    %509 = vector.load %arg27[%c0_291, %c0_292, %c0_293] : memref<3x32x32xf32, #tpu.memory_space<vmem>>, vector<1x32x32xf32>
    %510 = vector.shape_cast %509 : vector<1x32x32xf32> to vector<32x32xf32>
    %cst_294 = arith.constant dense<0.000000e+00> : vector<8x32xf32>
    %511 = tpu.matmul %508, %510, %cst_294 {dimension_numbers = #tpu.dot_dimension_numbers<[1], [0], [0], [1], [0, 0, 1, 1], [], []>} : vector<8x32xf32>, vector<32x32xf32>, vector<8x32xf32> -> vector<8x32xf32>
    %c1_295 = arith.constant 1 : index
    %c0_296 = arith.constant 0 : index
    %c0_297 = arith.constant 0 : index
    %512 = vector.load %arg27[%c1_295, %c0_296, %c0_297] : memref<3x32x32xf32, #tpu.memory_space<vmem>>, vector<1x32x32xf32>
    %513 = vector.shape_cast %512 : vector<1x32x32xf32> to vector<32x32xf32>
    %cst_298 = arith.constant dense<0.000000e+00> : vector<8x32xf32>
    %514 = tpu.matmul %504, %513, %cst_298 {dimension_numbers = #tpu.dot_dimension_numbers<[1], [0], [0], [1], [0, 0, 1, 1], [], []>} : vector<8x32xf32>, vector<32x32xf32>, vector<8x32xf32> -> vector<8x32xf32>
    %515 = arith.addf %511, %514 : vector<8x32xf32>
    %c2_299 = arith.constant 2 : index
    %c0_300 = arith.constant 0 : index
    %516 = vector.load %arg48[%c2_299, %c0_300] : memref<18x32xf32, #tpu.memory_space<vmem>>, vector<8x32xf32>
    %c2_301 = arith.constant 2 : index
    %c0_302 = arith.constant 0 : index
    %c0_303 = arith.constant 0 : index
    %517 = vector.load %arg27[%c2_301, %c0_302, %c0_303] : memref<3x32x32xf32, #tpu.memory_space<vmem>>, vector<1x32x32xf32>
    %518 = vector.shape_cast %517 : vector<1x32x32xf32> to vector<32x32xf32>
    %cst_304 = arith.constant dense<0.000000e+00> : vector<8x32xf32>
    %519 = tpu.matmul %516, %518, %cst_304 {dimension_numbers = #tpu.dot_dimension_numbers<[1], [0], [0], [1], [0, 0, 1, 1], [], []>} : vector<8x32xf32>, vector<32x32xf32>, vector<8x32xf32> -> vector<8x32xf32>
    %520 = arith.addf %515, %519 : vector<8x32xf32>
    %c0_305 = arith.constant 0 : index
    %c0_306 = arith.constant 0 : index
    %521 = vector.load %arg26[%c0_305, %c0_306] : memref<1x32xf32, #tpu.memory_space<vmem>>, vector<1x32xf32>
    %522 = vector.broadcast %521 : vector<1x32xf32> to vector<8x32xf32>
    %523 = arith.addf %520, %522 : vector<8x32xf32>
    %c0_307 = arith.constant 0 : index
    %c0_308 = arith.constant 0 : index
    %c0_309 = arith.constant 0 : index
    %524 = vector.load %arg29[%c0_307, %c0_308, %c0_309] : memref<1x16x32xf32, #tpu.memory_space<vmem>>, vector<1x16x32xf32>
    %525 = vector.shape_cast %524 : vector<1x16x32xf32> to vector<16x32xf32>
    %cst_310 = arith.constant dense<0.000000e+00> : vector<8x32xf32>
    %526 = tpu.matmul %365, %525, %cst_310 {dimension_numbers = #tpu.dot_dimension_numbers<[1], [0], [0], [1], [0, 0, 1, 1], [], []>} : vector<8x16xf32>, vector<16x32xf32>, vector<8x32xf32> -> vector<8x32xf32>
    %c0_311 = arith.constant 0 : index
    %c0_312 = arith.constant 0 : index
    %527 = vector.load %arg28[%c0_311, %c0_312] : memref<1x32xf32, #tpu.memory_space<vmem>>, vector<1x32xf32>
    %528 = vector.broadcast %527 : vector<1x32xf32> to vector<8x32xf32>
    %529 = arith.addf %526, %528 : vector<8x32xf32>
    %530 = arith.addf %529, %523 : vector<8x32xf32>
    %531 = tpu.iota {dimensions = array<i32: 0>} : vector<32x4xi32>
    %532 = tpu.iota {dimensions = array<i32: 1>} : vector<32x4xi32>
    %c8_i32_313 = arith.constant 8 : i32
    %533 = vector.broadcast %c8_i32_313 : i32 to vector<32x4xi32>
    %534 = arith.muli %532, %533 : vector<32x4xi32>
    %535 = arith.cmpi sge, %531, %534 : vector<32x4xi32>
    %c1_i32_314 = arith.constant 1 : i32
    %536 = vector.broadcast %c1_i32_314 : i32 to vector<32x4xi32>
    %537 = arith.addi %532, %536 : vector<32x4xi32>
    %c8_i32_315 = arith.constant 8 : i32
    %538 = vector.broadcast %c8_i32_315 : i32 to vector<32x4xi32>
    %539 = arith.muli %537, %538 : vector<32x4xi32>
    %540 = arith.cmpi slt, %531, %539 : vector<32x4xi32>
    %541 = arith.andi %535, %540 : vector<32x4xi1>
    %542 = arith.extui %541 : vector<32x4xi1> to vector<32x4xi32>
    %543 = arith.sitofp %542 : vector<32x4xi32> to vector<32x4xf32>
    %544 = tpu.iota {dimensions = array<i32: 0>} : vector<4x32xi32>
    %545 = tpu.iota {dimensions = array<i32: 1>} : vector<4x32xi32>
    %c8_i32_316 = arith.constant 8 : i32
    %546 = vector.broadcast %c8_i32_316 : i32 to vector<4x32xi32>
    %547 = arith.muli %544, %546 : vector<4x32xi32>
    %548 = arith.cmpi sge, %545, %547 : vector<4x32xi32>
    %c1_i32_317 = arith.constant 1 : i32
    %549 = vector.broadcast %c1_i32_317 : i32 to vector<4x32xi32>
    %550 = arith.addi %544, %549 : vector<4x32xi32>
    %c8_i32_318 = arith.constant 8 : i32
    %551 = vector.broadcast %c8_i32_318 : i32 to vector<4x32xi32>
    %552 = arith.muli %550, %551 : vector<4x32xi32>
    %553 = arith.cmpi slt, %545, %552 : vector<4x32xi32>
    %554 = arith.andi %548, %553 : vector<4x32xi1>
    %555 = arith.extui %554 : vector<4x32xi1> to vector<4x32xi32>
    %556 = arith.sitofp %555 : vector<4x32xi32> to vector<4x32xf32>
    %cst_319 = arith.constant dense<0.000000e+00> : vector<32xf32>
    %557 = vector.multi_reduction <add>, %530, %cst_319 [0] : vector<8x32xf32> to vector<32xf32>
    %558 = vector.shape_cast %557 : vector<32xf32> to vector<1x32xf32>
    %cst_320 = arith.constant dense<0.000000e+00> : vector<1x4xf32>
    %559 = tpu.matmul %558, %543, %cst_320 {dimension_numbers = #tpu.dot_dimension_numbers<[1], [0], [0], [1], [0, 0, 1, 1], [], []>} : vector<1x32xf32>, vector<32x4xf32>, vector<1x4xf32> -> vector<1x4xf32>
    %cst_321 = arith.constant 1.562500e-02 : f32
    %560 = vector.broadcast %cst_321 : f32 to vector<1x4xf32>
    %561 = arith.mulf %559, %560 : vector<1x4xf32>
    %cst_322 = arith.constant dense<0.000000e+00> : vector<1x32xf32>
    %562 = tpu.matmul %561, %556, %cst_322 {dimension_numbers = #tpu.dot_dimension_numbers<[1], [0], [0], [1], [0, 0, 1, 1], [], []>} : vector<1x4xf32>, vector<4x32xf32>, vector<1x32xf32> -> vector<1x32xf32>
    %563 = vector.broadcast %562 : vector<1x32xf32> to vector<8x32xf32>
    %564 = arith.subf %530, %563 : vector<8x32xf32>
    %565 = arith.mulf %564, %564 : vector<8x32xf32>
    %cst_323 = arith.constant dense<0.000000e+00> : vector<32xf32>
    %566 = vector.multi_reduction <add>, %565, %cst_323 [0] : vector<8x32xf32> to vector<32xf32>
    %567 = vector.shape_cast %566 : vector<32xf32> to vector<1x32xf32>
    %cst_324 = arith.constant dense<0.000000e+00> : vector<1x4xf32>
    %568 = tpu.matmul %567, %543, %cst_324 {dimension_numbers = #tpu.dot_dimension_numbers<[1], [0], [0], [1], [0, 0, 1, 1], [], []>} : vector<1x32xf32>, vector<32x4xf32>, vector<1x4xf32> -> vector<1x4xf32>
    %cst_325 = arith.constant 1.562500e-02 : f32
    %569 = vector.broadcast %cst_325 : f32 to vector<1x4xf32>
    %570 = arith.mulf %568, %569 : vector<1x4xf32>
    %cst_326 = arith.constant 0.000000e+00 : f32
    %571 = vector.broadcast %cst_326 : f32 to vector<1x4xf32>
    %572 = arith.maximumf %570, %571 : vector<1x4xf32>
    %cst_327 = arith.constant dense<0.000000e+00> : vector<1x32xf32>
    %573 = tpu.matmul %572, %556, %cst_327 {dimension_numbers = #tpu.dot_dimension_numbers<[1], [0], [0], [1], [0, 0, 1, 1], [], []>} : vector<1x4xf32>, vector<4x32xf32>, vector<1x32xf32> -> vector<1x32xf32>
    %cst_328 = arith.constant 9.99999997E-7 : f32
    %574 = vector.broadcast %cst_328 : f32 to vector<1x32xf32>
    %575 = arith.addf %573, %574 : vector<1x32xf32>
    %576 = math.rsqrt %575 : vector<1x32xf32>
    %577 = vector.broadcast %576 : vector<1x32xf32> to vector<8x32xf32>
    %578 = arith.mulf %564, %577 : vector<8x32xf32>
    %c0_329 = arith.constant 0 : index
    %c0_330 = arith.constant 0 : index
    %579 = vector.load %arg39[%c0_329, %c0_330] : memref<1x32xf32, #tpu.memory_space<vmem>>, vector<1x32xf32>
    %580 = vector.broadcast %579 : vector<1x32xf32> to vector<8x32xf32>
    %581 = arith.mulf %578, %580 : vector<8x32xf32>
    %c0_331 = arith.constant 0 : index
    %c0_332 = arith.constant 0 : index
    %582 = vector.load %arg38[%c0_331, %c0_332] : memref<1x32xf32, #tpu.memory_space<vmem>>, vector<1x32xf32>
    %583 = vector.broadcast %582 : vector<1x32xf32> to vector<8x32xf32>
    %584 = arith.addf %581, %583 : vector<8x32xf32>
    %585 = arith.negf %584 : vector<8x32xf32>
    %586 = math.exp %585 : vector<8x32xf32>
    %cst_333 = arith.constant 1.000000e+00 : f32
    %587 = vector.broadcast %cst_333 : f32 to vector<8x32xf32>
    %588 = arith.addf %587, %586 : vector<8x32xf32>
    %589 = arith.divf %587, %588 : vector<8x32xf32>
    %590 = arith.mulf %584, %589 : vector<8x32xf32>
    %cst_334 = arith.constant 0.000000e+00 : f32
    %591 = vector.broadcast %cst_334 : f32 to vector<18x32xf32>
    %c0_335 = arith.constant 0 : index
    %c0_336 = arith.constant 0 : index
    %592 = vector.load %arg48[%c0_335, %c0_336] : memref<18x32xf32, #tpu.memory_space<vmem>>, vector<18x32xf32>
    tpu.vector_store %arg48[%c0_335, %c0_336], %591 {strides = array<i32>} : memref<18x32xf32, #tpu.memory_space<vmem>>, vector<18x32xf32>,
    %c1_337 = arith.constant 1 : index
    %c0_338 = arith.constant 0 : index
    %593 = vector.load %arg48[%c1_337, %c0_338] : memref<18x32xf32, #tpu.memory_space<vmem>>, vector<8x32xf32>
    tpu.vector_store %arg48[%c1_337, %c0_338], %590 {strides = array<i32>} : memref<18x32xf32, #tpu.memory_space<vmem>>, vector<8x32xf32>,
    %c0_339 = arith.constant 0 : index
    %c0_340 = arith.constant 0 : index
    %594 = vector.load %arg48[%c0_339, %c0_340] : memref<18x32xf32, #tpu.memory_space<vmem>>, vector<8x32xf32>
    %c0_341 = arith.constant 0 : index
    %c0_342 = arith.constant 0 : index
    %c0_343 = arith.constant 0 : index
    %595 = vector.load %arg35[%c0_341, %c0_342, %c0_343] : memref<3x32x32xf32, #tpu.memory_space<vmem>>, vector<1x32x32xf32>
    %596 = vector.shape_cast %595 : vector<1x32x32xf32> to vector<32x32xf32>
    %cst_344 = arith.constant dense<0.000000e+00> : vector<8x32xf32>
    %597 = tpu.matmul %594, %596, %cst_344 {dimension_numbers = #tpu.dot_dimension_numbers<[1], [0], [0], [1], [0, 0, 1, 1], [], []>} : vector<8x32xf32>, vector<32x32xf32>, vector<8x32xf32> -> vector<8x32xf32>
    %c1_345 = arith.constant 1 : index
    %c0_346 = arith.constant 0 : index
    %c0_347 = arith.constant 0 : index
    %598 = vector.load %arg35[%c1_345, %c0_346, %c0_347] : memref<3x32x32xf32, #tpu.memory_space<vmem>>, vector<1x32x32xf32>
    %599 = vector.shape_cast %598 : vector<1x32x32xf32> to vector<32x32xf32>
    %cst_348 = arith.constant dense<0.000000e+00> : vector<8x32xf32>
    %600 = tpu.matmul %590, %599, %cst_348 {dimension_numbers = #tpu.dot_dimension_numbers<[1], [0], [0], [1], [0, 0, 1, 1], [], []>} : vector<8x32xf32>, vector<32x32xf32>, vector<8x32xf32> -> vector<8x32xf32>
    %601 = arith.addf %597, %600 : vector<8x32xf32>
    %c2_349 = arith.constant 2 : index
    %c0_350 = arith.constant 0 : index
    %602 = vector.load %arg48[%c2_349, %c0_350] : memref<18x32xf32, #tpu.memory_space<vmem>>, vector<8x32xf32>
    %c2_351 = arith.constant 2 : index
    %c0_352 = arith.constant 0 : index
    %c0_353 = arith.constant 0 : index
    %603 = vector.load %arg35[%c2_351, %c0_352, %c0_353] : memref<3x32x32xf32, #tpu.memory_space<vmem>>, vector<1x32x32xf32>
    %604 = vector.shape_cast %603 : vector<1x32x32xf32> to vector<32x32xf32>
    %cst_354 = arith.constant dense<0.000000e+00> : vector<8x32xf32>
    %605 = tpu.matmul %602, %604, %cst_354 {dimension_numbers = #tpu.dot_dimension_numbers<[1], [0], [0], [1], [0, 0, 1, 1], [], []>} : vector<8x32xf32>, vector<32x32xf32>, vector<8x32xf32> -> vector<8x32xf32>
    %606 = arith.addf %601, %605 : vector<8x32xf32>
    %c0_355 = arith.constant 0 : index
    %c0_356 = arith.constant 0 : index
    %607 = vector.load %arg34[%c0_355, %c0_356] : memref<1x32xf32, #tpu.memory_space<vmem>>, vector<1x32xf32>
    %608 = vector.broadcast %607 : vector<1x32xf32> to vector<8x32xf32>
    %609 = arith.addf %606, %608 : vector<8x32xf32>
    %610 = tpu.iota {dimensions = array<i32: 0>} : vector<32x4xi32>
    %611 = tpu.iota {dimensions = array<i32: 1>} : vector<32x4xi32>
    %c8_i32_357 = arith.constant 8 : i32
    %612 = vector.broadcast %c8_i32_357 : i32 to vector<32x4xi32>
    %613 = arith.muli %611, %612 : vector<32x4xi32>
    %614 = arith.cmpi sge, %610, %613 : vector<32x4xi32>
    %c1_i32_358 = arith.constant 1 : i32
    %615 = vector.broadcast %c1_i32_358 : i32 to vector<32x4xi32>
    %616 = arith.addi %611, %615 : vector<32x4xi32>
    %c8_i32_359 = arith.constant 8 : i32
    %617 = vector.broadcast %c8_i32_359 : i32 to vector<32x4xi32>
    %618 = arith.muli %616, %617 : vector<32x4xi32>
    %619 = arith.cmpi slt, %610, %618 : vector<32x4xi32>
    %620 = arith.andi %614, %619 : vector<32x4xi1>
    %621 = arith.extui %620 : vector<32x4xi1> to vector<32x4xi32>
    %622 = arith.sitofp %621 : vector<32x4xi32> to vector<32x4xf32>
    %623 = tpu.iota {dimensions = array<i32: 0>} : vector<4x32xi32>
    %624 = tpu.iota {dimensions = array<i32: 1>} : vector<4x32xi32>
    %c8_i32_360 = arith.constant 8 : i32
    %625 = vector.broadcast %c8_i32_360 : i32 to vector<4x32xi32>
    %626 = arith.muli %623, %625 : vector<4x32xi32>
    %627 = arith.cmpi sge, %624, %626 : vector<4x32xi32>
    %c1_i32_361 = arith.constant 1 : i32
    %628 = vector.broadcast %c1_i32_361 : i32 to vector<4x32xi32>
    %629 = arith.addi %623, %628 : vector<4x32xi32>
    %c8_i32_362 = arith.constant 8 : i32
    %630 = vector.broadcast %c8_i32_362 : i32 to vector<4x32xi32>
    %631 = arith.muli %629, %630 : vector<4x32xi32>
    %632 = arith.cmpi slt, %624, %631 : vector<4x32xi32>
    %633 = arith.andi %627, %632 : vector<4x32xi1>
    %634 = arith.extui %633 : vector<4x32xi1> to vector<4x32xi32>
    %635 = arith.sitofp %634 : vector<4x32xi32> to vector<4x32xf32>
    %cst_363 = arith.constant dense<0.000000e+00> : vector<32xf32>
    %636 = vector.multi_reduction <add>, %609, %cst_363 [0] : vector<8x32xf32> to vector<32xf32>
    %637 = vector.shape_cast %636 : vector<32xf32> to vector<1x32xf32>
    %cst_364 = arith.constant dense<0.000000e+00> : vector<1x4xf32>
    %638 = tpu.matmul %637, %622, %cst_364 {dimension_numbers = #tpu.dot_dimension_numbers<[1], [0], [0], [1], [0, 0, 1, 1], [], []>} : vector<1x32xf32>, vector<32x4xf32>, vector<1x4xf32> -> vector<1x4xf32>
    %cst_365 = arith.constant 1.562500e-02 : f32
    %639 = vector.broadcast %cst_365 : f32 to vector<1x4xf32>
    %640 = arith.mulf %638, %639 : vector<1x4xf32>
    %cst_366 = arith.constant dense<0.000000e+00> : vector<1x32xf32>
    %641 = tpu.matmul %640, %635, %cst_366 {dimension_numbers = #tpu.dot_dimension_numbers<[1], [0], [0], [1], [0, 0, 1, 1], [], []>} : vector<1x4xf32>, vector<4x32xf32>, vector<1x32xf32> -> vector<1x32xf32>
    %642 = vector.broadcast %641 : vector<1x32xf32> to vector<8x32xf32>
    %643 = arith.subf %609, %642 : vector<8x32xf32>
    %644 = arith.mulf %643, %643 : vector<8x32xf32>
    %cst_367 = arith.constant dense<0.000000e+00> : vector<32xf32>
    %645 = vector.multi_reduction <add>, %644, %cst_367 [0] : vector<8x32xf32> to vector<32xf32>
    %646 = vector.shape_cast %645 : vector<32xf32> to vector<1x32xf32>
    %cst_368 = arith.constant dense<0.000000e+00> : vector<1x4xf32>
    %647 = tpu.matmul %646, %622, %cst_368 {dimension_numbers = #tpu.dot_dimension_numbers<[1], [0], [0], [1], [0, 0, 1, 1], [], []>} : vector<1x32xf32>, vector<32x4xf32>, vector<1x4xf32> -> vector<1x4xf32>
    %cst_369 = arith.constant 1.562500e-02 : f32
    %648 = vector.broadcast %cst_369 : f32 to vector<1x4xf32>
    %649 = arith.mulf %647, %648 : vector<1x4xf32>
    %cst_370 = arith.constant 0.000000e+00 : f32
    %650 = vector.broadcast %cst_370 : f32 to vector<1x4xf32>
    %651 = arith.maximumf %649, %650 : vector<1x4xf32>
    %cst_371 = arith.constant dense<0.000000e+00> : vector<1x32xf32>
    %652 = tpu.matmul %651, %635, %cst_371 {dimension_numbers = #tpu.dot_dimension_numbers<[1], [0], [0], [1], [0, 0, 1, 1], [], []>} : vector<1x4xf32>, vector<4x32xf32>, vector<1x32xf32> -> vector<1x32xf32>
    %cst_372 = arith.constant 9.99999997E-7 : f32
    %653 = vector.broadcast %cst_372 : f32 to vector<1x32xf32>
    %654 = arith.addf %652, %653 : vector<1x32xf32>
    %655 = math.rsqrt %654 : vector<1x32xf32>
    %656 = vector.broadcast %655 : vector<1x32xf32> to vector<8x32xf32>
    %657 = arith.mulf %643, %656 : vector<8x32xf32>
    %c0_373 = arith.constant 0 : index
    %c0_374 = arith.constant 0 : index
    %658 = vector.load %arg41[%c0_373, %c0_374] : memref<1x32xf32, #tpu.memory_space<vmem>>, vector<1x32xf32>
    %659 = vector.broadcast %658 : vector<1x32xf32> to vector<8x32xf32>
    %660 = arith.mulf %657, %659 : vector<8x32xf32>
    %c0_375 = arith.constant 0 : index
    %c0_376 = arith.constant 0 : index
    %661 = vector.load %arg40[%c0_375, %c0_376] : memref<1x32xf32, #tpu.memory_space<vmem>>, vector<1x32xf32>
    %662 = vector.broadcast %661 : vector<1x32xf32> to vector<8x32xf32>
    %663 = arith.addf %660, %662 : vector<8x32xf32>
    %664 = arith.negf %663 : vector<8x32xf32>
    %665 = math.exp %664 : vector<8x32xf32>
    %cst_377 = arith.constant 1.000000e+00 : f32
    %666 = vector.broadcast %cst_377 : f32 to vector<8x32xf32>
    %667 = arith.addf %666, %665 : vector<8x32xf32>
    %668 = arith.divf %666, %667 : vector<8x32xf32>
    %669 = arith.mulf %663, %668 : vector<8x32xf32>
    %cst_378 = arith.constant 0.000000e+00 : f32
    %670 = vector.broadcast %cst_378 : f32 to vector<18x32xf32>
    %c0_379 = arith.constant 0 : index
    %c0_380 = arith.constant 0 : index
    %671 = vector.load %arg48[%c0_379, %c0_380] : memref<18x32xf32, #tpu.memory_space<vmem>>, vector<18x32xf32>
    tpu.vector_store %arg48[%c0_379, %c0_380], %670 {strides = array<i32>} : memref<18x32xf32, #tpu.memory_space<vmem>>, vector<18x32xf32>,
    %c1_381 = arith.constant 1 : index
    %c0_382 = arith.constant 0 : index
    %672 = vector.load %arg48[%c1_381, %c0_382] : memref<18x32xf32, #tpu.memory_space<vmem>>, vector<8x32xf32>
    tpu.vector_store %arg48[%c1_381, %c0_382], %669 {strides = array<i32>} : memref<18x32xf32, #tpu.memory_space<vmem>>, vector<8x32xf32>,
    %c0_383 = arith.constant 0 : index
    %c0_384 = arith.constant 0 : index
    %673 = vector.load %arg48[%c0_383, %c0_384] : memref<18x32xf32, #tpu.memory_space<vmem>>, vector<8x32xf32>
    %c0_385 = arith.constant 0 : index
    %c0_386 = arith.constant 0 : index
    %c0_387 = arith.constant 0 : index
    %674 = vector.load %arg37[%c0_385, %c0_386, %c0_387] : memref<3x32x32xf32, #tpu.memory_space<vmem>>, vector<1x32x32xf32>
    %675 = vector.shape_cast %674 : vector<1x32x32xf32> to vector<32x32xf32>
    %cst_388 = arith.constant dense<0.000000e+00> : vector<8x32xf32>
    %676 = tpu.matmul %673, %675, %cst_388 {dimension_numbers = #tpu.dot_dimension_numbers<[1], [0], [0], [1], [0, 0, 1, 1], [], []>} : vector<8x32xf32>, vector<32x32xf32>, vector<8x32xf32> -> vector<8x32xf32>
    %c1_389 = arith.constant 1 : index
    %c0_390 = arith.constant 0 : index
    %c0_391 = arith.constant 0 : index
    %677 = vector.load %arg37[%c1_389, %c0_390, %c0_391] : memref<3x32x32xf32, #tpu.memory_space<vmem>>, vector<1x32x32xf32>
    %678 = vector.shape_cast %677 : vector<1x32x32xf32> to vector<32x32xf32>
    %cst_392 = arith.constant dense<0.000000e+00> : vector<8x32xf32>
    %679 = tpu.matmul %669, %678, %cst_392 {dimension_numbers = #tpu.dot_dimension_numbers<[1], [0], [0], [1], [0, 0, 1, 1], [], []>} : vector<8x32xf32>, vector<32x32xf32>, vector<8x32xf32> -> vector<8x32xf32>
    %680 = arith.addf %676, %679 : vector<8x32xf32>
    %c2_393 = arith.constant 2 : index
    %c0_394 = arith.constant 0 : index
    %681 = vector.load %arg48[%c2_393, %c0_394] : memref<18x32xf32, #tpu.memory_space<vmem>>, vector<8x32xf32>
    %c2_395 = arith.constant 2 : index
    %c0_396 = arith.constant 0 : index
    %c0_397 = arith.constant 0 : index
    %682 = vector.load %arg37[%c2_395, %c0_396, %c0_397] : memref<3x32x32xf32, #tpu.memory_space<vmem>>, vector<1x32x32xf32>
    %683 = vector.shape_cast %682 : vector<1x32x32xf32> to vector<32x32xf32>
    %cst_398 = arith.constant dense<0.000000e+00> : vector<8x32xf32>
    %684 = tpu.matmul %681, %683, %cst_398 {dimension_numbers = #tpu.dot_dimension_numbers<[1], [0], [0], [1], [0, 0, 1, 1], [], []>} : vector<8x32xf32>, vector<32x32xf32>, vector<8x32xf32> -> vector<8x32xf32>
    %685 = arith.addf %680, %684 : vector<8x32xf32>
    %c0_399 = arith.constant 0 : index
    %c0_400 = arith.constant 0 : index
    %686 = vector.load %arg36[%c0_399, %c0_400] : memref<1x32xf32, #tpu.memory_space<vmem>>, vector<1x32xf32>
    %687 = vector.broadcast %686 : vector<1x32xf32> to vector<8x32xf32>
    %688 = arith.addf %685, %687 : vector<8x32xf32>
    %689 = arith.addf %530, %688 : vector<8x32xf32>
    %c0_401 = arith.constant 0 : index
    %c0_402 = arith.constant 0 : index
    %c0_403 = arith.constant 0 : index
    %690 = vector.load %arg5[%c0_401, %c0_402, %c0_403] : memref<1x32x32xf32, #tpu.memory_space<vmem>>, vector<1x32x32xf32>
    %691 = vector.shape_cast %690 : vector<1x32x32xf32> to vector<32x32xf32>
    %cst_404 = arith.constant dense<0.000000e+00> : vector<8x32xf32>
    %692 = tpu.matmul %689, %691, %cst_404 {dimension_numbers = #tpu.dot_dimension_numbers<[1], [0], [0], [1], [0, 0, 1, 1], [], []>} : vector<8x32xf32>, vector<32x32xf32>, vector<8x32xf32> -> vector<8x32xf32>
    %c0_405 = arith.constant 0 : index
    %c0_406 = arith.constant 0 : index
    %693 = vector.load %arg4[%c0_405, %c0_406] : memref<1x32xf32, #tpu.memory_space<vmem>>, vector<1x32xf32>
    %694 = vector.broadcast %693 : vector<1x32xf32> to vector<8x32xf32>
    %695 = arith.addf %692, %694 : vector<8x32xf32>
    %c0_407 = arith.constant 0 : index
    %c0_408 = arith.constant 0 : index
    %696 = vector.load %arg48[%c0_407, %c0_408] : memref<18x32xf32, #tpu.memory_space<vmem>>, vector<8x32xf32>
    tpu.vector_store %arg48[%c0_407, %c0_408], %695 {strides = array<i32>} : memref<18x32xf32, #tpu.memory_space<vmem>>, vector<8x32xf32>,
    %c1_409 = arith.constant 1 : index
    %c0_410 = arith.constant 0 : index
    %697 = vector.load %arg48[%c1_409, %c0_410] : memref<18x32xf32, #tpu.memory_space<vmem>>, vector<7x32xf32>
    %c0_411 = arith.constant 0 : index
    %c0_412 = arith.constant 0 : index
    %698 = vector.load %arg48[%c0_411, %c0_412] : memref<18x32xf32, #tpu.memory_space<vmem>>, vector<7x32xf32>
    %699 = arith.subf %697, %698 : vector<7x32xf32>
    %c0_413 = arith.constant 0 : index
    %c0_414 = arith.constant 0 : index
    %c0_415 = arith.constant 0 : index
    %700 = vector.load %arg43[%c0_413, %c0_414, %c0_415] : memref<1x32x32xf32, #tpu.memory_space<vmem>>, vector<1x32x32xf32>
    %701 = vector.shape_cast %700 : vector<1x32x32xf32> to vector<32x32xf32>
    %cst_416 = arith.constant dense<0.000000e+00> : vector<8x32xf32>
    %702 = tpu.matmul %695, %701, %cst_416 {dimension_numbers = #tpu.dot_dimension_numbers<[1], [0], [0], [1], [0, 0, 1, 1], [], []>} : vector<8x32xf32>, vector<32x32xf32>, vector<8x32xf32> -> vector<8x32xf32>
    %c0_417 = arith.constant 0 : index
    %c0_418 = arith.constant 0 : index
    %703 = vector.load %arg42[%c0_417, %c0_418] : memref<1x32xf32, #tpu.memory_space<vmem>>, vector<1x32xf32>
    %704 = vector.broadcast %703 : vector<1x32xf32> to vector<8x32xf32>
    %705 = arith.addf %702, %704 : vector<8x32xf32>
    %c0_419 = arith.constant 0 : index
    %c0_420 = arith.constant 0 : index
    %c0_421 = arith.constant 0 : index
    %706 = vector.load %arg46[%c0_419, %c0_420, %c0_421] : memref<1x8x32xf32, #tpu.memory_space<vmem>>, vector<1x8x32xf32>
    %707 = vector.shape_cast %706 : vector<1x8x32xf32> to vector<8x32xf32>
    %708 = vector.shape_cast %705 : vector<8x32xf32> to vector<1x8x32xf32>
    tpu.vector_store %arg46[%c0_419, %c0_420, %c0_421], %708 {strides = array<i32>} : memref<1x8x32xf32, #tpu.memory_space<vmem>>, vector<1x8x32xf32>,
    %c0_422 = arith.constant 0 : index
    %c0_423 = arith.constant 0 : index
    %c0_424 = arith.constant 0 : index
    %709 = vector.load %arg45[%c0_422, %c0_423, %c0_424] : memref<1x32x32xf32, #tpu.memory_space<vmem>>, vector<1x32x32xf32>
    %710 = vector.shape_cast %709 : vector<1x32x32xf32> to vector<32x32xf32>
    %cst_425 = arith.constant dense<0.000000e+00> : vector<7x32xf32>
    %711 = tpu.matmul %699, %710, %cst_425 {dimension_numbers = #tpu.dot_dimension_numbers<[1], [0], [0], [1], [0, 0, 1, 1], [], []>} : vector<7x32xf32>, vector<32x32xf32>, vector<7x32xf32> -> vector<7x32xf32>
    %c0_426 = arith.constant 0 : index
    %c0_427 = arith.constant 0 : index
    %712 = vector.load %arg44[%c0_426, %c0_427] : memref<1x32xf32, #tpu.memory_space<vmem>>, vector<1x32xf32>
    %713 = vector.broadcast %712 : vector<1x32xf32> to vector<7x32xf32>
    %714 = arith.addf %711, %713 : vector<7x32xf32>
    %c0_428 = arith.constant 0 : index
    %c0_429 = arith.constant 0 : index
    %c0_430 = arith.constant 0 : index
    %715 = vector.load %arg47[%c0_428, %c0_429, %c0_430] : memref<1x7x32xf32, #tpu.memory_space<vmem>>, vector<1x7x32xf32>
    %716 = vector.shape_cast %715 : vector<1x7x32xf32> to vector<7x32xf32>
    %717 = vector.shape_cast %714 : vector<7x32xf32> to vector<1x7x32xf32>
    tpu.vector_store %arg47[%c0_428, %c0_429, %c0_430], %717 {strides = array<i32>} : memref<1x7x32xf32, #tpu.memory_space<vmem>>, vector<1x7x32xf32>,
    return
  }
  func.func @transform_0(%arg0: i32) -> (i32, i32, i32) {
    %c0_i32 = arith.constant 0 : i32
    %c0_i32_0 = arith.constant 0 : i32
    %c0_i32_1 = arith.constant 0 : i32
    return %arg0, %c0_i32, %c0_i32_0 : i32, i32, i32
  }
  func.func @transform_1(%arg0: i32) -> (i32, i32) {
    %c0_i32 = arith.constant 0 : i32
    %c0_i32_0 = arith.constant 0 : i32
    %c0_i32_1 = arith.constant 0 : i32
    return %c0_i32, %c0_i32_0 : i32, i32
  }
  func.func @transform_2(%arg0: i32) -> (i32, i32, i32) {
    %c0_i32 = arith.constant 0 : i32
    %c0_i32_0 = arith.constant 0 : i32
    %c0_i32_1 = arith.constant 0 : i32
    %c0_i32_2 = arith.constant 0 : i32
    return %c0_i32, %c0_i32_0, %c0_i32_1 : i32, i32, i32
  }
  func.func @transform_3(%arg0: i32) -> (i32, i32) {
    %c0_i32 = arith.constant 0 : i32
    %c0_i32_0 = arith.constant 0 : i32
    %c0_i32_1 = arith.constant 0 : i32
    return %c0_i32, %c0_i32_0 : i32, i32
  }
  func.func @transform_4(%arg0: i32) -> (i32, i32, i32) {
    %c0_i32 = arith.constant 0 : i32
    %c0_i32_0 = arith.constant 0 : i32
    %c0_i32_1 = arith.constant 0 : i32
    %c0_i32_2 = arith.constant 0 : i32
    return %c0_i32, %c0_i32_0, %c0_i32_1 : i32, i32, i32
  }
  func.func @transform_5(%arg0: i32) -> (i32, i32) {
    %c0_i32 = arith.constant 0 : i32
    %c0_i32_0 = arith.constant 0 : i32
    %c0_i32_1 = arith.constant 0 : i32
    return %c0_i32, %c0_i32_0 : i32, i32
  }
  func.func @transform_6(%arg0: i32) -> (i32, i32, i32) {
    %c0_i32 = arith.constant 0 : i32
    %c0_i32_0 = arith.constant 0 : i32
    %c0_i32_1 = arith.constant 0 : i32
    %c0_i32_2 = arith.constant 0 : i32
    return %c0_i32, %c0_i32_0, %c0_i32_1 : i32, i32, i32
  }
  func.func @transform_7(%arg0: i32) -> (i32, i32) {
    %c0_i32 = arith.constant 0 : i32
    %c0_i32_0 = arith.constant 0 : i32
    %c0_i32_1 = arith.constant 0 : i32
    return %c0_i32, %c0_i32_0 : i32, i32
  }
  func.func @transform_8(%arg0: i32) -> (i32, i32, i32) {
    %c0_i32 = arith.constant 0 : i32
    %c0_i32_0 = arith.constant 0 : i32
    %c0_i32_1 = arith.constant 0 : i32
    %c0_i32_2 = arith.constant 0 : i32
    return %c0_i32, %c0_i32_0, %c0_i32_1 : i32, i32, i32
  }
  func.func @transform_9(%arg0: i32) -> (i32, i32) {
    %c0_i32 = arith.constant 0 : i32
    %c0_i32_0 = arith.constant 0 : i32
    %c0_i32_1 = arith.constant 0 : i32
    return %c0_i32, %c0_i32_0 : i32, i32
  }
  func.func @transform_10(%arg0: i32) -> (i32, i32) {
    %c0_i32 = arith.constant 0 : i32
    %c0_i32_0 = arith.constant 0 : i32
    %c0_i32_1 = arith.constant 0 : i32
    return %c0_i32, %c0_i32_0 : i32, i32
  }
  func.func @transform_11(%arg0: i32) -> (i32, i32) {
    %c0_i32 = arith.constant 0 : i32
    %c0_i32_0 = arith.constant 0 : i32
    %c0_i32_1 = arith.constant 0 : i32
    return %c0_i32, %c0_i32_0 : i32, i32
  }
  func.func @transform_12(%arg0: i32) -> (i32, i32) {
    %c0_i32 = arith.constant 0 : i32
    %c0_i32_0 = arith.constant 0 : i32
    %c0_i32_1 = arith.constant 0 : i32
    return %c0_i32, %c0_i32_0 : i32, i32
  }
  func.func @transform_13(%arg0: i32) -> (i32, i32) {
    %c0_i32 = arith.constant 0 : i32
    %c0_i32_0 = arith.constant 0 : i32
    %c0_i32_1 = arith.constant 0 : i32
    return %c0_i32, %c0_i32_0 : i32, i32
  }
  func.func @transform_14(%arg0: i32) -> (i32, i32, i32) {
    %c0_i32 = arith.constant 0 : i32
    %c0_i32_0 = arith.constant 0 : i32
    %c0_i32_1 = arith.constant 0 : i32
    %c0_i32_2 = arith.constant 0 : i32
    return %c0_i32, %c0_i32_0, %c0_i32_1 : i32, i32, i32
  }
  func.func @transform_15(%arg0: i32) -> (i32, i32) {
    %c0_i32 = arith.constant 0 : i32
    %c0_i32_0 = arith.constant 0 : i32
    %c0_i32_1 = arith.constant 0 : i32
    return %c0_i32, %c0_i32_0 : i32, i32
  }
  func.func @transform_16(%arg0: i32) -> (i32, i32, i32) {
    %c0_i32 = arith.constant 0 : i32
    %c0_i32_0 = arith.constant 0 : i32
    %c0_i32_1 = arith.constant 0 : i32
    %c0_i32_2 = arith.constant 0 : i32
    return %c0_i32, %c0_i32_0, %c0_i32_1 : i32, i32, i32
  }
  func.func @transform_17(%arg0: i32) -> (i32, i32) {
    %c0_i32 = arith.constant 0 : i32
    %c0_i32_0 = arith.constant 0 : i32
    %c0_i32_1 = arith.constant 0 : i32
    return %c0_i32, %c0_i32_0 : i32, i32
  }
  func.func @transform_18(%arg0: i32) -> (i32, i32) {
    %c0_i32 = arith.constant 0 : i32
    %c0_i32_0 = arith.constant 0 : i32
    %c0_i32_1 = arith.constant 0 : i32
    return %c0_i32, %c0_i32_0 : i32, i32
  }
  func.func @transform_19(%arg0: i32) -> (i32, i32) {
    %c0_i32 = arith.constant 0 : i32
    %c0_i32_0 = arith.constant 0 : i32
    %c0_i32_1 = arith.constant 0 : i32
    return %c0_i32, %c0_i32_0 : i32, i32
  }
  func.func @transform_20(%arg0: i32) -> (i32, i32) {
    %c0_i32 = arith.constant 0 : i32
    %c0_i32_0 = arith.constant 0 : i32
    %c0_i32_1 = arith.constant 0 : i32
    return %c0_i32, %c0_i32_0 : i32, i32
  }
  func.func @transform_21(%arg0: i32) -> (i32, i32) {
    %c0_i32 = arith.constant 0 : i32
    %c0_i32_0 = arith.constant 0 : i32
    %c0_i32_1 = arith.constant 0 : i32
    return %c0_i32, %c0_i32_0 : i32, i32
  }
  func.func @transform_22(%arg0: i32) -> (i32, i32, i32) {
    %c0_i32 = arith.constant 0 : i32
    %c0_i32_0 = arith.constant 0 : i32
    %c0_i32_1 = arith.constant 0 : i32
    %c0_i32_2 = arith.constant 0 : i32
    return %c0_i32, %c0_i32_0, %c0_i32_1 : i32, i32, i32
  }
  func.func @transform_23(%arg0: i32) -> (i32, i32) {
    %c0_i32 = arith.constant 0 : i32
    %c0_i32_0 = arith.constant 0 : i32
    %c0_i32_1 = arith.constant 0 : i32
    return %c0_i32, %c0_i32_0 : i32, i32
  }
  func.func @transform_24(%arg0: i32) -> (i32, i32, i32) {
    %c0_i32 = arith.constant 0 : i32
    %c0_i32_0 = arith.constant 0 : i32
    %c0_i32_1 = arith.constant 0 : i32
    %c0_i32_2 = arith.constant 0 : i32
    return %c0_i32, %c0_i32_0, %c0_i32_1 : i32, i32, i32
  }
  func.func @transform_25(%arg0: i32) -> (i32, i32) {
    %c0_i32 = arith.constant 0 : i32
    %c0_i32_0 = arith.constant 0 : i32
    %c0_i32_1 = arith.constant 0 : i32
    return %c0_i32, %c0_i32_0 : i32, i32
  }
  func.func @transform_26(%arg0: i32) -> (i32, i32, i32) {
    %c0_i32 = arith.constant 0 : i32
    %c0_i32_0 = arith.constant 0 : i32
    %c0_i32_1 = arith.constant 0 : i32
    %c0_i32_2 = arith.constant 0 : i32
    return %c0_i32, %c0_i32_0, %c0_i32_1 : i32, i32, i32
  }
  func.func @transform_27(%arg0: i32) -> (i32, i32) {
    %c0_i32 = arith.constant 0 : i32
    %c0_i32_0 = arith.constant 0 : i32
    %c0_i32_1 = arith.constant 0 : i32
    return %c0_i32, %c0_i32_0 : i32, i32
  }
  func.func @transform_28(%arg0: i32) -> (i32, i32, i32) {
    %c0_i32 = arith.constant 0 : i32
    %c0_i32_0 = arith.constant 0 : i32
    %c0_i32_1 = arith.constant 0 : i32
    %c0_i32_2 = arith.constant 0 : i32
    return %c0_i32, %c0_i32_0, %c0_i32_1 : i32, i32, i32
  }
  func.func @transform_29(%arg0: i32) -> (i32, i32) {
    %c0_i32 = arith.constant 0 : i32
    %c0_i32_0 = arith.constant 0 : i32
    %c0_i32_1 = arith.constant 0 : i32
    return %c0_i32, %c0_i32_0 : i32, i32
  }
  func.func @transform_30(%arg0: i32) -> (i32, i32) {
    %c0_i32 = arith.constant 0 : i32
    %c0_i32_0 = arith.constant 0 : i32
    %c0_i32_1 = arith.constant 0 : i32
    return %c0_i32, %c0_i32_0 : i32, i32
  }
  func.func @transform_31(%arg0: i32) -> (i32, i32) {
    %c0_i32 = arith.constant 0 : i32
    %c0_i32_0 = arith.constant 0 : i32
    %c0_i32_1 = arith.constant 0 : i32
    return %c0_i32, %c0_i32_0 : i32, i32
  }
  func.func @transform_32(%arg0: i32) -> (i32, i32) {
    %c0_i32 = arith.constant 0 : i32
    %c0_i32_0 = arith.constant 0 : i32
    %c0_i32_1 = arith.constant 0 : i32
    return %c0_i32, %c0_i32_0 : i32, i32
  }
  func.func @transform_33(%arg0: i32) -> (i32, i32) {
    %c0_i32 = arith.constant 0 : i32
    %c0_i32_0 = arith.constant 0 : i32
    %c0_i32_1 = arith.constant 0 : i32
    return %c0_i32, %c0_i32_0 : i32, i32
  }
  func.func @transform_34(%arg0: i32) -> (i32, i32, i32) {
    %c0_i32 = arith.constant 0 : i32
    %c0_i32_0 = arith.constant 0 : i32
    %c0_i32_1 = arith.constant 0 : i32
    %c0_i32_2 = arith.constant 0 : i32
    return %c0_i32, %c0_i32_0, %c0_i32_1 : i32, i32, i32
  }
  func.func @transform_35(%arg0: i32) -> (i32, i32) {
    %c0_i32 = arith.constant 0 : i32
    %c0_i32_0 = arith.constant 0 : i32
    %c0_i32_1 = arith.constant 0 : i32
    return %c0_i32, %c0_i32_0 : i32, i32
  }
  func.func @transform_36(%arg0: i32) -> (i32, i32, i32) {
    %c0_i32 = arith.constant 0 : i32
    %c0_i32_0 = arith.constant 0 : i32
    %c0_i32_1 = arith.constant 0 : i32
    %c0_i32_2 = arith.constant 0 : i32
    return %c0_i32, %c0_i32_0, %c0_i32_1 : i32, i32, i32
  }
  func.func @transform_37(%arg0: i32) -> (i32, i32) {
    %c0_i32 = arith.constant 0 : i32
    %c0_i32_0 = arith.constant 0 : i32
    %c0_i32_1 = arith.constant 0 : i32
    return %c0_i32, %c0_i32_0 : i32, i32
  }
  func.func @transform_38(%arg0: i32) -> (i32, i32) {
    %c0_i32 = arith.constant 0 : i32
    %c0_i32_0 = arith.constant 0 : i32
    %c0_i32_1 = arith.constant 0 : i32
    return %c0_i32, %c0_i32_0 : i32, i32
  }
  func.func @transform_39(%arg0: i32) -> (i32, i32) {
    %c0_i32 = arith.constant 0 : i32
    %c0_i32_0 = arith.constant 0 : i32
    %c0_i32_1 = arith.constant 0 : i32
    return %c0_i32, %c0_i32_0 : i32, i32
  }
  func.func @transform_40(%arg0: i32) -> (i32, i32) {
    %c0_i32 = arith.constant 0 : i32
    %c0_i32_0 = arith.constant 0 : i32
    %c0_i32_1 = arith.constant 0 : i32
    return %c0_i32, %c0_i32_0 : i32, i32
  }
  func.func @transform_41(%arg0: i32) -> (i32, i32) {
    %c0_i32 = arith.constant 0 : i32
    %c0_i32_0 = arith.constant 0 : i32
    %c0_i32_1 = arith.constant 0 : i32
    return %c0_i32, %c0_i32_0 : i32, i32
  }
  func.func @transform_42(%arg0: i32) -> (i32, i32, i32) {
    %c0_i32 = arith.constant 0 : i32
    %c0_i32_0 = arith.constant 0 : i32
    %c0_i32_1 = arith.constant 0 : i32
    %c0_i32_2 = arith.constant 0 : i32
    return %c0_i32, %c0_i32_0, %c0_i32_1 : i32, i32, i32
  }
  func.func @transform_43(%arg0: i32) -> (i32, i32) {
    %c0_i32 = arith.constant 0 : i32
    %c0_i32_0 = arith.constant 0 : i32
    %c0_i32_1 = arith.constant 0 : i32
    return %c0_i32, %c0_i32_0 : i32, i32
  }
  func.func @transform_44(%arg0: i32) -> (i32, i32, i32) {
    %c0_i32 = arith.constant 0 : i32
    %c0_i32_0 = arith.constant 0 : i32
    %c0_i32_1 = arith.constant 0 : i32
    %c0_i32_2 = arith.constant 0 : i32
    return %c0_i32, %c0_i32_0, %c0_i32_1 : i32, i32, i32
  }
  func.func @transform_45(%arg0: i32) -> (i32, i32, i32) {
    %c0_i32 = arith.constant 0 : i32
    %c0_i32_0 = arith.constant 0 : i32
    %c0_i32_1 = arith.constant 0 : i32
    return %arg0, %c0_i32, %c0_i32_0 : i32, i32, i32
  }
  func.func @transform_46(%arg0: i32) -> (i32, i32, i32) {
    %c0_i32 = arith.constant 0 : i32
    %c0_i32_0 = arith.constant 0 : i32
    %c0_i32_1 = arith.constant 0 : i32
    return %arg0, %c0_i32, %c0_i32_0 : i32, i32, i32
  }
}

</mosaic_0001>

<llo_original>
// kernel: encoder1diff_forward.1
$region0: #{encoder1diff_forward.1}
  #allocation0 [shape = 'u32[]', space=smem, size = 0x4, offset = 0x4, fixed_abs, tag = 'smem constant byte address 0x4 - core index']
  #allocation1 [shape = 'u32[144,128]{1,0:T(1,128)}', space=vmem, size = 0x12000, scoped, tag = 'internal scratch']
  #allocation2 [shape = 'f32[18,32]{1,0:T(8,128)}', space=vmem, size = 0x3000, scoped, tag = 'scratch operand']
  %s0 = inlined_call_operand.smem [shape: u32[47], index: -1, kind: input, shape index: {}]
  %s1 = sld [smem:[%s0]]
  %s2 = scalar_lea.smem %s0, 1
  %s3 = sld [smem:[%s2]]
  %s4 = scalar_lea.smem %s0, 2
  %s5 = sld [smem:[%s4]]
  %s6 = scalar_lea.smem %s0, 3
  %s7 = sld [smem:[%s6]]
  %s8 = scalar_lea.smem %s0, 4
  %s9 = sld [smem:[%s8]]
  %s10 = scalar_lea.smem %s0, 5
  %s11 = sld [smem:[%s10]]
  %s12 = scalar_lea.smem %s0, 6
  %s13 = sld [smem:[%s12]]
  %s14 = scalar_lea.smem %s0, 7
  %s15 = sld [smem:[%s14]]
  %s16 = scalar_lea.smem %s0, 8
  %s17 = sld [smem:[%s16]]
  %s18 = scalar_lea.smem %s0, 9
  %s19 = sld [smem:[%s18]]
  %s20 = scalar_lea.smem %s0, 10
  %s21 = sld [smem:[%s20]]
  %s22 = scalar_lea.smem %s0, 11
  %s23 = sld [smem:[%s22]]
  %s24 = scalar_lea.smem %s0, 12
  %s25 = sld [smem:[%s24]]
  %s26 = scalar_lea.smem %s0, 13
  %s27 = sld [smem:[%s26]]
  %s28 = scalar_lea.smem %s0, 14
  %s29 = sld [smem:[%s28]]
  %s30 = scalar_lea.smem %s0, 15
  %s31 = sld [smem:[%s30]]
  %s32 = scalar_lea.smem %s0, 16
  %s33 = sld [smem:[%s32]]
  %s34 = scalar_lea.smem %s0, 17
  %s35 = sld [smem:[%s34]]
  %s36 = scalar_lea.smem %s0, 18
  %s37 = sld [smem:[%s36]]
  %s38 = scalar_lea.smem %s0, 19
  %s39 = sld [smem:[%s38]]
  %s40 = scalar_lea.smem %s0, 20
  %s41 = sld [smem:[%s40]]
  %s42 = scalar_lea.smem %s0, 21
  %s43 = sld [smem:[%s42]]
  %s44 = scalar_lea.smem %s0, 22
  %s45 = sld [smem:[%s44]]
  %s46 = scalar_lea.smem %s0, 23
  %s47 = sld [smem:[%s46]]
  %s48 = scalar_lea.smem %s0, 24
  %s49 = sld [smem:[%s48]]
  %s50 = scalar_lea.smem %s0, 25
  %s51 = sld [smem:[%s50]]
  %s52 = scalar_lea.smem %s0, 26
  %s53 = sld [smem:[%s52]]
  %s54 = scalar_lea.smem %s0, 27
  %s55 = sld [smem:[%s54]]
  %s56 = scalar_lea.smem %s0, 28
  %s57 = sld [smem:[%s56]]
  %s58 = scalar_lea.smem %s0, 29
  %s59 = sld [smem:[%s58]]
  %s60 = scalar_lea.smem %s0, 30
  %s61 = sld [smem:[%s60]]
  %s62 = scalar_lea.smem %s0, 31
  %s63 = sld [smem:[%s62]]
  %s64 = scalar_lea.smem %s0, 32
  %s65 = sld [smem:[%s64]]
  %s66 = scalar_lea.smem %s0, 33
  %s67 = sld [smem:[%s66]]
  %s68 = scalar_lea.smem %s0, 34
  %s69 = sld [smem:[%s68]]
  %s70 = scalar_lea.smem %s0, 35
  %s71 = sld [smem:[%s70]]
  %s72 = scalar_lea.smem %s0, 36
  %s73 = sld [smem:[%s72]]
  %s74 = scalar_lea.smem %s0, 37
  %s75 = sld [smem:[%s74]]
  %s76 = scalar_lea.smem %s0, 38
  %s77 = sld [smem:[%s76]]
  %s78 = scalar_lea.smem %s0, 39
  %s79 = sld [smem:[%s78]]
  %s80 = scalar_lea.smem %s0, 40
  %s81 = sld [smem:[%s80]]
  %s82 = scalar_lea.smem %s0, 41
  %s83 = sld [smem:[%s82]]
  %s84 = scalar_lea.smem %s0, 42
  %s85 = sld [smem:[%s84]]
  %s86 = scalar_lea.smem %s0, 43
  %s87 = sld [smem:[%s86]]
  %s88 = scalar_lea.smem %s0, 44
  %s89 = sld [smem:[%s88]]
  %s90 = scalar_lea.smem %s0, 45
  %s91 = sld [smem:[%s90]]
  %s92 = scalar_lea.smem %s0, 46
  %s93 = sld [smem:[%s92]]
  %94 = xla_tuple %s91, %s93
  %s95 = sld [smem:[#allocation0]]
  $region361: #{encoder1diff_forward.1} parent=0
    _
  %s97 = ssub.s32 1, %s95
  %s98 = scalar_select 0, %s97, %s95
  $region1: #{encoder1diff_forward.1} parent=0
    #allocation3 [shape = 'u8[6144]{0}', space=vmem, size = 0x1800, scoped, tag = 'input window, operand 2, single buffered']
    #allocation4 [shape = 's32[2]{0}', space=sflag, size = 0x8, scoped, tag = 'scoped memory for encoder1diff_forward.1']
    #allocation5 [shape = 's32[2]{0}', space=sflag, size = 0x8, scoped, tag = 'scoped memory for encoder1diff_forward.1']
    #allocation6 [shape = 'u8[512]{0}', space=vmem, size = 0x400, scoped, tag = 'input window, operand 3, single buffered']
    #allocation7 [shape = 's32[1]{0}', space=sflag, size = 0x4, scoped, tag = 'scoped memory for encoder1diff_forward.1']
    #allocation8 [shape = 'u8[512]{0}', space=vmem, size = 0x400, scoped, tag = 'input window, operand 5, single buffered']
    #allocation9 [shape = 'u8[24576]{0}', space=vmem, size = 0x6000, scoped, tag = 'input window, operand 6, single buffered']
    #allocation10 [shape = 's32[1]{0}', space=sflag, size = 0x4, scoped, tag = 'scoped memory for encoder1diff_forward.1']
    #allocation11 [shape = 'u8[512]{0}', space=vmem, size = 0x400, scoped, tag = 'input window, operand 7, single buffered']
    #allocation12 [shape = 'u8[24576]{0}', space=vmem, size = 0x6000, scoped, tag = 'input window, operand 8, single buffered']
    #allocation13 [shape = 's32[1]{0}', space=sflag, size = 0x4, scoped, tag = 'scoped memory for encoder1diff_forward.1']
    #allocation14 [shape = 'u8[512]{0}', space=vmem, size = 0x400, scoped, tag = 'input window, operand 9, single buffered']
    #allocation15 [shape = 'u8[512]{0}', space=vmem, size = 0x400, scoped, tag = 'input window, operand 10, single buffered']
    #allocation16 [shape = 's32[1]{0}', space=sflag, size = 0x4, scoped, tag = 'scoped memory for encoder1diff_forward.1']
    #allocation17 [shape = 'u8[512]{0}', space=vmem, size = 0x400, scoped, tag = 'input window, operand 11, single buffered']
    #allocation18 [shape = 'u8[512]{0}', space=vmem, size = 0x400, scoped, tag = 'input window, operand 12, single buffered']
    #allocation19 [shape = 's32[1]{0}', space=sflag, size = 0x4, scoped, tag = 'scoped memory for encoder1diff_forward.1']
    #allocation20 [shape = 'u8[512]{0}', space=vmem, size = 0x400, scoped, tag = 'input window, operand 13, single buffered']
    #allocation21 [shape = 'u8[24576]{0}', space=vmem, size = 0x6000, scoped, tag = 'input window, operand 14, single buffered']
    #allocation22 [shape = 's32[1]{0}', space=sflag, size = 0x4, scoped, tag = 'scoped memory for encoder1diff_forward.1']
    #allocation23 [shape = 'u8[512]{0}', space=vmem, size = 0x400, scoped, tag = 'input window, operand 15, single buffered']
    #allocation24 [shape = 'u8[24576]{0}', space=vmem, size = 0x6000, scoped, tag = 'input window, operand 16, single buffered']
    #allocation25 [shape = 's32[1]{0}', space=sflag, size = 0x4, scoped, tag = 'scoped memory for encoder1diff_forward.1']
    #allocation26 [shape = 'u8[512]{0}', space=vmem, size = 0x400, scoped, tag = 'input window, operand 17, single buffered']
    #allocation27 [shape = 'u8[512]{0}', space=vmem, size = 0x400, scoped, tag = 'input window, operand 18, single buffered']
    #allocation28 [shape = 's32[1]{0}', space=sflag, size = 0x4, scoped, tag = 'scoped memory for encoder1diff_forward.1']
    #allocation29 [shape = 'u8[512]{0}', space=vmem, size = 0x400, scoped, tag = 'input window, operand 19, single buffered']
    #allocation30 [shape = 'u8[512]{0}', space=vmem, size = 0x400, scoped, tag = 'input window, operand 20, single buffered']
    #allocation31 [shape = 's32[1]{0}', space=sflag, size = 0x4, scoped, tag = 'scoped memory for encoder1diff_forward.1']
    #allocation32 [shape = 'u8[512]{0}', space=vmem, size = 0x400, scoped, tag = 'input window, operand 21, single buffered']
    #allocation33 [shape = 'u8[24576]{0}', space=vmem, size = 0x6000, scoped, tag = 'input window, operand 22, single buffered']
    #allocation34 [shape = 's32[1]{0}', space=sflag, size = 0x4, scoped, tag = 'scoped memory for encoder1diff_forward.1']
    #allocation35 [shape = 'u8[512]{0}', space=vmem, size = 0x400, scoped, tag = 'input window, operand 23, single buffered']
    #allocation36 [shape = 'u8[24576]{0}', space=vmem, size = 0x6000, scoped, tag = 'input window, operand 24, single buffered']
    #allocation37 [shape = 's32[1]{0}', space=sflag, size = 0x4, scoped, tag = 'scoped memory for encoder1diff_forward.1']
    #allocation38 [shape = 'u8[512]{0}', space=vmem, size = 0x400, scoped, tag = 'input window, operand 25, single buffered']
    #allocation39 [shape = 'u8[512]{0}', space=vmem, size = 0x400, scoped, tag = 'input window, operand 27, single buffered']
    #allocation40 [shape = 's32[1]{0}', space=sflag, size = 0x4, scoped, tag = 'scoped memory for encoder1diff_forward.1']
    #allocation41 [shape = 'u8[8192]{0}', space=vmem, size = 0x2000, scoped, tag = 'input window, operand 28, single buffered']
    #allocation42 [shape = 'u8[512]{0}', space=vmem, size = 0x400, scoped, tag = 'input window, operand 29, single buffered']
    #allocation43 [shape = 's32[1]{0}', space=sflag, size = 0x4, scoped, tag = 'scoped memory for encoder1diff_forward.1']
    #allocation44 [shape = 'u8[512]{0}', space=vmem, size = 0x400, scoped, tag = 'input window, operand 30, single buffered']
    #allocation45 [shape = 'u8[512]{0}', space=vmem, size = 0x400, scoped, tag = 'input window, operand 31, single buffered']
    #allocation46 [shape = 's32[1]{0}', space=sflag, size = 0x4, scoped, tag = 'scoped memory for encoder1diff_forward.1']
    #allocation47 [shape = 'u8[49152]{0}', space=vmem, size = 0xc000, scoped, tag = 'input window, operand 34, single buffered']
    #allocation48 [shape = 'u8[512]{0}', space=vmem, size = 0x400, scoped, tag = 'input window, operand 35, single buffered']
    #allocation49 [shape = 's32[1]{0}', space=sflag, size = 0x4, scoped, tag = 'scoped memory for encoder1diff_forward.1']
    #allocation50 [shape = 'u8[49152]{0}', space=vmem, size = 0xc000, scoped, tag = 'input window, operand 36, single buffered']
    #allocation51 [shape = 'u8[512]{0}', space=vmem, size = 0x400, scoped, tag = 'input window, operand 37, single buffered']
    #allocation52 [shape = 's32[1]{0}', space=sflag, size = 0x4, scoped, tag = 'scoped memory for encoder1diff_forward.1']
    #allocation53 [shape = 'u8[512]{0}', space=vmem, size = 0x400, scoped, tag = 'input window, operand 38, single buffered']
    #allocation54 [shape = 'u8[512]{0}', space=vmem, size = 0x400, scoped, tag = 'input window, operand 39, single buffered']
    #allocation55 [shape = 's32[1]{0}', space=sflag, size = 0x4, scoped, tag = 'scoped memory for encoder1diff_forward.1']
    #allocation56 [shape = 'u8[512]{0}', space=vmem, size = 0x400, scoped, tag = 'input window, operand 40, single buffered']
    #allocation57 [shape = 'u8[8192]{0}', space=vmem, size = 0x2000, scoped, tag = 'output window, operand 0']
    %99 = vsyncpa [#allocation4], 0
    %100 = vsyncpa [#allocation7], 0
    %101 = vsyncpa [#allocation10], 0
    %102 = vsyncpa [#allocation13], 0
    %103 = vsyncpa [#allocation16], 0
    %104 = vsyncpa [#allocation19], 0
    %105 = vsyncpa [#allocation22], 0
    %106 = vsyncpa [#allocation25], 0
    %107 = vsyncpa [#allocation28], 0
    %108 = vsyncpa [#allocation31], 0
    %109 = vsyncpa [#allocation34], 0
    %110 = vsyncpa [#allocation37], 0
    %111 = vsyncpa [#allocation40], 0
    %112 = vsyncpa [#allocation43], 0
    %113 = vsyncpa [#allocation46], 0
    %114 = vsyncpa [#allocation49], 0
    %115 = vsyncpa [#allocation52], 0
    %116 = vsyncpa [#allocation55], 0
    %117 = vsyncpa [#allocation5], 0
    %s118 = scalar_lea.sflag [#allocation5], 1
    %119 = vsyncpa %s118, 0
    loop: start=0, step=1, limit=4
    $region2: #{encoder1diff_forward.1} parent=1 // loop_pre_header
      _
    $region3: #{encoder1diff_forward.1} parent=1 // loop_header
      %s121 = sphi 0, %s125
      %p122 = scmp.ge.s32.totalorder %s121, 4
      %s131 = sphi 0, %s133
      %s134 = sphi 0, %s131
      %s135 = sphi 0, %s134
      %s151 = sphi 0, %s135
      %s155 = sphi 0, %s155
      %s157 = sphi 0, %s155
      %s158 = sphi 0, %s157
      %s172 = sphi 0, %s158
      %s176 = sphi 0, %s176
      %s178 = sphi 0, %s176
      %s179 = sphi 0, %s178
      %s193 = sphi 0, %s179
      %s197 = sphi 0, %s197
      %s199 = sphi 0, %s197
      %s200 = sphi 0, %s199
      %s214 = sphi 0, %s200
      %s218 = sphi 0, %s218
      %s220 = sphi 0, %s218
      %s221 = sphi 0, %s220
      %s235 = sphi 0, %s221
      %s239 = sphi 0, %s239
      %s241 = sphi 0, %s239
      %s242 = sphi 0, %s241
      %s256 = sphi 0, %s242
      %s260 = sphi 0, %s260
      %s262 = sphi 0, %s260
      %s263 = sphi 0, %s262
      %s277 = sphi 0, %s263
      %s281 = sphi 0, %s281
      %s283 = sphi 0, %s281
      %s284 = sphi 0, %s283
      %s298 = sphi 0, %s284
      %s302 = sphi 0, %s302
      %s304 = sphi 0, %s302
      %s305 = sphi 0, %s304
      %s319 = sphi 0, %s305
      %s323 = sphi 0, %s323
      %s325 = sphi 0, %s323
      %s326 = sphi 0, %s325
      %s340 = sphi 0, %s326
      %s344 = sphi 0, %s344
      %s346 = sphi 0, %s344
      %s347 = sphi 0, %s346
      %s361 = sphi 0, %s347
      %s365 = sphi 0, %s365
      %s367 = sphi 0, %s365
      %s368 = sphi 0, %s367
      %s382 = sphi 0, %s368
      %s386 = sphi 0, %s386
      %s388 = sphi 0, %s386
      %s389 = sphi 0, %s388
      %s403 = sphi 0, %s389
      %s407 = sphi 0, %s407
      %s409 = sphi 0, %s407
      %s410 = sphi 0, %s409
      %s424 = sphi 0, %s410
      %s428 = sphi 0, %s428
      %s430 = sphi 0, %s428
      %s431 = sphi 0, %s430
      %s445 = sphi 0, %s431
      %s449 = sphi 0, %s449
      %s451 = sphi 0, %s449
      %s452 = sphi 0, %s451
      %s466 = sphi 0, %s452
      %s470 = sphi 0, %s470
      %s472 = sphi 0, %s470
      %s473 = sphi 0, %s472
      %s487 = sphi 0, %s473
      %s491 = sphi 0, %s491
      %s493 = sphi 0, %s491
      %s494 = sphi 0, %s493
      %s508 = sphi 0, %s494
      %s512 = sphi 0, %s512
      %s514 = sphi 0, %s512
      %s515 = sphi 0, %s514
      %s529 = sphi 0, %s515
      %s533 = sphi 0, %s533
      %s535 = sphi 0, %s533
      %s536 = sphi 0, %s535
      %s550 = sphi 0, %s536
      %s554 = sphi 0, %s554
      %s556 = sphi 0, %s554
      %s557 = sphi 0, %s556
      %s571 = sphi 0, %s557
      %s575 = sphi 0, %s575
      %s577 = sphi 0, %s575
      %s578 = sphi 0, %s577
      %s592 = sphi 0, %s578
      %s596 = sphi 0, %s596
      %s598 = sphi 0, %s596
      %s599 = sphi 0, %s598
      %s613 = sphi 0, %s599
      %s617 = sphi 0, %s617
      %s619 = sphi 0, %s617
      %s620 = sphi 0, %s619
      %s634 = sphi 0, %s620
      %s638 = sphi 0, %s638
      %s640 = sphi 0, %s638
      %s641 = sphi 0, %s640
      %s655 = sphi 0, %s641
      %s659 = sphi 0, %s659
      %s661 = sphi 0, %s659
      %s662 = sphi 0, %s661
      %s676 = sphi 0, %s662
      %s680 = sphi 0, %s680
      %s682 = sphi 0, %s680
      %s683 = sphi 0, %s682
      %s697 = sphi 0, %s683
      %s701 = sphi 0, %s701
      %s703 = sphi 0, %s701
      %s704 = sphi 0, %s703
      %s718 = sphi 0, %s704
      %s722 = sphi 0, %s722
      %s724 = sphi 0, %s722
      %s725 = sphi 0, %s724
      %s739 = sphi 0, %s725
      %s743 = sphi 0, %s743
      %s745 = sphi 0, %s743
      %s746 = sphi 0, %s745
      %s760 = sphi 0, %s746
      %s764 = sphi 0, %s764
      %s766 = sphi 0, %s764
      %s767 = sphi 0, %s766
      %s781 = sphi 0, %s767
      %s785 = sphi 0, %s785
      %s787 = sphi 0, %s785
      %s788 = sphi 0, %s787
      %s802 = sphi 0, %s788
      %s806 = sphi 0, %s806
      %s808 = sphi 0, %s806
      %s809 = sphi 0, %s808
      %s823 = sphi 0, %s809
      %s827 = sphi 0, %s827
      %s829 = sphi 0, %s827
      %s830 = sphi 0, %s829
      %s844 = sphi 0, %s830
      %s848 = sphi 0, %s848
      %s850 = sphi 0, %s848
      %s851 = sphi 0, %s850
      %s865 = sphi 0, %s851
      %s869 = sphi 0, %s869
      %s871 = sphi 0, %s869
      %s872 = sphi 0, %s871
      %s886 = sphi 0, %s872
      %s890 = sphi 0, %s890
      %s892 = sphi 0, %s890
      %s893 = sphi 0, %s892
      %s907 = sphi 0, %s893
      %s911 = sphi 0, %s911
      %s913 = sphi 0, %s911
      %s914 = sphi 0, %s913
      %s928 = sphi 0, %s914
      %s932 = sphi 0, %s932
      %s934 = sphi 0, %s932
      %s935 = sphi 0, %s934
      %s949 = sphi 0, %s935
      %s953 = sphi 0, %s953
      %s955 = sphi 0, %s953
      %s956 = sphi 0, %s955
      %s970 = sphi 0, %s956
      %s974 = sphi 0, %s974
      %s976 = sphi 0, %s974
      %s977 = sphi 0, %s976
      %s991 = sphi 0, %s977
      %s995 = sphi 0, %s995
      %s997 = sphi 0, %s995
      %s998 = sphi 0, %s997
      %s1012 = sphi 0, %s998
      %s1016 = sphi 0, %s1016
      %s1018 = sphi 0, %s1016
      %s1019 = sphi 0, %s1018
      %s1033 = sphi 0, %s1019
      %s1037 = sphi 0, %s1037
      %s1039 = sphi 0, %s1037
      %s1040 = sphi 0, %s1039
      %s1054 = sphi 0, %s1040
      %s1058 = sphi 0, %s1058
      %s1060 = sphi 0, %s1058
      %s1061 = sphi 0, %s1060
      %s1075 = sphi 0, %s1061
      %s1081 = sphi 0, %s1083
      %s1084 = sphi 0, %s1081
      %s1085 = sphi 0, %s1084
      %s1101 = sphi 0, %s1085
      %s1107 = sphi 0, %s1109
      %s1110 = sphi 0, %s1107
      %s1111 = sphi 0, %s1110
      %s1127 = sphi 0, %s1111
    $region4: #{encoder1diff_forward.1} parent=1 // loop_header_branch
      %124 = sbr.rel (%p122) target = $region8
    $region5: #{encoder1diff_forward.1} parent=1 // loop_body
      %s126 = ssub.s32 %s121, 1
      %s127 = ssub.s32 %s121, 2
      %s128 = sadd.s32 %s121, 1
      %s129 = ssub.s32 %s121, %s128
      %p130 = scmp.eq.s32.totalorder %s129, 0
      %s132 = sadd.s32 %s131, 1
      %s133 = scalar_select %p130, %s131, %s132
      %p136 = pneg %p130
      %p137 = scmp.eq.s32.totalorder %s121, 1
      %p138 = por %p136, %p137
      %p139 = scmp.ne.s32.totalorder %s131, %s134
      %p140 = scmp.eq.s32.totalorder %s121, 0
      %p141 = por %p139, %p140
      %p142 = scmp.ne.s32.totalorder %s131, %s134
      %p143 = scmp.eq.s32.totalorder %s126, 1
      %p144 = por %p142, %p143
      %p145 = scmp.ne.s32.totalorder %s134, %s135
      %p146 = scmp.eq.s32.totalorder %s126, 0
      %p147 = por %p145, %p146
      %p148 = scmp.ne.s32.totalorder %s134, %s135
      %p149 = scmp.eq.s32.totalorder %s127, 1
      %p150 = por %p148, %p149
      %p152 = scmp.ne.s32.totalorder %s135, %s151
      %p153 = scmp.eq.s32.totalorder %s127, 0
      %p154 = por %p152, %p153
      %s156 = sadd.s32 %s155, 1
      %p159 = scmp.eq.s32.totalorder %s121, 1
      %p160 = scmp.ne.s32.totalorder %s155, %s157
      %p161 = scmp.eq.s32.totalorder %s121, 0
      %p162 = por %p160, %p161
      %p163 = scmp.ne.s32.totalorder %s155, %s157
      %p164 = scmp.eq.s32.totalorder %s126, 1
      %p165 = por %p163, %p164
      %p166 = scmp.ne.s32.totalorder %s157, %s158
      %p167 = scmp.eq.s32.totalorder %s126, 0
      %p168 = por %p166, %p167
      %p169 = scmp.ne.s32.totalorder %s157, %s158
      %p170 = scmp.eq.s32.totalorder %s127, 1
      %p171 = por %p169, %p170
      %p173 = scmp.ne.s32.totalorder %s158, %s172
      %p174 = scmp.eq.s32.totalorder %s127, 0
      %p175 = por %p173, %p174
      %s177 = sadd.s32 %s176, 1
      %p180 = scmp.eq.s32.totalorder %s121, 1
      %p181 = scmp.ne.s32.totalorder %s176, %s178
      %p182 = scmp.eq.s32.totalorder %s121, 0
      %p183 = por %p181, %p182
      %p184 = scmp.ne.s32.totalorder %s176, %s178
      %p185 = scmp.eq.s32.totalorder %s126, 1
      %p186 = por %p184, %p185
      %p187 = scmp.ne.s32.totalorder %s178, %s179
      %p188 = scmp.eq.s32.totalorder %s126, 0
      %p189 = por %p187, %p188
      %p190 = scmp.ne.s32.totalorder %s178, %s179
      %p191 = scmp.eq.s32.totalorder %s127, 1
      %p192 = por %p190, %p191
      %p194 = scmp.ne.s32.totalorder %s179, %s193
      %p195 = scmp.eq.s32.totalorder %s127, 0
      %p196 = por %p194, %p195
      %s198 = sadd.s32 %s197, 1
      %p201 = scmp.eq.s32.totalorder %s121, 1
      %p202 = scmp.ne.s32.totalorder %s197, %s199
      %p203 = scmp.eq.s32.totalorder %s121, 0
      %p204 = por %p202, %p203
      %p205 = scmp.ne.s32.totalorder %s197, %s199
      %p206 = scmp.eq.s32.totalorder %s126, 1
      %p207 = por %p205, %p206
      %p208 = scmp.ne.s32.totalorder %s199, %s200
      %p209 = scmp.eq.s32.totalorder %s126, 0
      %p210 = por %p208, %p209
      %p211 = scmp.ne.s32.totalorder %s199, %s200
      %p212 = scmp.eq.s32.totalorder %s127, 1
      %p213 = por %p211, %p212
      %p215 = scmp.ne.s32.totalorder %s200, %s214
      %p216 = scmp.eq.s32.totalorder %s127, 0
      %p217 = por %p215, %p216
      %s219 = sadd.s32 %s218, 1
      %p222 = scmp.eq.s32.totalorder %s121, 1
      %p223 = scmp.ne.s32.totalorder %s218, %s220
      %p224 = scmp.eq.s32.totalorder %s121, 0
      %p225 = por %p223, %p224
      %p226 = scmp.ne.s32.totalorder %s218, %s220
      %p227 = scmp.eq.s32.totalorder %s126, 1
      %p228 = por %p226, %p227
      %p229 = scmp.ne.s32.totalorder %s220, %s221
      %p230 = scmp.eq.s32.totalorder %s126, 0
      %p231 = por %p229, %p230
      %p232 = scmp.ne.s32.totalorder %s220, %s221
      %p233 = scmp.eq.s32.totalorder %s127, 1
      %p234 = por %p232, %p233
      %p236 = scmp.ne.s32.totalorder %s221, %s235
      %p237 = scmp.eq.s32.totalorder %s127, 0
      %p238 = por %p236, %p237
      %s240 = sadd.s32 %s239, 1
      %p243 = scmp.eq.s32.totalorder %s121, 1
      %p244 = scmp.ne.s32.totalorder %s239, %s241
      %p245 = scmp.eq.s32.totalorder %s121, 0
      %p246 = por %p244, %p245
      %p247 = scmp.ne.s32.totalorder %s239, %s241
      %p248 = scmp.eq.s32.totalorder %s126, 1
      %p249 = por %p247, %p248
      %p250 = scmp.ne.s32.totalorder %s241, %s242
      %p251 = scmp.eq.s32.totalorder %s126, 0
      %p252 = por %p250, %p251
      %p253 = scmp.ne.s32.totalorder %s241, %s242
      %p254 = scmp.eq.s32.totalorder %s127, 1
      %p255 = por %p253, %p254
      %p257 = scmp.ne.s32.totalorder %s242, %s256
      %p258 = scmp.eq.s32.totalorder %s127, 0
      %p259 = por %p257, %p258
      %s261 = sadd.s32 %s260, 1
      %p264 = scmp.eq.s32.totalorder %s121, 1
      %p265 = scmp.ne.s32.totalorder %s260, %s262
      %p266 = scmp.eq.s32.totalorder %s121, 0
      %p267 = por %p265, %p266
      %p268 = scmp.ne.s32.totalorder %s260, %s262
      %p269 = scmp.eq.s32.totalorder %s126, 1
      %p270 = por %p268, %p269
      %p271 = scmp.ne.s32.totalorder %s262, %s263
      %p272 = scmp.eq.s32.totalorder %s126, 0
      %p273 = por %p271, %p272
      %p274 = scmp.ne.s32.totalorder %s262, %s263
      %p275 = scmp.eq.s32.totalorder %s127, 1
      %p276 = por %p274, %p275
      %p278 = scmp.ne.s32.totalorder %s263, %s277
      %p279 = scmp.eq.s32.totalorder %s127, 0
      %p280 = por %p278, %p279
      %s282 = sadd.s32 %s281, 1
      %p285 = scmp.eq.s32.totalorder %s121, 1
      %p286 = scmp.ne.s32.totalorder %s281, %s283
      %p287 = scmp.eq.s32.totalorder %s121, 0
      %p288 = por %p286, %p287
      %p289 = scmp.ne.s32.totalorder %s281, %s283
      %p290 = scmp.eq.s32.totalorder %s126, 1
      %p291 = por %p289, %p290
      %p292 = scmp.ne.s32.totalorder %s283, %s284
      %p293 = scmp.eq.s32.totalorder %s126, 0
      %p294 = por %p292, %p293
      %p295 = scmp.ne.s32.totalorder %s283, %s284
      %p296 = scmp.eq.s32.totalorder %s127, 1
      %p297 = por %p295, %p296
      %p299 = scmp.ne.s32.totalorder %s284, %s298
      %p300 = scmp.eq.s32.totalorder %s127, 0
      %p301 = por %p299, %p300
      %s303 = sadd.s32 %s302, 1
      %p306 = scmp.eq.s32.totalorder %s121, 1
      %p307 = scmp.ne.s32.totalorder %s302, %s304
      %p308 = scmp.eq.s32.totalorder %s121, 0
      %p309 = por %p307, %p308
      %p310 = scmp.ne.s32.totalorder %s302, %s304
      %p311 = scmp.eq.s32.totalorder %s126, 1
      %p312 = por %p310, %p311
      %p313 = scmp.ne.s32.totalorder %s304, %s305
      %p314 = scmp.eq.s32.totalorder %s126, 0
      %p315 = por %p313, %p314
      %p316 = scmp.ne.s32.totalorder %s304, %s305
      %p317 = scmp.eq.s32.totalorder %s127, 1
      %p318 = por %p316, %p317
      %p320 = scmp.ne.s32.totalorder %s305, %s319
      %p321 = scmp.eq.s32.totalorder %s127, 0
      %p322 = por %p320, %p321
      %s324 = sadd.s32 %s323, 1
      %p327 = scmp.eq.s32.totalorder %s121, 1
      %p328 = scmp.ne.s32.totalorder %s323, %s325
      %p329 = scmp.eq.s32.totalorder %s121, 0
      %p330 = por %p328, %p329
      %p331 = scmp.ne.s32.totalorder %s323, %s325
      %p332 = scmp.eq.s32.totalorder %s126, 1
      %p333 = por %p331, %p332
      %p334 = scmp.ne.s32.totalorder %s325, %s326
      %p335 = scmp.eq.s32.totalorder %s126, 0
      %p336 = por %p334, %p335
      %p337 = scmp.ne.s32.totalorder %s325, %s326
      %p338 = scmp.eq.s32.totalorder %s127, 1
      %p339 = por %p337, %p338
      %p341 = scmp.ne.s32.totalorder %s326, %s340
      %p342 = scmp.eq.s32.totalorder %s127, 0
      %p343 = por %p341, %p342
      %s345 = sadd.s32 %s344, 1
      %p348 = scmp.eq.s32.totalorder %s121, 1
      %p349 = scmp.ne.s32.totalorder %s344, %s346
      %p350 = scmp.eq.s32.totalorder %s121, 0
      %p351 = por %p349, %p350
      %p352 = scmp.ne.s32.totalorder %s344, %s346
      %p353 = scmp.eq.s32.totalorder %s126, 1
      %p354 = por %p352, %p353
      %p355 = scmp.ne.s32.totalorder %s346, %s347
      %p356 = scmp.eq.s32.totalorder %s126, 0
      %p357 = por %p355, %p356
      %p358 = scmp.ne.s32.totalorder %s346, %s347
      %p359 = scmp.eq.s32.totalorder %s127, 1
      %p360 = por %p358, %p359
      %p362 = scmp.ne.s32.totalorder %s347, %s361
      %p363 = scmp.eq.s32.totalorder %s127, 0
      %p364 = por %p362, %p363
      %s366 = sadd.s32 %s365, 1
      %p369 = scmp.eq.s32.totalorder %s121, 1
      %p370 = scmp.ne.s32.totalorder %s365, %s367
      %p371 = scmp.eq.s32.totalorder %s121, 0
      %p372 = por %p370, %p371
      %p373 = scmp.ne.s32.totalorder %s365, %s367
      %p374 = scmp.eq.s32.totalorder %s126, 1
      %p375 = por %p373, %p374
      %p376 = scmp.ne.s32.totalorder %s367, %s368
      %p377 = scmp.eq.s32.totalorder %s126, 0
      %p378 = por %p376, %p377
      %p379 = scmp.ne.s32.totalorder %s367, %s368
      %p380 = scmp.eq.s32.totalorder %s127, 1
      %p381 = por %p379, %p380
      %p383 = scmp.ne.s32.totalorder %s368, %s382
      %p384 = scmp.eq.s32.totalorder %s127, 0
      %p385 = por %p383, %p384
      %s387 = sadd.s32 %s386, 1
      %p390 = scmp.eq.s32.totalorder %s121, 1
      %p391 = scmp.ne.s32.totalorder %s386, %s388
      %p392 = scmp.eq.s32.totalorder %s121, 0
      %p393 = por %p391, %p392
      %p394 = scmp.ne.s32.totalorder %s386, %s388
      %p395 = scmp.eq.s32.totalorder %s126, 1
      %p396 = por %p394, %p395
      %p397 = scmp.ne.s32.totalorder %s388, %s389
      %p398 = scmp.eq.s32.totalorder %s126, 0
      %p399 = por %p397, %p398
      %p400 = scmp.ne.s32.totalorder %s388, %s389
      %p401 = scmp.eq.s32.totalorder %s127, 1
      %p402 = por %p400, %p401
      %p404 = scmp.ne.s32.totalorder %s389, %s403
      %p405 = scmp.eq.s32.totalorder %s127, 0
      %p406 = por %p404, %p405
      %s408 = sadd.s32 %s407, 1
      %p411 = scmp.eq.s32.totalorder %s121, 1
      %p412 = scmp.ne.s32.totalorder %s407, %s409
      %p413 = scmp.eq.s32.totalorder %s121, 0
      %p414 = por %p412, %p413
      %p415 = scmp.ne.s32.totalorder %s407, %s409
      %p416 = scmp.eq.s32.totalorder %s126, 1
      %p417 = por %p415, %p416
      %p418 = scmp.ne.s32.totalorder %s409, %s410
      %p419 = scmp.eq.s32.totalorder %s126, 0
      %p420 = por %p418, %p419
      %p421 = scmp.ne.s32.totalorder %s409, %s410
      %p422 = scmp.eq.s32.totalorder %s127, 1
      %p423 = por %p421, %p422
      %p425 = scmp.ne.s32.totalorder %s410, %s424
      %p426 = scmp.eq.s32.totalorder %s127, 0
      %p427 = por %p425, %p426
      %s429 = sadd.s32 %s428, 1
      %p432 = scmp.eq.s32.totalorder %s121, 1
      %p433 = scmp.ne.s32.totalorder %s428, %s430
      %p434 = scmp.eq.s32.totalorder %s121, 0
      %p435 = por %p433, %p434
      %p436 = scmp.ne.s32.totalorder %s428, %s430
      %p437 = scmp.eq.s32.totalorder %s126, 1
      %p438 = por %p436, %p437
      %p439 = scmp.ne.s32.totalorder %s430, %s431
      %p440 = scmp.eq.s32.totalorder %s126, 0
      %p441 = por %p439, %p440
      %p442 = scmp.ne.s32.totalorder %s430, %s431
      %p443 = scmp.eq.s32.totalorder %s127, 1
      %p444 = por %p442, %p443
      %p446 = scmp.ne.s32.totalorder %s431, %s445
      %p447 = scmp.eq.s32.totalorder %s127, 0
      %p448 = por %p446, %p447
      %s450 = sadd.s32 %s449, 1
      %p453 = scmp.eq.s32.totalorder %s121, 1
      %p454 = scmp.ne.s32.totalorder %s449, %s451
      %p455 = scmp.eq.s32.totalorder %s121, 0
      %p456 = por %p454, %p455
      %p457 = scmp.ne.s32.totalorder %s449, %s451
      %p458 = scmp.eq.s32.totalorder %s126, 1
      %p459 = por %p457, %p458
      %p460 = scmp.ne.s32.totalorder %s451, %s452
      %p461 = scmp.eq.s32.totalorder %s126, 0
      %p462 = por %p460, %p461
      %p463 = scmp.ne.s32.totalorder %s451, %s452
      %p464 = scmp.eq.s32.totalorder %s127, 1
      %p465 = por %p463, %p464
      %p467 = scmp.ne.s32.totalorder %s452, %s466
      %p468 = scmp.eq.s32.totalorder %s127, 0
      %p469 = por %p467, %p468
      %s471 = sadd.s32 %s470, 1
      %p474 = scmp.eq.s32.totalorder %s121, 1
      %p475 = scmp.ne.s32.totalorder %s470, %s472
      %p476 = scmp.eq.s32.totalorder %s121, 0
      %p477 = por %p475, %p476
      %p478 = scmp.ne.s32.totalorder %s470, %s472
      %p479 = scmp.eq.s32.totalorder %s126, 1
      %p480 = por %p478, %p479
      %p481 = scmp.ne.s32.totalorder %s472, %s473
      %p482 = scmp.eq.s32.totalorder %s126, 0
      %p483 = por %p481, %p482
      %p484 = scmp.ne.s32.totalorder %s472, %s473
      %p485 = scmp.eq.s32.totalorder %s127, 1
      %p486 = por %p484, %p485
      %p488 = scmp.ne.s32.totalorder %s473, %s487
      %p489 = scmp.eq.s32.totalorder %s127, 0
      %p490 = por %p488, %p489
      %s492 = sadd.s32 %s491, 1
      %p495 = scmp.eq.s32.totalorder %s121, 1
      %p496 = scmp.ne.s32.totalorder %s491, %s493
      %p497 = scmp.eq.s32.totalorder %s121, 0
      %p498 = por %p496, %p497
      %p499 = scmp.ne.s32.totalorder %s491, %s493
      %p500 = scmp.eq.s32.totalorder %s126, 1
      %p501 = por %p499, %p500
      %p502 = scmp.ne.s32.totalorder %s493, %s494
      %p503 = scmp.eq.s32.totalorder %s126, 0
      %p504 = por %p502, %p503
      %p505 = scmp.ne.s32.totalorder %s493, %s494
      %p506 = scmp.eq.s32.totalorder %s127, 1
      %p507 = por %p505, %p506
      %p509 = scmp.ne.s32.totalorder %s494, %s508
      %p510 = scmp.eq.s32.totalorder %s127, 0
      %p511 = por %p509, %p510
      %s513 = sadd.s32 %s512, 1
      %p516 = scmp.eq.s32.totalorder %s121, 1
      %p517 = scmp.ne.s32.totalorder %s512, %s514
      %p518 = scmp.eq.s32.totalorder %s121, 0
      %p519 = por %p517, %p518
      %p520 = scmp.ne.s32.totalorder %s512, %s514
      %p521 = scmp.eq.s32.totalorder %s126, 1
      %p522 = por %p520, %p521
      %p523 = scmp.ne.s32.totalorder %s514, %s515
      %p524 = scmp.eq.s32.totalorder %s126, 0
      %p525 = por %p523, %p524
      %p526 = scmp.ne.s32.totalorder %s514, %s515
      %p527 = scmp.eq.s32.totalorder %s127, 1
      %p528 = por %p526, %p527
      %p530 = scmp.ne.s32.totalorder %s515, %s529
      %p531 = scmp.eq.s32.totalorder %s127, 0
      %p532 = por %p530, %p531
      %s534 = sadd.s32 %s533, 1
      %p537 = scmp.eq.s32.totalorder %s121, 1
      %p538 = scmp.ne.s32.totalorder %s533, %s535
      %p539 = scmp.eq.s32.totalorder %s121, 0
      %p540 = por %p538, %p539
      %p541 = scmp.ne.s32.totalorder %s533, %s535
      %p542 = scmp.eq.s32.totalorder %s126, 1
      %p543 = por %p541, %p542
      %p544 = scmp.ne.s32.totalorder %s535, %s536
      %p545 = scmp.eq.s32.totalorder %s126, 0
      %p546 = por %p544, %p545
      %p547 = scmp.ne.s32.totalorder %s535, %s536
      %p548 = scmp.eq.s32.totalorder %s127, 1
      %p549 = por %p547, %p548
      %p551 = scmp.ne.s32.totalorder %s536, %s550
      %p552 = scmp.eq.s32.totalorder %s127, 0
      %p553 = por %p551, %p552
      %s555 = sadd.s32 %s554, 1
      %p558 = scmp.eq.s32.totalorder %s121, 1
      %p559 = scmp.ne.s32.totalorder %s554, %s556
      %p560 = scmp.eq.s32.totalorder %s121, 0
      %p561 = por %p559, %p560
      %p562 = scmp.ne.s32.totalorder %s554, %s556
      %p563 = scmp.eq.s32.totalorder %s126, 1
      %p564 = por %p562, %p563
      %p565 = scmp.ne.s32.totalorder %s556, %s557
      %p566 = scmp.eq.s32.totalorder %s126, 0
      %p567 = por %p565, %p566
      %p568 = scmp.ne.s32.totalorder %s556, %s557
      %p569 = scmp.eq.s32.totalorder %s127, 1
      %p570 = por %p568, %p569
      %p572 = scmp.ne.s32.totalorder %s557, %s571
      %p573 = scmp.eq.s32.totalorder %s127, 0
      %p574 = por %p572, %p573
      %s576 = sadd.s32 %s575, 1
      %p579 = scmp.eq.s32.totalorder %s121, 1
      %p580 = scmp.ne.s32.totalorder %s575, %s577
      %p581 = scmp.eq.s32.totalorder %s121, 0
      %p582 = por %p580, %p581
      %p583 = scmp.ne.s32.totalorder %s575, %s577
      %p584 = scmp.eq.s32.totalorder %s126, 1
      %p585 = por %p583, %p584
      %p586 = scmp.ne.s32.totalorder %s577, %s578
      %p587 = scmp.eq.s32.totalorder %s126, 0
      %p588 = por %p586, %p587
      %p589 = scmp.ne.s32.totalorder %s577, %s578
      %p590 = scmp.eq.s32.totalorder %s127, 1
      %p591 = por %p589, %p590
      %p593 = scmp.ne.s32.totalorder %s578, %s592
      %p594 = scmp.eq.s32.totalorder %s127, 0
      %p595 = por %p593, %p594
      %s597 = sadd.s32 %s596, 1
      %p600 = scmp.eq.s32.totalorder %s121, 1
      %p601 = scmp.ne.s32.totalorder %s596, %s598
      %p602 = scmp.eq.s32.totalorder %s121, 0
      %p603 = por %p601, %p602
      %p604 = scmp.ne.s32.totalorder %s596, %s598
      %p605 = scmp.eq.s32.totalorder %s126, 1
      %p606 = por %p604, %p605
      %p607 = scmp.ne.s32.totalorder %s598, %s599
      %p608 = scmp.eq.s32.totalorder %s126, 0
      %p609 = por %p607, %p608
      %p610 = scmp.ne.s32.totalorder %s598, %s599
      %p611 = scmp.eq.s32.totalorder %s127, 1
      %p612 = por %p610, %p611
      %p614 = scmp.ne.s32.totalorder %s599, %s613
      %p615 = scmp.eq.s32.totalorder %s127, 0
      %p616 = por %p614, %p615
      %s618 = sadd.s32 %s617, 1
      %p621 = scmp.eq.s32.totalorder %s121, 1
      %p622 = scmp.ne.s32.totalorder %s617, %s619
      %p623 = scmp.eq.s32.totalorder %s121, 0
      %p624 = por %p622, %p623
      %p625 = scmp.ne.s32.totalorder %s617, %s619
      %p626 = scmp.eq.s32.totalorder %s126, 1
      %p627 = por %p625, %p626
      %p628 = scmp.ne.s32.totalorder %s619, %s620
      %p629 = scmp.eq.s32.totalorder %s126, 0
      %p630 = por %p628, %p629
      %p631 = scmp.ne.s32.totalorder %s619, %s620
      %p632 = scmp.eq.s32.totalorder %s127, 1
      %p633 = por %p631, %p632
      %p635 = scmp.ne.s32.totalorder %s620, %s634
      %p636 = scmp.eq.s32.totalorder %s127, 0
      %p637 = por %p635, %p636
      %s639 = sadd.s32 %s638, 1
      %p642 = scmp.eq.s32.totalorder %s121, 1
      %p643 = scmp.ne.s32.totalorder %s638, %s640
      %p644 = scmp.eq.s32.totalorder %s121, 0
      %p645 = por %p643, %p644
      %p646 = scmp.ne.s32.totalorder %s638, %s640
      %p647 = scmp.eq.s32.totalorder %s126, 1
      %p648 = por %p646, %p647
      %p649 = scmp.ne.s32.totalorder %s640, %s641
      %p650 = scmp.eq.s32.totalorder %s126, 0
      %p651 = por %p649, %p650
      %p652 = scmp.ne.s32.totalorder %s640, %s641
      %p653 = scmp.eq.s32.totalorder %s127, 1
      %p654 = por %p652, %p653
      %p656 = scmp.ne.s32.totalorder %s641, %s655
      %p657 = scmp.eq.s32.totalorder %s127, 0
      %p658 = por %p656, %p657
      %s660 = sadd.s32 %s659, 1
      %p663 = scmp.eq.s32.totalorder %s121, 1
      %p664 = scmp.ne.s32.totalorder %s659, %s661
      %p665 = scmp.eq.s32.totalorder %s121, 0
      %p666 = por %p664, %p665
      %p667 = scmp.ne.s32.totalorder %s659, %s661
      %p668 = scmp.eq.s32.totalorder %s126, 1
      %p669 = por %p667, %p668
      %p670 = scmp.ne.s32.totalorder %s661, %s662
      %p671 = scmp.eq.s32.totalorder %s126, 0
      %p672 = por %p670, %p671
      %p673 = scmp.ne.s32.totalorder %s661, %s662
      %p674 = scmp.eq.s32.totalorder %s127, 1
      %p675 = por %p673, %p674
      %p677 = scmp.ne.s32.totalorder %s662, %s676
      %p678 = scmp.eq.s32.totalorder %s127, 0
      %p679 = por %p677, %p678
      %s681 = sadd.s32 %s680, 1
      %p684 = scmp.eq.s32.totalorder %s121, 1
      %p685 = scmp.ne.s32.totalorder %s680, %s682
      %p686 = scmp.eq.s32.totalorder %s121, 0
      %p687 = por %p685, %p686
      %p688 = scmp.ne.s32.totalorder %s680, %s682
      %p689 = scmp.eq.s32.totalorder %s126, 1
      %p690 = por %p688, %p689
      %p691 = scmp.ne.s32.totalorder %s682, %s683
      %p692 = scmp.eq.s32.totalorder %s126, 0
      %p693 = por %p691, %p692
      %p694 = scmp.ne.s32.totalorder %s682, %s683
      %p695 = scmp.eq.s32.totalorder %s127, 1
      %p696 = por %p694, %p695
      %p698 = scmp.ne.s32.totalorder %s683, %s697
      %p699 = scmp.eq.s32.totalorder %s127, 0
      %p700 = por %p698, %p699
      %s702 = sadd.s32 %s701, 1
      %p705 = scmp.eq.s32.totalorder %s121, 1
      %p706 = scmp.ne.s32.totalorder %s701, %s703
      %p707 = scmp.eq.s32.totalorder %s121, 0
      %p708 = por %p706, %p707
      %p709 = scmp.ne.s32.totalorder %s701, %s703
      %p710 = scmp.eq.s32.totalorder %s126, 1
      %p711 = por %p709, %p710
      %p712 = scmp.ne.s32.totalorder %s703, %s704
      %p713 = scmp.eq.s32.totalorder %s126, 0
      %p714 = por %p712, %p713
      %p715 = scmp.ne.s32.totalorder %s703, %s704
      %p716 = scmp.eq.s32.totalorder %s127, 1
      %p717 = por %p715, %p716
      %p719 = scmp.ne.s32.totalorder %s704, %s718
      %p720 = scmp.eq.s32.totalorder %s127, 0
      %p721 = por %p719, %p720
      %s723 = sadd.s32 %s722, 1
      %p726 = scmp.eq.s32.totalorder %s121, 1
      %p727 = scmp.ne.s32.totalorder %s722, %s724
      %p728 = scmp.eq.s32.totalorder %s121, 0
      %p729 = por %p727, %p728
      %p730 = scmp.ne.s32.totalorder %s722, %s724
      %p731 = scmp.eq.s32.totalorder %s126, 1
      %p732 = por %p730, %p731
      %p733 = scmp.ne.s32.totalorder %s724, %s725
      %p734 = scmp.eq.s32.totalorder %s126, 0
      %p735 = por %p733, %p734
      %p736 = scmp.ne.s32.totalorder %s724, %s725
      %p737 = scmp.eq.s32.totalorder %s127, 1
      %p738 = por %p736, %p737
      %p740 = scmp.ne.s32.totalorder %s725, %s739
      %p741 = scmp.eq.s32.totalorder %s127, 0
      %p742 = por %p740, %p741
      %s744 = sadd.s32 %s743, 1
      %p747 = scmp.eq.s32.totalorder %s121, 1
      %p748 = scmp.ne.s32.totalorder %s743, %s745
      %p749 = scmp.eq.s32.totalorder %s121, 0
      %p750 = por %p748, %p749
      %p751 = scmp.ne.s32.totalorder %s743, %s745
      %p752 = scmp.eq.s32.totalorder %s126, 1
      %p753 = por %p751, %p752
      %p754 = scmp.ne.s32.totalorder %s745, %s746
      %p755 = scmp.eq.s32.totalorder %s126, 0
      %p756 = por %p754, %p755
      %p757 = scmp.ne.s32.totalorder %s745, %s746
      %p758 = scmp.eq.s32.totalorder %s127, 1
      %p759 = por %p757, %p758
      %p761 = scmp.ne.s32.totalorder %s746, %s760
      %p762 = scmp.eq.s32.totalorder %s127, 0
      %p763 = por %p761, %p762
      %s765 = sadd.s32 %s764, 1
      %p768 = scmp.eq.s32.totalorder %s121, 1
      %p769 = scmp.ne.s32.totalorder %s764, %s766
      %p770 = scmp.eq.s32.totalorder %s121, 0
      %p771 = por %p769, %p770
      %p772 = scmp.ne.s32.totalorder %s764, %s766
      %p773 = scmp.eq.s32.totalorder %s126, 1
      %p774 = por %p772, %p773
      %p775 = scmp.ne.s32.totalorder %s766, %s767
      %p776 = scmp.eq.s32.totalorder %s126, 0
      %p777 = por %p775, %p776
      %p778 = scmp.ne.s32.totalorder %s766, %s767
      %p779 = scmp.eq.s32.totalorder %s127, 1
      %p780 = por %p778, %p779
      %p782 = scmp.ne.s32.totalorder %s767, %s781
      %p783 = scmp.eq.s32.totalorder %s127, 0
      %p784 = por %p782, %p783
      %s786 = sadd.s32 %s785, 1
      %p789 = scmp.eq.s32.totalorder %s121, 1
      %p790 = scmp.ne.s32.totalorder %s785, %s787
      %p791 = scmp.eq.s32.totalorder %s121, 0
      %p792 = por %p790, %p791
      %p793 = scmp.ne.s32.totalorder %s785, %s787
      %p794 = scmp.eq.s32.totalorder %s126, 1
      %p795 = por %p793, %p794
      %p796 = scmp.ne.s32.totalorder %s787, %s788
      %p797 = scmp.eq.s32.totalorder %s126, 0
      %p798 = por %p796, %p797
      %p799 = scmp.ne.s32.totalorder %s787, %s788
      %p800 = scmp.eq.s32.totalorder %s127, 1
      %p801 = por %p799, %p800
      %p803 = scmp.ne.s32.totalorder %s788, %s802
      %p804 = scmp.eq.s32.totalorder %s127, 0
      %p805 = por %p803, %p804
      %s807 = sadd.s32 %s806, 1
      %p810 = scmp.eq.s32.totalorder %s121, 1
      %p811 = scmp.ne.s32.totalorder %s806, %s808
      %p812 = scmp.eq.s32.totalorder %s121, 0
      %p813 = por %p811, %p812
      %p814 = scmp.ne.s32.totalorder %s806, %s808
      %p815 = scmp.eq.s32.totalorder %s126, 1
      %p816 = por %p814, %p815
      %p817 = scmp.ne.s32.totalorder %s808, %s809
      %p818 = scmp.eq.s32.totalorder %s126, 0
      %p819 = por %p817, %p818
      %p820 = scmp.ne.s32.totalorder %s808, %s809
      %p821 = scmp.eq.s32.totalorder %s127, 1
      %p822 = por %p820, %p821
      %p824 = scmp.ne.s32.totalorder %s809, %s823
      %p825 = scmp.eq.s32.totalorder %s127, 0
      %p826 = por %p824, %p825
      %s828 = sadd.s32 %s827, 1
      %p831 = scmp.eq.s32.totalorder %s121, 1
      %p832 = scmp.ne.s32.totalorder %s827, %s829
      %p833 = scmp.eq.s32.totalorder %s121, 0
      %p834 = por %p832, %p833
      %p835 = scmp.ne.s32.totalorder %s827, %s829
      %p836 = scmp.eq.s32.totalorder %s126, 1
      %p837 = por %p835, %p836
      %p838 = scmp.ne.s32.totalorder %s829, %s830
      %p839 = scmp.eq.s32.totalorder %s126, 0
      %p840 = por %p838, %p839
      %p841 = scmp.ne.s32.totalorder %s829, %s830
      %p842 = scmp.eq.s32.totalorder %s127, 1
      %p843 = por %p841, %p842
      %p845 = scmp.ne.s32.totalorder %s830, %s844
      %p846 = scmp.eq.s32.totalorder %s127, 0
      %p847 = por %p845, %p846
      %s849 = sadd.s32 %s848, 1
      %p852 = scmp.eq.s32.totalorder %s121, 1
      %p853 = scmp.ne.s32.totalorder %s848, %s850
      %p854 = scmp.eq.s32.totalorder %s121, 0
      %p855 = por %p853, %p854
      %p856 = scmp.ne.s32.totalorder %s848, %s850
      %p857 = scmp.eq.s32.totalorder %s126, 1
      %p858 = por %p856, %p857
      %p859 = scmp.ne.s32.totalorder %s850, %s851
      %p860 = scmp.eq.s32.totalorder %s126, 0
      %p861 = por %p859, %p860
      %p862 = scmp.ne.s32.totalorder %s850, %s851
      %p863 = scmp.eq.s32.totalorder %s127, 1
      %p864 = por %p862, %p863
      %p866 = scmp.ne.s32.totalorder %s851, %s865
      %p867 = scmp.eq.s32.totalorder %s127, 0
      %p868 = por %p866, %p867
      %s870 = sadd.s32 %s869, 1
      %p873 = scmp.eq.s32.totalorder %s121, 1
      %p874 = scmp.ne.s32.totalorder %s869, %s871
      %p875 = scmp.eq.s32.totalorder %s121, 0
      %p876 = por %p874, %p875
      %p877 = scmp.ne.s32.totalorder %s869, %s871
      %p878 = scmp.eq.s32.totalorder %s126, 1
      %p879 = por %p877, %p878
      %p880 = scmp.ne.s32.totalorder %s871, %s872
      %p881 = scmp.eq.s32.totalorder %s126, 0
      %p882 = por %p880, %p881
      %p883 = scmp.ne.s32.totalorder %s871, %s872
      %p884 = scmp.eq.s32.totalorder %s127, 1
      %p885 = por %p883, %p884
      %p887 = scmp.ne.s32.totalorder %s872, %s886
      %p888 = scmp.eq.s32.totalorder %s127, 0
      %p889 = por %p887, %p888
      %s891 = sadd.s32 %s890, 1
      %p894 = scmp.eq.s32.totalorder %s121, 1
      %p895 = scmp.ne.s32.totalorder %s890, %s892
      %p896 = scmp.eq.s32.totalorder %s121, 0
      %p897 = por %p895, %p896
      %p898 = scmp.ne.s32.totalorder %s890, %s892
      %p899 = scmp.eq.s32.totalorder %s126, 1
      %p900 = por %p898, %p899
      %p901 = scmp.ne.s32.totalorder %s892, %s893
      %p902 = scmp.eq.s32.totalorder %s126, 0
      %p903 = por %p901, %p902
      %p904 = scmp.ne.s32.totalorder %s892, %s893
      %p905 = scmp.eq.s32.totalorder %s127, 1
      %p906 = por %p904, %p905
      %p908 = scmp.ne.s32.totalorder %s893, %s907
      %p909 = scmp.eq.s32.totalorder %s127, 0
      %p910 = por %p908, %p909
      %s912 = sadd.s32 %s911, 1
      %p915 = scmp.eq.s32.totalorder %s121, 1
      %p916 = scmp.ne.s32.totalorder %s911, %s913
      %p917 = scmp.eq.s32.totalorder %s121, 0
      %p918 = por %p916, %p917
      %p919 = scmp.ne.s32.totalorder %s911, %s913
      %p920 = scmp.eq.s32.totalorder %s126, 1
      %p921 = por %p919, %p920
      %p922 = scmp.ne.s32.totalorder %s913, %s914
      %p923 = scmp.eq.s32.totalorder %s126, 0
      %p924 = por %p922, %p923
      %p925 = scmp.ne.s32.totalorder %s913, %s914
      %p926 = scmp.eq.s32.totalorder %s127, 1
      %p927 = por %p925, %p926
      %p929 = scmp.ne.s32.totalorder %s914, %s928
      %p930 = scmp.eq.s32.totalorder %s127, 0
      %p931 = por %p929, %p930
      %s933 = sadd.s32 %s932, 1
      %p936 = scmp.eq.s32.totalorder %s121, 1
      %p937 = scmp.ne.s32.totalorder %s932, %s934
      %p938 = scmp.eq.s32.totalorder %s121, 0
      %p939 = por %p937, %p938
      %p940 = scmp.ne.s32.totalorder %s932, %s934
      %p941 = scmp.eq.s32.totalorder %s126, 1
      %p942 = por %p940, %p941
      %p943 = scmp.ne.s32.totalorder %s934, %s935
      %p944 = scmp.eq.s32.totalorder %s126, 0
      %p945 = por %p943, %p944
      %p946 = scmp.ne.s32.totalorder %s934, %s935
      %p947 = scmp.eq.s32.totalorder %s127, 1
      %p948 = por %p946, %p947
      %p950 = scmp.ne.s32.totalorder %s935, %s949
      %p951 = scmp.eq.s32.totalorder %s127, 0
      %p952 = por %p950, %p951
      %s954 = sadd.s32 %s953, 1
      %p957 = scmp.eq.s32.totalorder %s121, 1
      %p958 = scmp.ne.s32.totalorder %s953, %s955
      %p959 = scmp.eq.s32.totalorder %s121, 0
      %p960 = por %p958, %p959
      %p961 = scmp.ne.s32.totalorder %s953, %s955
      %p962 = scmp.eq.s32.totalorder %s126, 1
      %p963 = por %p961, %p962
      %p964 = scmp.ne.s32.totalorder %s955, %s956
      %p965 = scmp.eq.s32.totalorder %s126, 0
      %p966 = por %p964, %p965
      %p967 = scmp.ne.s32.totalorder %s955, %s956
      %p968 = scmp.eq.s32.totalorder %s127, 1
      %p969 = por %p967, %p968
      %p971 = scmp.ne.s32.totalorder %s956, %s970
      %p972 = scmp.eq.s32.totalorder %s127, 0
      %p973 = por %p971, %p972
      %s975 = sadd.s32 %s974, 1
      %p978 = scmp.eq.s32.totalorder %s121, 1
      %p979 = scmp.ne.s32.totalorder %s974, %s976
      %p980 = scmp.eq.s32.totalorder %s121, 0
      %p981 = por %p979, %p980
      %p982 = scmp.ne.s32.totalorder %s974, %s976
      %p983 = scmp.eq.s32.totalorder %s126, 1
      %p984 = por %p982, %p983
      %p985 = scmp.ne.s32.totalorder %s976, %s977
      %p986 = scmp.eq.s32.totalorder %s126, 0
      %p987 = por %p985, %p986
      %p988 = scmp.ne.s32.totalorder %s976, %s977
      %p989 = scmp.eq.s32.totalorder %s127, 1
      %p990 = por %p988, %p989
      %p992 = scmp.ne.s32.totalorder %s977, %s991
      %p993 = scmp.eq.s32.totalorder %s127, 0
      %p994 = por %p992, %p993
      %s996 = sadd.s32 %s995, 1
      %p999 = scmp.eq.s32.totalorder %s121, 1
      %p1000 = scmp.ne.s32.totalorder %s995, %s997
      %p1001 = scmp.eq.s32.totalorder %s121, 0
      %p1002 = por %p1000, %p1001
      %p1003 = scmp.ne.s32.totalorder %s995, %s997
      %p1004 = scmp.eq.s32.totalorder %s126, 1
      %p1005 = por %p1003, %p1004
      %p1006 = scmp.ne.s32.totalorder %s997, %s998
      %p1007 = scmp.eq.s32.totalorder %s126, 0
      %p1008 = por %p1006, %p1007
      %p1009 = scmp.ne.s32.totalorder %s997, %s998
      %p1010 = scmp.eq.s32.totalorder %s127, 1
      %p1011 = por %p1009, %p1010
      %p1013 = scmp.ne.s32.totalorder %s998, %s1012
      %p1014 = scmp.eq.s32.totalorder %s127, 0
      %p1015 = por %p1013, %p1014
      %s1017 = sadd.s32 %s1016, 1
      %p1020 = scmp.eq.s32.totalorder %s121, 1
      %p1021 = scmp.ne.s32.totalorder %s1016, %s1018
      %p1022 = scmp.eq.s32.totalorder %s121, 0
      %p1023 = por %p1021, %p1022
      %p1024 = scmp.ne.s32.totalorder %s1016, %s1018
      %p1025 = scmp.eq.s32.totalorder %s126, 1
      %p1026 = por %p1024, %p1025
      %p1027 = scmp.ne.s32.totalorder %s1018, %s1019
      %p1028 = scmp.eq.s32.totalorder %s126, 0
      %p1029 = por %p1027, %p1028
      %p1030 = scmp.ne.s32.totalorder %s1018, %s1019
      %p1031 = scmp.eq.s32.totalorder %s127, 1
      %p1032 = por %p1030, %p1031
      %p1034 = scmp.ne.s32.totalorder %s1019, %s1033
      %p1035 = scmp.eq.s32.totalorder %s127, 0
      %p1036 = por %p1034, %p1035
      %s1038 = sadd.s32 %s1037, 1
      %p1041 = scmp.eq.s32.totalorder %s121, 1
      %p1042 = scmp.ne.s32.totalorder %s1037, %s1039
      %p1043 = scmp.eq.s32.totalorder %s121, 0
      %p1044 = por %p1042, %p1043
      %p1045 = scmp.ne.s32.totalorder %s1037, %s1039
      %p1046 = scmp.eq.s32.totalorder %s126, 1
      %p1047 = por %p1045, %p1046
      %p1048 = scmp.ne.s32.totalorder %s1039, %s1040
      %p1049 = scmp.eq.s32.totalorder %s126, 0
      %p1050 = por %p1048, %p1049
      %p1051 = scmp.ne.s32.totalorder %s1039, %s1040
      %p1052 = scmp.eq.s32.totalorder %s127, 1
      %p1053 = por %p1051, %p1052
      %p1055 = scmp.ne.s32.totalorder %s1040, %s1054
      %p1056 = scmp.eq.s32.totalorder %s127, 0
      %p1057 = por %p1055, %p1056
      %s1059 = sadd.s32 %s1058, 1
      %p1062 = scmp.eq.s32.totalorder %s121, 1
      %p1063 = scmp.ne.s32.totalorder %s1058, %s1060
      %p1064 = scmp.eq.s32.totalorder %s121, 0
      %p1065 = por %p1063, %p1064
      %p1066 = scmp.ne.s32.totalorder %s1058, %s1060
      %p1067 = scmp.eq.s32.totalorder %s126, 1
      %p1068 = por %p1066, %p1067
      %p1069 = scmp.ne.s32.totalorder %s1060, %s1061
      %p1070 = scmp.eq.s32.totalorder %s126, 0
      %p1071 = por %p1069, %p1070
      %p1072 = scmp.ne.s32.totalorder %s1060, %s1061
      %p1073 = scmp.eq.s32.totalorder %s127, 1
      %p1074 = por %p1072, %p1073
      %p1076 = scmp.ne.s32.totalorder %s1061, %s1075
      %p1077 = scmp.eq.s32.totalorder %s127, 0
      %p1078 = por %p1076, %p1077
      %s1079 = ssub.s32 %s121, %s128
      %p1080 = scmp.eq.s32.totalorder %s1079, 0
      %s1082 = sadd.s32 %s1081, 1
      %s1083 = scalar_select %p1080, %s1081, %s1082
      %p1086 = pneg %p1080
      %p1087 = scmp.eq.s32.totalorder %s121, 1
      %p1088 = por %p1086, %p1087
      %p1089 = scmp.ne.s32.totalorder %s1081, %s1084
      %p1090 = scmp.eq.s32.totalorder %s121, 0
      %p1091 = por %p1089, %p1090
      %p1092 = scmp.ne.s32.totalorder %s1081, %s1084
      %p1093 = scmp.eq.s32.totalorder %s126, 1
      %p1094 = por %p1092, %p1093
      %p1095 = scmp.ne.s32.totalorder %s1084, %s1085
      %p1096 = scmp.eq.s32.totalorder %s126, 0
      %p1097 = por %p1095, %p1096
      %p1098 = scmp.ne.s32.totalorder %s1084, %s1085
      %p1099 = scmp.eq.s32.totalorder %s127, 1
      %p1100 = por %p1098, %p1099
      %p1102 = scmp.ne.s32.totalorder %s1085, %s1101
      %p1103 = scmp.eq.s32.totalorder %s127, 0
      %p1104 = por %p1102, %p1103
      %s1105 = ssub.s32 %s121, %s128
      %p1106 = scmp.eq.s32.totalorder %s1105, 0
      %s1108 = sadd.s32 %s1107, 1
      %s1109 = scalar_select %p1106, %s1107, %s1108
      %p1112 = pneg %p1106
      %p1113 = scmp.eq.s32.totalorder %s121, 1
      %p1114 = por %p1112, %p1113
      %p1115 = scmp.ne.s32.totalorder %s1107, %s1110
      %p1116 = scmp.eq.s32.totalorder %s121, 0
      %p1117 = por %p1115, %p1116
      %p1118 = scmp.ne.s32.totalorder %s1107, %s1110
      %p1119 = scmp.eq.s32.totalorder %s126, 1
      %p1120 = por %p1118, %p1119
      %p1121 = scmp.ne.s32.totalorder %s1110, %s1111
      %p1122 = scmp.eq.s32.totalorder %s126, 0
      %p1123 = por %p1121, %p1122
      %p1124 = scmp.ne.s32.totalorder %s1110, %s1111
      %p1125 = scmp.eq.s32.totalorder %s127, 1
      %p1126 = por %p1124, %p1125
      %p1128 = scmp.ne.s32.totalorder %s1111, %s1127
      %p1129 = scmp.eq.s32.totalorder %s127, 0
      %p1130 = por %p1128, %p1129
      %p1131 = scmp.le.s32.totalorder 1, %s121
      %p1132 = scmp.lt.s32.totalorder %s121, 3
      %p1133 = pnand %p1131, %p1132
      %p1134 = pneg %p1133
      // Predicated region
      $region9: #{encoder1diff_forward.1} parent=5 // pred_check
        _
      $region10: #{encoder1diff_forward.1} parent=5 // pred_check_branch
        %1136 = sbr.rel (%p1133) target = $region12
      $region11: #{encoder1diff_forward.1} parent=5 // pred_region
        %s1137 = ssub.s32 %s121, 1
        // Predicated region
        $region13: #{encoder1diff_forward.1} parent=11 // pred_check
          %p1138 = pneg %p168
        $region14: #{encoder1diff_forward.1} parent=11 // pred_check_branch
          %1140 = sbr.rel (%p1138) target = $region16
        $region15: #{encoder1diff_forward.1} parent=11 // pred_region
          _
        $region16: #{encoder1diff_forward.1} parent=11 // pred_fallthru
          _
        // Predicated region
        $region17: #{encoder1diff_forward.1} parent=11 // pred_check
          %p1141 = pneg %p189
        $region18: #{encoder1diff_forward.1} parent=11 // pred_check_branch
          %1143 = sbr.rel (%p1141) target = $region20
        $region19: #{encoder1diff_forward.1} parent=11 // pred_region
          %s1145 = ssub.s32 192, 192
          %1146 = vsyncadd [#allocation4], %s1145
          %s1147 = sshll.u32 [#allocation3], 4
          %s1148 = int_to_ptr.vmem [resolvable:$true] %s1147
          %1153 = dma.hbm_to_vmem [thread:$0]  %s5, 192, %s1148, [#allocation4], 64, 64, 4
        $region20: #{encoder1diff_forward.1} parent=11 // pred_fallthru
          _
        // Predicated region
        $region21: #{encoder1diff_forward.1} parent=11 // pred_check
          %p1154 = pneg %p210
        $region22: #{encoder1diff_forward.1} parent=11 // pred_check_branch
          %1156 = sbr.rel (%p1154) target = $region24
        $region23: #{encoder1diff_forward.1} parent=11 // pred_region
          %s1158 = ssub.s32 16, 16
          %1159 = vsyncadd [#allocation7], %s1158
          %s1161 = sshll.u32 [#allocation6], 4
          %s1162 = int_to_ptr.vmem [resolvable:$true] %s1161
          %1164 = dma.hbm_to_vmem [thread:$0]  %s7, 16, %s1162, [#allocation7]
        $region24: #{encoder1diff_forward.1} parent=11 // pred_fallthru
          _
        // Predicated region
        $region25: #{encoder1diff_forward.1} parent=11 // pred_check
          %p1165 = pneg %p231
        $region26: #{encoder1diff_forward.1} parent=11 // pred_check_branch
          %1167 = sbr.rel (%p1165) target = $region28
        $region27: #{encoder1diff_forward.1} parent=11 // pred_region
          _
        $region28: #{encoder1diff_forward.1} parent=11 // pred_fallthru
          _
        // Predicated region
        $region29: #{encoder1diff_forward.1} parent=11 // pred_check
          %p1168 = pneg %p252
        $region30: #{encoder1diff_forward.1} parent=11 // pred_check_branch
          %1170 = sbr.rel (%p1168) target = $region32
        $region31: #{encoder1diff_forward.1} parent=11 // pred_region
          %s1172 = ssub.s32 16, 16
          %1173 = vsyncadd [#allocation7], %s1172
          %s1175 = sshll.u32 [#allocation8], 4
          %s1176 = int_to_ptr.vmem [resolvable:$true] %s1175
          %1178 = dma.hbm_to_vmem [thread:$0]  %s11, 16, %s1176, [#allocation7]
        $region32: #{encoder1diff_forward.1} parent=11 // pred_fallthru
          _
        // Predicated region
        $region33: #{encoder1diff_forward.1} parent=11 // pred_check
          %p1179 = pneg %p273
        $region34: #{encoder1diff_forward.1} parent=11 // pred_check_branch
          %1181 = sbr.rel (%p1179) target = $region36
        $region35: #{encoder1diff_forward.1} parent=11 // pred_region
          %s1183 = ssub.s32 768, 768
          %1184 = vsyncadd [#allocation10], %s1183
          %s1185 = sshll.u32 [#allocation9], 4
          %s1186 = int_to_ptr.vmem [resolvable:$true] %s1185
          %1191 = dma.hbm_to_vmem [thread:$0]  %s13, 768, %s1186, [#allocation10], 128, 128, 8
        $region36: #{encoder1diff_forward.1} parent=11 // pred_fallthru
          _
        // Predicated region
        $region37: #{encoder1diff_forward.1} parent=11 // pred_check
          %p1192 = pneg %p294
        $region38: #{encoder1diff_forward.1} parent=11 // pred_check_branch
          %1194 = sbr.rel (%p1192) target = $region40
        $region39: #{encoder1diff_forward.1} parent=11 // pred_region
          %s1196 = ssub.s32 16, 16
          %1197 = vsyncadd [#allocation10], %s1196
          %s1199 = sshll.u32 [#allocation11], 4
          %s1200 = int_to_ptr.vmem [resolvable:$true] %s1199
          %1202 = dma.hbm_to_vmem [thread:$0]  %s15, 16, %s1200, [#allocation10]
        $region40: #{encoder1diff_forward.1} parent=11 // pred_fallthru
          _
        // Predicated region
        $region41: #{encoder1diff_forward.1} parent=11 // pred_check
          %p1203 = pneg %p315
        $region42: #{encoder1diff_forward.1} parent=11 // pred_check_branch
          %1205 = sbr.rel (%p1203) target = $region44
        $region43: #{encoder1diff_forward.1} parent=11 // pred_region
          %s1207 = ssub.s32 768, 768
          %1208 = vsyncadd [#allocation13], %s1207
          %s1209 = sshll.u32 [#allocation12], 4
          %s1210 = int_to_ptr.vmem [resolvable:$true] %s1209
          %1215 = dma.hbm_to_vmem [thread:$0]  %s17, 768, %s1210, [#allocation13], 128, 128, 8
        $region44: #{encoder1diff_forward.1} parent=11 // pred_fallthru
          _
        // Predicated region
        $region45: #{encoder1diff_forward.1} parent=11 // pred_check
          %p1216 = pneg %p336
        $region46: #{encoder1diff_forward.1} parent=11 // pred_check_branch
          %1218 = sbr.rel (%p1216) target = $region48
        $region47: #{encoder1diff_forward.1} parent=11 // pred_region
          %s1220 = ssub.s32 16, 16
          %1221 = vsyncadd [#allocation13], %s1220
          %s1223 = sshll.u32 [#allocation14], 4
          %s1224 = int_to_ptr.vmem [resolvable:$true] %s1223
          %1226 = dma.hbm_to_vmem [thread:$0]  %s19, 16, %s1224, [#allocation13]
        $region48: #{encoder1diff_forward.1} parent=11 // pred_fallthru
          _
        // Predicated region
        $region49: #{encoder1diff_forward.1} parent=11 // pred_check
          %p1227 = pneg %p357
        $region50: #{encoder1diff_forward.1} parent=11 // pred_check_branch
          %1229 = sbr.rel (%p1227) target = $region52
        $region51: #{encoder1diff_forward.1} parent=11 // pred_region
          %s1231 = ssub.s32 16, 16
          %1232 = vsyncadd [#allocation16], %s1231
          %s1234 = sshll.u32 [#allocation15], 4
          %s1235 = int_to_ptr.vmem [resolvable:$true] %s1234
          %1237 = dma.hbm_to_vmem [thread:$0]  %s21, 16, %s1235, [#allocation16]
        $region52: #{encoder1diff_forward.1} parent=11 // pred_fallthru
          _
        // Predicated region
        $region53: #{encoder1diff_forward.1} parent=11 // pred_check
          %p1238 = pneg %p378
        $region54: #{encoder1diff_forward.1} parent=11 // pred_check_branch
          %1240 = sbr.rel (%p1238) target = $region56
        $region55: #{encoder1diff_forward.1} parent=11 // pred_region
          %s1242 = ssub.s32 16, 16
          %1243 = vsyncadd [#allocation16], %s1242
          %s1245 = sshll.u32 [#allocation17], 4
          %s1246 = int_to_ptr.vmem [resolvable:$true] %s1245
          %1248 = dma.hbm_to_vmem [thread:$0]  %s23, 16, %s1246, [#allocation16]
        $region56: #{encoder1diff_forward.1} parent=11 // pred_fallthru
          _
        // Predicated region
        $region57: #{encoder1diff_forward.1} parent=11 // pred_check
          %p1249 = pneg %p399
        $region58: #{encoder1diff_forward.1} parent=11 // pred_check_branch
          %1251 = sbr.rel (%p1249) target = $region60
        $region59: #{encoder1diff_forward.1} parent=11 // pred_region
          %s1253 = ssub.s32 16, 16
          %1254 = vsyncadd [#allocation19], %s1253
          %s1256 = sshll.u32 [#allocation18], 4
          %s1257 = int_to_ptr.vmem [resolvable:$true] %s1256
          %1259 = dma.hbm_to_vmem [thread:$0]  %s25, 16, %s1257, [#allocation19]
        $region60: #{encoder1diff_forward.1} parent=11 // pred_fallthru
          _
        // Predicated region
        $region61: #{encoder1diff_forward.1} parent=11 // pred_check
          %p1260 = pneg %p420
        $region62: #{encoder1diff_forward.1} parent=11 // pred_check_branch
          %1262 = sbr.rel (%p1260) target = $region64
        $region63: #{encoder1diff_forward.1} parent=11 // pred_region
          %s1264 = ssub.s32 16, 16
          %1265 = vsyncadd [#allocation19], %s1264
          %s1267 = sshll.u32 [#allocation20], 4
          %s1268 = int_to_ptr.vmem [resolvable:$true] %s1267
          %1270 = dma.hbm_to_vmem [thread:$0]  %s27, 16, %s1268, [#allocation19]
        $region64: #{encoder1diff_forward.1} parent=11 // pred_fallthru
          _
        // Predicated region
        $region65: #{encoder1diff_forward.1} parent=11 // pred_check
          %p1271 = pneg %p441
        $region66: #{encoder1diff_forward.1} parent=11 // pred_check_branch
          %1273 = sbr.rel (%p1271) target = $region68
        $region67: #{encoder1diff_forward.1} parent=11 // pred_region
          %s1275 = ssub.s32 768, 768
          %1276 = vsyncadd [#allocation22], %s1275
          %s1277 = sshll.u32 [#allocation21], 4
          %s1278 = int_to_ptr.vmem [resolvable:$true] %s1277
          %1283 = dma.hbm_to_vmem [thread:$0]  %s29, 768, %s1278, [#allocation22], 128, 128, 8
        $region68: #{encoder1diff_forward.1} parent=11 // pred_fallthru
          _
        // Predicated region
        $region69: #{encoder1diff_forward.1} parent=11 // pred_check
          %p1284 = pneg %p462
        $region70: #{encoder1diff_forward.1} parent=11 // pred_check_branch
          %1286 = sbr.rel (%p1284) target = $region72
        $region71: #{encoder1diff_forward.1} parent=11 // pred_region
          %s1288 = ssub.s32 16, 16
          %1289 = vsyncadd [#allocation22], %s1288
          %s1291 = sshll.u32 [#allocation23], 4
          %s1292 = int_to_ptr.vmem [resolvable:$true] %s1291
          %1294 = dma.hbm_to_vmem [thread:$0]  %s31, 16, %s1292, [#allocation22]
        $region72: #{encoder1diff_forward.1} parent=11 // pred_fallthru
          _
        // Predicated region
        $region73: #{encoder1diff_forward.1} parent=11 // pred_check
          %p1295 = pneg %p483
        $region74: #{encoder1diff_forward.1} parent=11 // pred_check_branch
          %1297 = sbr.rel (%p1295) target = $region76
        $region75: #{encoder1diff_forward.1} parent=11 // pred_region
          %s1299 = ssub.s32 768, 768
          %1300 = vsyncadd [#allocation25], %s1299
          %s1301 = sshll.u32 [#allocation24], 4
          %s1302 = int_to_ptr.vmem [resolvable:$true] %s1301
          %1307 = dma.hbm_to_vmem [thread:$0]  %s33, 768, %s1302, [#allocation25], 128, 128, 8
        $region76: #{encoder1diff_forward.1} parent=11 // pred_fallthru
          _
        // Predicated region
        $region77: #{encoder1diff_forward.1} parent=11 // pred_check
          %p1308 = pneg %p504
        $region78: #{encoder1diff_forward.1} parent=11 // pred_check_branch
          %1310 = sbr.rel (%p1308) target = $region80
        $region79: #{encoder1diff_forward.1} parent=11 // pred_region
          %s1312 = ssub.s32 16, 16
          %1313 = vsyncadd [#allocation25], %s1312
          %s1315 = sshll.u32 [#allocation26], 4
          %s1316 = int_to_ptr.vmem [resolvable:$true] %s1315
          %1318 = dma.hbm_to_vmem [thread:$0]  %s35, 16, %s1316, [#allocation25]
        $region80: #{encoder1diff_forward.1} parent=11 // pred_fallthru
          _
        // Predicated region
        $region81: #{encoder1diff_forward.1} parent=11 // pred_check
          %p1319 = pneg %p525
        $region82: #{encoder1diff_forward.1} parent=11 // pred_check_branch
          %1321 = sbr.rel (%p1319) target = $region84
        $region83: #{encoder1diff_forward.1} parent=11 // pred_region
          %s1323 = ssub.s32 16, 16
          %1324 = vsyncadd [#allocation28], %s1323
          %s1326 = sshll.u32 [#allocation27], 4
          %s1327 = int_to_ptr.vmem [resolvable:$true] %s1326
          %1329 = dma.hbm_to_vmem [thread:$0]  %s37, 16, %s1327, [#allocation28]
        $region84: #{encoder1diff_forward.1} parent=11 // pred_fallthru
          _
        // Predicated region
        $region85: #{encoder1diff_forward.1} parent=11 // pred_check
          %p1330 = pneg %p546
        $region86: #{encoder1diff_forward.1} parent=11 // pred_check_branch
          %1332 = sbr.rel (%p1330) target = $region88
        $region87: #{encoder1diff_forward.1} parent=11 // pred_region
          %s1334 = ssub.s32 16, 16
          %1335 = vsyncadd [#allocation28], %s1334
          %s1337 = sshll.u32 [#allocation29], 4
          %s1338 = int_to_ptr.vmem [resolvable:$true] %s1337
          %1340 = dma.hbm_to_vmem [thread:$0]  %s39, 16, %s1338, [#allocation28]
        $region88: #{encoder1diff_forward.1} parent=11 // pred_fallthru
          _
        // Predicated region
        $region89: #{encoder1diff_forward.1} parent=11 // pred_check
          %p1341 = pneg %p567
        $region90: #{encoder1diff_forward.1} parent=11 // pred_check_branch
          %1343 = sbr.rel (%p1341) target = $region92
        $region91: #{encoder1diff_forward.1} parent=11 // pred_region
          %s1345 = ssub.s32 16, 16
          %1346 = vsyncadd [#allocation31], %s1345
          %s1348 = sshll.u32 [#allocation30], 4
          %s1349 = int_to_ptr.vmem [resolvable:$true] %s1348
          %1351 = dma.hbm_to_vmem [thread:$0]  %s41, 16, %s1349, [#allocation31]
        $region92: #{encoder1diff_forward.1} parent=11 // pred_fallthru
          _
        // Predicated region
        $region93: #{encoder1diff_forward.1} parent=11 // pred_check
          %p1352 = pneg %p588
        $region94: #{encoder1diff_forward.1} parent=11 // pred_check_branch
          %1354 = sbr.rel (%p1352) target = $region96
        $region95: #{encoder1diff_forward.1} parent=11 // pred_region
          %s1356 = ssub.s32 16, 16
          %1357 = vsyncadd [#allocation31], %s1356
          %s1359 = sshll.u32 [#allocation32], 4
          %s1360 = int_to_ptr.vmem [resolvable:$true] %s1359
          %1362 = dma.hbm_to_vmem [thread:$0]  %s43, 16, %s1360, [#allocation31]
        $region96: #{encoder1diff_forward.1} parent=11 // pred_fallthru
          _
        // Predicated region
        $region97: #{encoder1diff_forward.1} parent=11 // pred_check
          %p1363 = pneg %p609
        $region98: #{encoder1diff_forward.1} parent=11 // pred_check_branch
          %1365 = sbr.rel (%p1363) target = $region100
        $region99: #{encoder1diff_forward.1} parent=11 // pred_region
          %s1367 = ssub.s32 768, 768
          %1368 = vsyncadd [#allocation34], %s1367
          %s1369 = sshll.u32 [#allocation33], 4
          %s1370 = int_to_ptr.vmem [resolvable:$true] %s1369
          %1375 = dma.hbm_to_vmem [thread:$0]  %s45, 768, %s1370, [#allocation34], 128, 128, 8
        $region100: #{encoder1diff_forward.1} parent=11 // pred_fallthru
          _
        // Predicated region
        $region101: #{encoder1diff_forward.1} parent=11 // pred_check
          %p1376 = pneg %p630
        $region102: #{encoder1diff_forward.1} parent=11 // pred_check_branch
          %1378 = sbr.rel (%p1376) target = $region104
        $region103: #{encoder1diff_forward.1} parent=11 // pred_region
          %s1380 = ssub.s32 16, 16
          %1381 = vsyncadd [#allocation34], %s1380
          %s1383 = sshll.u32 [#allocation35], 4
          %s1384 = int_to_ptr.vmem [resolvable:$true] %s1383
          %1386 = dma.hbm_to_vmem [thread:$0]  %s47, 16, %s1384, [#allocation34]
        $region104: #{encoder1diff_forward.1} parent=11 // pred_fallthru
          _
        // Predicated region
        $region105: #{encoder1diff_forward.1} parent=11 // pred_check
          %p1387 = pneg %p651
        $region106: #{encoder1diff_forward.1} parent=11 // pred_check_branch
          %1389 = sbr.rel (%p1387) target = $region108
        $region107: #{encoder1diff_forward.1} parent=11 // pred_region
          %s1391 = ssub.s32 768, 768
          %1392 = vsyncadd [#allocation37], %s1391
          %s1393 = sshll.u32 [#allocation36], 4
          %s1394 = int_to_ptr.vmem [resolvable:$true] %s1393
          %1399 = dma.hbm_to_vmem [thread:$0]  %s49, 768, %s1394, [#allocation37], 128, 128, 8
        $region108: #{encoder1diff_forward.1} parent=11 // pred_fallthru
          _
        // Predicated region
        $region109: #{encoder1diff_forward.1} parent=11 // pred_check
          %p1400 = pneg %p672
        $region110: #{encoder1diff_forward.1} parent=11 // pred_check_branch
          %1402 = sbr.rel (%p1400) target = $region112
        $region111: #{encoder1diff_forward.1} parent=11 // pred_region
          %s1404 = ssub.s32 16, 16
          %1405 = vsyncadd [#allocation37], %s1404
          %s1407 = sshll.u32 [#allocation38], 4
          %s1408 = int_to_ptr.vmem [resolvable:$true] %s1407
          %1410 = dma.hbm_to_vmem [thread:$0]  %s51, 16, %s1408, [#allocation37]
        $region112: #{encoder1diff_forward.1} parent=11 // pred_fallthru
          _
        // Predicated region
        $region113: #{encoder1diff_forward.1} parent=11 // pred_check
          %p1411 = pneg %p693
        $region114: #{encoder1diff_forward.1} parent=11 // pred_check_branch
          %1413 = sbr.rel (%p1411) target = $region116
        $region115: #{encoder1diff_forward.1} parent=11 // pred_region
          _
        $region116: #{encoder1diff_forward.1} parent=11 // pred_fallthru
          _
        // Predicated region
        $region117: #{encoder1diff_forward.1} parent=11 // pred_check
          %p1414 = pneg %p714
        $region118: #{encoder1diff_forward.1} parent=11 // pred_check_branch
          %1416 = sbr.rel (%p1414) target = $region120
        $region119: #{encoder1diff_forward.1} parent=11 // pred_region
          %s1418 = ssub.s32 16, 16
          %1419 = vsyncadd [#allocation40], %s1418
          %s1421 = sshll.u32 [#allocation39], 4
          %s1422 = int_to_ptr.vmem [resolvable:$true] %s1421
          %1424 = dma.hbm_to_vmem [thread:$0]  %s55, 16, %s1422, [#allocation40]
        $region120: #{encoder1diff_forward.1} parent=11 // pred_fallthru
          _
        // Predicated region
        $region121: #{encoder1diff_forward.1} parent=11 // pred_check
          %p1425 = pneg %p735
        $region122: #{encoder1diff_forward.1} parent=11 // pred_check_branch
          %1427 = sbr.rel (%p1425) target = $region124
        $region123: #{encoder1diff_forward.1} parent=11 // pred_region
          %s1429 = ssub.s32 256, 256
          %1430 = vsyncadd [#allocation40], %s1429
          %s1431 = sshll.u32 [#allocation41], 4
          %s1432 = int_to_ptr.vmem [resolvable:$true] %s1431
          %1437 = dma.hbm_to_vmem [thread:$0]  %s57, 256, %s1432, [#allocation40], 128, 128, 8
        $region124: #{encoder1diff_forward.1} parent=11 // pred_fallthru
          _
        // Predicated region
        $region125: #{encoder1diff_forward.1} parent=11 // pred_check
          %p1438 = pneg %p756
        $region126: #{encoder1diff_forward.1} parent=11 // pred_check_branch
          %1440 = sbr.rel (%p1438) target = $region128
        $region127: #{encoder1diff_forward.1} parent=11 // pred_region
          %s1442 = ssub.s32 16, 16
          %1443 = vsyncadd [#allocation43], %s1442
          %s1445 = sshll.u32 [#allocation42], 4
          %s1446 = int_to_ptr.vmem [resolvable:$true] %s1445
          %1448 = dma.hbm_to_vmem [thread:$0]  %s59, 16, %s1446, [#allocation43]
        $region128: #{encoder1diff_forward.1} parent=11 // pred_fallthru
          _
        // Predicated region
        $region129: #{encoder1diff_forward.1} parent=11 // pred_check
          %p1449 = pneg %p777
        $region130: #{encoder1diff_forward.1} parent=11 // pred_check_branch
          %1451 = sbr.rel (%p1449) target = $region132
        $region131: #{encoder1diff_forward.1} parent=11 // pred_region
          %s1453 = ssub.s32 16, 16
          %1454 = vsyncadd [#allocation43], %s1453
          %s1456 = sshll.u32 [#allocation44], 4
          %s1457 = int_to_ptr.vmem [resolvable:$true] %s1456
          %1459 = dma.hbm_to_vmem [thread:$0]  %s61, 16, %s1457, [#allocation43]
        $region132: #{encoder1diff_forward.1} parent=11 // pred_fallthru
          _
        // Predicated region
        $region133: #{encoder1diff_forward.1} parent=11 // pred_check
          %p1460 = pneg %p798
        $region134: #{encoder1diff_forward.1} parent=11 // pred_check_branch
          %1462 = sbr.rel (%p1460) target = $region136
        $region135: #{encoder1diff_forward.1} parent=11 // pred_region
          %s1464 = ssub.s32 16, 16
          %1465 = vsyncadd [#allocation46], %s1464
          %s1467 = sshll.u32 [#allocation45], 4
          %s1468 = int_to_ptr.vmem [resolvable:$true] %s1467
          %1470 = dma.hbm_to_vmem [thread:$0]  %s63, 16, %s1468, [#allocation46]
        $region136: #{encoder1diff_forward.1} parent=11 // pred_fallthru
          _
        // Predicated region
        $region137: #{encoder1diff_forward.1} parent=11 // pred_check
          %p1471 = pneg %p819
        $region138: #{encoder1diff_forward.1} parent=11 // pred_check_branch
          %1473 = sbr.rel (%p1471) target = $region140
        $region139: #{encoder1diff_forward.1} parent=11 // pred_region
          _
        $region140: #{encoder1diff_forward.1} parent=11 // pred_fallthru
          _
        // Predicated region
        $region141: #{encoder1diff_forward.1} parent=11 // pred_check
          %p1474 = pneg %p840
        $region142: #{encoder1diff_forward.1} parent=11 // pred_check_branch
          %1476 = sbr.rel (%p1474) target = $region144
        $region143: #{encoder1diff_forward.1} parent=11 // pred_region
          _
        $region144: #{encoder1diff_forward.1} parent=11 // pred_fallthru
          _
        // Predicated region
        $region145: #{encoder1diff_forward.1} parent=11 // pred_check
          %p1477 = pneg %p861
        $region146: #{encoder1diff_forward.1} parent=11 // pred_check_branch
          %1479 = sbr.rel (%p1477) target = $region148
        $region147: #{encoder1diff_forward.1} parent=11 // pred_region
          %s1481 = ssub.s32 1536, 1536
          %1482 = vsyncadd [#allocation46], %s1481
          %s1483 = sshll.u32 [#allocation47], 4
          %s1484 = int_to_ptr.vmem [resolvable:$true] %s1483
          %1489 = dma.hbm_to_vmem [thread:$0]  %s69, 1536, %s1484, [#allocation46], 128, 128, 8
        $region148: #{encoder1diff_forward.1} parent=11 // pred_fallthru
          _
        // Predicated region
        $region149: #{encoder1diff_forward.1} parent=11 // pred_check
          %p1490 = pneg %p882
        $region150: #{encoder1diff_forward.1} parent=11 // pred_check_branch
          %1492 = sbr.rel (%p1490) target = $region152
        $region151: #{encoder1diff_forward.1} parent=11 // pred_region
          %s1494 = ssub.s32 16, 16
          %1495 = vsyncadd [#allocation49], %s1494
          %s1497 = sshll.u32 [#allocation48], 4
          %s1498 = int_to_ptr.vmem [resolvable:$true] %s1497
          %1500 = dma.hbm_to_vmem [thread:$0]  %s71, 16, %s1498, [#allocation49]
        $region152: #{encoder1diff_forward.1} parent=11 // pred_fallthru
          _
        // Predicated region
        $region153: #{encoder1diff_forward.1} parent=11 // pred_check
          %p1501 = pneg %p903
        $region154: #{encoder1diff_forward.1} parent=11 // pred_check_branch
          %1503 = sbr.rel (%p1501) target = $region156
        $region155: #{encoder1diff_forward.1} parent=11 // pred_region
          %s1505 = ssub.s32 1536, 1536
          %1506 = vsyncadd [#allocation49], %s1505
          %s1507 = sshll.u32 [#allocation50], 4
          %s1508 = int_to_ptr.vmem [resolvable:$true] %s1507
          %1513 = dma.hbm_to_vmem [thread:$0]  %s73, 1536, %s1508, [#allocation49], 128, 128, 8
        $region156: #{encoder1diff_forward.1} parent=11 // pred_fallthru
          _
        // Predicated region
        $region157: #{encoder1diff_forward.1} parent=11 // pred_check
          %p1514 = pneg %p924
        $region158: #{encoder1diff_forward.1} parent=11 // pred_check_branch
          %1516 = sbr.rel (%p1514) target = $region160
        $region159: #{encoder1diff_forward.1} parent=11 // pred_region
          %s1518 = ssub.s32 16, 16
          %1519 = vsyncadd [#allocation52], %s1518
          %s1521 = sshll.u32 [#allocation51], 4
          %s1522 = int_to_ptr.vmem [resolvable:$true] %s1521
          %1524 = dma.hbm_to_vmem [thread:$0]  %s75, 16, %s1522, [#allocation52]
        $region160: #{encoder1diff_forward.1} parent=11 // pred_fallthru
          _
        // Predicated region
        $region161: #{encoder1diff_forward.1} parent=11 // pred_check
          %p1525 = pneg %p945
        $region162: #{encoder1diff_forward.1} parent=11 // pred_check_branch
          %1527 = sbr.rel (%p1525) target = $region164
        $region163: #{encoder1diff_forward.1} parent=11 // pred_region
          %s1529 = ssub.s32 16, 16
          %1530 = vsyncadd [#allocation52], %s1529
          %s1532 = sshll.u32 [#allocation53], 4
          %s1533 = int_to_ptr.vmem [resolvable:$true] %s1532
          %1535 = dma.hbm_to_vmem [thread:$0]  %s77, 16, %s1533, [#allocation52]
        $region164: #{encoder1diff_forward.1} parent=11 // pred_fallthru
          _
        // Predicated region
        $region165: #{encoder1diff_forward.1} parent=11 // pred_check
          %p1536 = pneg %p966
        $region166: #{encoder1diff_forward.1} parent=11 // pred_check_branch
          %1538 = sbr.rel (%p1536) target = $region168
        $region167: #{encoder1diff_forward.1} parent=11 // pred_region
          %s1540 = ssub.s32 16, 16
          %1541 = vsyncadd [#allocation55], %s1540
          %s1543 = sshll.u32 [#allocation54], 4
          %s1544 = int_to_ptr.vmem [resolvable:$true] %s1543
          %1546 = dma.hbm_to_vmem [thread:$0]  %s79, 16, %s1544, [#allocation55]
        $region168: #{encoder1diff_forward.1} parent=11 // pred_fallthru
          _
        // Predicated region
        $region169: #{encoder1diff_forward.1} parent=11 // pred_check
          %p1547 = pneg %p987
        $region170: #{encoder1diff_forward.1} parent=11 // pred_check_branch
          %1549 = sbr.rel (%p1547) target = $region172
        $region171: #{encoder1diff_forward.1} parent=11 // pred_region
          %s1551 = ssub.s32 16, 16
          %1552 = vsyncadd [#allocation55], %s1551
          %s1554 = sshll.u32 [#allocation56], 4
          %s1555 = int_to_ptr.vmem [resolvable:$true] %s1554
          %1557 = dma.hbm_to_vmem [thread:$0]  %s81, 16, %s1555, [#allocation55]
        $region172: #{encoder1diff_forward.1} parent=11 // pred_fallthru
          _
        // Predicated region
        $region173: #{encoder1diff_forward.1} parent=11 // pred_check
          %p1558 = pneg %p1008
        $region174: #{encoder1diff_forward.1} parent=11 // pred_check_branch
          %1560 = sbr.rel (%p1558) target = $region176
        $region175: #{encoder1diff_forward.1} parent=11 // pred_region
          _
        $region176: #{encoder1diff_forward.1} parent=11 // pred_fallthru
          _
        // Predicated region
        $region177: #{encoder1diff_forward.1} parent=11 // pred_check
          %p1561 = pneg %p1029
        $region178: #{encoder1diff_forward.1} parent=11 // pred_check_branch
          %1563 = sbr.rel (%p1561) target = $region180
        $region179: #{encoder1diff_forward.1} parent=11 // pred_region
          _
        $region180: #{encoder1diff_forward.1} parent=11 // pred_fallthru
          _
        // Predicated region
        $region181: #{encoder1diff_forward.1} parent=11 // pred_check
          %p1564 = pneg %p1050
        $region182: #{encoder1diff_forward.1} parent=11 // pred_check_branch
          %1566 = sbr.rel (%p1564) target = $region184
        $region183: #{encoder1diff_forward.1} parent=11 // pred_region
          _
        $region184: #{encoder1diff_forward.1} parent=11 // pred_fallthru
          _
        // Predicated region
        $region185: #{encoder1diff_forward.1} parent=11 // pred_check
          %p1567 = pneg %p1071
        $region186: #{encoder1diff_forward.1} parent=11 // pred_check_branch
          %1569 = sbr.rel (%p1567) target = $region188
        $region187: #{encoder1diff_forward.1} parent=11 // pred_region
          _
        $region188: #{encoder1diff_forward.1} parent=11 // pred_fallthru
          _
      $region12: #{encoder1diff_forward.1} parent=5 // pred_fallthru
        _
      %p1570 = scmp.lt.s32.totalorder %s121, 2
      // Predicated region
      $region189: #{encoder1diff_forward.1} parent=5 // pred_check
        %p1571 = pneg %p1570
      $region190: #{encoder1diff_forward.1} parent=5 // pred_check_branch
        %1573 = sbr.rel (%p1571) target = $region192
      $region191: #{encoder1diff_forward.1} parent=5 // pred_region
        // Predicated region
        $region193: #{encoder1diff_forward.1} parent=191 // pred_check
          %p1574 = pneg %p141
        $region194: #{encoder1diff_forward.1} parent=191 // pred_check_branch
          %1576 = sbr.rel (%p1574) target = $region196
        $region195: #{encoder1diff_forward.1} parent=191 // pred_region
          %p1577 = scmp.lt.s32.totalorder %s121, 1
          %s1578 = scalar_select %p1577, %s121, 1
          %s1579 = smul.addr %s1578, 2
          %s1580 = smul.addr %s1579, 8
          %s1581 = scalar_lea.vmem %s1, %s1580
        $region196: #{encoder1diff_forward.1} parent=191 // pred_fallthru
          _
      $region192: #{encoder1diff_forward.1} parent=5 // pred_fallthru
        _
      %p1582 = scmp.le.s32.totalorder 1, %s121
      %p1583 = scmp.lt.s32.totalorder %s121, 3
      %p1584 = pnand %p1582, %p1583
      %p1585 = pneg %p1584
      // Predicated region
      $region197: #{encoder1diff_forward.1} parent=5 // pred_check
        _
      $region198: #{encoder1diff_forward.1} parent=5 // pred_check_branch
        %1587 = sbr.rel (%p1584) target = $region200
      $region199: #{encoder1diff_forward.1} parent=5 // pred_region
        %s1588 = ssub.s32 %s121, 1
        // Predicated region
        $region201: #{encoder1diff_forward.1} parent=199 // pred_check
          %p1589 = pneg %p189
        $region202: #{encoder1diff_forward.1} parent=199 // pred_check_branch
          %1591 = sbr.rel (%p1589) target = $region204
        $region203: #{encoder1diff_forward.1} parent=199 // pred_region
          %1592 = dma.done [#allocation4], 192
        $region204: #{encoder1diff_forward.1} parent=199 // pred_fallthru
          _
        // Predicated region
        $region205: #{encoder1diff_forward.1} parent=199 // pred_check
          %p1593 = pneg %p210
        $region206: #{encoder1diff_forward.1} parent=199 // pred_check_branch
          %1595 = sbr.rel (%p1593) target = $region208
        $region207: #{encoder1diff_forward.1} parent=199 // pred_region
          %1596 = dma.done [#allocation7], 16
        $region208: #{encoder1diff_forward.1} parent=199 // pred_fallthru
          _
        // Predicated region
        $region209: #{encoder1diff_forward.1} parent=199 // pred_check
          %p1597 = pneg %p252
        $region210: #{encoder1diff_forward.1} parent=199 // pred_check_branch
          %1599 = sbr.rel (%p1597) target = $region212
        $region211: #{encoder1diff_forward.1} parent=199 // pred_region
          %1600 = dma.done [#allocation7], 16
        $region212: #{encoder1diff_forward.1} parent=199 // pred_fallthru
          _
        // Predicated region
        $region213: #{encoder1diff_forward.1} parent=199 // pred_check
          %p1601 = pneg %p273
        $region214: #{encoder1diff_forward.1} parent=199 // pred_check_branch
          %1603 = sbr.rel (%p1601) target = $region216
        $region215: #{encoder1diff_forward.1} parent=199 // pred_region
          %1604 = dma.done [#allocation10], 768
        $region216: #{encoder1diff_forward.1} parent=199 // pred_fallthru
          _
        // Predicated region
        $region217: #{encoder1diff_forward.1} parent=199 // pred_check
          %p1605 = pneg %p294
        $region218: #{encoder1diff_forward.1} parent=199 // pred_check_branch
          %1607 = sbr.rel (%p1605) target = $region220
        $region219: #{encoder1diff_forward.1} parent=199 // pred_region
          %1608 = dma.done [#allocation10], 16
        $region220: #{encoder1diff_forward.1} parent=199 // pred_fallthru
          _
        // Predicated region
        $region221: #{encoder1diff_forward.1} parent=199 // pred_check
          %p1609 = pneg %p315
        $region222: #{encoder1diff_forward.1} parent=199 // pred_check_branch
          %1611 = sbr.rel (%p1609) target = $region224
        $region223: #{encoder1diff_forward.1} parent=199 // pred_region
          %1612 = dma.done [#allocation13], 768
        $region224: #{encoder1diff_forward.1} parent=199 // pred_fallthru
          _
        // Predicated region
        $region225: #{encoder1diff_forward.1} parent=199 // pred_check
          %p1613 = pneg %p336
        $region226: #{encoder1diff_forward.1} parent=199 // pred_check_branch
          %1615 = sbr.rel (%p1613) target = $region228
        $region227: #{encoder1diff_forward.1} parent=199 // pred_region
          %1616 = dma.done [#allocation13], 16
        $region228: #{encoder1diff_forward.1} parent=199 // pred_fallthru
          _
        // Predicated region
        $region229: #{encoder1diff_forward.1} parent=199 // pred_check
          %p1617 = pneg %p357
        $region230: #{encoder1diff_forward.1} parent=199 // pred_check_branch
          %1619 = sbr.rel (%p1617) target = $region232
        $region231: #{encoder1diff_forward.1} parent=199 // pred_region
          %1620 = dma.done [#allocation16], 16
        $region232: #{encoder1diff_forward.1} parent=199 // pred_fallthru
          _
        // Predicated region
        $region233: #{encoder1diff_forward.1} parent=199 // pred_check
          %p1621 = pneg %p378
        $region234: #{encoder1diff_forward.1} parent=199 // pred_check_branch
          %1623 = sbr.rel (%p1621) target = $region236
        $region235: #{encoder1diff_forward.1} parent=199 // pred_region
          %1624 = dma.done [#allocation16], 16
        $region236: #{encoder1diff_forward.1} parent=199 // pred_fallthru
          _
        // Predicated region
        $region237: #{encoder1diff_forward.1} parent=199 // pred_check
          %p1625 = pneg %p399
        $region238: #{encoder1diff_forward.1} parent=199 // pred_check_branch
          %1627 = sbr.rel (%p1625) target = $region240
        $region239: #{encoder1diff_forward.1} parent=199 // pred_region
          %1628 = dma.done [#allocation19], 16
        $region240: #{encoder1diff_forward.1} parent=199 // pred_fallthru
          _
        // Predicated region
        $region241: #{encoder1diff_forward.1} parent=199 // pred_check
          %p1629 = pneg %p420
        $region242: #{encoder1diff_forward.1} parent=199 // pred_check_branch
          %1631 = sbr.rel (%p1629) target = $region244
        $region243: #{encoder1diff_forward.1} parent=199 // pred_region
          %1632 = dma.done [#allocation19], 16
        $region244: #{encoder1diff_forward.1} parent=199 // pred_fallthru
          _
        // Predicated region
        $region245: #{encoder1diff_forward.1} parent=199 // pred_check
          %p1633 = pneg %p441
        $region246: #{encoder1diff_forward.1} parent=199 // pred_check_branch
          %1635 = sbr.rel (%p1633) target = $region248
        $region247: #{encoder1diff_forward.1} parent=199 // pred_region
          %1636 = dma.done [#allocation22], 768
        $region248: #{encoder1diff_forward.1} parent=199 // pred_fallthru
          _
        // Predicated region
        $region249: #{encoder1diff_forward.1} parent=199 // pred_check
          %p1637 = pneg %p462
        $region250: #{encoder1diff_forward.1} parent=199 // pred_check_branch
          %1639 = sbr.rel (%p1637) target = $region252
        $region251: #{encoder1diff_forward.1} parent=199 // pred_region
          %1640 = dma.done [#allocation22], 16
        $region252: #{encoder1diff_forward.1} parent=199 // pred_fallthru
          _
        // Predicated region
        $region253: #{encoder1diff_forward.1} parent=199 // pred_check
          %p1641 = pneg %p483
        $region254: #{encoder1diff_forward.1} parent=199 // pred_check_branch
          %1643 = sbr.rel (%p1641) target = $region256
        $region255: #{encoder1diff_forward.1} parent=199 // pred_region
          %1644 = dma.done [#allocation25], 768
        $region256: #{encoder1diff_forward.1} parent=199 // pred_fallthru
          _
        // Predicated region
        $region257: #{encoder1diff_forward.1} parent=199 // pred_check
          %p1645 = pneg %p504
        $region258: #{encoder1diff_forward.1} parent=199 // pred_check_branch
          %1647 = sbr.rel (%p1645) target = $region260
        $region259: #{encoder1diff_forward.1} parent=199 // pred_region
          %1648 = dma.done [#allocation25], 16
        $region260: #{encoder1diff_forward.1} parent=199 // pred_fallthru
          _
        // Predicated region
        $region261: #{encoder1diff_forward.1} parent=199 // pred_check
          %p1649 = pneg %p525
        $region262: #{encoder1diff_forward.1} parent=199 // pred_check_branch
          %1651 = sbr.rel (%p1649) target = $region264
        $region263: #{encoder1diff_forward.1} parent=199 // pred_region
          %1652 = dma.done [#allocation28], 16
        $region264: #{encoder1diff_forward.1} parent=199 // pred_fallthru
          _
        // Predicated region
        $region265: #{encoder1diff_forward.1} parent=199 // pred_check
          %p1653 = pneg %p546
        $region266: #{encoder1diff_forward.1} parent=199 // pred_check_branch
          %1655 = sbr.rel (%p1653) target = $region268
        $region267: #{encoder1diff_forward.1} parent=199 // pred_region
          %1656 = dma.done [#allocation28], 16
        $region268: #{encoder1diff_forward.1} parent=199 // pred_fallthru
          _
        // Predicated region
        $region269: #{encoder1diff_forward.1} parent=199 // pred_check
          %p1657 = pneg %p567
        $region270: #{encoder1diff_forward.1} parent=199 // pred_check_branch
          %1659 = sbr.rel (%p1657) target = $region272
        $region271: #{encoder1diff_forward.1} parent=199 // pred_region
          %1660 = dma.done [#allocation31], 16
        $region272: #{encoder1diff_forward.1} parent=199 // pred_fallthru
          _
        // Predicated region
        $region273: #{encoder1diff_forward.1} parent=199 // pred_check
          %p1661 = pneg %p588
        $region274: #{encoder1diff_forward.1} parent=199 // pred_check_branch
          %1663 = sbr.rel (%p1661) target = $region276
        $region275: #{encoder1diff_forward.1} parent=199 // pred_region
          %1664 = dma.done [#allocation31], 16
        $region276: #{encoder1diff_forward.1} parent=199 // pred_fallthru
          _
        // Predicated region
        $region277: #{encoder1diff_forward.1} parent=199 // pred_check
          %p1665 = pneg %p609
        $region278: #{encoder1diff_forward.1} parent=199 // pred_check_branch
          %1667 = sbr.rel (%p1665) target = $region280
        $region279: #{encoder1diff_forward.1} parent=199 // pred_region
          %1668 = dma.done [#allocation34], 768
        $region280: #{encoder1diff_forward.1} parent=199 // pred_fallthru
          _
        // Predicated region
        $region281: #{encoder1diff_forward.1} parent=199 // pred_check
          %p1669 = pneg %p630
        $region282: #{encoder1diff_forward.1} parent=199 // pred_check_branch
          %1671 = sbr.rel (%p1669) target = $region284
        $region283: #{encoder1diff_forward.1} parent=199 // pred_region
          %1672 = dma.done [#allocation34], 16
        $region284: #{encoder1diff_forward.1} parent=199 // pred_fallthru
          _
        // Predicated region
        $region285: #{encoder1diff_forward.1} parent=199 // pred_check
          %p1673 = pneg %p651
        $region286: #{encoder1diff_forward.1} parent=199 // pred_check_branch
          %1675 = sbr.rel (%p1673) target = $region288
        $region287: #{encoder1diff_forward.1} parent=199 // pred_region
          %1676 = dma.done [#allocation37], 768
        $region288: #{encoder1diff_forward.1} parent=199 // pred_fallthru
          _
        // Predicated region
        $region289: #{encoder1diff_forward.1} parent=199 // pred_check
          %p1677 = pneg %p672
        $region290: #{encoder1diff_forward.1} parent=199 // pred_check_branch
          %1679 = sbr.rel (%p1677) target = $region292
        $region291: #{encoder1diff_forward.1} parent=199 // pred_region
          %1680 = dma.done [#allocation37], 16
        $region292: #{encoder1diff_forward.1} parent=199 // pred_fallthru
          _
        // Predicated region
        $region293: #{encoder1diff_forward.1} parent=199 // pred_check
          %p1681 = pneg %p714
        $region294: #{encoder1diff_forward.1} parent=199 // pred_check_branch
          %1683 = sbr.rel (%p1681) target = $region296
        $region295: #{encoder1diff_forward.1} parent=199 // pred_region
          %1684 = dma.done [#allocation40], 16
        $region296: #{encoder1diff_forward.1} parent=199 // pred_fallthru
          _
        // Predicated region
        $region297: #{encoder1diff_forward.1} parent=199 // pred_check
          %p1685 = pneg %p735
        $region298: #{encoder1diff_forward.1} parent=199 // pred_check_branch
          %1687 = sbr.rel (%p1685) target = $region300
        $region299: #{encoder1diff_forward.1} parent=199 // pred_region
          %1688 = dma.done [#allocation40], 256
        $region300: #{encoder1diff_forward.1} parent=199 // pred_fallthru
          _
        // Predicated region
        $region301: #{encoder1diff_forward.1} parent=199 // pred_check
          %p1689 = pneg %p756
        $region302: #{encoder1diff_forward.1} parent=199 // pred_check_branch
          %1691 = sbr.rel (%p1689) target = $region304
        $region303: #{encoder1diff_forward.1} parent=199 // pred_region
          %1692 = dma.done [#allocation43], 16
        $region304: #{encoder1diff_forward.1} parent=199 // pred_fallthru
          _
        // Predicated region
        $region305: #{encoder1diff_forward.1} parent=199 // pred_check
          %p1693 = pneg %p777
        $region306: #{encoder1diff_forward.1} parent=199 // pred_check_branch
          %1695 = sbr.rel (%p1693) target = $region308
        $region307: #{encoder1diff_forward.1} parent=199 // pred_region
          %1696 = dma.done [#allocation43], 16
        $region308: #{encoder1diff_forward.1} parent=199 // pred_fallthru
          _
        // Predicated region
        $region309: #{encoder1diff_forward.1} parent=199 // pred_check
          %p1697 = pneg %p798
        $region310: #{encoder1diff_forward.1} parent=199 // pred_check_branch
          %1699 = sbr.rel (%p1697) target = $region312
        $region311: #{encoder1diff_forward.1} parent=199 // pred_region
          %1700 = dma.done [#allocation46], 16
        $region312: #{encoder1diff_forward.1} parent=199 // pred_fallthru
          _
        // Predicated region
        $region313: #{encoder1diff_forward.1} parent=199 // pred_check
          %p1701 = pneg %p861
        $region314: #{encoder1diff_forward.1} parent=199 // pred_check_branch
          %1703 = sbr.rel (%p1701) target = $region316
        $region315: #{encoder1diff_forward.1} parent=199 // pred_region
          %1704 = dma.done [#allocation46], 1536
        $region316: #{encoder1diff_forward.1} parent=199 // pred_fallthru
          _
        // Predicated region
        $region317: #{encoder1diff_forward.1} parent=199 // pred_check
          %p1705 = pneg %p882
        $region318: #{encoder1diff_forward.1} parent=199 // pred_check_branch
          %1707 = sbr.rel (%p1705) target = $region320
        $region319: #{encoder1diff_forward.1} parent=199 // pred_region
          %1708 = dma.done [#allocation49], 16
        $region320: #{encoder1diff_forward.1} parent=199 // pred_fallthru
          _
        // Predicated region
        $region321: #{encoder1diff_forward.1} parent=199 // pred_check
          %p1709 = pneg %p903
        $region322: #{encoder1diff_forward.1} parent=199 // pred_check_branch
          %1711 = sbr.rel (%p1709) target = $region324
        $region323: #{encoder1diff_forward.1} parent=199 // pred_region
          %1712 = dma.done [#allocation49], 1536
        $region324: #{encoder1diff_forward.1} parent=199 // pred_fallthru
          _
        // Predicated region
        $region325: #{encoder1diff_forward.1} parent=199 // pred_check
          %p1713 = pneg %p924
        $region326: #{encoder1diff_forward.1} parent=199 // pred_check_branch
          %1715 = sbr.rel (%p1713) target = $region328
        $region327: #{encoder1diff_forward.1} parent=199 // pred_region
          %1716 = dma.done [#allocation52], 16
        $region328: #{encoder1diff_forward.1} parent=199 // pred_fallthru
          _
        // Predicated region
        $region329: #{encoder1diff_forward.1} parent=199 // pred_check
          %p1717 = pneg %p945
        $region330: #{encoder1diff_forward.1} parent=199 // pred_check_branch
          %1719 = sbr.rel (%p1717) target = $region332
        $region331: #{encoder1diff_forward.1} parent=199 // pred_region
          %1720 = dma.done [#allocation52], 16
        $region332: #{encoder1diff_forward.1} parent=199 // pred_fallthru
          _
        // Predicated region
        $region333: #{encoder1diff_forward.1} parent=199 // pred_check
          %p1721 = pneg %p966
        $region334: #{encoder1diff_forward.1} parent=199 // pred_check_branch
          %1723 = sbr.rel (%p1721) target = $region336
        $region335: #{encoder1diff_forward.1} parent=199 // pred_region
          %1724 = dma.done [#allocation55], 16
        $region336: #{encoder1diff_forward.1} parent=199 // pred_fallthru
          _
        // Predicated region
        $region337: #{encoder1diff_forward.1} parent=199 // pred_check
          %p1725 = pneg %p987
        $region338: #{encoder1diff_forward.1} parent=199 // pred_check_branch
          %1727 = sbr.rel (%p1725) target = $region340
        $region339: #{encoder1diff_forward.1} parent=199 // pred_region
          %1728 = dma.done [#allocation55], 16
        $region340: #{encoder1diff_forward.1} parent=199 // pred_fallthru
          _
        %p1729 = scmp.lt.s32.totalorder %s126, 1
        %s1730 = scalar_select %p1729, %s126, 1
        %s1731 = smul.addr %s1730, 2
        %s1732 = smul.addr %s1731, 8
        %s1733 = scalar_lea.vmem %s1, %s1732
        %p1734 = pneg %p147
        %p1735 = pneg %p144
        %p1736 = pneg %p168
        %p1737 = pneg %p165
        %p1738 = pneg %p189
        %p1739 = pneg %p186
        %p1740 = pneg %p210
        %p1741 = pneg %p207
        %p1742 = pneg %p231
        %p1743 = pneg %p228
        %p1744 = pneg %p252
        %p1745 = pneg %p249
        %p1746 = pneg %p273
        %p1747 = pneg %p270
        %p1748 = pneg %p294
        %p1749 = pneg %p291
        %p1750 = pneg %p315
        %p1751 = pneg %p312
        %p1752 = pneg %p336
        %p1753 = pneg %p333
        %p1754 = pneg %p357
        %p1755 = pneg %p354
        %p1756 = pneg %p378
        %p1757 = pneg %p375
        %p1758 = pneg %p399
        %p1759 = pneg %p396
        %p1760 = pneg %p420
        %p1761 = pneg %p417
        %p1762 = pneg %p441
        %p1763 = pneg %p438
        %p1764 = pneg %p462
        %p1765 = pneg %p459
        %p1766 = pneg %p483
        %p1767 = pneg %p480
        %p1768 = pneg %p504
        %p1769 = pneg %p501
        %p1770 = pneg %p525
        %p1771 = pneg %p522
        %p1772 = pneg %p546
        %p1773 = pneg %p543
        %p1774 = pneg %p567
        %p1775 = pneg %p564
        %p1776 = pneg %p588
        %p1777 = pneg %p585
        %p1778 = pneg %p609
        %p1779 = pneg %p606
        %p1780 = pneg %p630
        %p1781 = pneg %p627
        %p1782 = pneg %p651
        %p1783 = pneg %p648
        %p1784 = pneg %p672
        %p1785 = pneg %p669
        %p1786 = pneg %p693
        %p1787 = pneg %p690
        %p1788 = pneg %p714
        %p1789 = pneg %p711
        %p1790 = pneg %p735
        %p1791 = pneg %p732
        %p1792 = pneg %p756
        %p1793 = pneg %p753
        %p1794 = pneg %p777
        %p1795 = pneg %p774
        %p1796 = pneg %p798
        %p1797 = pneg %p795
        %p1798 = pneg %p819
        %p1799 = pneg %p816
        %p1800 = pneg %p840
        %p1801 = pneg %p837
        %p1802 = pneg %p861
        %p1803 = pneg %p858
        %p1804 = pneg %p882
        %p1805 = pneg %p879
        %p1806 = pneg %p903
        %p1807 = pneg %p900
        %p1808 = pneg %p924
        %p1809 = pneg %p921
        %p1810 = pneg %p945
        %p1811 = pneg %p942
        %p1812 = pneg %p966
        %p1813 = pneg %p963
        %p1814 = pneg %p987
        %p1815 = pneg %p984
        %p1816 = pneg %p1008
        %p1817 = pneg %p1005
        %p1818 = pneg %p1029
        %p1819 = pneg %p1026
        %p1820 = pneg %p1050
        %p1821 = pneg %p1047
        %p1822 = pneg %p1071
        %p1823 = pneg %p1068
        %p1824 = pneg %p1097
        %p1825 = pneg %p1094
        %s1826 = sand.u32 %s1084, 1
        %s1827 = scalar_lea.sflag [#allocation5], %s1826
        %s1828 = sand.u32 %s1084, 1
        %s1829 = smul.addr %s1828, 8
        %s1830 = scalar_lea.vmem [#allocation57], %s1829
        %p1831 = pneg %p1123
        %p1832 = pneg %p1120
        %p1833 = scmp.lt.s32.totalorder %s126, 1
        %s1834 = scalar_select %p1833, %s126, 1
        %s1835 = smul.addr %s1834, 8
        %s1836 = scalar_lea.vmem %s93, %s1835
        %p1837 = scmp.lt.s32.totalorder %s126, 1
        %s1838 = scalar_select %p1837, %s126, 1
        %s1839 = smul.addr %s1838, 2
        %s1840 = smul.addr %s1839, 8
        %s1841 = scalar_lea.vmem %s1, %s1840
        %p1842 = scmp.lt.s32.totalorder %s126, 1
        %s1843 = scalar_select %p1842, %s126, 1
        %s1844 = smul.addr %s1843, 8
        %s1845 = scalar_lea.vmem %s93, %s1844
        %v1846 = vld [vmem:[%s1841] sm:$0xff]
        %v1847 = vld [vmem:[%s1841 + $0x8] sm:$0xff]
        %vm1848 = vcmask 261120
        %1849 = vst.msk [vmem:[#allocation2] sm:$0xff] %vm1848, 0.0
        %1850 = vst.msk [vmem:[#allocation2 + $0x8] sm:$0xff] %vm1848, 0.0
        %vm1851 = vcmask 254976
        %1852 = vst.msk [vmem:[#allocation2 + $0x10] sm:$0x3] %vm1851, 0.0
        %vm1853 = vcmask 31744
        %1854 = vst.msk [vmem:[#allocation2 + $0x1] sm:$0xff] %vm1853, %v1846
        %1855 = vst.msk [vmem:[#allocation2 + $0x9] sm:$0xff] %vm1853, %v1847
        %v1856 = vld [vmem:[#allocation2] sm:$0xff]
        %v1857 = vld [vmem:[#allocation2 + $0x8] sm:$0xff]
        %v1858 = vld [vmem:[#allocation3] sm:$0xf]
        %s1859 = scalar_lea.vmem [#allocation3], 4
        %v1860 = vld [vmem:[%s1859] sm:$0xf]
        %v1862 = vsel %vm1853, %v1846, 0
        %v1865 = vsel %vm1853, %v1847, 0
        %vm1867 = vcmask 1043456
        %v1869 = vsel %vm1867, %v1860, 0
        %1871 = vmatprep.subr.mxu0 0.0
        %1872 = vmatpush1.msra.mxu0 %v1869
        %1873 = vmatprep.subr.mxu0 0.0
        %1874 = vmatpush1.msra.mxu0 0.0
        %1875 = vmatprep.subr.mxu0 0.0
        %1876 = vmatpush1.msra.mxu0 0.0
        %1877 = vmatprep.subr.mxu0 0.0
        %1878 = vmatpush1.msra.mxu0 0.0
        %1879 = vmatprep.subr.mxu0 0.0
        %1880 = vmatpush1.msra.mxu0 0.0
        %1881 = vmatprep.subr.mxu0 0.0
        %1882 = vmatpush1.msra.mxu0 0.0
        %1883 = vmatprep.subr.mxu0 0.0
        %1884 = vmatpush1.msra.mxu0 0.0
        %1885 = vmatprep.subr.mxu0 0.0
        %1886 = vmatpush1.msra.mxu0 0.0
        %1887 = vmatprep.subr.mxu0 0.0
        %1888 = vmatpush1.msra.mxu0 0.0
        %1889 = vmatprep.subr.mxu0 0.0
        %1890 = vmatpush1.msra.mxu0 0.0
        %1891 = vmatprep.subr.mxu0 0.0
        %1892 = vmatpush1.msra.mxu0 0.0
        %1893 = vmatprep.subr.mxu0 0.0
        %1894 = vmatpush1.msra.mxu0 0.0
        %1895 = vmatprep.subr.mxu0 0.0
        %1896 = vmatpush1.msra.mxu0 0.0
        %1897 = vmatprep.subr.mxu0 0.0
        %1898 = vmatpush1.msra.mxu0 0.0
        %1899 = vmatprep.subr.mxu0 0.0
        %1900 = vmatpush1.msra.mxu0 0.0
        %1901 = vmatprep.subr.mxu0 0.0
        %1902 = vmatpush1.msra.mxu0 0.0
        %1903 = vmatprep.subr.mxu0 0.0
        %1904 = vmatpush1.msra.mxu0 0.0
        %1905 = vmatprep.subr.mxu0 0.0
        %1906 = vmatpush1.msra.mxu0 0.0
        %1907 = vmatprep.subr.mxu0 0.0
        %1908 = vmatpush1.msra.mxu0 0.0
        %1909 = vmatprep.subr.mxu0 0.0
        %1910 = vmatpush1.msra.mxu0 0.0
        %1911 = vmatprep.subr.mxu0 0.0
        %1912 = vmatpush1.msra.mxu0 0.0
        %1913 = vmatprep.subr.mxu0 0.0
        %1914 = vmatpush1.msra.mxu0 0.0
        %1915 = vmatprep.subr.mxu0 0.0
        %1916 = vmatpush1.msra.mxu0 0.0
        %1917 = vmatprep.subr.mxu0 0.0
        %1918 = vmatpush1.msra.mxu0 0.0
        %1919 = vmatprep.subr.mxu0 0.0
        %1920 = vmatpush1.msra.mxu0 0.0
        %1921 = vmatprep.subr.mxu0 0.0
        %1922 = vmatpush1.msra.mxu0 0.0
        %1923 = vmatprep.subr.mxu0 0.0
        %1924 = vmatpush1.msra.mxu0 0.0
        %1925 = vmatprep.subr.mxu0 0.0
        %1926 = vmatpush1.msra.mxu0 0.0
        %1927 = vmatprep.subr.mxu0 0.0
        %1928 = vmatpush1.msra.mxu0 0.0
        %1929 = vmatprep.subr.mxu0 0.0
        %1930 = vmatpush1.msra.mxu0 0.0
        %1931 = vmatprep.subr.mxu0 0.0
        %1932 = vmatpush1.msra.mxu0 0.0
        %1933 = vmatprep.subr.mxu0 0.0
        %1934 = vmatpush1.msra.mxu0 0.0
        %1935 = vmatprep.mubr.f32.mxu0 0.0
        %1936 = vmatmul.mubr.f32.gmra.mrb[0].mxu0 %v1862
        %v1937 = vpop.f32.mrb[0].mxu0
        %v1938 = vadd.f32 0.0, %v1937
        %v1939 = vpop.f32.mrb[0].mxu0
        %1940 = vmatprep.mubr.f32.mxu0 0.0
        %1941 = vmatmul.mubr.f32.gmra.mrb[0].mxu0 %v1865
        %v1942 = vpop.f32.mrb[0].mxu0
        %v1943 = vadd.f32 0.0, %v1942
        %v1944 = vpop.f32.mrb[0].mxu0
        %1945 = vdwg.mxu0
        %v1947 = vsel %vm1853, %v1856, 0
        %v1950 = vsel %vm1853, %v1857, 0
        %v1953 = vsel %vm1867, %v1858, 0
        %1955 = vmatprep.subr.mxu0 0.0
        %1956 = vmatpush1.msra.mxu0 %v1953
        %1957 = vmatprep.subr.mxu0 0.0
        %1958 = vmatpush1.msra.mxu0 0.0
        %1959 = vmatprep.subr.mxu0 0.0
        %1960 = vmatpush1.msra.mxu0 0.0
        %1961 = vmatprep.subr.mxu0 0.0
        %1962 = vmatpush1.msra.mxu0 0.0
        %1963 = vmatprep.subr.mxu0 0.0
        %1964 = vmatpush1.msra.mxu0 0.0
        %1965 = vmatprep.subr.mxu0 0.0
        %1966 = vmatpush1.msra.mxu0 0.0
        %1967 = vmatprep.subr.mxu0 0.0
        %1968 = vmatpush1.msra.mxu0 0.0
        %1969 = vmatprep.subr.mxu0 0.0
        %1970 = vmatpush1.msra.mxu0 0.0
        %1971 = vmatprep.subr.mxu0 0.0
        %1972 = vmatpush1.msra.mxu0 0.0
        %1973 = vmatprep.subr.mxu0 0.0
        %1974 = vmatpush1.msra.mxu0 0.0
        %1975 = vmatprep.subr.mxu0 0.0
        %1976 = vmatpush1.msra.mxu0 0.0
        %1977 = vmatprep.subr.mxu0 0.0
        %1978 = vmatpush1.msra.mxu0 0.0
        %1979 = vmatprep.subr.mxu0 0.0
        %1980 = vmatpush1.msra.mxu0 0.0
        %1981 = vmatprep.subr.mxu0 0.0
        %1982 = vmatpush1.msra.mxu0 0.0
        %1983 = vmatprep.subr.mxu0 0.0
        %1984 = vmatpush1.msra.mxu0 0.0
        %1985 = vmatprep.subr.mxu0 0.0
        %1986 = vmatpush1.msra.mxu0 0.0
        %1987 = vmatprep.subr.mxu0 0.0
        %1988 = vmatpush1.msra.mxu0 0.0
        %1989 = vmatprep.subr.mxu0 0.0
        %1990 = vmatpush1.msra.mxu0 0.0
        %1991 = vmatprep.subr.mxu0 0.0
        %1992 = vmatpush1.msra.mxu0 0.0
        %1993 = vmatprep.subr.mxu0 0.0
        %1994 = vmatpush1.msra.mxu0 0.0
        %1995 = vmatprep.subr.mxu0 0.0
        %1996 = vmatpush1.msra.mxu0 0.0
        %1997 = vmatprep.subr.mxu0 0.0
        %1998 = vmatpush1.msra.mxu0 0.0
        %1999 = vmatprep.subr.mxu0 0.0
        %2000 = vmatpush1.msra.mxu0 0.0
        %2001 = vmatprep.subr.mxu0 0.0
        %2002 = vmatpush1.msra.mxu0 0.0
        %2003 = vmatprep.subr.mxu0 0.0
        %2004 = vmatpush1.msra.mxu0 0.0
        %2005 = vmatprep.subr.mxu0 0.0
        %2006 = vmatpush1.msra.mxu0 0.0
        %2007 = vmatprep.subr.mxu0 0.0
        %2008 = vmatpush1.msra.mxu0 0.0
        %2009 = vmatprep.subr.mxu0 0.0
        %2010 = vmatpush1.msra.mxu0 0.0
        %2011 = vmatprep.subr.mxu0 0.0
        %2012 = vmatpush1.msra.mxu0 0.0
        %2013 = vmatprep.subr.mxu0 0.0
        %2014 = vmatpush1.msra.mxu0 0.0
        %2015 = vmatprep.subr.mxu0 0.0
        %2016 = vmatpush1.msra.mxu0 0.0
        %2017 = vmatprep.subr.mxu0 0.0
        %2018 = vmatpush1.msra.mxu0 0.0
        %2019 = vmatprep.mubr.f32.mxu0 0.0
        %2020 = vmatmul.mubr.f32.gmra.mrb[0].mxu0 %v1947
        %v2021 = vpop.f32.mrb[0].mxu0
        %v2022 = vadd.f32 %v1938, %v2021
        %v2023 = vpop.f32.mrb[0].mxu0
        %2024 = vmatprep.mubr.f32.mxu0 0.0
        %2025 = vmatmul.mubr.f32.gmra.mrb[0].mxu0 %v1950
        %v2026 = vpop.f32.mrb[0].mxu0
        %v2027 = vadd.f32 %v1943, %v2026
        %v2028 = vpop.f32.mrb[0].mxu0
        %2029 = vdwg.mxu0
        %v2030 = vld [vmem:[#allocation2 + $0x2] sm:$0xff]
        %v2031 = vld [vmem:[#allocation2 + $0xa] sm:$0xff]
        %s2032 = scalar_lea.vmem [#allocation3], 8
        %v2033 = vld [vmem:[%s2032] sm:$0xf]
        %v2035 = vsel %vm1853, %v2030, 0
        %v2038 = vsel %vm1853, %v2031, 0
        %v2041 = vsel %vm1867, %v2033, 0
        %2043 = vmatprep.subr.mxu0 0.0
        %2044 = vmatpush1.msra.mxu0 %v2041
        %2045 = vmatprep.subr.mxu0 0.0
        %2046 = vmatpush1.msra.mxu0 0.0
        %2047 = vmatprep.subr.mxu0 0.0
        %2048 = vmatpush1.msra.mxu0 0.0
        %2049 = vmatprep.subr.mxu0 0.0
        %2050 = vmatpush1.msra.mxu0 0.0
        %2051 = vmatprep.subr.mxu0 0.0
        %2052 = vmatpush1.msra.mxu0 0.0
        %2053 = vmatprep.subr.mxu0 0.0
        %2054 = vmatpush1.msra.mxu0 0.0
        %2055 = vmatprep.subr.mxu0 0.0
        %2056 = vmatpush1.msra.mxu0 0.0
        %2057 = vmatprep.subr.mxu0 0.0
        %2058 = vmatpush1.msra.mxu0 0.0
        %2059 = vmatprep.subr.mxu0 0.0
        %2060 = vmatpush1.msra.mxu0 0.0
        %2061 = vmatprep.subr.mxu0 0.0
        %2062 = vmatpush1.msra.mxu0 0.0
        %2063 = vmatprep.subr.mxu0 0.0
        %2064 = vmatpush1.msra.mxu0 0.0
        %2065 = vmatprep.subr.mxu0 0.0
        %2066 = vmatpush1.msra.mxu0 0.0
        %2067 = vmatprep.subr.mxu0 0.0
        %2068 = vmatpush1.msra.mxu0 0.0
        %2069 = vmatprep.subr.mxu0 0.0
        %2070 = vmatpush1.msra.mxu0 0.0
        %2071 = vmatprep.subr.mxu0 0.0
        %2072 = vmatpush1.msra.mxu0 0.0
        %2073 = vmatprep.subr.mxu0 0.0
        %2074 = vmatpush1.msra.mxu0 0.0
        %2075 = vmatprep.subr.mxu0 0.0
        %2076 = vmatpush1.msra.mxu0 0.0
        %2077 = vmatprep.subr.mxu0 0.0
        %2078 = vmatpush1.msra.mxu0 0.0
        %2079 = vmatprep.subr.mxu0 0.0
        %2080 = vmatpush1.msra.mxu0 0.0
        %2081 = vmatprep.subr.mxu0 0.0
        %2082 = vmatpush1.msra.mxu0 0.0
        %2083 = vmatprep.subr.mxu0 0.0
        %2084 = vmatpush1.msra.mxu0 0.0
        %2085 = vmatprep.subr.mxu0 0.0
        %2086 = vmatpush1.msra.mxu0 0.0
        %2087 = vmatprep.subr.mxu0 0.0
        %2088 = vmatpush1.msra.mxu0 0.0
        %2089 = vmatprep.subr.mxu0 0.0
        %2090 = vmatpush1.msra.mxu0 0.0
        %2091 = vmatprep.subr.mxu0 0.0
        %2092 = vmatpush1.msra.mxu0 0.0
        %2093 = vmatprep.subr.mxu0 0.0
        %2094 = vmatpush1.msra.mxu0 0.0
        %2095 = vmatprep.subr.mxu0 0.0
        %2096 = vmatpush1.msra.mxu0 0.0
        %2097 = vmatprep.subr.mxu0 0.0
        %2098 = vmatpush1.msra.mxu0 0.0
        %2099 = vmatprep.subr.mxu0 0.0
        %2100 = vmatpush1.msra.mxu0 0.0
        %2101 = vmatprep.subr.mxu0 0.0
        %2102 = vmatpush1.msra.mxu0 0.0
        %2103 = vmatprep.subr.mxu0 0.0
        %2104 = vmatpush1.msra.mxu0 0.0
        %2105 = vmatprep.subr.mxu0 0.0
        %2106 = vmatpush1.msra.mxu0 0.0
        %2107 = vmatprep.mubr.f32.mxu0 0.0
        %2108 = vmatmul.mubr.f32.gmra.mrb[0].mxu0 %v2035
        %v2109 = vpop.f32.mrb[0].mxu0
        %v2110 = vadd.f32 0.0, %v2109
        %v2111 = vpop.f32.mrb[0].mxu0
        %2112 = vmatprep.mubr.f32.mxu0 0.0
        %2113 = vmatmul.mubr.f32.gmra.mrb[0].mxu0 %v2038
        %v2114 = vpop.f32.mrb[0].mxu0
        %v2115 = vadd.f32 0.0, %v2114
        %v2116 = vpop.f32.mrb[0].mxu0
        %2117 = vdwg.mxu0
        %v2118 = vadd.f32 %v2022, %v2110
        %v2119 = vadd.f32 %v2027, %v2115
        %v2120 = vld [vmem:[%s3] sm:$0x1]
        %v2122 = vlaneseq
        %v2123 = vshrl.u32 %v2122, 7
        %v2124 = vsub.s32 0, %v2123
        %v2125 = vrot.slane %v2120, %v2124
        %v2127 = vadd.f32 %v2118, %v2125
        %v2128 = vadd.f32 %v2119, %v2125
        %v2129 = vlaneseq
        %v2130 = vshrl.u32 %v2129, 7
        %v2131 = vadd.s32 %v2130, 8
        %v2132 = vlaneseq
        %v2133 = vand.u32 %v2132, 127
        %v2134 = vmul.u32 %v2133, 4
        %vm2135 = vcmp.ge.s32.totalorder %v2130, %v2134
        %vm2136 = vcmp.ge.s32.totalorder %v2131, %v2134
        %v2137 = vadd.s32 %v2133, 1
        %v2138 = vmul.u32 %v2137, 4
        %vm2139 = vcmp.lt.s32.totalorder %v2130, %v2138
        %vm2140 = vcmp.lt.s32.totalorder %v2131, %v2138
        %vm2141 = vmand %vm2135, %vm2139
        %vm2142 = vmand %vm2136, %vm2140
        %v2143 = vsel %vm2141, 1, 0
        %v2144 = vsel %vm2142, 1, 0
        %v2145 = vcvt.s32.f32 %v2143
        %v2146 = vcvt.s32.f32 %v2144
        %v2147 = vmul.u32 %v2130, 4
        %vm2148 = vcmp.ge.s32.totalorder %v2133, %v2147
        %v2149 = vadd.s32 %v2130, 1
        %v2150 = vmul.u32 %v2149, 4
        %vm2151 = vcmp.lt.s32.totalorder %v2133, %v2150
        %vm2152 = vmand %vm2148, %vm2151
        %v2153 = vsel %vm2152, 1, 0
        %v2154 = vcvt.s32.f32 %v2153
        %vm2155 = vcmask 130048
        %v2156 = vsel %vm2155, %v2127, 0.0
        %v2157 = vsel %vm2155, %v2128, 0.0
        %v2158 = vadd.f32 %v2156, %v2157
        %v2159 = vrot.slane %v2158, 4
        %v2160 = vadd.f32 %v2158, %v2159
        %v2161 = vrot.slane %v2160, 2
        %v2162 = vadd.f32 %v2160, %v2161
        %v2163 = vrot.slane %v2162, 1
        %v2164 = vadd.f32 %v2162, %v2163
        %v2166 = vsel %vm2155, %v2164, 0
        %2168 = vmatprep.subr.mxu0 0.0
        %2169 = vmatpush1.msra.mxu0 %v2145
        %2170 = vmatprep.subr.mxu0 0.0
        %2171 = vmatpush1.msra.mxu0 %v2146
        %2172 = vmatprep.subr.mxu0 0.0
        %2173 = vmatpush1.msra.mxu0 0.0
        %2174 = vmatprep.subr.mxu0 0.0
        %2175 = vmatpush1.msra.mxu0 0.0
        %2176 = vmatprep.subr.mxu0 0.0
        %2177 = vmatpush1.msra.mxu0 0.0
        %2178 = vmatprep.subr.mxu0 0.0
        %2179 = vmatpush1.msra.mxu0 0.0
        %2180 = vmatprep.subr.mxu0 0.0
        %2181 = vmatpush1.msra.mxu0 0.0
        %2182 = vmatprep.subr.mxu0 0.0
        %2183 = vmatpush1.msra.mxu0 0.0
        %2184 = vmatprep.subr.mxu0 0.0
        %2185 = vmatpush1.msra.mxu0 0.0
        %2186 = vmatprep.subr.mxu0 0.0
        %2187 = vmatpush1.msra.mxu0 0.0
        %2188 = vmatprep.subr.mxu0 0.0
        %2189 = vmatpush1.msra.mxu0 0.0
        %2190 = vmatprep.subr.mxu0 0.0
        %2191 = vmatpush1.msra.mxu0 0.0
        %2192 = vmatprep.subr.mxu0 0.0
        %2193 = vmatpush1.msra.mxu0 0.0
        %2194 = vmatprep.subr.mxu0 0.0
        %2195 = vmatpush1.msra.mxu0 0.0
        %2196 = vmatprep.subr.mxu0 0.0
        %2197 = vmatpush1.msra.mxu0 0.0
        %2198 = vmatprep.subr.mxu0 0.0
        %2199 = vmatpush1.msra.mxu0 0.0
        %2200 = vmatprep.subr.mxu0 0.0
        %2201 = vmatpush1.msra.mxu0 0.0
        %2202 = vmatprep.subr.mxu0 0.0
        %2203 = vmatpush1.msra.mxu0 0.0
        %2204 = vmatprep.subr.mxu0 0.0
        %2205 = vmatpush1.msra.mxu0 0.0
        %2206 = vmatprep.subr.mxu0 0.0
        %2207 = vmatpush1.msra.mxu0 0.0
        %2208 = vmatprep.subr.mxu0 0.0
        %2209 = vmatpush1.msra.mxu0 0.0
        %2210 = vmatprep.subr.mxu0 0.0
        %2211 = vmatpush1.msra.mxu0 0.0
        %2212 = vmatprep.subr.mxu0 0.0
        %2213 = vmatpush1.msra.mxu0 0.0
        %2214 = vmatprep.subr.mxu0 0.0
        %2215 = vmatpush1.msra.mxu0 0.0
        %2216 = vmatprep.subr.mxu0 0.0
        %2217 = vmatpush1.msra.mxu0 0.0
        %2218 = vmatprep.subr.mxu0 0.0
        %2219 = vmatpush1.msra.mxu0 0.0
        %2220 = vmatprep.subr.mxu0 0.0
        %2221 = vmatpush1.msra.mxu0 0.0
        %2222 = vmatprep.subr.mxu0 0.0
        %2223 = vmatpush1.msra.mxu0 0.0
        %2224 = vmatprep.subr.mxu0 0.0
        %2225 = vmatpush1.msra.mxu0 0.0
        %2226 = vmatprep.subr.mxu0 0.0
        %2227 = vmatpush1.msra.mxu0 0.0
        %2228 = vmatprep.subr.mxu0 0.0
        %2229 = vmatpush1.msra.mxu0 0.0
        %2230 = vmatprep.subr.mxu0 0.0
        %2231 = vmatpush1.msra.mxu0 0.0
        %2232 = vmatprep.mubr.f32.mxu0 0.0
        %2233 = vmatmul.mubr.f32.gmra.mrb[0].mxu0 %v2166
        %v2234 = vpop.f32.mrb[0].mxu0
        %v2235 = vadd.f32 0.0, %v2234
        %v2236 = vpop.f32.mrb[0].mxu0
        %2237 = vdwg.mxu0
        %v2238 = vmul.f32 %v2235, 0.015625
        %v2240 = vsel %vm1853, %v2238, 0
        %v2243 = vsel %vm1867, %v2154, 0
        %2245 = vmatprep.subr.mxu0 0.0
        %2246 = vmatpush1.msra.mxu0 %v2243
        %2247 = vmatprep.subr.mxu0 0.0
        %2248 = vmatpush1.msra.mxu0 0.0
        %2249 = vmatprep.subr.mxu0 0.0
        %2250 = vmatpush1.msra.mxu0 0.0
        %2251 = vmatprep.subr.mxu0 0.0
        %2252 = vmatpush1.msra.mxu0 0.0
        %2253 = vmatprep.subr.mxu0 0.0
        %2254 = vmatpush1.msra.mxu0 0.0
        %2255 = vmatprep.subr.mxu0 0.0
        %2256 = vmatpush1.msra.mxu0 0.0
        %2257 = vmatprep.subr.mxu0 0.0
        %2258 = vmatpush1.msra.mxu0 0.0
        %2259 = vmatprep.subr.mxu0 0.0
        %2260 = vmatpush1.msra.mxu0 0.0
        %2261 = vmatprep.subr.mxu0 0.0
        %2262 = vmatpush1.msra.mxu0 0.0
        %2263 = vmatprep.subr.mxu0 0.0
        %2264 = vmatpush1.msra.mxu0 0.0
        %2265 = vmatprep.subr.mxu0 0.0
        %2266 = vmatpush1.msra.mxu0 0.0
        %2267 = vmatprep.subr.mxu0 0.0
        %2268 = vmatpush1.msra.mxu0 0.0
        %2269 = vmatprep.subr.mxu0 0.0
        %2270 = vmatpush1.msra.mxu0 0.0
        %2271 = vmatprep.subr.mxu0 0.0
        %2272 = vmatpush1.msra.mxu0 0.0
        %2273 = vmatprep.subr.mxu0 0.0
        %2274 = vmatpush1.msra.mxu0 0.0
        %2275 = vmatprep.subr.mxu0 0.0
        %2276 = vmatpush1.msra.mxu0 0.0
        %2277 = vmatprep.subr.mxu0 0.0
        %2278 = vmatpush1.msra.mxu0 0.0
        %2279 = vmatprep.subr.mxu0 0.0
        %2280 = vmatpush1.msra.mxu0 0.0
        %2281 = vmatprep.subr.mxu0 0.0
        %2282 = vmatpush1.msra.mxu0 0.0
        %2283 = vmatprep.subr.mxu0 0.0
        %2284 = vmatpush1.msra.mxu0 0.0
        %2285 = vmatprep.subr.mxu0 0.0
        %2286 = vmatpush1.msra.mxu0 0.0
        %2287 = vmatprep.subr.mxu0 0.0
        %2288 = vmatpush1.msra.mxu0 0.0
        %2289 = vmatprep.subr.mxu0 0.0
        %2290 = vmatpush1.msra.mxu0 0.0
        %2291 = vmatprep.subr.mxu0 0.0
        %2292 = vmatpush1.msra.mxu0 0.0
        %2293 = vmatprep.subr.mxu0 0.0
        %2294 = vmatpush1.msra.mxu0 0.0
        %2295 = vmatprep.subr.mxu0 0.0
        %2296 = vmatpush1.msra.mxu0 0.0
        %2297 = vmatprep.subr.mxu0 0.0
        %2298 = vmatpush1.msra.mxu0 0.0
        %2299 = vmatprep.subr.mxu0 0.0
        %2300 = vmatpush1.msra.mxu0 0.0
        %2301 = vmatprep.subr.mxu0 0.0
        %2302 = vmatpush1.msra.mxu0 0.0
        %2303 = vmatprep.subr.mxu0 0.0
        %2304 = vmatpush1.msra.mxu0 0.0
        %2305 = vmatprep.subr.mxu0 0.0
        %2306 = vmatpush1.msra.mxu0 0.0
        %2307 = vmatprep.subr.mxu0 0.0
        %2308 = vmatpush1.msra.mxu0 0.0
        %2309 = vmatprep.mubr.f32.mxu0 0.0
        %2310 = vmatmul.mubr.f32.gmra.mrb[0].mxu0 %v2240
        %v2311 = vpop.f32.mrb[0].mxu0
        %v2312 = vadd.f32 0.0, %v2311
        %v2313 = vpop.f32.mrb[0].mxu0
        %2314 = vdwg.mxu0
        %v2315 = vlaneseq
        %v2316 = vshrl.u32 %v2315, 7
        %v2317 = vsub.s32 0, %v2316
        %v2318 = vrot.slane %v2312, %v2317
        %v2319 = vsub.f32 %v2127, %v2318
        %v2320 = vsub.f32 %v2128, %v2318
        %v2321 = vmul.f32 %v2319, %v2319
        %v2322 = vmul.f32 %v2320, %v2320
        %v2323 = vsel %vm2155, %v2321, 0.0
        %v2324 = vsel %vm2155, %v2322, 0.0
        %v2325 = vadd.f32 %v2323, %v2324
        %v2326 = vrot.slane %v2325, 4
        %v2327 = vadd.f32 %v2325, %v2326
        %v2328 = vrot.slane %v2327, 2
        %v2329 = vadd.f32 %v2327, %v2328
        %v2330 = vrot.slane %v2329, 1
        %v2331 = vadd.f32 %v2329, %v2330
        %v2333 = vsel %vm2155, %v2331, 0
        %2335 = vmatprep.subr.mxu0 0.0
        %2336 = vmatpush1.msra.mxu0 %v2145
        %2337 = vmatprep.subr.mxu0 0.0
        %2338 = vmatpush1.msra.mxu0 %v2146
        %2339 = vmatprep.subr.mxu0 0.0
        %2340 = vmatpush1.msra.mxu0 0.0
        %2341 = vmatprep.subr.mxu0 0.0
        %2342 = vmatpush1.msra.mxu0 0.0
        %2343 = vmatprep.subr.mxu0 0.0
        %2344 = vmatpush1.msra.mxu0 0.0
        %2345 = vmatprep.subr.mxu0 0.0
        %2346 = vmatpush1.msra.mxu0 0.0
        %2347 = vmatprep.subr.mxu0 0.0
        %2348 = vmatpush1.msra.mxu0 0.0
        %2349 = vmatprep.subr.mxu0 0.0
        %2350 = vmatpush1.msra.mxu0 0.0
        %2351 = vmatprep.subr.mxu0 0.0
        %2352 = vmatpush1.msra.mxu0 0.0
        %2353 = vmatprep.subr.mxu0 0.0
        %2354 = vmatpush1.msra.mxu0 0.0
        %2355 = vmatprep.subr.mxu0 0.0
        %2356 = vmatpush1.msra.mxu0 0.0
        %2357 = vmatprep.subr.mxu0 0.0
        %2358 = vmatpush1.msra.mxu0 0.0
        %2359 = vmatprep.subr.mxu0 0.0
        %2360 = vmatpush1.msra.mxu0 0.0
        %2361 = vmatprep.subr.mxu0 0.0
        %2362 = vmatpush1.msra.mxu0 0.0
        %2363 = vmatprep.subr.mxu0 0.0
        %2364 = vmatpush1.msra.mxu0 0.0
        %2365 = vmatprep.subr.mxu0 0.0
        %2366 = vmatpush1.msra.mxu0 0.0
        %2367 = vmatprep.subr.mxu0 0.0
        %2368 = vmatpush1.msra.mxu0 0.0
        %2369 = vmatprep.subr.mxu0 0.0
        %2370 = vmatpush1.msra.mxu0 0.0
        %2371 = vmatprep.subr.mxu0 0.0
        %2372 = vmatpush1.msra.mxu0 0.0
        %2373 = vmatprep.subr.mxu0 0.0
        %2374 = vmatpush1.msra.mxu0 0.0
        %2375 = vmatprep.subr.mxu0 0.0
        %2376 = vmatpush1.msra.mxu0 0.0
        %2377 = vmatprep.subr.mxu0 0.0
        %2378 = vmatpush1.msra.mxu0 0.0
        %2379 = vmatprep.subr.mxu0 0.0
        %2380 = vmatpush1.msra.mxu0 0.0
        %2381 = vmatprep.subr.mxu0 0.0
        %2382 = vmatpush1.msra.mxu0 0.0
        %2383 = vmatprep.subr.mxu0 0.0
        %2384 = vmatpush1.msra.mxu0 0.0
        %2385 = vmatprep.subr.mxu0 0.0
        %2386 = vmatpush1.msra.mxu0 0.0
        %2387 = vmatprep.subr.mxu0 0.0
        %2388 = vmatpush1.msra.mxu0 0.0
        %2389 = vmatprep.subr.mxu0 0.0
        %2390 = vmatpush1.msra.mxu0 0.0
        %2391 = vmatprep.subr.mxu0 0.0
        %2392 = vmatpush1.msra.mxu0 0.0
        %2393 = vmatprep.subr.mxu0 0.0
        %2394 = vmatpush1.msra.mxu0 0.0
        %2395 = vmatprep.subr.mxu0 0.0
        %2396 = vmatpush1.msra.mxu0 0.0
        %2397 = vmatprep.subr.mxu0 0.0
        %2398 = vmatpush1.msra.mxu0 0.0
        %2399 = vmatprep.mubr.f32.mxu0 0.0
        %2400 = vmatmul.mubr.f32.gmra.mrb[0].mxu0 %v2333
        %v2401 = vpop.f32.mrb[0].mxu0
        %v2402 = vadd.f32 0.0, %v2401
        %v2403 = vpop.f32.mrb[0].mxu0
        %2404 = vdwg.mxu0
        %v2405 = vmul.f32 %v2402, 0.015625
        %v2406 = vmax.f32 %v2405, 0.0
        %v2408 = vsel %vm1853, %v2406, 0
        %2410 = vmatprep.subr.mxu0 0.0
        %2411 = vmatpush1.msra.mxu0 %v2243
        %2412 = vmatprep.subr.mxu0 0.0
        %2413 = vmatpush1.msra.mxu0 0.0
        %2414 = vmatprep.subr.mxu0 0.0
        %2415 = vmatpush1.msra.mxu0 0.0
        %2416 = vmatprep.subr.mxu0 0.0
        %2417 = vmatpush1.msra.mxu0 0.0
        %2418 = vmatprep.subr.mxu0 0.0
        %2419 = vmatpush1.msra.mxu0 0.0
        %2420 = vmatprep.subr.mxu0 0.0
        %2421 = vmatpush1.msra.mxu0 0.0
        %2422 = vmatprep.subr.mxu0 0.0
        %2423 = vmatpush1.msra.mxu0 0.0
        %2424 = vmatprep.subr.mxu0 0.0
        %2425 = vmatpush1.msra.mxu0 0.0
        %2426 = vmatprep.subr.mxu0 0.0
        %2427 = vmatpush1.msra.mxu0 0.0
        %2428 = vmatprep.subr.mxu0 0.0
        %2429 = vmatpush1.msra.mxu0 0.0
        %2430 = vmatprep.subr.mxu0 0.0
        %2431 = vmatpush1.msra.mxu0 0.0
        %2432 = vmatprep.subr.mxu0 0.0
        %2433 = vmatpush1.msra.mxu0 0.0
        %2434 = vmatprep.subr.mxu0 0.0
        %2435 = vmatpush1.msra.mxu0 0.0
        %2436 = vmatprep.subr.mxu0 0.0
        %2437 = vmatpush1.msra.mxu0 0.0
        %2438 = vmatprep.subr.mxu0 0.0
        %2439 = vmatpush1.msra.mxu0 0.0
        %2440 = vmatprep.subr.mxu0 0.0
        %2441 = vmatpush1.msra.mxu0 0.0
        %2442 = vmatprep.subr.mxu0 0.0
        %2443 = vmatpush1.msra.mxu0 0.0
        %2444 = vmatprep.subr.mxu0 0.0
        %2445 = vmatpush1.msra.mxu0 0.0
        %2446 = vmatprep.subr.mxu0 0.0
        %2447 = vmatpush1.msra.mxu0 0.0
        %2448 = vmatprep.subr.mxu0 0.0
        %2449 = vmatpush1.msra.mxu0 0.0
        %2450 = vmatprep.subr.mxu0 0.0
        %2451 = vmatpush1.msra.mxu0 0.0
        %2452 = vmatprep.subr.mxu0 0.0
        %2453 = vmatpush1.msra.mxu0 0.0
        %2454 = vmatprep.subr.mxu0 0.0
        %2455 = vmatpush1.msra.mxu0 0.0
        %2456 = vmatprep.subr.mxu0 0.0
        %2457 = vmatpush1.msra.mxu0 0.0
        %2458 = vmatprep.subr.mxu0 0.0
        %2459 = vmatpush1.msra.mxu0 0.0
        %2460 = vmatprep.subr.mxu0 0.0
        %2461 = vmatpush1.msra.mxu0 0.0
        %2462 = vmatprep.subr.mxu0 0.0
        %2463 = vmatpush1.msra.mxu0 0.0
        %2464 = vmatprep.subr.mxu0 0.0
        %2465 = vmatpush1.msra.mxu0 0.0
        %2466 = vmatprep.subr.mxu0 0.0
        %2467 = vmatpush1.msra.mxu0 0.0
        %2468 = vmatprep.subr.mxu0 0.0
        %2469 = vmatpush1.msra.mxu0 0.0
        %2470 = vmatprep.subr.mxu0 0.0
        %2471 = vmatpush1.msra.mxu0 0.0
        %2472 = vmatprep.subr.mxu0 0.0
        %2473 = vmatpush1.msra.mxu0 0.0
        %2474 = vmatprep.mubr.f32.mxu0 0.0
        %2475 = vmatmul.mubr.f32.gmra.mrb[0].mxu0 %v2408
        %v2476 = vpop.f32.mrb[0].mxu0
        %v2477 = vadd.f32 1e-06, %v2476
        %v2478 = vpop.f32.mrb[0].mxu0
        %2479 = vdwg.mxu0
        %v2480 = vrsqrt.pop %v2477
        %v2481 = vlaneseq
        %v2482 = vshrl.u32 %v2481, 7
        %v2483 = vsub.s32 0, %v2482
        %v2484 = vrot.slane %v2480, %v2483
        %v2485 = vmul.f32 %v2319, %v2484
        %v2486 = vmul.f32 %v2320, %v2484
        %v2487 = vld [vmem:[#allocation15] sm:$0x1]
        %v2489 = vlaneseq
        %v2490 = vshrl.u32 %v2489, 7
        %v2491 = vsub.s32 0, %v2490
        %v2492 = vrot.slane %v2487, %v2491
        %v2494 = vmul.f32 %v2485, %v2492
        %v2495 = vmul.f32 %v2486, %v2492
        %v2496 = vld [vmem:[#allocation14] sm:$0x1]
        %v2498 = vlaneseq
        %v2499 = vshrl.u32 %v2498, 7
        %v2500 = vsub.s32 0, %v2499
        %v2501 = vrot.slane %v2496, %v2500
        %v2503 = vadd.f32 %v2494, %v2501
        %v2504 = vadd.f32 %v2495, %v2501
        %v2505 = vxor.u32 %v2503, 2147483648
        %v2506 = vxor.u32 %v2504, 2147483648
        %v2507 = vmul.f32 %v2505, 1.442695
        %v2508 = vpow.pop %v2507
        %v2509 = vmul.f32 %v2506, 1.442695
        %v2510 = vpow.pop %v2509
        %v2511 = vadd.f32 %v2508, 1.0
        %v2512 = vadd.f32 %v2510, 1.0
        %v2513 = vrcp.pop %v2511
        %v2514 = vmul.f32 1.0, %v2513
        %v2515 = vrcp.pop %v2512
        %v2516 = vmul.f32 1.0, %v2515
        %v2517 = vmul.f32 %v2503, %v2514
        %v2518 = vmul.f32 %v2504, %v2516
        %2519 = vst.msk [vmem:[#allocation2] sm:$0xff] %vm1848, 0.0
        %2520 = vst.msk [vmem:[#allocation2 + $0x8] sm:$0xff] %vm1848, 0.0
        %2521 = vst.msk [vmem:[#allocation2 + $0x10] sm:$0x3] %vm1851, 0.0
        %2522 = vst.msk [vmem:[#allocation2 + $0x1] sm:$0xff] %vm2155, %v2517
        %2523 = vst.msk [vmem:[#allocation2 + $0x9] sm:$0xff] %vm2155, %v2518
        %v2524 = vld [vmem:[#allocation2] sm:$0xff]
        %v2525 = vld [vmem:[#allocation2 + $0x8] sm:$0xff]
        %v2526 = vld [vmem:[#allocation9] sm:$0xff]
        %v2527 = vld [vmem:[#allocation9 + $0x8] sm:$0xff]
        %s2528 = scalar_lea.vmem [#allocation9], 16
        %v2529 = vld [vmem:[%s2528] sm:$0xff]
        %v2530 = vld [vmem:[%s2528 + $0x8] sm:$0xff]
        %v2532 = vsel %vm2155, %v2517, 0
        %v2535 = vsel %vm2155, %v2518, 0
        %2537 = vmatprep.subr.mxu0 0.0
        %2538 = vmatpush1.msra.mxu0 %v2529
        %2539 = vmatprep.subr.mxu0 0.0
        %2540 = vmatpush1.msra.mxu0 %v2530
        %2541 = vmatprep.subr.mxu0 0.0
        %2542 = vmatpush1.msra.mxu0 0.0
        %2543 = vmatprep.subr.mxu0 0.0
        %2544 = vmatpush1.msra.mxu0 0.0
        %2545 = vmatprep.subr.mxu0 0.0
        %2546 = vmatpush1.msra.mxu0 0.0
        %2547 = vmatprep.subr.mxu0 0.0
        %2548 = vmatpush1.msra.mxu0 0.0
        %2549 = vmatprep.subr.mxu0 0.0
        %2550 = vmatpush1.msra.mxu0 0.0
        %2551 = vmatprep.subr.mxu0 0.0
        %2552 = vmatpush1.msra.mxu0 0.0
        %2553 = vmatprep.subr.mxu0 0.0
        %2554 = vmatpush1.msra.mxu0 0.0
        %2555 = vmatprep.subr.mxu0 0.0
        %2556 = vmatpush1.msra.mxu0 0.0
        %2557 = vmatprep.subr.mxu0 0.0
        %2558 = vmatpush1.msra.mxu0 0.0
        %2559 = vmatprep.subr.mxu0 0.0
        %2560 = vmatpush1.msra.mxu0 0.0
        %2561 = vmatprep.subr.mxu0 0.0
        %2562 = vmatpush1.msra.mxu0 0.0
        %2563 = vmatprep.subr.mxu0 0.0
        %2564 = vmatpush1.msra.mxu0 0.0
        %2565 = vmatprep.subr.mxu0 0.0
        %2566 = vmatpush1.msra.mxu0 0.0
        %2567 = vmatprep.subr.mxu0 0.0
        %2568 = vmatpush1.msra.mxu0 0.0
        %2569 = vmatprep.subr.mxu0 0.0
        %2570 = vmatpush1.msra.mxu0 0.0
        %2571 = vmatprep.subr.mxu0 0.0
        %2572 = vmatpush1.msra.mxu0 0.0
        %2573 = vmatprep.subr.mxu0 0.0
        %2574 = vmatpush1.msra.mxu0 0.0
        %2575 = vmatprep.subr.mxu0 0.0
        %2576 = vmatpush1.msra.mxu0 0.0
        %2577 = vmatprep.subr.mxu0 0.0
        %2578 = vmatpush1.msra.mxu0 0.0
        %2579 = vmatprep.subr.mxu0 0.0
        %2580 = vmatpush1.msra.mxu0 0.0
        %2581 = vmatprep.subr.mxu0 0.0
        %2582 = vmatpush1.msra.mxu0 0.0
        %2583 = vmatprep.subr.mxu0 0.0
        %2584 = vmatpush1.msra.mxu0 0.0
        %2585 = vmatprep.subr.mxu0 0.0
        %2586 = vmatpush1.msra.mxu0 0.0
        %2587 = vmatprep.subr.mxu0 0.0
        %2588 = vmatpush1.msra.mxu0 0.0
        %2589 = vmatprep.subr.mxu0 0.0
        %2590 = vmatpush1.msra.mxu0 0.0
        %2591 = vmatprep.subr.mxu0 0.0
        %2592 = vmatpush1.msra.mxu0 0.0
        %2593 = vmatprep.subr.mxu0 0.0
        %2594 = vmatpush1.msra.mxu0 0.0
        %2595 = vmatprep.subr.mxu0 0.0
        %2596 = vmatpush1.msra.mxu0 0.0
        %2597 = vmatprep.subr.mxu0 0.0
        %2598 = vmatpush1.msra.mxu0 0.0
        %2599 = vmatprep.subr.mxu0 0.0
        %2600 = vmatpush1.msra.mxu0 0.0
        %2601 = vmatprep.mubr.f32.mxu0 0.0
        %2602 = vmatmul.mubr.f32.gmra.mrb[0].mxu0 %v2532
        %v2603 = vpop.f32.mrb[0].mxu0
        %v2604 = vadd.f32 0.0, %v2603
        %v2605 = vpop.f32.mrb[0].mxu0
        %2606 = vmatprep.mubr.f32.mxu0 0.0
        %2607 = vmatmul.mubr.f32.gmra.mrb[0].mxu0 %v2535
        %v2608 = vpop.f32.mrb[0].mxu0
        %v2609 = vadd.f32 0.0, %v2608
        %v2610 = vpop.f32.mrb[0].mxu0
        %2611 = vdwg.mxu0
        %v2613 = vsel %vm2155, %v2524, 0
        %v2616 = vsel %vm2155, %v2525, 0
        %2618 = vmatprep.subr.mxu0 0.0
        %2619 = vmatpush1.msra.mxu0 %v2526
        %2620 = vmatprep.subr.mxu0 0.0
        %2621 = vmatpush1.msra.mxu0 %v2527
        %2622 = vmatprep.subr.mxu0 0.0
        %2623 = vmatpush1.msra.mxu0 0.0
        %2624 = vmatprep.subr.mxu0 0.0
        %2625 = vmatpush1.msra.mxu0 0.0
        %2626 = vmatprep.subr.mxu0 0.0
        %2627 = vmatpush1.msra.mxu0 0.0
        %2628 = vmatprep.subr.mxu0 0.0
        %2629 = vmatpush1.msra.mxu0 0.0
        %2630 = vmatprep.subr.mxu0 0.0
        %2631 = vmatpush1.msra.mxu0 0.0
        %2632 = vmatprep.subr.mxu0 0.0
        %2633 = vmatpush1.msra.mxu0 0.0
        %2634 = vmatprep.subr.mxu0 0.0
        %2635 = vmatpush1.msra.mxu0 0.0
        %2636 = vmatprep.subr.mxu0 0.0
        %2637 = vmatpush1.msra.mxu0 0.0
        %2638 = vmatprep.subr.mxu0 0.0
        %2639 = vmatpush1.msra.mxu0 0.0
        %2640 = vmatprep.subr.mxu0 0.0
        %2641 = vmatpush1.msra.mxu0 0.0
        %2642 = vmatprep.subr.mxu0 0.0
        %2643 = vmatpush1.msra.mxu0 0.0
        %2644 = vmatprep.subr.mxu0 0.0
        %2645 = vmatpush1.msra.mxu0 0.0
        %2646 = vmatprep.subr.mxu0 0.0
        %2647 = vmatpush1.msra.mxu0 0.0
        %2648 = vmatprep.subr.mxu0 0.0
        %2649 = vmatpush1.msra.mxu0 0.0
        %2650 = vmatprep.subr.mxu0 0.0
        %2651 = vmatpush1.msra.mxu0 0.0
        %2652 = vmatprep.subr.mxu0 0.0
        %2653 = vmatpush1.msra.mxu0 0.0
        %2654 = vmatprep.subr.mxu0 0.0
        %2655 = vmatpush1.msra.mxu0 0.0
        %2656 = vmatprep.subr.mxu0 0.0
        %2657 = vmatpush1.msra.mxu0 0.0
        %2658 = vmatprep.subr.mxu0 0.0
        %2659 = vmatpush1.msra.mxu0 0.0
        %2660 = vmatprep.subr.mxu0 0.0
        %2661 = vmatpush1.msra.mxu0 0.0
        %2662 = vmatprep.subr.mxu0 0.0
        %2663 = vmatpush1.msra.mxu0 0.0
        %2664 = vmatprep.subr.mxu0 0.0
        %2665 = vmatpush1.msra.mxu0 0.0
        %2666 = vmatprep.subr.mxu0 0.0
        %2667 = vmatpush1.msra.mxu0 0.0
        %2668 = vmatprep.subr.mxu0 0.0
        %2669 = vmatpush1.msra.mxu0 0.0
        %2670 = vmatprep.subr.mxu0 0.0
        %2671 = vmatpush1.msra.mxu0 0.0
        %2672 = vmatprep.subr.mxu0 0.0
        %2673 = vmatpush1.msra.mxu0 0.0
        %2674 = vmatprep.subr.mxu0 0.0
        %2675 = vmatpush1.msra.mxu0 0.0
        %2676 = vmatprep.subr.mxu0 0.0
        %2677 = vmatpush1.msra.mxu0 0.0
        %2678 = vmatprep.subr.mxu0 0.0
        %2679 = vmatpush1.msra.mxu0 0.0
        %2680 = vmatprep.subr.mxu0 0.0
        %2681 = vmatpush1.msra.mxu0 0.0
        %2682 = vmatprep.mubr.f32.mxu0 0.0
        %2683 = vmatmul.mubr.f32.gmra.mrb[0].mxu0 %v2613
        %v2684 = vpop.f32.mrb[0].mxu0
        %v2685 = vadd.f32 %v2604, %v2684
        %v2686 = vpop.f32.mrb[0].mxu0
        %2687 = vmatprep.mubr.f32.mxu0 0.0
        %2688 = vmatmul.mubr.f32.gmra.mrb[0].mxu0 %v2616
        %v2689 = vpop.f32.mrb[0].mxu0
        %v2690 = vadd.f32 %v2609, %v2689
        %v2691 = vpop.f32.mrb[0].mxu0
        %2692 = vdwg.mxu0
        %v2693 = vld [vmem:[#allocation2 + $0x2] sm:$0xff]
        %v2694 = vld [vmem:[#allocation2 + $0xa] sm:$0xff]
        %s2695 = scalar_lea.vmem [#allocation9], 32
        %v2696 = vld [vmem:[%s2695] sm:$0xff]
        %v2697 = vld [vmem:[%s2695 + $0x8] sm:$0xff]
        %v2699 = vsel %vm2155, %v2693, 0
        %v2702 = vsel %vm2155, %v2694, 0
        %2704 = vmatprep.subr.mxu0 0.0
        %2705 = vmatpush1.msra.mxu0 %v2696
        %2706 = vmatprep.subr.mxu0 0.0
        %2707 = vmatpush1.msra.mxu0 %v2697
        %2708 = vmatprep.subr.mxu0 0.0
        %2709 = vmatpush1.msra.mxu0 0.0
        %2710 = vmatprep.subr.mxu0 0.0
        %2711 = vmatpush1.msra.mxu0 0.0
        %2712 = vmatprep.subr.mxu0 0.0
        %2713 = vmatpush1.msra.mxu0 0.0
        %2714 = vmatprep.subr.mxu0 0.0
        %2715 = vmatpush1.msra.mxu0 0.0
        %2716 = vmatprep.subr.mxu0 0.0
        %2717 = vmatpush1.msra.mxu0 0.0
        %2718 = vmatprep.subr.mxu0 0.0
        %2719 = vmatpush1.msra.mxu0 0.0
        %2720 = vmatprep.subr.mxu0 0.0
        %2721 = vmatpush1.msra.mxu0 0.0
        %2722 = vmatprep.subr.mxu0 0.0
        %2723 = vmatpush1.msra.mxu0 0.0
        %2724 = vmatprep.subr.mxu0 0.0
        %2725 = vmatpush1.msra.mxu0 0.0
        %2726 = vmatprep.subr.mxu0 0.0
        %2727 = vmatpush1.msra.mxu0 0.0
        %2728 = vmatprep.subr.mxu0 0.0
        %2729 = vmatpush1.msra.mxu0 0.0
        %2730 = vmatprep.subr.mxu0 0.0
        %2731 = vmatpush1.msra.mxu0 0.0
        %2732 = vmatprep.subr.mxu0 0.0
        %2733 = vmatpush1.msra.mxu0 0.0
        %2734 = vmatprep.subr.mxu0 0.0
        %2735 = vmatpush1.msra.mxu0 0.0
        %2736 = vmatprep.subr.mxu0 0.0
        %2737 = vmatpush1.msra.mxu0 0.0
        %2738 = vmatprep.subr.mxu0 0.0
        %2739 = vmatpush1.msra.mxu0 0.0
        %2740 = vmatprep.subr.mxu0 0.0
        %2741 = vmatpush1.msra.mxu0 0.0
        %2742 = vmatprep.subr.mxu0 0.0
        %2743 = vmatpush1.msra.mxu0 0.0
        %2744 = vmatprep.subr.mxu0 0.0
        %2745 = vmatpush1.msra.mxu0 0.0
        %2746 = vmatprep.subr.mxu0 0.0
        %2747 = vmatpush1.msra.mxu0 0.0
        %2748 = vmatprep.subr.mxu0 0.0
        %2749 = vmatpush1.msra.mxu0 0.0
        %2750 = vmatprep.subr.mxu0 0.0
        %2751 = vmatpush1.msra.mxu0 0.0
        %2752 = vmatprep.subr.mxu0 0.0
        %2753 = vmatpush1.msra.mxu0 0.0
        %2754 = vmatprep.subr.mxu0 0.0
        %2755 = vmatpush1.msra.mxu0 0.0
        %2756 = vmatprep.subr.mxu0 0.0
        %2757 = vmatpush1.msra.mxu0 0.0
        %2758 = vmatprep.subr.mxu0 0.0
        %2759 = vmatpush1.msra.mxu0 0.0
        %2760 = vmatprep.subr.mxu0 0.0
        %2761 = vmatpush1.msra.mxu0 0.0
        %2762 = vmatprep.subr.mxu0 0.0
        %2763 = vmatpush1.msra.mxu0 0.0
        %2764 = vmatprep.subr.mxu0 0.0
        %2765 = vmatpush1.msra.mxu0 0.0
        %2766 = vmatprep.subr.mxu0 0.0
        %2767 = vmatpush1.msra.mxu0 0.0
        %2768 = vmatprep.mubr.f32.mxu0 0.0
        %2769 = vmatmul.mubr.f32.gmra.mrb[0].mxu0 %v2699
        %v2770 = vpop.f32.mrb[0].mxu0
        %v2771 = vadd.f32 0.0, %v2770
        %v2772 = vpop.f32.mrb[0].mxu0
        %2773 = vmatprep.mubr.f32.mxu0 0.0
        %2774 = vmatmul.mubr.f32.gmra.mrb[0].mxu0 %v2702
        %v2775 = vpop.f32.mrb[0].mxu0
        %v2776 = vadd.f32 0.0, %v2775
        %v2777 = vpop.f32.mrb[0].mxu0
        %2778 = vdwg.mxu0
        %v2779 = vadd.f32 %v2685, %v2771
        %v2780 = vadd.f32 %v2690, %v2776
        %v2781 = vld [vmem:[#allocation8] sm:$0x1]
        %v2783 = vlaneseq
        %v2784 = vshrl.u32 %v2783, 7
        %v2785 = vsub.s32 0, %v2784
        %v2786 = vrot.slane %v2781, %v2785
        %v2788 = vadd.f32 %v2779, %v2786
        %v2789 = vadd.f32 %v2780, %v2786
        %v2790 = vsel %vm2155, %v2788, 0.0
        %v2791 = vsel %vm2155, %v2789, 0.0
        %v2792 = vadd.f32 %v2790, %v2791
        %v2793 = vrot.slane %v2792, 4
        %v2794 = vadd.f32 %v2792, %v2793
        %v2795 = vrot.slane %v2794, 2
        %v2796 = vadd.f32 %v2794, %v2795
        %v2797 = vrot.slane %v2796, 1
        %v2798 = vadd.f32 %v2796, %v2797
        %v2800 = vsel %vm2155, %v2798, 0
        %2802 = vmatprep.subr.mxu0 0.0
        %2803 = vmatpush1.msra.mxu0 %v2145
        %2804 = vmatprep.subr.mxu0 0.0
        %2805 = vmatpush1.msra.mxu0 %v2146
        %2806 = vmatprep.subr.mxu0 0.0
        %2807 = vmatpush1.msra.mxu0 0.0
        %2808 = vmatprep.subr.mxu0 0.0
        %2809 = vmatpush1.msra.mxu0 0.0
        %2810 = vmatprep.subr.mxu0 0.0
        %2811 = vmatpush1.msra.mxu0 0.0
        %2812 = vmatprep.subr.mxu0 0.0
        %2813 = vmatpush1.msra.mxu0 0.0
        %2814 = vmatprep.subr.mxu0 0.0
        %2815 = vmatpush1.msra.mxu0 0.0
        %2816 = vmatprep.subr.mxu0 0.0
        %2817 = vmatpush1.msra.mxu0 0.0
        %2818 = vmatprep.subr.mxu0 0.0
        %2819 = vmatpush1.msra.mxu0 0.0
        %2820 = vmatprep.subr.mxu0 0.0
        %2821 = vmatpush1.msra.mxu0 0.0
        %2822 = vmatprep.subr.mxu0 0.0
        %2823 = vmatpush1.msra.mxu0 0.0
        %2824 = vmatprep.subr.mxu0 0.0
        %2825 = vmatpush1.msra.mxu0 0.0
        %2826 = vmatprep.subr.mxu0 0.0
        %2827 = vmatpush1.msra.mxu0 0.0
        %2828 = vmatprep.subr.mxu0 0.0
        %2829 = vmatpush1.msra.mxu0 0.0
        %2830 = vmatprep.subr.mxu0 0.0
        %2831 = vmatpush1.msra.mxu0 0.0
        %2832 = vmatprep.subr.mxu0 0.0
        %2833 = vmatpush1.msra.mxu0 0.0
        %2834 = vmatprep.subr.mxu0 0.0
        %2835 = vmatpush1.msra.mxu0 0.0
        %2836 = vmatprep.subr.mxu0 0.0
        %2837 = vmatpush1.msra.mxu0 0.0
        %2838 = vmatprep.subr.mxu0 0.0
        %2839 = vmatpush1.msra.mxu0 0.0
        %2840 = vmatprep.subr.mxu0 0.0
        %2841 = vmatpush1.msra.mxu0 0.0
        %2842 = vmatprep.subr.mxu0 0.0
        %2843 = vmatpush1.msra.mxu0 0.0
        %2844 = vmatprep.subr.mxu0 0.0
        %2845 = vmatpush1.msra.mxu0 0.0
        %2846 = vmatprep.subr.mxu0 0.0
        %2847 = vmatpush1.msra.mxu0 0.0
        %2848 = vmatprep.subr.mxu0 0.0
        %2849 = vmatpush1.msra.mxu0 0.0
        %2850 = vmatprep.subr.mxu0 0.0
        %2851 = vmatpush1.msra.mxu0 0.0
        %2852 = vmatprep.subr.mxu0 0.0
        %2853 = vmatpush1.msra.mxu0 0.0
        %2854 = vmatprep.subr.mxu0 0.0
        %2855 = vmatpush1.msra.mxu0 0.0
        %2856 = vmatprep.subr.mxu0 0.0
        %2857 = vmatpush1.msra.mxu0 0.0
        %2858 = vmatprep.subr.mxu0 0.0
        %2859 = vmatpush1.msra.mxu0 0.0
        %2860 = vmatprep.subr.mxu0 0.0
        %2861 = vmatpush1.msra.mxu0 0.0
        %2862 = vmatprep.subr.mxu0 0.0
        %2863 = vmatpush1.msra.mxu0 0.0
        %2864 = vmatprep.subr.mxu0 0.0
        %2865 = vmatpush1.msra.mxu0 0.0
        %2866 = vmatprep.mubr.f32.mxu0 0.0
        %2867 = vmatmul.mubr.f32.gmra.mrb[0].mxu0 %v2800
        %v2868 = vpop.f32.mrb[0].mxu0
        %v2869 = vadd.f32 0.0, %v2868
        %v2870 = vpop.f32.mrb[0].mxu0
        %2871 = vdwg.mxu0
        %v2872 = vmul.f32 %v2869, 0.015625
        %v2874 = vsel %vm1853, %v2872, 0
        %2876 = vmatprep.subr.mxu0 0.0
        %2877 = vmatpush1.msra.mxu0 %v2243
        %2878 = vmatprep.subr.mxu0 0.0
        %2879 = vmatpush1.msra.mxu0 0.0
        %2880 = vmatprep.subr.mxu0 0.0
        %2881 = vmatpush1.msra.mxu0 0.0
        %2882 = vmatprep.subr.mxu0 0.0
        %2883 = vmatpush1.msra.mxu0 0.0
        %2884 = vmatprep.subr.mxu0 0.0
        %2885 = vmatpush1.msra.mxu0 0.0
        %2886 = vmatprep.subr.mxu0 0.0
        %2887 = vmatpush1.msra.mxu0 0.0
        %2888 = vmatprep.subr.mxu0 0.0
        %2889 = vmatpush1.msra.mxu0 0.0
        %2890 = vmatprep.subr.mxu0 0.0
        %2891 = vmatpush1.msra.mxu0 0.0
        %2892 = vmatprep.subr.mxu0 0.0
        %2893 = vmatpush1.msra.mxu0 0.0
        %2894 = vmatprep.subr.mxu0 0.0
        %2895 = vmatpush1.msra.mxu0 0.0
        %2896 = vmatprep.subr.mxu0 0.0
        %2897 = vmatpush1.msra.mxu0 0.0
        %2898 = vmatprep.subr.mxu0 0.0
        %2899 = vmatpush1.msra.mxu0 0.0
        %2900 = vmatprep.subr.mxu0 0.0
        %2901 = vmatpush1.msra.mxu0 0.0
        %2902 = vmatprep.subr.mxu0 0.0
        %2903 = vmatpush1.msra.mxu0 0.0
        %2904 = vmatprep.subr.mxu0 0.0
        %2905 = vmatpush1.msra.mxu0 0.0
        %2906 = vmatprep.subr.mxu0 0.0
        %2907 = vmatpush1.msra.mxu0 0.0
        %2908 = vmatprep.subr.mxu0 0.0
        %2909 = vmatpush1.msra.mxu0 0.0
        %2910 = vmatprep.subr.mxu0 0.0
        %2911 = vmatpush1.msra.mxu0 0.0
        %2912 = vmatprep.subr.mxu0 0.0
        %2913 = vmatpush1.msra.mxu0 0.0
        %2914 = vmatprep.subr.mxu0 0.0
        %2915 = vmatpush1.msra.mxu0 0.0
        %2916 = vmatprep.subr.mxu0 0.0
        %2917 = vmatpush1.msra.mxu0 0.0
        %2918 = vmatprep.subr.mxu0 0.0
        %2919 = vmatpush1.msra.mxu0 0.0
        %2920 = vmatprep.subr.mxu0 0.0
        %2921 = vmatpush1.msra.mxu0 0.0
        %2922 = vmatprep.subr.mxu0 0.0
        %2923 = vmatpush1.msra.mxu0 0.0
        %2924 = vmatprep.subr.mxu0 0.0
        %2925 = vmatpush1.msra.mxu0 0.0
        %2926 = vmatprep.subr.mxu0 0.0
        %2927 = vmatpush1.msra.mxu0 0.0
        %2928 = vmatprep.subr.mxu0 0.0
        %2929 = vmatpush1.msra.mxu0 0.0
        %2930 = vmatprep.subr.mxu0 0.0
        %2931 = vmatpush1.msra.mxu0 0.0
        %2932 = vmatprep.subr.mxu0 0.0
        %2933 = vmatpush1.msra.mxu0 0.0
        %2934 = vmatprep.subr.mxu0 0.0
        %2935 = vmatpush1.msra.mxu0 0.0
        %2936 = vmatprep.subr.mxu0 0.0
        %2937 = vmatpush1.msra.mxu0 0.0
        %2938 = vmatprep.subr.mxu0 0.0
        %2939 = vmatpush1.msra.mxu0 0.0
        %2940 = vmatprep.mubr.f32.mxu0 0.0
        %2941 = vmatmul.mubr.f32.gmra.mrb[0].mxu0 %v2874
        %v2942 = vpop.f32.mrb[0].mxu0
        %v2943 = vadd.f32 0.0, %v2942
        %v2944 = vpop.f32.mrb[0].mxu0
        %2945 = vdwg.mxu0
        %v2946 = vlaneseq
        %v2947 = vshrl.u32 %v2946, 7
        %v2948 = vsub.s32 0, %v2947
        %v2949 = vrot.slane %v2943, %v2948
        %v2950 = vsub.f32 %v2788, %v2949
        %v2951 = vsub.f32 %v2789, %v2949
        %v2952 = vmul.f32 %v2950, %v2950
        %v2953 = vmul.f32 %v2951, %v2951
        %v2954 = vsel %vm2155, %v2952, 0.0
        %v2955 = vsel %vm2155, %v2953, 0.0
        %v2956 = vadd.f32 %v2954, %v2955
        %v2957 = vrot.slane %v2956, 4
        %v2958 = vadd.f32 %v2956, %v2957
        %v2959 = vrot.slane %v2958, 2
        %v2960 = vadd.f32 %v2958, %v2959
        %v2961 = vrot.slane %v2960, 1
        %v2962 = vadd.f32 %v2960, %v2961
        %v2964 = vsel %vm2155, %v2962, 0
        %2966 = vmatprep.subr.mxu0 0.0
        %2967 = vmatpush1.msra.mxu0 %v2145
        %2968 = vmatprep.subr.mxu0 0.0
        %2969 = vmatpush1.msra.mxu0 %v2146
        %2970 = vmatprep.subr.mxu0 0.0
        %2971 = vmatpush1.msra.mxu0 0.0
        %2972 = vmatprep.subr.mxu0 0.0
        %2973 = vmatpush1.msra.mxu0 0.0
        %2974 = vmatprep.subr.mxu0 0.0
        %2975 = vmatpush1.msra.mxu0 0.0
        %2976 = vmatprep.subr.mxu0 0.0
        %2977 = vmatpush1.msra.mxu0 0.0
        %2978 = vmatprep.subr.mxu0 0.0
        %2979 = vmatpush1.msra.mxu0 0.0
        %2980 = vmatprep.subr.mxu0 0.0
        %2981 = vmatpush1.msra.mxu0 0.0
        %2982 = vmatprep.subr.mxu0 0.0
        %2983 = vmatpush1.msra.mxu0 0.0
        %2984 = vmatprep.subr.mxu0 0.0
        %2985 = vmatpush1.msra.mxu0 0.0
        %2986 = vmatprep.subr.mxu0 0.0
        %2987 = vmatpush1.msra.mxu0 0.0
        %2988 = vmatprep.subr.mxu0 0.0
        %2989 = vmatpush1.msra.mxu0 0.0
        %2990 = vmatprep.subr.mxu0 0.0
        %2991 = vmatpush1.msra.mxu0 0.0
        %2992 = vmatprep.subr.mxu0 0.0
        %2993 = vmatpush1.msra.mxu0 0.0
        %2994 = vmatprep.subr.mxu0 0.0
        %2995 = vmatpush1.msra.mxu0 0.0
        %2996 = vmatprep.subr.mxu0 0.0
        %2997 = vmatpush1.msra.mxu0 0.0
        %2998 = vmatprep.subr.mxu0 0.0
        %2999 = vmatpush1.msra.mxu0 0.0
        %3000 = vmatprep.subr.mxu0 0.0
        %3001 = vmatpush1.msra.mxu0 0.0
        %3002 = vmatprep.subr.mxu0 0.0
        %3003 = vmatpush1.msra.mxu0 0.0
        %3004 = vmatprep.subr.mxu0 0.0
        %3005 = vmatpush1.msra.mxu0 0.0
        %3006 = vmatprep.subr.mxu0 0.0
        %3007 = vmatpush1.msra.mxu0 0.0
        %3008 = vmatprep.subr.mxu0 0.0
        %3009 = vmatpush1.msra.mxu0 0.0
        %3010 = vmatprep.subr.mxu0 0.0
        %3011 = vmatpush1.msra.mxu0 0.0
        %3012 = vmatprep.subr.mxu0 0.0
        %3013 = vmatpush1.msra.mxu0 0.0
        %3014 = vmatprep.subr.mxu0 0.0
        %3015 = vmatpush1.msra.mxu0 0.0
        %3016 = vmatprep.subr.mxu0 0.0
        %3017 = vmatpush1.msra.mxu0 0.0
        %3018 = vmatprep.subr.mxu0 0.0
        %3019 = vmatpush1.msra.mxu0 0.0
        %3020 = vmatprep.subr.mxu0 0.0
        %3021 = vmatpush1.msra.mxu0 0.0
        %3022 = vmatprep.subr.mxu0 0.0
        %3023 = vmatpush1.msra.mxu0 0.0
        %3024 = vmatprep.subr.mxu0 0.0
        %3025 = vmatpush1.msra.mxu0 0.0
        %3026 = vmatprep.subr.mxu0 0.0
        %3027 = vmatpush1.msra.mxu0 0.0
        %3028 = vmatprep.subr.mxu0 0.0
        %3029 = vmatpush1.msra.mxu0 0.0
        %3030 = vmatprep.mubr.f32.mxu0 0.0
        %3031 = vmatmul.mubr.f32.gmra.mrb[0].mxu0 %v2964
        %v3032 = vpop.f32.mrb[0].mxu0
        %v3033 = vadd.f32 0.0, %v3032
        %v3034 = vpop.f32.mrb[0].mxu0
        %3035 = vdwg.mxu0
        %v3036 = vmul.f32 %v3033, 0.015625
        %v3037 = vmax.f32 %v3036, 0.0
        %v3039 = vsel %vm1853, %v3037, 0
        %3041 = vmatprep.subr.mxu0 0.0
        %3042 = vmatpush1.msra.mxu0 %v2243
        %3043 = vmatprep.subr.mxu0 0.0
        %3044 = vmatpush1.msra.mxu0 0.0
        %3045 = vmatprep.subr.mxu0 0.0
        %3046 = vmatpush1.msra.mxu0 0.0
        %3047 = vmatprep.subr.mxu0 0.0
        %3048 = vmatpush1.msra.mxu0 0.0
        %3049 = vmatprep.subr.mxu0 0.0
        %3050 = vmatpush1.msra.mxu0 0.0
        %3051 = vmatprep.subr.mxu0 0.0
        %3052 = vmatpush1.msra.mxu0 0.0
        %3053 = vmatprep.subr.mxu0 0.0
        %3054 = vmatpush1.msra.mxu0 0.0
        %3055 = vmatprep.subr.mxu0 0.0
        %3056 = vmatpush1.msra.mxu0 0.0
        %3057 = vmatprep.subr.mxu0 0.0
        %3058 = vmatpush1.msra.mxu0 0.0
        %3059 = vmatprep.subr.mxu0 0.0
        %3060 = vmatpush1.msra.mxu0 0.0
        %3061 = vmatprep.subr.mxu0 0.0
        %3062 = vmatpush1.msra.mxu0 0.0
        %3063 = vmatprep.subr.mxu0 0.0
        %3064 = vmatpush1.msra.mxu0 0.0
        %3065 = vmatprep.subr.mxu0 0.0
        %3066 = vmatpush1.msra.mxu0 0.0
        %3067 = vmatprep.subr.mxu0 0.0
        %3068 = vmatpush1.msra.mxu0 0.0
        %3069 = vmatprep.subr.mxu0 0.0
        %3070 = vmatpush1.msra.mxu0 0.0
        %3071 = vmatprep.subr.mxu0 0.0
        %3072 = vmatpush1.msra.mxu0 0.0
        %3073 = vmatprep.subr.mxu0 0.0
        %3074 = vmatpush1.msra.mxu0 0.0
        %3075 = vmatprep.subr.mxu0 0.0
        %3076 = vmatpush1.msra.mxu0 0.0
        %3077 = vmatprep.subr.mxu0 0.0
        %3078 = vmatpush1.msra.mxu0 0.0
        %3079 = vmatprep.subr.mxu0 0.0
        %3080 = vmatpush1.msra.mxu0 0.0
        %3081 = vmatprep.subr.mxu0 0.0
        %3082 = vmatpush1.msra.mxu0 0.0
        %3083 = vmatprep.subr.mxu0 0.0
        %3084 = vmatpush1.msra.mxu0 0.0
        %3085 = vmatprep.subr.mxu0 0.0
        %3086 = vmatpush1.msra.mxu0 0.0
        %3087 = vmatprep.subr.mxu0 0.0
        %3088 = vmatpush1.msra.mxu0 0.0
        %3089 = vmatprep.subr.mxu0 0.0
        %3090 = vmatpush1.msra.mxu0 0.0
        %3091 = vmatprep.subr.mxu0 0.0
        %3092 = vmatpush1.msra.mxu0 0.0
        %3093 = vmatprep.subr.mxu0 0.0
        %3094 = vmatpush1.msra.mxu0 0.0
        %3095 = vmatprep.subr.mxu0 0.0
        %3096 = vmatpush1.msra.mxu0 0.0
        %3097 = vmatprep.subr.mxu0 0.0
        %3098 = vmatpush1.msra.mxu0 0.0
        %3099 = vmatprep.subr.mxu0 0.0
        %3100 = vmatpush1.msra.mxu0 0.0
        %3101 = vmatprep.subr.mxu0 0.0
        %3102 = vmatpush1.msra.mxu0 0.0
        %3103 = vmatprep.subr.mxu0 0.0
        %3104 = vmatpush1.msra.mxu0 0.0
        %3105 = vmatprep.mubr.f32.mxu0 0.0
        %3106 = vmatmul.mubr.f32.gmra.mrb[0].mxu0 %v3039
        %v3107 = vpop.f32.mrb[0].mxu0
        %v3108 = vadd.f32 1e-06, %v3107
        %v3109 = vpop.f32.mrb[0].mxu0
        %3110 = vdwg.mxu0
        %v3111 = vrsqrt.pop %v3108
        %v3112 = vlaneseq
        %v3113 = vshrl.u32 %v3112, 7
        %v3114 = vsub.s32 0, %v3113
        %v3115 = vrot.slane %v3111, %v3114
        %v3116 = vmul.f32 %v2950, %v3115
        %v3117 = vmul.f32 %v2951, %v3115
        %v3118 = vld [vmem:[#allocation18] sm:$0x1]
        %v3120 = vlaneseq
        %v3121 = vshrl.u32 %v3120, 7
        %v3122 = vsub.s32 0, %v3121
        %v3123 = vrot.slane %v3118, %v3122
        %v3125 = vmul.f32 %v3116, %v3123
        %v3126 = vmul.f32 %v3117, %v3123
        %v3127 = vld [vmem:[#allocation17] sm:$0x1]
        %v3129 = vlaneseq
        %v3130 = vshrl.u32 %v3129, 7
        %v3131 = vsub.s32 0, %v3130
        %v3132 = vrot.slane %v3127, %v3131
        %v3134 = vadd.f32 %v3125, %v3132
        %v3135 = vadd.f32 %v3126, %v3132
        %v3136 = vxor.u32 %v3134, 2147483648
        %v3137 = vxor.u32 %v3135, 2147483648
        %v3138 = vmul.f32 %v3136, 1.442695
        %v3139 = vpow.pop %v3138
        %v3140 = vmul.f32 %v3137, 1.442695
        %v3141 = vpow.pop %v3140
        %v3142 = vadd.f32 %v3139, 1.0
        %v3143 = vadd.f32 %v3141, 1.0
        %v3144 = vrcp.pop %v3142
        %v3145 = vmul.f32 1.0, %v3144
        %v3146 = vrcp.pop %v3143
        %v3147 = vmul.f32 1.0, %v3146
        %v3148 = vmul.f32 %v3134, %v3145
        %v3149 = vmul.f32 %v3135, %v3147
        %3150 = vst.msk [vmem:[#allocation2] sm:$0xff] %vm1848, 0.0
        %3151 = vst.msk [vmem:[#allocation2 + $0x8] sm:$0xff] %vm1848, 0.0
        %3152 = vst.msk [vmem:[#allocation2 + $0x10] sm:$0x3] %vm1851, 0.0
        %3153 = vst.msk [vmem:[#allocation2 + $0x1] sm:$0xff] %vm2155, %v3148
        %3154 = vst.msk [vmem:[#allocation2 + $0x9] sm:$0xff] %vm2155, %v3149
        %v3155 = vld [vmem:[#allocation2] sm:$0xff]
        %v3156 = vld [vmem:[#allocation2 + $0x8] sm:$0xff]
        %v3157 = vld [vmem:[#allocation12] sm:$0xff]
        %v3158 = vld [vmem:[#allocation12 + $0x8] sm:$0xff]
        %s3159 = scalar_lea.vmem [#allocation12], 16
        %v3160 = vld [vmem:[%s3159] sm:$0xff]
        %v3161 = vld [vmem:[%s3159 + $0x8] sm:$0xff]
        %v3163 = vsel %vm2155, %v3148, 0
        %v3166 = vsel %vm2155, %v3149, 0
        %3168 = vmatprep.subr.mxu0 0.0
        %3169 = vmatpush1.msra.mxu0 %v3160
        %3170 = vmatprep.subr.mxu0 0.0
        %3171 = vmatpush1.msra.mxu0 %v3161
        %3172 = vmatprep.subr.mxu0 0.0
        %3173 = vmatpush1.msra.mxu0 0.0
        %3174 = vmatprep.subr.mxu0 0.0
        %3175 = vmatpush1.msra.mxu0 0.0
        %3176 = vmatprep.subr.mxu0 0.0
        %3177 = vmatpush1.msra.mxu0 0.0
        %3178 = vmatprep.subr.mxu0 0.0
        %3179 = vmatpush1.msra.mxu0 0.0
        %3180 = vmatprep.subr.mxu0 0.0
        %3181 = vmatpush1.msra.mxu0 0.0
        %3182 = vmatprep.subr.mxu0 0.0
        %3183 = vmatpush1.msra.mxu0 0.0
        %3184 = vmatprep.subr.mxu0 0.0
        %3185 = vmatpush1.msra.mxu0 0.0
        %3186 = vmatprep.subr.mxu0 0.0
        %3187 = vmatpush1.msra.mxu0 0.0
        %3188 = vmatprep.subr.mxu0 0.0
        %3189 = vmatpush1.msra.mxu0 0.0
        %3190 = vmatprep.subr.mxu0 0.0
        %3191 = vmatpush1.msra.mxu0 0.0
        %3192 = vmatprep.subr.mxu0 0.0
        %3193 = vmatpush1.msra.mxu0 0.0
        %3194 = vmatprep.subr.mxu0 0.0
        %3195 = vmatpush1.msra.mxu0 0.0
        %3196 = vmatprep.subr.mxu0 0.0
        %3197 = vmatpush1.msra.mxu0 0.0
        %3198 = vmatprep.subr.mxu0 0.0
        %3199 = vmatpush1.msra.mxu0 0.0
        %3200 = vmatprep.subr.mxu0 0.0
        %3201 = vmatpush1.msra.mxu0 0.0
        %3202 = vmatprep.subr.mxu0 0.0
        %3203 = vmatpush1.msra.mxu0 0.0
        %3204 = vmatprep.subr.mxu0 0.0
        %3205 = vmatpush1.msra.mxu0 0.0
        %3206 = vmatprep.subr.mxu0 0.0
        %3207 = vmatpush1.msra.mxu0 0.0
        %3208 = vmatprep.subr.mxu0 0.0
        %3209 = vmatpush1.msra.mxu0 0.0
        %3210 = vmatprep.subr.mxu0 0.0
        %3211 = vmatpush1.msra.mxu0 0.0
        %3212 = vmatprep.subr.mxu0 0.0
        %3213 = vmatpush1.msra.mxu0 0.0
        %3214 = vmatprep.subr.mxu0 0.0
        %3215 = vmatpush1.msra.mxu0 0.0
        %3216 = vmatprep.subr.mxu0 0.0
        %3217 = vmatpush1.msra.mxu0 0.0
        %3218 = vmatprep.subr.mxu0 0.0
        %3219 = vmatpush1.msra.mxu0 0.0
        %3220 = vmatprep.subr.mxu0 0.0
        %3221 = vmatpush1.msra.mxu0 0.0
        %3222 = vmatprep.subr.mxu0 0.0
        %3223 = vmatpush1.msra.mxu0 0.0
        %3224 = vmatprep.subr.mxu0 0.0
        %3225 = vmatpush1.msra.mxu0 0.0
        %3226 = vmatprep.subr.mxu0 0.0
        %3227 = vmatpush1.msra.mxu0 0.0
        %3228 = vmatprep.subr.mxu0 0.0
        %3229 = vmatpush1.msra.mxu0 0.0
        %3230 = vmatprep.subr.mxu0 0.0
        %3231 = vmatpush1.msra.mxu0 0.0
        %3232 = vmatprep.mubr.f32.mxu0 0.0
        %3233 = vmatmul.mubr.f32.gmra.mrb[0].mxu0 %v3163
        %v3234 = vpop.f32.mrb[0].mxu0
        %v3235 = vadd.f32 0.0, %v3234
        %v3236 = vpop.f32.mrb[0].mxu0
        %3237 = vmatprep.mubr.f32.mxu0 0.0
        %3238 = vmatmul.mubr.f32.gmra.mrb[0].mxu0 %v3166
        %v3239 = vpop.f32.mrb[0].mxu0
        %v3240 = vadd.f32 0.0, %v3239
        %v3241 = vpop.f32.mrb[0].mxu0
        %3242 = vdwg.mxu0
        %v3244 = vsel %vm2155, %v3155, 0
        %v3247 = vsel %vm2155, %v3156, 0
        %3249 = vmatprep.subr.mxu0 0.0
        %3250 = vmatpush1.msra.mxu0 %v3157
        %3251 = vmatprep.subr.mxu0 0.0
        %3252 = vmatpush1.msra.mxu0 %v3158
        %3253 = vmatprep.subr.mxu0 0.0
        %3254 = vmatpush1.msra.mxu0 0.0
        %3255 = vmatprep.subr.mxu0 0.0
        %3256 = vmatpush1.msra.mxu0 0.0
        %3257 = vmatprep.subr.mxu0 0.0
        %3258 = vmatpush1.msra.mxu0 0.0
        %3259 = vmatprep.subr.mxu0 0.0
        %3260 = vmatpush1.msra.mxu0 0.0
        %3261 = vmatprep.subr.mxu0 0.0
        %3262 = vmatpush1.msra.mxu0 0.0
        %3263 = vmatprep.subr.mxu0 0.0
        %3264 = vmatpush1.msra.mxu0 0.0
        %3265 = vmatprep.subr.mxu0 0.0
        %3266 = vmatpush1.msra.mxu0 0.0
        %3267 = vmatprep.subr.mxu0 0.0
        %3268 = vmatpush1.msra.mxu0 0.0
        %3269 = vmatprep.subr.mxu0 0.0
        %3270 = vmatpush1.msra.mxu0 0.0
        %3271 = vmatprep.subr.mxu0 0.0
        %3272 = vmatpush1.msra.mxu0 0.0
        %3273 = vmatprep.subr.mxu0 0.0
        %3274 = vmatpush1.msra.mxu0 0.0
        %3275 = vmatprep.subr.mxu0 0.0
        %3276 = vmatpush1.msra.mxu0 0.0
        %3277 = vmatprep.subr.mxu0 0.0
        %3278 = vmatpush1.msra.mxu0 0.0
        %3279 = vmatprep.subr.mxu0 0.0
        %3280 = vmatpush1.msra.mxu0 0.0
        %3281 = vmatprep.subr.mxu0 0.0
        %3282 = vmatpush1.msra.mxu0 0.0
        %3283 = vmatprep.subr.mxu0 0.0
        %3284 = vmatpush1.msra.mxu0 0.0
        %3285 = vmatprep.subr.mxu0 0.0
        %3286 = vmatpush1.msra.mxu0 0.0
        %3287 = vmatprep.subr.mxu0 0.0
        %3288 = vmatpush1.msra.mxu0 0.0
        %3289 = vmatprep.subr.mxu0 0.0
        %3290 = vmatpush1.msra.mxu0 0.0
        %3291 = vmatprep.subr.mxu0 0.0
        %3292 = vmatpush1.msra.mxu0 0.0
        %3293 = vmatprep.subr.mxu0 0.0
        %3294 = vmatpush1.msra.mxu0 0.0
        %3295 = vmatprep.subr.mxu0 0.0
        %3296 = vmatpush1.msra.mxu0 0.0
        %3297 = vmatprep.subr.mxu0 0.0
        %3298 = vmatpush1.msra.mxu0 0.0
        %3299 = vmatprep.subr.mxu0 0.0
        %3300 = vmatpush1.msra.mxu0 0.0
        %3301 = vmatprep.subr.mxu0 0.0
        %3302 = vmatpush1.msra.mxu0 0.0
        %3303 = vmatprep.subr.mxu0 0.0
        %3304 = vmatpush1.msra.mxu0 0.0
        %3305 = vmatprep.subr.mxu0 0.0
        %3306 = vmatpush1.msra.mxu0 0.0
        %3307 = vmatprep.subr.mxu0 0.0
        %3308 = vmatpush1.msra.mxu0 0.0
        %3309 = vmatprep.subr.mxu0 0.0
        %3310 = vmatpush1.msra.mxu0 0.0
        %3311 = vmatprep.subr.mxu0 0.0
        %3312 = vmatpush1.msra.mxu0 0.0
        %3313 = vmatprep.mubr.f32.mxu0 0.0
        %3314 = vmatmul.mubr.f32.gmra.mrb[0].mxu0 %v3244
        %v3315 = vpop.f32.mrb[0].mxu0
        %v3316 = vadd.f32 %v3235, %v3315
        %v3317 = vpop.f32.mrb[0].mxu0
        %3318 = vmatprep.mubr.f32.mxu0 0.0
        %3319 = vmatmul.mubr.f32.gmra.mrb[0].mxu0 %v3247
        %v3320 = vpop.f32.mrb[0].mxu0
        %v3321 = vadd.f32 %v3240, %v3320
        %v3322 = vpop.f32.mrb[0].mxu0
        %3323 = vdwg.mxu0
        %v3324 = vld [vmem:[#allocation2 + $0x2] sm:$0xff]
        %v3325 = vld [vmem:[#allocation2 + $0xa] sm:$0xff]
        %s3326 = scalar_lea.vmem [#allocation12], 32
        %v3327 = vld [vmem:[%s3326] sm:$0xff]
        %v3328 = vld [vmem:[%s3326 + $0x8] sm:$0xff]
        %v3330 = vsel %vm2155, %v3324, 0
        %v3333 = vsel %vm2155, %v3325, 0
        %3335 = vmatprep.subr.mxu0 0.0
        %3336 = vmatpush1.msra.mxu0 %v3327
        %3337 = vmatprep.subr.mxu0 0.0
        %3338 = vmatpush1.msra.mxu0 %v3328
        %3339 = vmatprep.subr.mxu0 0.0
        %3340 = vmatpush1.msra.mxu0 0.0
        %3341 = vmatprep.subr.mxu0 0.0
        %3342 = vmatpush1.msra.mxu0 0.0
        %3343 = vmatprep.subr.mxu0 0.0
        %3344 = vmatpush1.msra.mxu0 0.0
        %3345 = vmatprep.subr.mxu0 0.0
        %3346 = vmatpush1.msra.mxu0 0.0
        %3347 = vmatprep.subr.mxu0 0.0
        %3348 = vmatpush1.msra.mxu0 0.0
        %3349 = vmatprep.subr.mxu0 0.0
        %3350 = vmatpush1.msra.mxu0 0.0
        %3351 = vmatprep.subr.mxu0 0.0
        %3352 = vmatpush1.msra.mxu0 0.0
        %3353 = vmatprep.subr.mxu0 0.0
        %3354 = vmatpush1.msra.mxu0 0.0
        %3355 = vmatprep.subr.mxu0 0.0
        %3356 = vmatpush1.msra.mxu0 0.0
        %3357 = vmatprep.subr.mxu0 0.0
        %3358 = vmatpush1.msra.mxu0 0.0
        %3359 = vmatprep.subr.mxu0 0.0
        %3360 = vmatpush1.msra.mxu0 0.0
        %3361 = vmatprep.subr.mxu0 0.0
        %3362 = vmatpush1.msra.mxu0 0.0
        %3363 = vmatprep.subr.mxu0 0.0
        %3364 = vmatpush1.msra.mxu0 0.0
        %3365 = vmatprep.subr.mxu0 0.0
        %3366 = vmatpush1.msra.mxu0 0.0
        %3367 = vmatprep.subr.mxu0 0.0
        %3368 = vmatpush1.msra.mxu0 0.0
        %3369 = vmatprep.subr.mxu0 0.0
        %3370 = vmatpush1.msra.mxu0 0.0
        %3371 = vmatprep.subr.mxu0 0.0
        %3372 = vmatpush1.msra.mxu0 0.0
        %3373 = vmatprep.subr.mxu0 0.0
        %3374 = vmatpush1.msra.mxu0 0.0
        %3375 = vmatprep.subr.mxu0 0.0
        %3376 = vmatpush1.msra.mxu0 0.0
        %3377 = vmatprep.subr.mxu0 0.0
        %3378 = vmatpush1.msra.mxu0 0.0
        %3379 = vmatprep.subr.mxu0 0.0
        %3380 = vmatpush1.msra.mxu0 0.0
        %3381 = vmatprep.subr.mxu0 0.0
        %3382 = vmatpush1.msra.mxu0 0.0
        %3383 = vmatprep.subr.mxu0 0.0
        %3384 = vmatpush1.msra.mxu0 0.0
        %3385 = vmatprep.subr.mxu0 0.0
        %3386 = vmatpush1.msra.mxu0 0.0
        %3387 = vmatprep.subr.mxu0 0.0
        %3388 = vmatpush1.msra.mxu0 0.0
        %3389 = vmatprep.subr.mxu0 0.0
        %3390 = vmatpush1.msra.mxu0 0.0
        %3391 = vmatprep.subr.mxu0 0.0
        %3392 = vmatpush1.msra.mxu0 0.0
        %3393 = vmatprep.subr.mxu0 0.0
        %3394 = vmatpush1.msra.mxu0 0.0
        %3395 = vmatprep.subr.mxu0 0.0
        %3396 = vmatpush1.msra.mxu0 0.0
        %3397 = vmatprep.subr.mxu0 0.0
        %3398 = vmatpush1.msra.mxu0 0.0
        %3399 = vmatprep.mubr.f32.mxu0 0.0
        %3400 = vmatmul.mubr.f32.gmra.mrb[0].mxu0 %v3330
        %v3401 = vpop.f32.mrb[0].mxu0
        %v3402 = vadd.f32 0.0, %v3401
        %v3403 = vpop.f32.mrb[0].mxu0
        %3404 = vmatprep.mubr.f32.mxu0 0.0
        %3405 = vmatmul.mubr.f32.gmra.mrb[0].mxu0 %v3333
        %v3406 = vpop.f32.mrb[0].mxu0
        %v3407 = vadd.f32 0.0, %v3406
        %v3408 = vpop.f32.mrb[0].mxu0
        %3409 = vdwg.mxu0
        %v3410 = vadd.f32 %v3316, %v3402
        %v3411 = vadd.f32 %v3321, %v3407
        %v3412 = vld [vmem:[#allocation11] sm:$0x1]
        %v3414 = vlaneseq
        %v3415 = vshrl.u32 %v3414, 7
        %v3416 = vsub.s32 0, %v3415
        %v3417 = vrot.slane %v3412, %v3416
        %v3419 = vadd.f32 %v3410, %v3417
        %v3420 = vadd.f32 %v3411, %v3417
        %v3421 = vadd.f32 %v2127, %v3419
        %v3422 = vadd.f32 %v2128, %v3420
        %v3423 = vsel %vm2155, %v3421, 0.0
        %v3424 = vsel %vm2155, %v3422, 0.0
        %v3425 = vadd.f32 %v3423, %v3424
        %v3426 = vrot.slane %v3425, 4
        %v3427 = vadd.f32 %v3425, %v3426
        %v3428 = vrot.slane %v3427, 2
        %v3429 = vadd.f32 %v3427, %v3428
        %v3430 = vrot.slane %v3429, 1
        %v3431 = vadd.f32 %v3429, %v3430
        %v3433 = vsel %vm2155, %v3431, 0
        %3435 = vmatprep.subr.mxu0 0.0
        %3436 = vmatpush1.msra.mxu0 %v2145
        %3437 = vmatprep.subr.mxu0 0.0
        %3438 = vmatpush1.msra.mxu0 %v2146
        %3439 = vmatprep.subr.mxu0 0.0
        %3440 = vmatpush1.msra.mxu0 0.0
        %3441 = vmatprep.subr.mxu0 0.0
        %3442 = vmatpush1.msra.mxu0 0.0
        %3443 = vmatprep.subr.mxu0 0.0
        %3444 = vmatpush1.msra.mxu0 0.0
        %3445 = vmatprep.subr.mxu0 0.0
        %3446 = vmatpush1.msra.mxu0 0.0
        %3447 = vmatprep.subr.mxu0 0.0
        %3448 = vmatpush1.msra.mxu0 0.0
        %3449 = vmatprep.subr.mxu0 0.0
        %3450 = vmatpush1.msra.mxu0 0.0
        %3451 = vmatprep.subr.mxu0 0.0
        %3452 = vmatpush1.msra.mxu0 0.0
        %3453 = vmatprep.subr.mxu0 0.0
        %3454 = vmatpush1.msra.mxu0 0.0
        %3455 = vmatprep.subr.mxu0 0.0
        %3456 = vmatpush1.msra.mxu0 0.0
        %3457 = vmatprep.subr.mxu0 0.0
        %3458 = vmatpush1.msra.mxu0 0.0
        %3459 = vmatprep.subr.mxu0 0.0
        %3460 = vmatpush1.msra.mxu0 0.0
        %3461 = vmatprep.subr.mxu0 0.0
        %3462 = vmatpush1.msra.mxu0 0.0
        %3463 = vmatprep.subr.mxu0 0.0
        %3464 = vmatpush1.msra.mxu0 0.0
        %3465 = vmatprep.subr.mxu0 0.0
        %3466 = vmatpush1.msra.mxu0 0.0
        %3467 = vmatprep.subr.mxu0 0.0
        %3468 = vmatpush1.msra.mxu0 0.0
        %3469 = vmatprep.subr.mxu0 0.0
        %3470 = vmatpush1.msra.mxu0 0.0
        %3471 = vmatprep.subr.mxu0 0.0
        %3472 = vmatpush1.msra.mxu0 0.0
        %3473 = vmatprep.subr.mxu0 0.0
        %3474 = vmatpush1.msra.mxu0 0.0
        %3475 = vmatprep.subr.mxu0 0.0
        %3476 = vmatpush1.msra.mxu0 0.0
        %3477 = vmatprep.subr.mxu0 0.0
        %3478 = vmatpush1.msra.mxu0 0.0
        %3479 = vmatprep.subr.mxu0 0.0
        %3480 = vmatpush1.msra.mxu0 0.0
        %3481 = vmatprep.subr.mxu0 0.0
        %3482 = vmatpush1.msra.mxu0 0.0
        %3483 = vmatprep.subr.mxu0 0.0
        %3484 = vmatpush1.msra.mxu0 0.0
        %3485 = vmatprep.subr.mxu0 0.0
        %3486 = vmatpush1.msra.mxu0 0.0
        %3487 = vmatprep.subr.mxu0 0.0
        %3488 = vmatpush1.msra.mxu0 0.0
        %3489 = vmatprep.subr.mxu0 0.0
        %3490 = vmatpush1.msra.mxu0 0.0
        %3491 = vmatprep.subr.mxu0 0.0
        %3492 = vmatpush1.msra.mxu0 0.0
        %3493 = vmatprep.subr.mxu0 0.0
        %3494 = vmatpush1.msra.mxu0 0.0
        %3495 = vmatprep.subr.mxu0 0.0
        %3496 = vmatpush1.msra.mxu0 0.0
        %3497 = vmatprep.subr.mxu0 0.0
        %3498 = vmatpush1.msra.mxu0 0.0
        %3499 = vmatprep.mubr.f32.mxu0 0.0
        %3500 = vmatmul.mubr.f32.gmra.mrb[0].mxu0 %v3433
        %v3501 = vpop.f32.mrb[0].mxu0
        %v3502 = vadd.f32 0.0, %v3501
        %v3503 = vpop.f32.mrb[0].mxu0
        %3504 = vdwg.mxu0
        %v3505 = vmul.f32 %v3502, 0.015625
        %v3507 = vsel %vm1853, %v3505, 0
        %3509 = vmatprep.subr.mxu0 0.0
        %3510 = vmatpush1.msra.mxu0 %v2243
        %3511 = vmatprep.subr.mxu0 0.0
        %3512 = vmatpush1.msra.mxu0 0.0
        %3513 = vmatprep.subr.mxu0 0.0
        %3514 = vmatpush1.msra.mxu0 0.0
        %3515 = vmatprep.subr.mxu0 0.0
        %3516 = vmatpush1.msra.mxu0 0.0
        %3517 = vmatprep.subr.mxu0 0.0
        %3518 = vmatpush1.msra.mxu0 0.0
        %3519 = vmatprep.subr.mxu0 0.0
        %3520 = vmatpush1.msra.mxu0 0.0
        %3521 = vmatprep.subr.mxu0 0.0
        %3522 = vmatpush1.msra.mxu0 0.0
        %3523 = vmatprep.subr.mxu0 0.0
        %3524 = vmatpush1.msra.mxu0 0.0
        %3525 = vmatprep.subr.mxu0 0.0
        %3526 = vmatpush1.msra.mxu0 0.0
        %3527 = vmatprep.subr.mxu0 0.0
        %3528 = vmatpush1.msra.mxu0 0.0
        %3529 = vmatprep.subr.mxu0 0.0
        %3530 = vmatpush1.msra.mxu0 0.0
        %3531 = vmatprep.subr.mxu0 0.0
        %3532 = vmatpush1.msra.mxu0 0.0
        %3533 = vmatprep.subr.mxu0 0.0
        %3534 = vmatpush1.msra.mxu0 0.0
        %3535 = vmatprep.subr.mxu0 0.0
        %3536 = vmatpush1.msra.mxu0 0.0
        %3537 = vmatprep.subr.mxu0 0.0
        %3538 = vmatpush1.msra.mxu0 0.0
        %3539 = vmatprep.subr.mxu0 0.0
        %3540 = vmatpush1.msra.mxu0 0.0
        %3541 = vmatprep.subr.mxu0 0.0
        %3542 = vmatpush1.msra.mxu0 0.0
        %3543 = vmatprep.subr.mxu0 0.0
        %3544 = vmatpush1.msra.mxu0 0.0
        %3545 = vmatprep.subr.mxu0 0.0
        %3546 = vmatpush1.msra.mxu0 0.0
        %3547 = vmatprep.subr.mxu0 0.0
        %3548 = vmatpush1.msra.mxu0 0.0
        %3549 = vmatprep.subr.mxu0 0.0
        %3550 = vmatpush1.msra.mxu0 0.0
        %3551 = vmatprep.subr.mxu0 0.0
        %3552 = vmatpush1.msra.mxu0 0.0
        %3553 = vmatprep.subr.mxu0 0.0
        %3554 = vmatpush1.msra.mxu0 0.0
        %3555 = vmatprep.subr.mxu0 0.0
        %3556 = vmatpush1.msra.mxu0 0.0
        %3557 = vmatprep.subr.mxu0 0.0
        %3558 = vmatpush1.msra.mxu0 0.0
        %3559 = vmatprep.subr.mxu0 0.0
        %3560 = vmatpush1.msra.mxu0 0.0
        %3561 = vmatprep.subr.mxu0 0.0
        %3562 = vmatpush1.msra.mxu0 0.0
        %3563 = vmatprep.subr.mxu0 0.0
        %3564 = vmatpush1.msra.mxu0 0.0
        %3565 = vmatprep.subr.mxu0 0.0
        %3566 = vmatpush1.msra.mxu0 0.0
        %3567 = vmatprep.subr.mxu0 0.0
        %3568 = vmatpush1.msra.mxu0 0.0
        %3569 = vmatprep.subr.mxu0 0.0
        %3570 = vmatpush1.msra.mxu0 0.0
        %3571 = vmatprep.subr.mxu0 0.0
        %3572 = vmatpush1.msra.mxu0 0.0
        %3573 = vmatprep.mubr.f32.mxu0 0.0
        %3574 = vmatmul.mubr.f32.gmra.mrb[0].mxu0 %v3507
        %v3575 = vpop.f32.mrb[0].mxu0
        %v3576 = vadd.f32 0.0, %v3575
        %v3577 = vpop.f32.mrb[0].mxu0
        %3578 = vdwg.mxu0
        %v3579 = vlaneseq
        %v3580 = vshrl.u32 %v3579, 7
        %v3581 = vsub.s32 0, %v3580
        %v3582 = vrot.slane %v3576, %v3581
        %v3583 = vsub.f32 %v3421, %v3582
        %v3584 = vsub.f32 %v3422, %v3582
        %v3585 = vmul.f32 %v3583, %v3583
        %v3586 = vmul.f32 %v3584, %v3584
        %v3587 = vsel %vm2155, %v3585, 0.0
        %v3588 = vsel %vm2155, %v3586, 0.0
        %v3589 = vadd.f32 %v3587, %v3588
        %v3590 = vrot.slane %v3589, 4
        %v3591 = vadd.f32 %v3589, %v3590
        %v3592 = vrot.slane %v3591, 2
        %v3593 = vadd.f32 %v3591, %v3592
        %v3594 = vrot.slane %v3593, 1
        %v3595 = vadd.f32 %v3593, %v3594
        %v3597 = vsel %vm2155, %v3595, 0
        %3599 = vmatprep.subr.mxu0 0.0
        %3600 = vmatpush1.msra.mxu0 %v2145
        %3601 = vmatprep.subr.mxu0 0.0
        %3602 = vmatpush1.msra.mxu0 %v2146
        %3603 = vmatprep.subr.mxu0 0.0
        %3604 = vmatpush1.msra.mxu0 0.0
        %3605 = vmatprep.subr.mxu0 0.0
        %3606 = vmatpush1.msra.mxu0 0.0
        %3607 = vmatprep.subr.mxu0 0.0
        %3608 = vmatpush1.msra.mxu0 0.0
        %3609 = vmatprep.subr.mxu0 0.0
        %3610 = vmatpush1.msra.mxu0 0.0
        %3611 = vmatprep.subr.mxu0 0.0
        %3612 = vmatpush1.msra.mxu0 0.0
        %3613 = vmatprep.subr.mxu0 0.0
        %3614 = vmatpush1.msra.mxu0 0.0
        %3615 = vmatprep.subr.mxu0 0.0
        %3616 = vmatpush1.msra.mxu0 0.0
        %3617 = vmatprep.subr.mxu0 0.0
        %3618 = vmatpush1.msra.mxu0 0.0
        %3619 = vmatprep.subr.mxu0 0.0
        %3620 = vmatpush1.msra.mxu0 0.0
        %3621 = vmatprep.subr.mxu0 0.0
        %3622 = vmatpush1.msra.mxu0 0.0
        %3623 = vmatprep.subr.mxu0 0.0
        %3624 = vmatpush1.msra.mxu0 0.0
        %3625 = vmatprep.subr.mxu0 0.0
        %3626 = vmatpush1.msra.mxu0 0.0
        %3627 = vmatprep.subr.mxu0 0.0
        %3628 = vmatpush1.msra.mxu0 0.0
        %3629 = vmatprep.subr.mxu0 0.0
        %3630 = vmatpush1.msra.mxu0 0.0
        %3631 = vmatprep.subr.mxu0 0.0
        %3632 = vmatpush1.msra.mxu0 0.0
        %3633 = vmatprep.subr.mxu0 0.0
        %3634 = vmatpush1.msra.mxu0 0.0
        %3635 = vmatprep.subr.mxu0 0.0
        %3636 = vmatpush1.msra.mxu0 0.0
        %3637 = vmatprep.subr.mxu0 0.0
        %3638 = vmatpush1.msra.mxu0 0.0
        %3639 = vmatprep.subr.mxu0 0.0
        %3640 = vmatpush1.msra.mxu0 0.0
        %3641 = vmatprep.subr.mxu0 0.0
        %3642 = vmatpush1.msra.mxu0 0.0
        %3643 = vmatprep.subr.mxu0 0.0
        %3644 = vmatpush1.msra.mxu0 0.0
        %3645 = vmatprep.subr.mxu0 0.0
        %3646 = vmatpush1.msra.mxu0 0.0
        %3647 = vmatprep.subr.mxu0 0.0
        %3648 = vmatpush1.msra.mxu0 0.0
        %3649 = vmatprep.subr.mxu0 0.0
        %3650 = vmatpush1.msra.mxu0 0.0
        %3651 = vmatprep.subr.mxu0 0.0
        %3652 = vmatpush1.msra.mxu0 0.0
        %3653 = vmatprep.subr.mxu0 0.0
        %3654 = vmatpush1.msra.mxu0 0.0
        %3655 = vmatprep.subr.mxu0 0.0
        %3656 = vmatpush1.msra.mxu0 0.0
        %3657 = vmatprep.subr.mxu0 0.0
        %3658 = vmatpush1.msra.mxu0 0.0
        %3659 = vmatprep.subr.mxu0 0.0
        %3660 = vmatpush1.msra.mxu0 0.0
        %3661 = vmatprep.subr.mxu0 0.0
        %3662 = vmatpush1.msra.mxu0 0.0
        %3663 = vmatprep.mubr.f32.mxu0 0.0
        %3664 = vmatmul.mubr.f32.gmra.mrb[0].mxu0 %v3597
        %v3665 = vpop.f32.mrb[0].mxu0
        %v3666 = vadd.f32 0.0, %v3665
        %v3667 = vpop.f32.mrb[0].mxu0
        %3668 = vdwg.mxu0
        %v3669 = vmul.f32 %v3666, 0.015625
        %v3670 = vmax.f32 %v3669, 0.0
        %v3672 = vsel %vm1853, %v3670, 0
        %3674 = vmatprep.subr.mxu0 0.0
        %3675 = vmatpush1.msra.mxu0 %v2243
        %3676 = vmatprep.subr.mxu0 0.0
        %3677 = vmatpush1.msra.mxu0 0.0
        %3678 = vmatprep.subr.mxu0 0.0
        %3679 = vmatpush1.msra.mxu0 0.0
        %3680 = vmatprep.subr.mxu0 0.0
        %3681 = vmatpush1.msra.mxu0 0.0
        %3682 = vmatprep.subr.mxu0 0.0
        %3683 = vmatpush1.msra.mxu0 0.0
        %3684 = vmatprep.subr.mxu0 0.0
        %3685 = vmatpush1.msra.mxu0 0.0
        %3686 = vmatprep.subr.mxu0 0.0
        %3687 = vmatpush1.msra.mxu0 0.0
        %3688 = vmatprep.subr.mxu0 0.0
        %3689 = vmatpush1.msra.mxu0 0.0
        %3690 = vmatprep.subr.mxu0 0.0
        %3691 = vmatpush1.msra.mxu0 0.0
        %3692 = vmatprep.subr.mxu0 0.0
        %3693 = vmatpush1.msra.mxu0 0.0
        %3694 = vmatprep.subr.mxu0 0.0
        %3695 = vmatpush1.msra.mxu0 0.0
        %3696 = vmatprep.subr.mxu0 0.0
        %3697 = vmatpush1.msra.mxu0 0.0
        %3698 = vmatprep.subr.mxu0 0.0
        %3699 = vmatpush1.msra.mxu0 0.0
        %3700 = vmatprep.subr.mxu0 0.0
        %3701 = vmatpush1.msra.mxu0 0.0
        %3702 = vmatprep.subr.mxu0 0.0
        %3703 = vmatpush1.msra.mxu0 0.0
        %3704 = vmatprep.subr.mxu0 0.0
        %3705 = vmatpush1.msra.mxu0 0.0
        %3706 = vmatprep.subr.mxu0 0.0
        %3707 = vmatpush1.msra.mxu0 0.0
        %3708 = vmatprep.subr.mxu0 0.0
        %3709 = vmatpush1.msra.mxu0 0.0
        %3710 = vmatprep.subr.mxu0 0.0
        %3711 = vmatpush1.msra.mxu0 0.0
        %3712 = vmatprep.subr.mxu0 0.0
        %3713 = vmatpush1.msra.mxu0 0.0
        %3714 = vmatprep.subr.mxu0 0.0
        %3715 = vmatpush1.msra.mxu0 0.0
        %3716 = vmatprep.subr.mxu0 0.0
        %3717 = vmatpush1.msra.mxu0 0.0
        %3718 = vmatprep.subr.mxu0 0.0
        %3719 = vmatpush1.msra.mxu0 0.0
        %3720 = vmatprep.subr.mxu0 0.0
        %3721 = vmatpush1.msra.mxu0 0.0
        %3722 = vmatprep.subr.mxu0 0.0
        %3723 = vmatpush1.msra.mxu0 0.0
        %3724 = vmatprep.subr.mxu0 0.0
        %3725 = vmatpush1.msra.mxu0 0.0
        %3726 = vmatprep.subr.mxu0 0.0
        %3727 = vmatpush1.msra.mxu0 0.0
        %3728 = vmatprep.subr.mxu0 0.0
        %3729 = vmatpush1.msra.mxu0 0.0
        %3730 = vmatprep.subr.mxu0 0.0
        %3731 = vmatpush1.msra.mxu0 0.0
        %3732 = vmatprep.subr.mxu0 0.0
        %3733 = vmatpush1.msra.mxu0 0.0
        %3734 = vmatprep.subr.mxu0 0.0
        %3735 = vmatpush1.msra.mxu0 0.0
        %3736 = vmatprep.subr.mxu0 0.0
        %3737 = vmatpush1.msra.mxu0 0.0
        %3738 = vmatprep.mubr.f32.mxu0 0.0
        %3739 = vmatmul.mubr.f32.gmra.mrb[0].mxu0 %v3672
        %v3740 = vpop.f32.mrb[0].mxu0
        %v3741 = vadd.f32 1e-06, %v3740
        %v3742 = vpop.f32.mrb[0].mxu0
        %3743 = vdwg.mxu0
        %v3744 = vrsqrt.pop %v3741
        %v3745 = vlaneseq
        %v3746 = vshrl.u32 %v3745, 7
        %v3747 = vsub.s32 0, %v3746
        %v3748 = vrot.slane %v3744, %v3747
        %v3749 = vmul.f32 %v3583, %v3748
        %v3750 = vmul.f32 %v3584, %v3748
        %v3751 = vld [vmem:[#allocation27] sm:$0x1]
        %v3753 = vlaneseq
        %v3754 = vshrl.u32 %v3753, 7
        %v3755 = vsub.s32 0, %v3754
        %v3756 = vrot.slane %v3751, %v3755
        %v3758 = vmul.f32 %v3749, %v3756
        %v3759 = vmul.f32 %v3750, %v3756
        %v3760 = vld [vmem:[#allocation26] sm:$0x1]
        %v3762 = vlaneseq
        %v3763 = vshrl.u32 %v3762, 7
        %v3764 = vsub.s32 0, %v3763
        %v3765 = vrot.slane %v3760, %v3764
        %v3767 = vadd.f32 %v3758, %v3765
        %v3768 = vadd.f32 %v3759, %v3765
        %v3769 = vxor.u32 %v3767, 2147483648
        %v3770 = vxor.u32 %v3768, 2147483648
        %v3771 = vmul.f32 %v3769, 1.442695
        %v3772 = vpow.pop %v3771
        %v3773 = vmul.f32 %v3770, 1.442695
        %v3774 = vpow.pop %v3773
        %v3775 = vadd.f32 %v3772, 1.0
        %v3776 = vadd.f32 %v3774, 1.0
        %v3777 = vrcp.pop %v3775
        %v3778 = vmul.f32 1.0, %v3777
        %v3779 = vrcp.pop %v3776
        %v3780 = vmul.f32 1.0, %v3779
        %v3781 = vmul.f32 %v3767, %v3778
        %v3782 = vmul.f32 %v3768, %v3780
        %3783 = vst.msk [vmem:[#allocation2] sm:$0xff] %vm1848, 0.0
        %3784 = vst.msk [vmem:[#allocation2 + $0x8] sm:$0xff] %vm1848, 0.0
        %3785 = vst.msk [vmem:[#allocation2 + $0x10] sm:$0x3] %vm1851, 0.0
        %3786 = vst.msk [vmem:[#allocation2 + $0x1] sm:$0xff] %vm2155, %v3781
        %3787 = vst.msk [vmem:[#allocation2 + $0x9] sm:$0xff] %vm2155, %v3782
        %v3788 = vld [vmem:[#allocation2] sm:$0xff]
        %v3789 = vld [vmem:[#allocation2 + $0x8] sm:$0xff]
        %v3790 = vld [vmem:[#allocation21] sm:$0xff]
        %v3791 = vld [vmem:[#allocation21 + $0x8] sm:$0xff]
        %s3792 = scalar_lea.vmem [#allocation21], 16
        %v3793 = vld [vmem:[%s3792] sm:$0xff]
        %v3794 = vld [vmem:[%s3792 + $0x8] sm:$0xff]
        %v3796 = vsel %vm2155, %v3781, 0
        %v3799 = vsel %vm2155, %v3782, 0
        %3801 = vmatprep.subr.mxu0 0.0
        %3802 = vmatpush1.msra.mxu0 %v3793
        %3803 = vmatprep.subr.mxu0 0.0
        %3804 = vmatpush1.msra.mxu0 %v3794
        %3805 = vmatprep.subr.mxu0 0.0
        %3806 = vmatpush1.msra.mxu0 0.0
        %3807 = vmatprep.subr.mxu0 0.0
        %3808 = vmatpush1.msra.mxu0 0.0
        %3809 = vmatprep.subr.mxu0 0.0
        %3810 = vmatpush1.msra.mxu0 0.0
        %3811 = vmatprep.subr.mxu0 0.0
        %3812 = vmatpush1.msra.mxu0 0.0
        %3813 = vmatprep.subr.mxu0 0.0
        %3814 = vmatpush1.msra.mxu0 0.0
        %3815 = vmatprep.subr.mxu0 0.0
        %3816 = vmatpush1.msra.mxu0 0.0
        %3817 = vmatprep.subr.mxu0 0.0
        %3818 = vmatpush1.msra.mxu0 0.0
        %3819 = vmatprep.subr.mxu0 0.0
        %3820 = vmatpush1.msra.mxu0 0.0
        %3821 = vmatprep.subr.mxu0 0.0
        %3822 = vmatpush1.msra.mxu0 0.0
        %3823 = vmatprep.subr.mxu0 0.0
        %3824 = vmatpush1.msra.mxu0 0.0
        %3825 = vmatprep.subr.mxu0 0.0
        %3826 = vmatpush1.msra.mxu0 0.0
        %3827 = vmatprep.subr.mxu0 0.0
        %3828 = vmatpush1.msra.mxu0 0.0
        %3829 = vmatprep.subr.mxu0 0.0
        %3830 = vmatpush1.msra.mxu0 0.0
        %3831 = vmatprep.subr.mxu0 0.0
        %3832 = vmatpush1.msra.mxu0 0.0
        %3833 = vmatprep.subr.mxu0 0.0
        %3834 = vmatpush1.msra.mxu0 0.0
        %3835 = vmatprep.subr.mxu0 0.0
        %3836 = vmatpush1.msra.mxu0 0.0
        %3837 = vmatprep.subr.mxu0 0.0
        %3838 = vmatpush1.msra.mxu0 0.0
        %3839 = vmatprep.subr.mxu0 0.0
        %3840 = vmatpush1.msra.mxu0 0.0
        %3841 = vmatprep.subr.mxu0 0.0
        %3842 = vmatpush1.msra.mxu0 0.0
        %3843 = vmatprep.subr.mxu0 0.0
        %3844 = vmatpush1.msra.mxu0 0.0
        %3845 = vmatprep.subr.mxu0 0.0
        %3846 = vmatpush1.msra.mxu0 0.0
        %3847 = vmatprep.subr.mxu0 0.0
        %3848 = vmatpush1.msra.mxu0 0.0
        %3849 = vmatprep.subr.mxu0 0.0
        %3850 = vmatpush1.msra.mxu0 0.0
        %3851 = vmatprep.subr.mxu0 0.0
        %3852 = vmatpush1.msra.mxu0 0.0
        %3853 = vmatprep.subr.mxu0 0.0
        %3854 = vmatpush1.msra.mxu0 0.0
        %3855 = vmatprep.subr.mxu0 0.0
        %3856 = vmatpush1.msra.mxu0 0.0
        %3857 = vmatprep.subr.mxu0 0.0
        %3858 = vmatpush1.msra.mxu0 0.0
        %3859 = vmatprep.subr.mxu0 0.0
        %3860 = vmatpush1.msra.mxu0 0.0
        %3861 = vmatprep.subr.mxu0 0.0
        %3862 = vmatpush1.msra.mxu0 0.0
        %3863 = vmatprep.subr.mxu0 0.0
        %3864 = vmatpush1.msra.mxu0 0.0
        %3865 = vmatprep.mubr.f32.mxu0 0.0
        %3866 = vmatmul.mubr.f32.gmra.mrb[0].mxu0 %v3796
        %v3867 = vpop.f32.mrb[0].mxu0
        %v3868 = vadd.f32 0.0, %v3867
        %v3869 = vpop.f32.mrb[0].mxu0
        %3870 = vmatprep.mubr.f32.mxu0 0.0
        %3871 = vmatmul.mubr.f32.gmra.mrb[0].mxu0 %v3799
        %v3872 = vpop.f32.mrb[0].mxu0
        %v3873 = vadd.f32 0.0, %v3872
        %v3874 = vpop.f32.mrb[0].mxu0
        %3875 = vdwg.mxu0
        %v3877 = vsel %vm2155, %v3788, 0
        %v3880 = vsel %vm2155, %v3789, 0
        %3882 = vmatprep.subr.mxu0 0.0
        %3883 = vmatpush1.msra.mxu0 %v3790
        %3884 = vmatprep.subr.mxu0 0.0
        %3885 = vmatpush1.msra.mxu0 %v3791
        %3886 = vmatprep.subr.mxu0 0.0
        %3887 = vmatpush1.msra.mxu0 0.0
        %3888 = vmatprep.subr.mxu0 0.0
        %3889 = vmatpush1.msra.mxu0 0.0
        %3890 = vmatprep.subr.mxu0 0.0
        %3891 = vmatpush1.msra.mxu0 0.0
        %3892 = vmatprep.subr.mxu0 0.0
        %3893 = vmatpush1.msra.mxu0 0.0
        %3894 = vmatprep.subr.mxu0 0.0
        %3895 = vmatpush1.msra.mxu0 0.0
        %3896 = vmatprep.subr.mxu0 0.0
        %3897 = vmatpush1.msra.mxu0 0.0
        %3898 = vmatprep.subr.mxu0 0.0
        %3899 = vmatpush1.msra.mxu0 0.0
        %3900 = vmatprep.subr.mxu0 0.0
        %3901 = vmatpush1.msra.mxu0 0.0
        %3902 = vmatprep.subr.mxu0 0.0
        %3903 = vmatpush1.msra.mxu0 0.0
        %3904 = vmatprep.subr.mxu0 0.0
        %3905 = vmatpush1.msra.mxu0 0.0
        %3906 = vmatprep.subr.mxu0 0.0
        %3907 = vmatpush1.msra.mxu0 0.0
        %3908 = vmatprep.subr.mxu0 0.0
        %3909 = vmatpush1.msra.mxu0 0.0
        %3910 = vmatprep.subr.mxu0 0.0
        %3911 = vmatpush1.msra.mxu0 0.0
        %3912 = vmatprep.subr.mxu0 0.0
        %3913 = vmatpush1.msra.mxu0 0.0
        %3914 = vmatprep.subr.mxu0 0.0
        %3915 = vmatpush1.msra.mxu0 0.0
        %3916 = vmatprep.subr.mxu0 0.0
        %3917 = vmatpush1.msra.mxu0 0.0
        %3918 = vmatprep.subr.mxu0 0.0
        %3919 = vmatpush1.msra.mxu0 0.0
        %3920 = vmatprep.subr.mxu0 0.0
        %3921 = vmatpush1.msra.mxu0 0.0
        %3922 = vmatprep.subr.mxu0 0.0
        %3923 = vmatpush1.msra.mxu0 0.0
        %3924 = vmatprep.subr.mxu0 0.0
        %3925 = vmatpush1.msra.mxu0 0.0
        %3926 = vmatprep.subr.mxu0 0.0
        %3927 = vmatpush1.msra.mxu0 0.0
        %3928 = vmatprep.subr.mxu0 0.0
        %3929 = vmatpush1.msra.mxu0 0.0
        %3930 = vmatprep.subr.mxu0 0.0
        %3931 = vmatpush1.msra.mxu0 0.0
        %3932 = vmatprep.subr.mxu0 0.0
        %3933 = vmatpush1.msra.mxu0 0.0
        %3934 = vmatprep.subr.mxu0 0.0
        %3935 = vmatpush1.msra.mxu0 0.0
        %3936 = vmatprep.subr.mxu0 0.0
        %3937 = vmatpush1.msra.mxu0 0.0
        %3938 = vmatprep.subr.mxu0 0.0
        %3939 = vmatpush1.msra.mxu0 0.0
        %3940 = vmatprep.subr.mxu0 0.0
        %3941 = vmatpush1.msra.mxu0 0.0
        %3942 = vmatprep.subr.mxu0 0.0
        %3943 = vmatpush1.msra.mxu0 0.0
        %3944 = vmatprep.subr.mxu0 0.0
        %3945 = vmatpush1.msra.mxu0 0.0
        %3946 = vmatprep.mubr.f32.mxu0 0.0
        %3947 = vmatmul.mubr.f32.gmra.mrb[0].mxu0 %v3877
        %v3948 = vpop.f32.mrb[0].mxu0
        %v3949 = vadd.f32 %v3868, %v3948
        %v3950 = vpop.f32.mrb[0].mxu0
        %3951 = vmatprep.mubr.f32.mxu0 0.0
        %3952 = vmatmul.mubr.f32.gmra.mrb[0].mxu0 %v3880
        %v3953 = vpop.f32.mrb[0].mxu0
        %v3954 = vadd.f32 %v3873, %v3953
        %v3955 = vpop.f32.mrb[0].mxu0
        %3956 = vdwg.mxu0
        %v3957 = vld [vmem:[#allocation2 + $0x2] sm:$0xff]
        %v3958 = vld [vmem:[#allocation2 + $0xa] sm:$0xff]
        %s3959 = scalar_lea.vmem [#allocation21], 32
        %v3960 = vld [vmem:[%s3959] sm:$0xff]
        %v3961 = vld [vmem:[%s3959 + $0x8] sm:$0xff]
        %v3963 = vsel %vm2155, %v3957, 0
        %v3966 = vsel %vm2155, %v3958, 0
        %3968 = vmatprep.subr.mxu0 0.0
        %3969 = vmatpush1.msra.mxu0 %v3960
        %3970 = vmatprep.subr.mxu0 0.0
        %3971 = vmatpush1.msra.mxu0 %v3961
        %3972 = vmatprep.subr.mxu0 0.0
        %3973 = vmatpush1.msra.mxu0 0.0
        %3974 = vmatprep.subr.mxu0 0.0
        %3975 = vmatpush1.msra.mxu0 0.0
        %3976 = vmatprep.subr.mxu0 0.0
        %3977 = vmatpush1.msra.mxu0 0.0
        %3978 = vmatprep.subr.mxu0 0.0
        %3979 = vmatpush1.msra.mxu0 0.0
        %3980 = vmatprep.subr.mxu0 0.0
        %3981 = vmatpush1.msra.mxu0 0.0
        %3982 = vmatprep.subr.mxu0 0.0
        %3983 = vmatpush1.msra.mxu0 0.0
        %3984 = vmatprep.subr.mxu0 0.0
        %3985 = vmatpush1.msra.mxu0 0.0
        %3986 = vmatprep.subr.mxu0 0.0
        %3987 = vmatpush1.msra.mxu0 0.0
        %3988 = vmatprep.subr.mxu0 0.0
        %3989 = vmatpush1.msra.mxu0 0.0
        %3990 = vmatprep.subr.mxu0 0.0
        %3991 = vmatpush1.msra.mxu0 0.0
        %3992 = vmatprep.subr.mxu0 0.0
        %3993 = vmatpush1.msra.mxu0 0.0
        %3994 = vmatprep.subr.mxu0 0.0
        %3995 = vmatpush1.msra.mxu0 0.0
        %3996 = vmatprep.subr.mxu0 0.0
        %3997 = vmatpush1.msra.mxu0 0.0
        %3998 = vmatprep.subr.mxu0 0.0
        %3999 = vmatpush1.msra.mxu0 0.0
        %4000 = vmatprep.subr.mxu0 0.0
        %4001 = vmatpush1.msra.mxu0 0.0
        %4002 = vmatprep.subr.mxu0 0.0
        %4003 = vmatpush1.msra.mxu0 0.0
        %4004 = vmatprep.subr.mxu0 0.0
        %4005 = vmatpush1.msra.mxu0 0.0
        %4006 = vmatprep.subr.mxu0 0.0
        %4007 = vmatpush1.msra.mxu0 0.0
        %4008 = vmatprep.subr.mxu0 0.0
        %4009 = vmatpush1.msra.mxu0 0.0
        %4010 = vmatprep.subr.mxu0 0.0
        %4011 = vmatpush1.msra.mxu0 0.0
        %4012 = vmatprep.subr.mxu0 0.0
        %4013 = vmatpush1.msra.mxu0 0.0
        %4014 = vmatprep.subr.mxu0 0.0
        %4015 = vmatpush1.msra.mxu0 0.0
        %4016 = vmatprep.subr.mxu0 0.0
        %4017 = vmatpush1.msra.mxu0 0.0
        %4018 = vmatprep.subr.mxu0 0.0
        %4019 = vmatpush1.msra.mxu0 0.0
        %4020 = vmatprep.subr.mxu0 0.0
        %4021 = vmatpush1.msra.mxu0 0.0
        %4022 = vmatprep.subr.mxu0 0.0
        %4023 = vmatpush1.msra.mxu0 0.0
        %4024 = vmatprep.subr.mxu0 0.0
        %4025 = vmatpush1.msra.mxu0 0.0
        %4026 = vmatprep.subr.mxu0 0.0
        %4027 = vmatpush1.msra.mxu0 0.0
        %4028 = vmatprep.subr.mxu0 0.0
        %4029 = vmatpush1.msra.mxu0 0.0
        %4030 = vmatprep.subr.mxu0 0.0
        %4031 = vmatpush1.msra.mxu0 0.0
        %4032 = vmatprep.mubr.f32.mxu0 0.0
        %4033 = vmatmul.mubr.f32.gmra.mrb[0].mxu0 %v3963
        %v4034 = vpop.f32.mrb[0].mxu0
        %v4035 = vadd.f32 0.0, %v4034
        %v4036 = vpop.f32.mrb[0].mxu0
        %4037 = vmatprep.mubr.f32.mxu0 0.0
        %4038 = vmatmul.mubr.f32.gmra.mrb[0].mxu0 %v3966
        %v4039 = vpop.f32.mrb[0].mxu0
        %v4040 = vadd.f32 0.0, %v4039
        %v4041 = vpop.f32.mrb[0].mxu0
        %4042 = vdwg.mxu0
        %v4043 = vadd.f32 %v3949, %v4035
        %v4044 = vadd.f32 %v3954, %v4040
        %v4045 = vld [vmem:[#allocation20] sm:$0x1]
        %v4047 = vlaneseq
        %v4048 = vshrl.u32 %v4047, 7
        %v4049 = vsub.s32 0, %v4048
        %v4050 = vrot.slane %v4045, %v4049
        %v4052 = vadd.f32 %v4043, %v4050
        %v4053 = vadd.f32 %v4044, %v4050
        %v4054 = vsel %vm2155, %v4052, 0.0
        %v4055 = vsel %vm2155, %v4053, 0.0
        %v4056 = vadd.f32 %v4054, %v4055
        %v4057 = vrot.slane %v4056, 4
        %v4058 = vadd.f32 %v4056, %v4057
        %v4059 = vrot.slane %v4058, 2
        %v4060 = vadd.f32 %v4058, %v4059
        %v4061 = vrot.slane %v4060, 1
        %v4062 = vadd.f32 %v4060, %v4061
        %v4064 = vsel %vm2155, %v4062, 0
        %4066 = vmatprep.subr.mxu0 0.0
        %4067 = vmatpush1.msra.mxu0 %v2145
        %4068 = vmatprep.subr.mxu0 0.0
        %4069 = vmatpush1.msra.mxu0 %v2146
        %4070 = vmatprep.subr.mxu0 0.0
        %4071 = vmatpush1.msra.mxu0 0.0
        %4072 = vmatprep.subr.mxu0 0.0
        %4073 = vmatpush1.msra.mxu0 0.0
        %4074 = vmatprep.subr.mxu0 0.0
        %4075 = vmatpush1.msra.mxu0 0.0
        %4076 = vmatprep.subr.mxu0 0.0
        %4077 = vmatpush1.msra.mxu0 0.0
        %4078 = vmatprep.subr.mxu0 0.0
        %4079 = vmatpush1.msra.mxu0 0.0
        %4080 = vmatprep.subr.mxu0 0.0
        %4081 = vmatpush1.msra.mxu0 0.0
        %4082 = vmatprep.subr.mxu0 0.0
        %4083 = vmatpush1.msra.mxu0 0.0
        %4084 = vmatprep.subr.mxu0 0.0
        %4085 = vmatpush1.msra.mxu0 0.0
        %4086 = vmatprep.subr.mxu0 0.0
        %4087 = vmatpush1.msra.mxu0 0.0
        %4088 = vmatprep.subr.mxu0 0.0
        %4089 = vmatpush1.msra.mxu0 0.0
        %4090 = vmatprep.subr.mxu0 0.0
        %4091 = vmatpush1.msra.mxu0 0.0
        %4092 = vmatprep.subr.mxu0 0.0
        %4093 = vmatpush1.msra.mxu0 0.0
        %4094 = vmatprep.subr.mxu0 0.0
        %4095 = vmatpush1.msra.mxu0 0.0
        %4096 = vmatprep.subr.mxu0 0.0
        %4097 = vmatpush1.msra.mxu0 0.0
        %4098 = vmatprep.subr.mxu0 0.0
        %4099 = vmatpush1.msra.mxu0 0.0
        %4100 = vmatprep.subr.mxu0 0.0
        %4101 = vmatpush1.msra.mxu0 0.0
        %4102 = vmatprep.subr.mxu0 0.0
        %4103 = vmatpush1.msra.mxu0 0.0
        %4104 = vmatprep.subr.mxu0 0.0
        %4105 = vmatpush1.msra.mxu0 0.0
        %4106 = vmatprep.subr.mxu0 0.0
        %4107 = vmatpush1.msra.mxu0 0.0
        %4108 = vmatprep.subr.mxu0 0.0
        %4109 = vmatpush1.msra.mxu0 0.0
        %4110 = vmatprep.subr.mxu0 0.0
        %4111 = vmatpush1.msra.mxu0 0.0
        %4112 = vmatprep.subr.mxu0 0.0
        %4113 = vmatpush1.msra.mxu0 0.0
        %4114 = vmatprep.subr.mxu0 0.0
        %4115 = vmatpush1.msra.mxu0 0.0
        %4116 = vmatprep.subr.mxu0 0.0
        %4117 = vmatpush1.msra.mxu0 0.0
        %4118 = vmatprep.subr.mxu0 0.0
        %4119 = vmatpush1.msra.mxu0 0.0
        %4120 = vmatprep.subr.mxu0 0.0
        %4121 = vmatpush1.msra.mxu0 0.0
        %4122 = vmatprep.subr.mxu0 0.0
        %4123 = vmatpush1.msra.mxu0 0.0
        %4124 = vmatprep.subr.mxu0 0.0
        %4125 = vmatpush1.msra.mxu0 0.0
        %4126 = vmatprep.subr.mxu0 0.0
        %4127 = vmatpush1.msra.mxu0 0.0
        %4128 = vmatprep.subr.mxu0 0.0
        %4129 = vmatpush1.msra.mxu0 0.0
        %4130 = vmatprep.mubr.f32.mxu0 0.0
        %4131 = vmatmul.mubr.f32.gmra.mrb[0].mxu0 %v4064
        %v4132 = vpop.f32.mrb[0].mxu0
        %v4133 = vadd.f32 0.0, %v4132
        %v4134 = vpop.f32.mrb[0].mxu0
        %4135 = vdwg.mxu0
        %v4136 = vmul.f32 %v4133, 0.015625
        %v4138 = vsel %vm1853, %v4136, 0
        %4140 = vmatprep.subr.mxu0 0.0
        %4141 = vmatpush1.msra.mxu0 %v2243
        %4142 = vmatprep.subr.mxu0 0.0
        %4143 = vmatpush1.msra.mxu0 0.0
        %4144 = vmatprep.subr.mxu0 0.0
        %4145 = vmatpush1.msra.mxu0 0.0
        %4146 = vmatprep.subr.mxu0 0.0
        %4147 = vmatpush1.msra.mxu0 0.0
        %4148 = vmatprep.subr.mxu0 0.0
        %4149 = vmatpush1.msra.mxu0 0.0
        %4150 = vmatprep.subr.mxu0 0.0
        %4151 = vmatpush1.msra.mxu0 0.0
        %4152 = vmatprep.subr.mxu0 0.0
        %4153 = vmatpush1.msra.mxu0 0.0
        %4154 = vmatprep.subr.mxu0 0.0
        %4155 = vmatpush1.msra.mxu0 0.0
        %4156 = vmatprep.subr.mxu0 0.0
        %4157 = vmatpush1.msra.mxu0 0.0
        %4158 = vmatprep.subr.mxu0 0.0
        %4159 = vmatpush1.msra.mxu0 0.0
        %4160 = vmatprep.subr.mxu0 0.0
        %4161 = vmatpush1.msra.mxu0 0.0
        %4162 = vmatprep.subr.mxu0 0.0
        %4163 = vmatpush1.msra.mxu0 0.0
        %4164 = vmatprep.subr.mxu0 0.0
        %4165 = vmatpush1.msra.mxu0 0.0
        %4166 = vmatprep.subr.mxu0 0.0
        %4167 = vmatpush1.msra.mxu0 0.0
        %4168 = vmatprep.subr.mxu0 0.0
        %4169 = vmatpush1.msra.mxu0 0.0
        %4170 = vmatprep.subr.mxu0 0.0
        %4171 = vmatpush1.msra.mxu0 0.0
        %4172 = vmatprep.subr.mxu0 0.0
        %4173 = vmatpush1.msra.mxu0 0.0
        %4174 = vmatprep.subr.mxu0 0.0
        %4175 = vmatpush1.msra.mxu0 0.0
        %4176 = vmatprep.subr.mxu0 0.0
        %4177 = vmatpush1.msra.mxu0 0.0
        %4178 = vmatprep.subr.mxu0 0.0
        %4179 = vmatpush1.msra.mxu0 0.0
        %4180 = vmatprep.subr.mxu0 0.0
        %4181 = vmatpush1.msra.mxu0 0.0
        %4182 = vmatprep.subr.mxu0 0.0
        %4183 = vmatpush1.msra.mxu0 0.0
        %4184 = vmatprep.subr.mxu0 0.0
        %4185 = vmatpush1.msra.mxu0 0.0
        %4186 = vmatprep.subr.mxu0 0.0
        %4187 = vmatpush1.msra.mxu0 0.0
        %4188 = vmatprep.subr.mxu0 0.0
        %4189 = vmatpush1.msra.mxu0 0.0
        %4190 = vmatprep.subr.mxu0 0.0
        %4191 = vmatpush1.msra.mxu0 0.0
        %4192 = vmatprep.subr.mxu0 0.0
        %4193 = vmatpush1.msra.mxu0 0.0
        %4194 = vmatprep.subr.mxu0 0.0
        %4195 = vmatpush1.msra.mxu0 0.0
        %4196 = vmatprep.subr.mxu0 0.0
        %4197 = vmatpush1.msra.mxu0 0.0
        %4198 = vmatprep.subr.mxu0 0.0
        %4199 = vmatpush1.msra.mxu0 0.0
        %4200 = vmatprep.subr.mxu0 0.0
        %4201 = vmatpush1.msra.mxu0 0.0
        %4202 = vmatprep.subr.mxu0 0.0
        %4203 = vmatpush1.msra.mxu0 0.0
        %4204 = vmatprep.mubr.f32.mxu0 0.0
        %4205 = vmatmul.mubr.f32.gmra.mrb[0].mxu0 %v4138
        %v4206 = vpop.f32.mrb[0].mxu0
        %v4207 = vadd.f32 0.0, %v4206
        %v4208 = vpop.f32.mrb[0].mxu0
        %4209 = vdwg.mxu0
        %v4210 = vlaneseq
        %v4211 = vshrl.u32 %v4210, 7
        %v4212 = vsub.s32 0, %v4211
        %v4213 = vrot.slane %v4207, %v4212
        %v4214 = vsub.f32 %v4052, %v4213
        %v4215 = vsub.f32 %v4053, %v4213
        %v4216 = vmul.f32 %v4214, %v4214
        %v4217 = vmul.f32 %v4215, %v4215
        %v4218 = vsel %vm2155, %v4216, 0.0
        %v4219 = vsel %vm2155, %v4217, 0.0
        %v4220 = vadd.f32 %v4218, %v4219
        %v4221 = vrot.slane %v4220, 4
        %v4222 = vadd.f32 %v4220, %v4221
        %v4223 = vrot.slane %v4222, 2
        %v4224 = vadd.f32 %v4222, %v4223
        %v4225 = vrot.slane %v4224, 1
        %v4226 = vadd.f32 %v4224, %v4225
        %v4228 = vsel %vm2155, %v4226, 0
        %4230 = vmatprep.subr.mxu0 0.0
        %4231 = vmatpush1.msra.mxu0 %v2145
        %4232 = vmatprep.subr.mxu0 0.0
        %4233 = vmatpush1.msra.mxu0 %v2146
        %4234 = vmatprep.subr.mxu0 0.0
        %4235 = vmatpush1.msra.mxu0 0.0
        %4236 = vmatprep.subr.mxu0 0.0
        %4237 = vmatpush1.msra.mxu0 0.0
        %4238 = vmatprep.subr.mxu0 0.0
        %4239 = vmatpush1.msra.mxu0 0.0
        %4240 = vmatprep.subr.mxu0 0.0
        %4241 = vmatpush1.msra.mxu0 0.0
        %4242 = vmatprep.subr.mxu0 0.0
        %4243 = vmatpush1.msra.mxu0 0.0
        %4244 = vmatprep.subr.mxu0 0.0
        %4245 = vmatpush1.msra.mxu0 0.0
        %4246 = vmatprep.subr.mxu0 0.0
        %4247 = vmatpush1.msra.mxu0 0.0
        %4248 = vmatprep.subr.mxu0 0.0
        %4249 = vmatpush1.msra.mxu0 0.0
        %4250 = vmatprep.subr.mxu0 0.0
        %4251 = vmatpush1.msra.mxu0 0.0
        %4252 = vmatprep.subr.mxu0 0.0
        %4253 = vmatpush1.msra.mxu0 0.0
        %4254 = vmatprep.subr.mxu0 0.0
        %4255 = vmatpush1.msra.mxu0 0.0
        %4256 = vmatprep.subr.mxu0 0.0
        %4257 = vmatpush1.msra.mxu0 0.0
        %4258 = vmatprep.subr.mxu0 0.0
        %4259 = vmatpush1.msra.mxu0 0.0
        %4260 = vmatprep.subr.mxu0 0.0
        %4261 = vmatpush1.msra.mxu0 0.0
        %4262 = vmatprep.subr.mxu0 0.0
        %4263 = vmatpush1.msra.mxu0 0.0
        %4264 = vmatprep.subr.mxu0 0.0
        %4265 = vmatpush1.msra.mxu0 0.0
        %4266 = vmatprep.subr.mxu0 0.0
        %4267 = vmatpush1.msra.mxu0 0.0
        %4268 = vmatprep.subr.mxu0 0.0
        %4269 = vmatpush1.msra.mxu0 0.0
        %4270 = vmatprep.subr.mxu0 0.0
        %4271 = vmatpush1.msra.mxu0 0.0
        %4272 = vmatprep.subr.mxu0 0.0
        %4273 = vmatpush1.msra.mxu0 0.0
        %4274 = vmatprep.subr.mxu0 0.0
        %4275 = vmatpush1.msra.mxu0 0.0
        %4276 = vmatprep.subr.mxu0 0.0
        %4277 = vmatpush1.msra.mxu0 0.0
        %4278 = vmatprep.subr.mxu0 0.0
        %4279 = vmatpush1.msra.mxu0 0.0
        %4280 = vmatprep.subr.mxu0 0.0
        %4281 = vmatpush1.msra.mxu0 0.0
        %4282 = vmatprep.subr.mxu0 0.0
        %4283 = vmatpush1.msra.mxu0 0.0
        %4284 = vmatprep.subr.mxu0 0.0
        %4285 = vmatpush1.msra.mxu0 0.0
        %4286 = vmatprep.subr.mxu0 0.0
        %4287 = vmatpush1.msra.mxu0 0.0
        %4288 = vmatprep.subr.mxu0 0.0
        %4289 = vmatpush1.msra.mxu0 0.0
        %4290 = vmatprep.subr.mxu0 0.0
        %4291 = vmatpush1.msra.mxu0 0.0
        %4292 = vmatprep.subr.mxu0 0.0
        %4293 = vmatpush1.msra.mxu0 0.0
        %4294 = vmatprep.mubr.f32.mxu0 0.0
        %4295 = vmatmul.mubr.f32.gmra.mrb[0].mxu0 %v4228
        %v4296 = vpop.f32.mrb[0].mxu0
        %v4297 = vadd.f32 0.0, %v4296
        %v4298 = vpop.f32.mrb[0].mxu0
        %4299 = vdwg.mxu0
        %v4300 = vmul.f32 %v4297, 0.015625
        %v4301 = vmax.f32 %v4300, 0.0
        %v4303 = vsel %vm1853, %v4301, 0
        %4305 = vmatprep.subr.mxu0 0.0
        %4306 = vmatpush1.msra.mxu0 %v2243
        %4307 = vmatprep.subr.mxu0 0.0
        %4308 = vmatpush1.msra.mxu0 0.0
        %4309 = vmatprep.subr.mxu0 0.0
        %4310 = vmatpush1.msra.mxu0 0.0
        %4311 = vmatprep.subr.mxu0 0.0
        %4312 = vmatpush1.msra.mxu0 0.0
        %4313 = vmatprep.subr.mxu0 0.0
        %4314 = vmatpush1.msra.mxu0 0.0
        %4315 = vmatprep.subr.mxu0 0.0
        %4316 = vmatpush1.msra.mxu0 0.0
        %4317 = vmatprep.subr.mxu0 0.0
        %4318 = vmatpush1.msra.mxu0 0.0
        %4319 = vmatprep.subr.mxu0 0.0
        %4320 = vmatpush1.msra.mxu0 0.0
        %4321 = vmatprep.subr.mxu0 0.0
        %4322 = vmatpush1.msra.mxu0 0.0
        %4323 = vmatprep.subr.mxu0 0.0
        %4324 = vmatpush1.msra.mxu0 0.0
        %4325 = vmatprep.subr.mxu0 0.0
        %4326 = vmatpush1.msra.mxu0 0.0
        %4327 = vmatprep.subr.mxu0 0.0
        %4328 = vmatpush1.msra.mxu0 0.0
        %4329 = vmatprep.subr.mxu0 0.0
        %4330 = vmatpush1.msra.mxu0 0.0
        %4331 = vmatprep.subr.mxu0 0.0
        %4332 = vmatpush1.msra.mxu0 0.0
        %4333 = vmatprep.subr.mxu0 0.0
        %4334 = vmatpush1.msra.mxu0 0.0
        %4335 = vmatprep.subr.mxu0 0.0
        %4336 = vmatpush1.msra.mxu0 0.0
        %4337 = vmatprep.subr.mxu0 0.0
        %4338 = vmatpush1.msra.mxu0 0.0
        %4339 = vmatprep.subr.mxu0 0.0
        %4340 = vmatpush1.msra.mxu0 0.0
        %4341 = vmatprep.subr.mxu0 0.0
        %4342 = vmatpush1.msra.mxu0 0.0
        %4343 = vmatprep.subr.mxu0 0.0
        %4344 = vmatpush1.msra.mxu0 0.0
        %4345 = vmatprep.subr.mxu0 0.0
        %4346 = vmatpush1.msra.mxu0 0.0
        %4347 = vmatprep.subr.mxu0 0.0
        %4348 = vmatpush1.msra.mxu0 0.0
        %4349 = vmatprep.subr.mxu0 0.0
        %4350 = vmatpush1.msra.mxu0 0.0
        %4351 = vmatprep.subr.mxu0 0.0
        %4352 = vmatpush1.msra.mxu0 0.0
        %4353 = vmatprep.subr.mxu0 0.0
        %4354 = vmatpush1.msra.mxu0 0.0
        %4355 = vmatprep.subr.mxu0 0.0
        %4356 = vmatpush1.msra.mxu0 0.0
        %4357 = vmatprep.subr.mxu0 0.0
        %4358 = vmatpush1.msra.mxu0 0.0
        %4359 = vmatprep.subr.mxu0 0.0
        %4360 = vmatpush1.msra.mxu0 0.0
        %4361 = vmatprep.subr.mxu0 0.0
        %4362 = vmatpush1.msra.mxu0 0.0
        %4363 = vmatprep.subr.mxu0 0.0
        %4364 = vmatpush1.msra.mxu0 0.0
        %4365 = vmatprep.subr.mxu0 0.0
        %4366 = vmatpush1.msra.mxu0 0.0
        %4367 = vmatprep.subr.mxu0 0.0
        %4368 = vmatpush1.msra.mxu0 0.0
        %4369 = vmatprep.mubr.f32.mxu0 0.0
        %4370 = vmatmul.mubr.f32.gmra.mrb[0].mxu0 %v4303
        %v4371 = vpop.f32.mrb[0].mxu0
        %v4372 = vadd.f32 1e-06, %v4371
        %v4373 = vpop.f32.mrb[0].mxu0
        %4374 = vdwg.mxu0
        %v4375 = vrsqrt.pop %v4372
        %v4376 = vlaneseq
        %v4377 = vshrl.u32 %v4376, 7
        %v4378 = vsub.s32 0, %v4377
        %v4379 = vrot.slane %v4375, %v4378
        %v4380 = vmul.f32 %v4214, %v4379
        %v4381 = vmul.f32 %v4215, %v4379
        %v4382 = vld [vmem:[#allocation30] sm:$0x1]
        %v4384 = vlaneseq
        %v4385 = vshrl.u32 %v4384, 7
        %v4386 = vsub.s32 0, %v4385
        %v4387 = vrot.slane %v4382, %v4386
        %v4389 = vmul.f32 %v4380, %v4387
        %v4390 = vmul.f32 %v4381, %v4387
        %v4391 = vld [vmem:[#allocation29] sm:$0x1]
        %v4393 = vlaneseq
        %v4394 = vshrl.u32 %v4393, 7
        %v4395 = vsub.s32 0, %v4394
        %v4396 = vrot.slane %v4391, %v4395
        %v4398 = vadd.f32 %v4389, %v4396
        %v4399 = vadd.f32 %v4390, %v4396
        %v4400 = vxor.u32 %v4398, 2147483648
        %v4401 = vxor.u32 %v4399, 2147483648
        %v4402 = vmul.f32 %v4400, 1.442695
        %v4403 = vpow.pop %v4402
        %v4404 = vmul.f32 %v4401, 1.442695
        %v4405 = vpow.pop %v4404
        %v4406 = vadd.f32 %v4403, 1.0
        %v4407 = vadd.f32 %v4405, 1.0
        %v4408 = vrcp.pop %v4406
        %v4409 = vmul.f32 1.0, %v4408
        %v4410 = vrcp.pop %v4407
        %v4411 = vmul.f32 1.0, %v4410
        %v4412 = vmul.f32 %v4398, %v4409
        %v4413 = vmul.f32 %v4399, %v4411
        %4414 = vst.msk [vmem:[#allocation2] sm:$0xff] %vm1848, 0.0
        %4415 = vst.msk [vmem:[#allocation2 + $0x8] sm:$0xff] %vm1848, 0.0
        %4416 = vst.msk [vmem:[#allocation2 + $0x10] sm:$0x3] %vm1851, 0.0
        %4417 = vst.msk [vmem:[#allocation2 + $0x1] sm:$0xff] %vm2155, %v4412
        %4418 = vst.msk [vmem:[#allocation2 + $0x9] sm:$0xff] %vm2155, %v4413
        %v4419 = vld [vmem:[#allocation2] sm:$0xff]
        %v4420 = vld [vmem:[#allocation2 + $0x8] sm:$0xff]
        %v4421 = vld [vmem:[#allocation24] sm:$0xff]
        %v4422 = vld [vmem:[#allocation24 + $0x8] sm:$0xff]
        %s4423 = scalar_lea.vmem [#allocation24], 16
        %v4424 = vld [vmem:[%s4423] sm:$0xff]
        %v4425 = vld [vmem:[%s4423 + $0x8] sm:$0xff]
        %v4427 = vsel %vm2155, %v4412, 0
        %v4430 = vsel %vm2155, %v4413, 0
        %4432 = vmatprep.subr.mxu0 0.0
        %4433 = vmatpush1.msra.mxu0 %v4424
        %4434 = vmatprep.subr.mxu0 0.0
        %4435 = vmatpush1.msra.mxu0 %v4425
        %4436 = vmatprep.subr.mxu0 0.0
        %4437 = vmatpush1.msra.mxu0 0.0
        %4438 = vmatprep.subr.mxu0 0.0
        %4439 = vmatpush1.msra.mxu0 0.0
        %4440 = vmatprep.subr.mxu0 0.0
        %4441 = vmatpush1.msra.mxu0 0.0
        %4442 = vmatprep.subr.mxu0 0.0
        %4443 = vmatpush1.msra.mxu0 0.0
        %4444 = vmatprep.subr.mxu0 0.0
        %4445 = vmatpush1.msra.mxu0 0.0
        %4446 = vmatprep.subr.mxu0 0.0
        %4447 = vmatpush1.msra.mxu0 0.0
        %4448 = vmatprep.subr.mxu0 0.0
        %4449 = vmatpush1.msra.mxu0 0.0
        %4450 = vmatprep.subr.mxu0 0.0
        %4451 = vmatpush1.msra.mxu0 0.0
        %4452 = vmatprep.subr.mxu0 0.0
        %4453 = vmatpush1.msra.mxu0 0.0
        %4454 = vmatprep.subr.mxu0 0.0
        %4455 = vmatpush1.msra.mxu0 0.0
        %4456 = vmatprep.subr.mxu0 0.0
        %4457 = vmatpush1.msra.mxu0 0.0
        %4458 = vmatprep.subr.mxu0 0.0
        %4459 = vmatpush1.msra.mxu0 0.0
        %4460 = vmatprep.subr.mxu0 0.0
        %4461 = vmatpush1.msra.mxu0 0.0
        %4462 = vmatprep.subr.mxu0 0.0
        %4463 = vmatpush1.msra.mxu0 0.0
        %4464 = vmatprep.subr.mxu0 0.0
        %4465 = vmatpush1.msra.mxu0 0.0
        %4466 = vmatprep.subr.mxu0 0.0
        %4467 = vmatpush1.msra.mxu0 0.0
        %4468 = vmatprep.subr.mxu0 0.0
        %4469 = vmatpush1.msra.mxu0 0.0
        %4470 = vmatprep.subr.mxu0 0.0
        %4471 = vmatpush1.msra.mxu0 0.0
        %4472 = vmatprep.subr.mxu0 0.0
        %4473 = vmatpush1.msra.mxu0 0.0
        %4474 = vmatprep.subr.mxu0 0.0
        %4475 = vmatpush1.msra.mxu0 0.0
        %4476 = vmatprep.subr.mxu0 0.0
        %4477 = vmatpush1.msra.mxu0 0.0
        %4478 = vmatprep.subr.mxu0 0.0
        %4479 = vmatpush1.msra.mxu0 0.0
        %4480 = vmatprep.subr.mxu0 0.0
        %4481 = vmatpush1.msra.mxu0 0.0
        %4482 = vmatprep.subr.mxu0 0.0
        %4483 = vmatpush1.msra.mxu0 0.0
        %4484 = vmatprep.subr.mxu0 0.0
        %4485 = vmatpush1.msra.mxu0 0.0
        %4486 = vmatprep.subr.mxu0 0.0
        %4487 = vmatpush1.msra.mxu0 0.0
        %4488 = vmatprep.subr.mxu0 0.0
        %4489 = vmatpush1.msra.mxu0 0.0
        %4490 = vmatprep.subr.mxu0 0.0
        %4491 = vmatpush1.msra.mxu0 0.0
        %4492 = vmatprep.subr.mxu0 0.0
        %4493 = vmatpush1.msra.mxu0 0.0
        %4494 = vmatprep.subr.mxu0 0.0
        %4495 = vmatpush1.msra.mxu0 0.0
        %4496 = vmatprep.mubr.f32.mxu0 0.0
        %4497 = vmatmul.mubr.f32.gmra.mrb[0].mxu0 %v4427
        %v4498 = vpop.f32.mrb[0].mxu0
        %v4499 = vadd.f32 0.0, %v4498
        %v4500 = vpop.f32.mrb[0].mxu0
        %4501 = vmatprep.mubr.f32.mxu0 0.0
        %4502 = vmatmul.mubr.f32.gmra.mrb[0].mxu0 %v4430
        %v4503 = vpop.f32.mrb[0].mxu0
        %v4504 = vadd.f32 0.0, %v4503
        %v4505 = vpop.f32.mrb[0].mxu0
        %4506 = vdwg.mxu0
        %v4508 = vsel %vm2155, %v4419, 0
        %v4511 = vsel %vm2155, %v4420, 0
        %4513 = vmatprep.subr.mxu0 0.0
        %4514 = vmatpush1.msra.mxu0 %v4421
        %4515 = vmatprep.subr.mxu0 0.0
        %4516 = vmatpush1.msra.mxu0 %v4422
        %4517 = vmatprep.subr.mxu0 0.0
        %4518 = vmatpush1.msra.mxu0 0.0
        %4519 = vmatprep.subr.mxu0 0.0
        %4520 = vmatpush1.msra.mxu0 0.0
        %4521 = vmatprep.subr.mxu0 0.0
        %4522 = vmatpush1.msra.mxu0 0.0
        %4523 = vmatprep.subr.mxu0 0.0
        %4524 = vmatpush1.msra.mxu0 0.0
        %4525 = vmatprep.subr.mxu0 0.0
        %4526 = vmatpush1.msra.mxu0 0.0
        %4527 = vmatprep.subr.mxu0 0.0
        %4528 = vmatpush1.msra.mxu0 0.0
        %4529 = vmatprep.subr.mxu0 0.0
        %4530 = vmatpush1.msra.mxu0 0.0
        %4531 = vmatprep.subr.mxu0 0.0
        %4532 = vmatpush1.msra.mxu0 0.0
        %4533 = vmatprep.subr.mxu0 0.0
        %4534 = vmatpush1.msra.mxu0 0.0
        %4535 = vmatprep.subr.mxu0 0.0
        %4536 = vmatpush1.msra.mxu0 0.0
        %4537 = vmatprep.subr.mxu0 0.0
        %4538 = vmatpush1.msra.mxu0 0.0
        %4539 = vmatprep.subr.mxu0 0.0
        %4540 = vmatpush1.msra.mxu0 0.0
        %4541 = vmatprep.subr.mxu0 0.0
        %4542 = vmatpush1.msra.mxu0 0.0
        %4543 = vmatprep.subr.mxu0 0.0
        %4544 = vmatpush1.msra.mxu0 0.0
        %4545 = vmatprep.subr.mxu0 0.0
        %4546 = vmatpush1.msra.mxu0 0.0
        %4547 = vmatprep.subr.mxu0 0.0
        %4548 = vmatpush1.msra.mxu0 0.0
        %4549 = vmatprep.subr.mxu0 0.0
        %4550 = vmatpush1.msra.mxu0 0.0
        %4551 = vmatprep.subr.mxu0 0.0
        %4552 = vmatpush1.msra.mxu0 0.0
        %4553 = vmatprep.subr.mxu0 0.0
        %4554 = vmatpush1.msra.mxu0 0.0
        %4555 = vmatprep.subr.mxu0 0.0
        %4556 = vmatpush1.msra.mxu0 0.0
        %4557 = vmatprep.subr.mxu0 0.0
        %4558 = vmatpush1.msra.mxu0 0.0
        %4559 = vmatprep.subr.mxu0 0.0
        %4560 = vmatpush1.msra.mxu0 0.0
        %4561 = vmatprep.subr.mxu0 0.0
        %4562 = vmatpush1.msra.mxu0 0.0
        %4563 = vmatprep.subr.mxu0 0.0
        %4564 = vmatpush1.msra.mxu0 0.0
        %4565 = vmatprep.subr.mxu0 0.0
        %4566 = vmatpush1.msra.mxu0 0.0
        %4567 = vmatprep.subr.mxu0 0.0
        %4568 = vmatpush1.msra.mxu0 0.0
        %4569 = vmatprep.subr.mxu0 0.0
        %4570 = vmatpush1.msra.mxu0 0.0
        %4571 = vmatprep.subr.mxu0 0.0
        %4572 = vmatpush1.msra.mxu0 0.0
        %4573 = vmatprep.subr.mxu0 0.0
        %4574 = vmatpush1.msra.mxu0 0.0
        %4575 = vmatprep.subr.mxu0 0.0
        %4576 = vmatpush1.msra.mxu0 0.0
        %4577 = vmatprep.mubr.f32.mxu0 0.0
        %4578 = vmatmul.mubr.f32.gmra.mrb[0].mxu0 %v4508
        %v4579 = vpop.f32.mrb[0].mxu0
        %v4580 = vadd.f32 %v4499, %v4579
        %v4581 = vpop.f32.mrb[0].mxu0
        %4582 = vmatprep.mubr.f32.mxu0 0.0
        %4583 = vmatmul.mubr.f32.gmra.mrb[0].mxu0 %v4511
        %v4584 = vpop.f32.mrb[0].mxu0
        %v4585 = vadd.f32 %v4504, %v4584
        %v4586 = vpop.f32.mrb[0].mxu0
        %4587 = vdwg.mxu0
        %v4588 = vld [vmem:[#allocation2 + $0x2] sm:$0xff]
        %v4589 = vld [vmem:[#allocation2 + $0xa] sm:$0xff]
        %s4590 = scalar_lea.vmem [#allocation24], 32
        %v4591 = vld [vmem:[%s4590] sm:$0xff]
        %v4592 = vld [vmem:[%s4590 + $0x8] sm:$0xff]
        %v4594 = vsel %vm2155, %v4588, 0
        %v4597 = vsel %vm2155, %v4589, 0
        %4599 = vmatprep.subr.mxu0 0.0
        %4600 = vmatpush1.msra.mxu0 %v4591
        %4601 = vmatprep.subr.mxu0 0.0
        %4602 = vmatpush1.msra.mxu0 %v4592
        %4603 = vmatprep.subr.mxu0 0.0
        %4604 = vmatpush1.msra.mxu0 0.0
        %4605 = vmatprep.subr.mxu0 0.0
        %4606 = vmatpush1.msra.mxu0 0.0
        %4607 = vmatprep.subr.mxu0 0.0
        %4608 = vmatpush1.msra.mxu0 0.0
        %4609 = vmatprep.subr.mxu0 0.0
        %4610 = vmatpush1.msra.mxu0 0.0
        %4611 = vmatprep.subr.mxu0 0.0
        %4612 = vmatpush1.msra.mxu0 0.0
        %4613 = vmatprep.subr.mxu0 0.0
        %4614 = vmatpush1.msra.mxu0 0.0
        %4615 = vmatprep.subr.mxu0 0.0
        %4616 = vmatpush1.msra.mxu0 0.0
        %4617 = vmatprep.subr.mxu0 0.0
        %4618 = vmatpush1.msra.mxu0 0.0
        %4619 = vmatprep.subr.mxu0 0.0
        %4620 = vmatpush1.msra.mxu0 0.0
        %4621 = vmatprep.subr.mxu0 0.0
        %4622 = vmatpush1.msra.mxu0 0.0
        %4623 = vmatprep.subr.mxu0 0.0
        %4624 = vmatpush1.msra.mxu0 0.0
        %4625 = vmatprep.subr.mxu0 0.0
        %4626 = vmatpush1.msra.mxu0 0.0
        %4627 = vmatprep.subr.mxu0 0.0
        %4628 = vmatpush1.msra.mxu0 0.0
        %4629 = vmatprep.subr.mxu0 0.0
        %4630 = vmatpush1.msra.mxu0 0.0
        %4631 = vmatprep.subr.mxu0 0.0
        %4632 = vmatpush1.msra.mxu0 0.0
        %4633 = vmatprep.subr.mxu0 0.0
        %4634 = vmatpush1.msra.mxu0 0.0
        %4635 = vmatprep.subr.mxu0 0.0
        %4636 = vmatpush1.msra.mxu0 0.0
        %4637 = vmatprep.subr.mxu0 0.0
        %4638 = vmatpush1.msra.mxu0 0.0
        %4639 = vmatprep.subr.mxu0 0.0
        %4640 = vmatpush1.msra.mxu0 0.0
        %4641 = vmatprep.subr.mxu0 0.0
        %4642 = vmatpush1.msra.mxu0 0.0
        %4643 = vmatprep.subr.mxu0 0.0
        %4644 = vmatpush1.msra.mxu0 0.0
        %4645 = vmatprep.subr.mxu0 0.0
        %4646 = vmatpush1.msra.mxu0 0.0
        %4647 = vmatprep.subr.mxu0 0.0
        %4648 = vmatpush1.msra.mxu0 0.0
        %4649 = vmatprep.subr.mxu0 0.0
        %4650 = vmatpush1.msra.mxu0 0.0
        %4651 = vmatprep.subr.mxu0 0.0
        %4652 = vmatpush1.msra.mxu0 0.0
        %4653 = vmatprep.subr.mxu0 0.0
        %4654 = vmatpush1.msra.mxu0 0.0
        %4655 = vmatprep.subr.mxu0 0.0
        %4656 = vmatpush1.msra.mxu0 0.0
        %4657 = vmatprep.subr.mxu0 0.0
        %4658 = vmatpush1.msra.mxu0 0.0
        %4659 = vmatprep.subr.mxu0 0.0
        %4660 = vmatpush1.msra.mxu0 0.0
        %4661 = vmatprep.subr.mxu0 0.0
        %4662 = vmatpush1.msra.mxu0 0.0
        %4663 = vmatprep.mubr.f32.mxu0 0.0
        %4664 = vmatmul.mubr.f32.gmra.mrb[0].mxu0 %v4594
        %v4665 = vpop.f32.mrb[0].mxu0
        %v4666 = vadd.f32 0.0, %v4665
        %v4667 = vpop.f32.mrb[0].mxu0
        %4668 = vmatprep.mubr.f32.mxu0 0.0
        %4669 = vmatmul.mubr.f32.gmra.mrb[0].mxu0 %v4597
        %v4670 = vpop.f32.mrb[0].mxu0
        %v4671 = vadd.f32 0.0, %v4670
        %v4672 = vpop.f32.mrb[0].mxu0
        %4673 = vdwg.mxu0
        %v4674 = vadd.f32 %v4580, %v4666
        %v4675 = vadd.f32 %v4585, %v4671
        %v4676 = vld [vmem:[#allocation23] sm:$0x1]
        %v4678 = vlaneseq
        %v4679 = vshrl.u32 %v4678, 7
        %v4680 = vsub.s32 0, %v4679
        %v4681 = vrot.slane %v4676, %v4680
        %v4683 = vadd.f32 %v4674, %v4681
        %v4684 = vadd.f32 %v4675, %v4681
        %v4685 = vadd.f32 %v3421, %v4683
        %v4686 = vadd.f32 %v3422, %v4684
        %4687 = vst.msk [vmem:[#allocation2] sm:$0xff] %vm1848, 0.0
        %4688 = vst.msk [vmem:[#allocation2 + $0x8] sm:$0xff] %vm1848, 0.0
        %4689 = vst.msk [vmem:[#allocation2 + $0x10] sm:$0x3] %vm1851, 0.0
        %4690 = vst.msk [vmem:[#allocation2 + $0x1] sm:$0xff] %vm2155, %v4685
        %4691 = vst.msk [vmem:[#allocation2 + $0x9] sm:$0xff] %vm2155, %v4686
        %v4692 = vld [vmem:[#allocation2] sm:$0xff]
        %v4693 = vld [vmem:[#allocation2 + $0x8] sm:$0xff]
        %v4694 = vld [vmem:[#allocation33] sm:$0xff]
        %v4695 = vld [vmem:[#allocation33 + $0x8] sm:$0xff]
        %s4696 = scalar_lea.vmem [#allocation33], 16
        %v4697 = vld [vmem:[%s4696] sm:$0xff]
        %v4698 = vld [vmem:[%s4696 + $0x8] sm:$0xff]
        %v4700 = vsel %vm2155, %v4685, 0
        %v4703 = vsel %vm2155, %v4686, 0
        %4705 = vmatprep.subr.mxu0 0.0
        %4706 = vmatpush1.msra.mxu0 %v4697
        %4707 = vmatprep.subr.mxu0 0.0
        %4708 = vmatpush1.msra.mxu0 %v4698
        %4709 = vmatprep.subr.mxu0 0.0
        %4710 = vmatpush1.msra.mxu0 0.0
        %4711 = vmatprep.subr.mxu0 0.0
        %4712 = vmatpush1.msra.mxu0 0.0
        %4713 = vmatprep.subr.mxu0 0.0
        %4714 = vmatpush1.msra.mxu0 0.0
        %4715 = vmatprep.subr.mxu0 0.0
        %4716 = vmatpush1.msra.mxu0 0.0
        %4717 = vmatprep.subr.mxu0 0.0
        %4718 = vmatpush1.msra.mxu0 0.0
        %4719 = vmatprep.subr.mxu0 0.0
        %4720 = vmatpush1.msra.mxu0 0.0
        %4721 = vmatprep.subr.mxu0 0.0
        %4722 = vmatpush1.msra.mxu0 0.0
        %4723 = vmatprep.subr.mxu0 0.0
        %4724 = vmatpush1.msra.mxu0 0.0
        %4725 = vmatprep.subr.mxu0 0.0
        %4726 = vmatpush1.msra.mxu0 0.0
        %4727 = vmatprep.subr.mxu0 0.0
        %4728 = vmatpush1.msra.mxu0 0.0
        %4729 = vmatprep.subr.mxu0 0.0
        %4730 = vmatpush1.msra.mxu0 0.0
        %4731 = vmatprep.subr.mxu0 0.0
        %4732 = vmatpush1.msra.mxu0 0.0
        %4733 = vmatprep.subr.mxu0 0.0
        %4734 = vmatpush1.msra.mxu0 0.0
        %4735 = vmatprep.subr.mxu0 0.0
        %4736 = vmatpush1.msra.mxu0 0.0
        %4737 = vmatprep.subr.mxu0 0.0
        %4738 = vmatpush1.msra.mxu0 0.0
        %4739 = vmatprep.subr.mxu0 0.0
        %4740 = vmatpush1.msra.mxu0 0.0
        %4741 = vmatprep.subr.mxu0 0.0
        %4742 = vmatpush1.msra.mxu0 0.0
        %4743 = vmatprep.subr.mxu0 0.0
        %4744 = vmatpush1.msra.mxu0 0.0
        %4745 = vmatprep.subr.mxu0 0.0
        %4746 = vmatpush1.msra.mxu0 0.0
        %4747 = vmatprep.subr.mxu0 0.0
        %4748 = vmatpush1.msra.mxu0 0.0
        %4749 = vmatprep.subr.mxu0 0.0
        %4750 = vmatpush1.msra.mxu0 0.0
        %4751 = vmatprep.subr.mxu0 0.0
        %4752 = vmatpush1.msra.mxu0 0.0
        %4753 = vmatprep.subr.mxu0 0.0
        %4754 = vmatpush1.msra.mxu0 0.0
        %4755 = vmatprep.subr.mxu0 0.0
        %4756 = vmatpush1.msra.mxu0 0.0
        %4757 = vmatprep.subr.mxu0 0.0
        %4758 = vmatpush1.msra.mxu0 0.0
        %4759 = vmatprep.subr.mxu0 0.0
        %4760 = vmatpush1.msra.mxu0 0.0
        %4761 = vmatprep.subr.mxu0 0.0
        %4762 = vmatpush1.msra.mxu0 0.0
        %4763 = vmatprep.subr.mxu0 0.0
        %4764 = vmatpush1.msra.mxu0 0.0
        %4765 = vmatprep.subr.mxu0 0.0
        %4766 = vmatpush1.msra.mxu0 0.0
        %4767 = vmatprep.subr.mxu0 0.0
        %4768 = vmatpush1.msra.mxu0 0.0
        %4769 = vmatprep.mubr.f32.mxu0 0.0
        %4770 = vmatmul.mubr.f32.gmra.mrb[0].mxu0 %v4700
        %v4771 = vpop.f32.mrb[0].mxu0
        %v4772 = vadd.f32 0.0, %v4771
        %v4773 = vpop.f32.mrb[0].mxu0
        %4774 = vmatprep.mubr.f32.mxu0 0.0
        %4775 = vmatmul.mubr.f32.gmra.mrb[0].mxu0 %v4703
        %v4776 = vpop.f32.mrb[0].mxu0
        %v4777 = vadd.f32 0.0, %v4776
        %v4778 = vpop.f32.mrb[0].mxu0
        %4779 = vdwg.mxu0
        %v4781 = vsel %vm2155, %v4692, 0
        %v4784 = vsel %vm2155, %v4693, 0
        %4786 = vmatprep.subr.mxu0 0.0
        %4787 = vmatpush1.msra.mxu0 %v4694
        %4788 = vmatprep.subr.mxu0 0.0
        %4789 = vmatpush1.msra.mxu0 %v4695
        %4790 = vmatprep.subr.mxu0 0.0
        %4791 = vmatpush1.msra.mxu0 0.0
        %4792 = vmatprep.subr.mxu0 0.0
        %4793 = vmatpush1.msra.mxu0 0.0
        %4794 = vmatprep.subr.mxu0 0.0
        %4795 = vmatpush1.msra.mxu0 0.0
        %4796 = vmatprep.subr.mxu0 0.0
        %4797 = vmatpush1.msra.mxu0 0.0
        %4798 = vmatprep.subr.mxu0 0.0
        %4799 = vmatpush1.msra.mxu0 0.0
        %4800 = vmatprep.subr.mxu0 0.0
        %4801 = vmatpush1.msra.mxu0 0.0
        %4802 = vmatprep.subr.mxu0 0.0
        %4803 = vmatpush1.msra.mxu0 0.0
        %4804 = vmatprep.subr.mxu0 0.0
        %4805 = vmatpush1.msra.mxu0 0.0
        %4806 = vmatprep.subr.mxu0 0.0
        %4807 = vmatpush1.msra.mxu0 0.0
        %4808 = vmatprep.subr.mxu0 0.0
        %4809 = vmatpush1.msra.mxu0 0.0
        %4810 = vmatprep.subr.mxu0 0.0
        %4811 = vmatpush1.msra.mxu0 0.0
        %4812 = vmatprep.subr.mxu0 0.0
        %4813 = vmatpush1.msra.mxu0 0.0
        %4814 = vmatprep.subr.mxu0 0.0
        %4815 = vmatpush1.msra.mxu0 0.0
        %4816 = vmatprep.subr.mxu0 0.0
        %4817 = vmatpush1.msra.mxu0 0.0
        %4818 = vmatprep.subr.mxu0 0.0
        %4819 = vmatpush1.msra.mxu0 0.0
        %4820 = vmatprep.subr.mxu0 0.0
        %4821 = vmatpush1.msra.mxu0 0.0
        %4822 = vmatprep.subr.mxu0 0.0
        %4823 = vmatpush1.msra.mxu0 0.0
        %4824 = vmatprep.subr.mxu0 0.0
        %4825 = vmatpush1.msra.mxu0 0.0
        %4826 = vmatprep.subr.mxu0 0.0
        %4827 = vmatpush1.msra.mxu0 0.0
        %4828 = vmatprep.subr.mxu0 0.0
        %4829 = vmatpush1.msra.mxu0 0.0
        %4830 = vmatprep.subr.mxu0 0.0
        %4831 = vmatpush1.msra.mxu0 0.0
        %4832 = vmatprep.subr.mxu0 0.0
        %4833 = vmatpush1.msra.mxu0 0.0
        %4834 = vmatprep.subr.mxu0 0.0
        %4835 = vmatpush1.msra.mxu0 0.0
        %4836 = vmatprep.subr.mxu0 0.0
        %4837 = vmatpush1.msra.mxu0 0.0
        %4838 = vmatprep.subr.mxu0 0.0
        %4839 = vmatpush1.msra.mxu0 0.0
        %4840 = vmatprep.subr.mxu0 0.0
        %4841 = vmatpush1.msra.mxu0 0.0
        %4842 = vmatprep.subr.mxu0 0.0
        %4843 = vmatpush1.msra.mxu0 0.0
        %4844 = vmatprep.subr.mxu0 0.0
        %4845 = vmatpush1.msra.mxu0 0.0
        %4846 = vmatprep.subr.mxu0 0.0
        %4847 = vmatpush1.msra.mxu0 0.0
        %4848 = vmatprep.subr.mxu0 0.0
        %4849 = vmatpush1.msra.mxu0 0.0
        %4850 = vmatprep.mubr.f32.mxu0 0.0
        %4851 = vmatmul.mubr.f32.gmra.mrb[0].mxu0 %v4781
        %v4852 = vpop.f32.mrb[0].mxu0
        %v4853 = vadd.f32 %v4772, %v4852
        %v4854 = vpop.f32.mrb[0].mxu0
        %4855 = vmatprep.mubr.f32.mxu0 0.0
        %4856 = vmatmul.mubr.f32.gmra.mrb[0].mxu0 %v4784
        %v4857 = vpop.f32.mrb[0].mxu0
        %v4858 = vadd.f32 %v4777, %v4857
        %v4859 = vpop.f32.mrb[0].mxu0
        %4860 = vdwg.mxu0
        %v4861 = vld [vmem:[#allocation2 + $0x2] sm:$0xff]
        %v4862 = vld [vmem:[#allocation2 + $0xa] sm:$0xff]
        %s4863 = scalar_lea.vmem [#allocation33], 32
        %v4864 = vld [vmem:[%s4863] sm:$0xff]
        %v4865 = vld [vmem:[%s4863 + $0x8] sm:$0xff]
        %v4867 = vsel %vm2155, %v4861, 0
        %v4870 = vsel %vm2155, %v4862, 0
        %4872 = vmatprep.subr.mxu0 0.0
        %4873 = vmatpush1.msra.mxu0 %v4864
        %4874 = vmatprep.subr.mxu0 0.0
        %4875 = vmatpush1.msra.mxu0 %v4865
        %4876 = vmatprep.subr.mxu0 0.0
        %4877 = vmatpush1.msra.mxu0 0.0
        %4878 = vmatprep.subr.mxu0 0.0
        %4879 = vmatpush1.msra.mxu0 0.0
        %4880 = vmatprep.subr.mxu0 0.0
        %4881 = vmatpush1.msra.mxu0 0.0
        %4882 = vmatprep.subr.mxu0 0.0
        %4883 = vmatpush1.msra.mxu0 0.0
        %4884 = vmatprep.subr.mxu0 0.0
        %4885 = vmatpush1.msra.mxu0 0.0
        %4886 = vmatprep.subr.mxu0 0.0
        %4887 = vmatpush1.msra.mxu0 0.0
        %4888 = vmatprep.subr.mxu0 0.0
        %4889 = vmatpush1.msra.mxu0 0.0
        %4890 = vmatprep.subr.mxu0 0.0
        %4891 = vmatpush1.msra.mxu0 0.0
        %4892 = vmatprep.subr.mxu0 0.0
        %4893 = vmatpush1.msra.mxu0 0.0
        %4894 = vmatprep.subr.mxu0 0.0
        %4895 = vmatpush1.msra.mxu0 0.0
        %4896 = vmatprep.subr.mxu0 0.0
        %4897 = vmatpush1.msra.mxu0 0.0
        %4898 = vmatprep.subr.mxu0 0.0
        %4899 = vmatpush1.msra.mxu0 0.0
        %4900 = vmatprep.subr.mxu0 0.0
        %4901 = vmatpush1.msra.mxu0 0.0
        %4902 = vmatprep.subr.mxu0 0.0
        %4903 = vmatpush1.msra.mxu0 0.0
        %4904 = vmatprep.subr.mxu0 0.0
        %4905 = vmatpush1.msra.mxu0 0.0
        %4906 = vmatprep.subr.mxu0 0.0
        %4907 = vmatpush1.msra.mxu0 0.0
        %4908 = vmatprep.subr.mxu0 0.0
        %4909 = vmatpush1.msra.mxu0 0.0
        %4910 = vmatprep.subr.mxu0 0.0
        %4911 = vmatpush1.msra.mxu0 0.0
        %4912 = vmatprep.subr.mxu0 0.0
        %4913 = vmatpush1.msra.mxu0 0.0
        %4914 = vmatprep.subr.mxu0 0.0
        %4915 = vmatpush1.msra.mxu0 0.0
        %4916 = vmatprep.subr.mxu0 0.0
        %4917 = vmatpush1.msra.mxu0 0.0
        %4918 = vmatprep.subr.mxu0 0.0
        %4919 = vmatpush1.msra.mxu0 0.0
        %4920 = vmatprep.subr.mxu0 0.0
        %4921 = vmatpush1.msra.mxu0 0.0
        %4922 = vmatprep.subr.mxu0 0.0
        %4923 = vmatpush1.msra.mxu0 0.0
        %4924 = vmatprep.subr.mxu0 0.0
        %4925 = vmatpush1.msra.mxu0 0.0
        %4926 = vmatprep.subr.mxu0 0.0
        %4927 = vmatpush1.msra.mxu0 0.0
        %4928 = vmatprep.subr.mxu0 0.0
        %4929 = vmatpush1.msra.mxu0 0.0
        %4930 = vmatprep.subr.mxu0 0.0
        %4931 = vmatpush1.msra.mxu0 0.0
        %4932 = vmatprep.subr.mxu0 0.0
        %4933 = vmatpush1.msra.mxu0 0.0
        %4934 = vmatprep.subr.mxu0 0.0
        %4935 = vmatpush1.msra.mxu0 0.0
        %4936 = vmatprep.mubr.f32.mxu0 0.0
        %4937 = vmatmul.mubr.f32.gmra.mrb[0].mxu0 %v4867
        %v4938 = vpop.f32.mrb[0].mxu0
        %v4939 = vadd.f32 0.0, %v4938
        %v4940 = vpop.f32.mrb[0].mxu0
        %4941 = vmatprep.mubr.f32.mxu0 0.0
        %4942 = vmatmul.mubr.f32.gmra.mrb[0].mxu0 %v4870
        %v4943 = vpop.f32.mrb[0].mxu0
        %v4944 = vadd.f32 0.0, %v4943
        %v4945 = vpop.f32.mrb[0].mxu0
        %4946 = vdwg.mxu0
        %v4947 = vadd.f32 %v4853, %v4939
        %v4948 = vadd.f32 %v4858, %v4944
        %v4949 = vmul.u32 %v2130, 2
        %vm4950 = vcmp.eq.s32.totalorder %v2133, %v4949
        %v4951 = vsel %vm4950, 1, 0
        %v4952 = vcvt.s32.f32 %v4951
        %v4953 = vld [vmem:[#allocation32] sm:$0x1]
        %v4955 = vlaneseq
        %v4956 = vshrl.u32 %v4955, 7
        %v4957 = vsub.s32 0, %v4956
        %v4958 = vrot.slane %v4953, %v4957
        %v4961 = vsel %vm2155, %v4952, 0
        %4963 = vmatprep.subr.mxu0 0.0
        %4964 = vmatpush1.msra.mxu0 %v4947
        %4965 = vmatprep.subr.mxu0 0.0
        %4966 = vmatpush1.msra.mxu0 %v4948
        %4967 = vmatprep.subr.mxu0 0.0
        %4968 = vmatpush1.msra.mxu0 0.0
        %4969 = vmatprep.subr.mxu0 0.0
        %4970 = vmatpush1.msra.mxu0 0.0
        %4971 = vmatprep.subr.mxu0 0.0
        %4972 = vmatpush1.msra.mxu0 0.0
        %4973 = vmatprep.subr.mxu0 0.0
        %4974 = vmatpush1.msra.mxu0 0.0
        %4975 = vmatprep.subr.mxu0 0.0
        %4976 = vmatpush1.msra.mxu0 0.0
        %4977 = vmatprep.subr.mxu0 0.0
        %4978 = vmatpush1.msra.mxu0 0.0
        %4979 = vmatprep.subr.mxu0 0.0
        %4980 = vmatpush1.msra.mxu0 0.0
        %4981 = vmatprep.subr.mxu0 0.0
        %4982 = vmatpush1.msra.mxu0 0.0
        %4983 = vmatprep.subr.mxu0 0.0
        %4984 = vmatpush1.msra.mxu0 0.0
        %4985 = vmatprep.subr.mxu0 0.0
        %4986 = vmatpush1.msra.mxu0 0.0
        %4987 = vmatprep.subr.mxu0 0.0
        %4988 = vmatpush1.msra.mxu0 0.0
        %4989 = vmatprep.subr.mxu0 0.0
        %4990 = vmatpush1.msra.mxu0 0.0
        %4991 = vmatprep.subr.mxu0 0.0
        %4992 = vmatpush1.msra.mxu0 0.0
        %4993 = vmatprep.subr.mxu0 0.0
        %4994 = vmatpush1.msra.mxu0 0.0
        %4995 = vmatprep.subr.mxu0 0.0
        %4996 = vmatpush1.msra.mxu0 0.0
        %4997 = vmatprep.subr.mxu0 0.0
        %4998 = vmatpush1.msra.mxu0 0.0
        %4999 = vmatprep.subr.mxu0 0.0
        %5000 = vmatpush1.msra.mxu0 0.0
        %5001 = vmatprep.subr.mxu0 0.0
        %5002 = vmatpush1.msra.mxu0 0.0
        %5003 = vmatprep.subr.mxu0 0.0
        %5004 = vmatpush1.msra.mxu0 0.0
        %5005 = vmatprep.subr.mxu0 0.0
        %5006 = vmatpush1.msra.mxu0 0.0
        %5007 = vmatprep.subr.mxu0 0.0
        %5008 = vmatpush1.msra.mxu0 0.0
        %5009 = vmatprep.subr.mxu0 0.0
        %5010 = vmatpush1.msra.mxu0 0.0
        %5011 = vmatprep.subr.mxu0 0.0
        %5012 = vmatpush1.msra.mxu0 0.0
        %5013 = vmatprep.subr.mxu0 0.0
        %5014 = vmatpush1.msra.mxu0 0.0
        %5015 = vmatprep.subr.mxu0 0.0
        %5016 = vmatpush1.msra.mxu0 0.0
        %5017 = vmatprep.subr.mxu0 0.0
        %5018 = vmatpush1.msra.mxu0 0.0
        %5019 = vmatprep.subr.mxu0 0.0
        %5020 = vmatpush1.msra.mxu0 0.0
        %5021 = vmatprep.subr.mxu0 0.0
        %5022 = vmatpush1.msra.mxu0 0.0
        %5023 = vmatprep.subr.mxu0 0.0
        %5024 = vmatpush1.msra.mxu0 0.0
        %5025 = vmatprep.subr.mxu0 0.0
        %5026 = vmatpush1.msra.mxu0 0.0
        %5027 = vmatprep.mubr.f32.mxu0 0.0
        %5028 = vmatmul.mubr.f32.gmra.mrb[0].mxu0 %v4961
        %v5029 = vpop.f32.mrb[0].mxu0
        %v5030 = vadd.f32 %v4958, %v5029
        %v5031 = vpop.f32.mrb[0].mxu0
        %5032 = vdwg.mxu0
        %v5033 = vsel %vm2155, %v5030, 0.0
        %v5034 = vrot.slane %v5033, 4
        %v5035 = vadd.f32 %v5033, %v5034
        %v5036 = vrot.slane %v5035, 2
        %v5037 = vadd.f32 %v5035, %v5036
        %v5038 = vrot.slane %v5037, 1
        %v5039 = vadd.f32 %v5037, %v5038
        %v5041 = vsel %vm2155, %v5039, 0
        %5043 = vmatprep.subr.mxu0 0.0
        %5044 = vmatpush1.msra.mxu0 %v2145
        %5045 = vmatprep.subr.mxu0 0.0
        %5046 = vmatpush1.msra.mxu0 %v2146
        %5047 = vmatprep.subr.mxu0 0.0
        %5048 = vmatpush1.msra.mxu0 0.0
        %5049 = vmatprep.subr.mxu0 0.0
        %5050 = vmatpush1.msra.mxu0 0.0
        %5051 = vmatprep.subr.mxu0 0.0
        %5052 = vmatpush1.msra.mxu0 0.0
        %5053 = vmatprep.subr.mxu0 0.0
        %5054 = vmatpush1.msra.mxu0 0.0
        %5055 = vmatprep.subr.mxu0 0.0
        %5056 = vmatpush1.msra.mxu0 0.0
        %5057 = vmatprep.subr.mxu0 0.0
        %5058 = vmatpush1.msra.mxu0 0.0
        %5059 = vmatprep.subr.mxu0 0.0
        %5060 = vmatpush1.msra.mxu0 0.0
        %5061 = vmatprep.subr.mxu0 0.0
        %5062 = vmatpush1.msra.mxu0 0.0
        %5063 = vmatprep.subr.mxu0 0.0
        %5064 = vmatpush1.msra.mxu0 0.0
        %5065 = vmatprep.subr.mxu0 0.0
        %5066 = vmatpush1.msra.mxu0 0.0
        %5067 = vmatprep.subr.mxu0 0.0
        %5068 = vmatpush1.msra.mxu0 0.0
        %5069 = vmatprep.subr.mxu0 0.0
        %5070 = vmatpush1.msra.mxu0 0.0
        %5071 = vmatprep.subr.mxu0 0.0
        %5072 = vmatpush1.msra.mxu0 0.0
        %5073 = vmatprep.subr.mxu0 0.0
        %5074 = vmatpush1.msra.mxu0 0.0
        %5075 = vmatprep.subr.mxu0 0.0
        %5076 = vmatpush1.msra.mxu0 0.0
        %5077 = vmatprep.subr.mxu0 0.0
        %5078 = vmatpush1.msra.mxu0 0.0
        %5079 = vmatprep.subr.mxu0 0.0
        %5080 = vmatpush1.msra.mxu0 0.0
        %5081 = vmatprep.subr.mxu0 0.0
        %5082 = vmatpush1.msra.mxu0 0.0
        %5083 = vmatprep.subr.mxu0 0.0
        %5084 = vmatpush1.msra.mxu0 0.0
        %5085 = vmatprep.subr.mxu0 0.0
        %5086 = vmatpush1.msra.mxu0 0.0
        %5087 = vmatprep.subr.mxu0 0.0
        %5088 = vmatpush1.msra.mxu0 0.0
        %5089 = vmatprep.subr.mxu0 0.0
        %5090 = vmatpush1.msra.mxu0 0.0
        %5091 = vmatprep.subr.mxu0 0.0
        %5092 = vmatpush1.msra.mxu0 0.0
        %5093 = vmatprep.subr.mxu0 0.0
        %5094 = vmatpush1.msra.mxu0 0.0
        %5095 = vmatprep.subr.mxu0 0.0
        %5096 = vmatpush1.msra.mxu0 0.0
        %5097 = vmatprep.subr.mxu0 0.0
        %5098 = vmatpush1.msra.mxu0 0.0
        %5099 = vmatprep.subr.mxu0 0.0
        %5100 = vmatpush1.msra.mxu0 0.0
        %5101 = vmatprep.subr.mxu0 0.0
        %5102 = vmatpush1.msra.mxu0 0.0
        %5103 = vmatprep.subr.mxu0 0.0
        %5104 = vmatpush1.msra.mxu0 0.0
        %5105 = vmatprep.subr.mxu0 0.0
        %5106 = vmatpush1.msra.mxu0 0.0
        %5107 = vmatprep.mubr.f32.mxu0 0.0
        %5108 = vmatmul.mubr.f32.gmra.mrb[0].mxu0 %v5041
        %v5109 = vpop.f32.mrb[0].mxu0
        %v5110 = vadd.f32 0.0, %v5109
        %v5111 = vpop.f32.mrb[0].mxu0
        %5112 = vdwg.mxu0
        %v5113 = vmul.f32 %v5110, 0.03125
        %v5115 = vsel %vm1853, %v5113, 0
        %5117 = vmatprep.subr.mxu0 0.0
        %5118 = vmatpush1.msra.mxu0 %v2243
        %5119 = vmatprep.subr.mxu0 0.0
        %5120 = vmatpush1.msra.mxu0 0.0
        %5121 = vmatprep.subr.mxu0 0.0
        %5122 = vmatpush1.msra.mxu0 0.0
        %5123 = vmatprep.subr.mxu0 0.0
        %5124 = vmatpush1.msra.mxu0 0.0
        %5125 = vmatprep.subr.mxu0 0.0
        %5126 = vmatpush1.msra.mxu0 0.0
        %5127 = vmatprep.subr.mxu0 0.0
        %5128 = vmatpush1.msra.mxu0 0.0
        %5129 = vmatprep.subr.mxu0 0.0
        %5130 = vmatpush1.msra.mxu0 0.0
        %5131 = vmatprep.subr.mxu0 0.0
        %5132 = vmatpush1.msra.mxu0 0.0
        %5133 = vmatprep.subr.mxu0 0.0
        %5134 = vmatpush1.msra.mxu0 0.0
        %5135 = vmatprep.subr.mxu0 0.0
        %5136 = vmatpush1.msra.mxu0 0.0
        %5137 = vmatprep.subr.mxu0 0.0
        %5138 = vmatpush1.msra.mxu0 0.0
        %5139 = vmatprep.subr.mxu0 0.0
        %5140 = vmatpush1.msra.mxu0 0.0
        %5141 = vmatprep.subr.mxu0 0.0
        %5142 = vmatpush1.msra.mxu0 0.0
        %5143 = vmatprep.subr.mxu0 0.0
        %5144 = vmatpush1.msra.mxu0 0.0
        %5145 = vmatprep.subr.mxu0 0.0
        %5146 = vmatpush1.msra.mxu0 0.0
        %5147 = vmatprep.subr.mxu0 0.0
        %5148 = vmatpush1.msra.mxu0 0.0
        %5149 = vmatprep.subr.mxu0 0.0
        %5150 = vmatpush1.msra.mxu0 0.0
        %5151 = vmatprep.subr.mxu0 0.0
        %5152 = vmatpush1.msra.mxu0 0.0
        %5153 = vmatprep.subr.mxu0 0.0
        %5154 = vmatpush1.msra.mxu0 0.0
        %5155 = vmatprep.subr.mxu0 0.0
        %5156 = vmatpush1.msra.mxu0 0.0
        %5157 = vmatprep.subr.mxu0 0.0
        %5158 = vmatpush1.msra.mxu0 0.0
        %5159 = vmatprep.subr.mxu0 0.0
        %5160 = vmatpush1.msra.mxu0 0.0
        %5161 = vmatprep.subr.mxu0 0.0
        %5162 = vmatpush1.msra.mxu0 0.0
        %5163 = vmatprep.subr.mxu0 0.0
        %5164 = vmatpush1.msra.mxu0 0.0
        %5165 = vmatprep.subr.mxu0 0.0
        %5166 = vmatpush1.msra.mxu0 0.0
        %5167 = vmatprep.subr.mxu0 0.0
        %5168 = vmatpush1.msra.mxu0 0.0
        %5169 = vmatprep.subr.mxu0 0.0
        %5170 = vmatpush1.msra.mxu0 0.0
        %5171 = vmatprep.subr.mxu0 0.0
        %5172 = vmatpush1.msra.mxu0 0.0
        %5173 = vmatprep.subr.mxu0 0.0
        %5174 = vmatpush1.msra.mxu0 0.0
        %5175 = vmatprep.subr.mxu0 0.0
        %5176 = vmatpush1.msra.mxu0 0.0
        %5177 = vmatprep.subr.mxu0 0.0
        %5178 = vmatpush1.msra.mxu0 0.0
        %5179 = vmatprep.subr.mxu0 0.0
        %5180 = vmatpush1.msra.mxu0 0.0
        %5181 = vmatprep.mubr.f32.mxu0 0.0
        %5182 = vmatmul.mubr.f32.gmra.mrb[0].mxu0 %v5115
        %v5183 = vpop.f32.mrb[0].mxu0
        %v5184 = vadd.f32 0.0, %v5183
        %v5185 = vpop.f32.mrb[0].mxu0
        %5186 = vdwg.mxu0
        %v5187 = vlaneseq
        %v5188 = vshrl.u32 %v5187, 7
        %v5189 = vsub.s32 0, %v5188
        %v5190 = vrot.slane %v5184, %v5189
        %v5191 = vsub.f32 %v5030, %v5190
        %v5192 = vmul.f32 %v5191, %v5191
        %v5193 = vsel %vm2155, %v5192, 0.0
        %v5194 = vrot.slane %v5193, 4
        %v5195 = vadd.f32 %v5193, %v5194
        %v5196 = vrot.slane %v5195, 2
        %v5197 = vadd.f32 %v5195, %v5196
        %v5198 = vrot.slane %v5197, 1
        %v5199 = vadd.f32 %v5197, %v5198
        %v5201 = vsel %vm2155, %v5199, 0
        %5203 = vmatprep.subr.mxu0 0.0
        %5204 = vmatpush1.msra.mxu0 %v2145
        %5205 = vmatprep.subr.mxu0 0.0
        %5206 = vmatpush1.msra.mxu0 %v2146
        %5207 = vmatprep.subr.mxu0 0.0
        %5208 = vmatpush1.msra.mxu0 0.0
        %5209 = vmatprep.subr.mxu0 0.0
        %5210 = vmatpush1.msra.mxu0 0.0
        %5211 = vmatprep.subr.mxu0 0.0
        %5212 = vmatpush1.msra.mxu0 0.0
        %5213 = vmatprep.subr.mxu0 0.0
        %5214 = vmatpush1.msra.mxu0 0.0
        %5215 = vmatprep.subr.mxu0 0.0
        %5216 = vmatpush1.msra.mxu0 0.0
        %5217 = vmatprep.subr.mxu0 0.0
        %5218 = vmatpush1.msra.mxu0 0.0
        %5219 = vmatprep.subr.mxu0 0.0
        %5220 = vmatpush1.msra.mxu0 0.0
        %5221 = vmatprep.subr.mxu0 0.0
        %5222 = vmatpush1.msra.mxu0 0.0
        %5223 = vmatprep.subr.mxu0 0.0
        %5224 = vmatpush1.msra.mxu0 0.0
        %5225 = vmatprep.subr.mxu0 0.0
        %5226 = vmatpush1.msra.mxu0 0.0
        %5227 = vmatprep.subr.mxu0 0.0
        %5228 = vmatpush1.msra.mxu0 0.0
        %5229 = vmatprep.subr.mxu0 0.0
        %5230 = vmatpush1.msra.mxu0 0.0
        %5231 = vmatprep.subr.mxu0 0.0
        %5232 = vmatpush1.msra.mxu0 0.0
        %5233 = vmatprep.subr.mxu0 0.0
        %5234 = vmatpush1.msra.mxu0 0.0
        %5235 = vmatprep.subr.mxu0 0.0
        %5236 = vmatpush1.msra.mxu0 0.0
        %5237 = vmatprep.subr.mxu0 0.0
        %5238 = vmatpush1.msra.mxu0 0.0
        %5239 = vmatprep.subr.mxu0 0.0
        %5240 = vmatpush1.msra.mxu0 0.0
        %5241 = vmatprep.subr.mxu0 0.0
        %5242 = vmatpush1.msra.mxu0 0.0
        %5243 = vmatprep.subr.mxu0 0.0
        %5244 = vmatpush1.msra.mxu0 0.0
        %5245 = vmatprep.subr.mxu0 0.0
        %5246 = vmatpush1.msra.mxu0 0.0
        %5247 = vmatprep.subr.mxu0 0.0
        %5248 = vmatpush1.msra.mxu0 0.0
        %5249 = vmatprep.subr.mxu0 0.0
        %5250 = vmatpush1.msra.mxu0 0.0
        %5251 = vmatprep.subr.mxu0 0.0
        %5252 = vmatpush1.msra.mxu0 0.0
        %5253 = vmatprep.subr.mxu0 0.0
        %5254 = vmatpush1.msra.mxu0 0.0
        %5255 = vmatprep.subr.mxu0 0.0
        %5256 = vmatpush1.msra.mxu0 0.0
        %5257 = vmatprep.subr.mxu0 0.0
        %5258 = vmatpush1.msra.mxu0 0.0
        %5259 = vmatprep.subr.mxu0 0.0
        %5260 = vmatpush1.msra.mxu0 0.0
        %5261 = vmatprep.subr.mxu0 0.0
        %5262 = vmatpush1.msra.mxu0 0.0
        %5263 = vmatprep.subr.mxu0 0.0
        %5264 = vmatpush1.msra.mxu0 0.0
        %5265 = vmatprep.subr.mxu0 0.0
        %5266 = vmatpush1.msra.mxu0 0.0
        %5267 = vmatprep.mubr.f32.mxu0 0.0
        %5268 = vmatmul.mubr.f32.gmra.mrb[0].mxu0 %v5201
        %v5269 = vpop.f32.mrb[0].mxu0
        %v5270 = vadd.f32 0.0, %v5269
        %v5271 = vpop.f32.mrb[0].mxu0
        %5272 = vdwg.mxu0
        %v5273 = vmul.f32 %v5270, 0.03125
        %v5274 = vmax.f32 %v5273, 0.0
        %v5276 = vsel %vm1853, %v5274, 0
        %5278 = vmatprep.subr.mxu0 0.0
        %5279 = vmatpush1.msra.mxu0 %v2243
        %5280 = vmatprep.subr.mxu0 0.0
        %5281 = vmatpush1.msra.mxu0 0.0
        %5282 = vmatprep.subr.mxu0 0.0
        %5283 = vmatpush1.msra.mxu0 0.0
        %5284 = vmatprep.subr.mxu0 0.0
        %5285 = vmatpush1.msra.mxu0 0.0
        %5286 = vmatprep.subr.mxu0 0.0
        %5287 = vmatpush1.msra.mxu0 0.0
        %5288 = vmatprep.subr.mxu0 0.0
        %5289 = vmatpush1.msra.mxu0 0.0
        %5290 = vmatprep.subr.mxu0 0.0
        %5291 = vmatpush1.msra.mxu0 0.0
        %5292 = vmatprep.subr.mxu0 0.0
        %5293 = vmatpush1.msra.mxu0 0.0
        %5294 = vmatprep.subr.mxu0 0.0
        %5295 = vmatpush1.msra.mxu0 0.0
        %5296 = vmatprep.subr.mxu0 0.0
        %5297 = vmatpush1.msra.mxu0 0.0
        %5298 = vmatprep.subr.mxu0 0.0
        %5299 = vmatpush1.msra.mxu0 0.0
        %5300 = vmatprep.subr.mxu0 0.0
        %5301 = vmatpush1.msra.mxu0 0.0
        %5302 = vmatprep.subr.mxu0 0.0
        %5303 = vmatpush1.msra.mxu0 0.0
        %5304 = vmatprep.subr.mxu0 0.0
        %5305 = vmatpush1.msra.mxu0 0.0
        %5306 = vmatprep.subr.mxu0 0.0
        %5307 = vmatpush1.msra.mxu0 0.0
        %5308 = vmatprep.subr.mxu0 0.0
        %5309 = vmatpush1.msra.mxu0 0.0
        %5310 = vmatprep.subr.mxu0 0.0
        %5311 = vmatpush1.msra.mxu0 0.0
        %5312 = vmatprep.subr.mxu0 0.0
        %5313 = vmatpush1.msra.mxu0 0.0
        %5314 = vmatprep.subr.mxu0 0.0
        %5315 = vmatpush1.msra.mxu0 0.0
        %5316 = vmatprep.subr.mxu0 0.0
        %5317 = vmatpush1.msra.mxu0 0.0
        %5318 = vmatprep.subr.mxu0 0.0
        %5319 = vmatpush1.msra.mxu0 0.0
        %5320 = vmatprep.subr.mxu0 0.0
        %5321 = vmatpush1.msra.mxu0 0.0
        %5322 = vmatprep.subr.mxu0 0.0
        %5323 = vmatpush1.msra.mxu0 0.0
        %5324 = vmatprep.subr.mxu0 0.0
        %5325 = vmatpush1.msra.mxu0 0.0
        %5326 = vmatprep.subr.mxu0 0.0
        %5327 = vmatpush1.msra.mxu0 0.0
        %5328 = vmatprep.subr.mxu0 0.0
        %5329 = vmatpush1.msra.mxu0 0.0
        %5330 = vmatprep.subr.mxu0 0.0
        %5331 = vmatpush1.msra.mxu0 0.0
        %5332 = vmatprep.subr.mxu0 0.0
        %5333 = vmatpush1.msra.mxu0 0.0
        %5334 = vmatprep.subr.mxu0 0.0
        %5335 = vmatpush1.msra.mxu0 0.0
        %5336 = vmatprep.subr.mxu0 0.0
        %5337 = vmatpush1.msra.mxu0 0.0
        %5338 = vmatprep.subr.mxu0 0.0
        %5339 = vmatpush1.msra.mxu0 0.0
        %5340 = vmatprep.subr.mxu0 0.0
        %5341 = vmatpush1.msra.mxu0 0.0
        %5342 = vmatprep.mubr.f32.mxu0 0.0
        %5343 = vmatmul.mubr.f32.gmra.mrb[0].mxu0 %v5276
        %v5344 = vpop.f32.mrb[0].mxu0
        %v5345 = vadd.f32 1e-06, %v5344
        %v5346 = vpop.f32.mrb[0].mxu0
        %5347 = vdwg.mxu0
        %v5348 = vrsqrt.pop %v5345
        %v5349 = vlaneseq
        %v5350 = vshrl.u32 %v5349, 7
        %v5351 = vsub.s32 0, %v5350
        %v5352 = vrot.slane %v5348, %v5351
        %v5353 = vmul.f32 %v5191, %v5352
        %v5354 = vld [vmem:[#allocation44] sm:$0x1]
        %v5356 = vlaneseq
        %v5357 = vshrl.u32 %v5356, 7
        %v5358 = vsub.s32 0, %v5357
        %v5359 = vrot.slane %v5354, %v5358
        %v5361 = vmul.f32 %v5353, %v5359
        %v5362 = vld [vmem:[#allocation42] sm:$0x1]
        %v5364 = vlaneseq
        %v5365 = vshrl.u32 %v5364, 7
        %v5366 = vsub.s32 0, %v5365
        %v5367 = vrot.slane %v5362, %v5366
        %v5369 = vadd.f32 %v5361, %v5367
        %v5370 = vxor.u32 %v5369, 2147483648
        %v5371 = vmul.f32 %v5370, 1.442695
        %v5372 = vpow.pop %v5371
        %v5373 = vadd.f32 %v5372, 1.0
        %v5374 = vrcp.pop %v5373
        %v5375 = vmul.f32 1.0, %v5374
        %v5376 = vmul.f32 %v5369, %v5375
        %5377 = vst.msk [vmem:[#allocation2] sm:$0xff] %vm1848, 0.0
        %5378 = vst.msk [vmem:[#allocation2 + $0x8] sm:$0xff] %vm1848, 0.0
        %5379 = vst.msk [vmem:[#allocation2 + $0x10] sm:$0x3] %vm1851, 0.0
        %5380 = vst.msk [vmem:[#allocation2 + $0x1] sm:$0xff] %vm2155, %v5376
        %v5381 = vld [vmem:[#allocation2] sm:$0xff]
        %v5382 = vld [vmem:[#allocation36] sm:$0xff]
        %v5383 = vld [vmem:[#allocation36 + $0x8] sm:$0xff]
        %s5384 = scalar_lea.vmem [#allocation36], 16
        %v5385 = vld [vmem:[%s5384] sm:$0xff]
        %v5386 = vld [vmem:[%s5384 + $0x8] sm:$0xff]
        %v5388 = vsel %vm2155, %v5376, 0
        %5390 = vmatprep.subr.mxu0 0.0
        %5391 = vmatpush1.msra.mxu0 %v5385
        %5392 = vmatprep.subr.mxu0 0.0
        %5393 = vmatpush1.msra.mxu0 %v5386
        %5394 = vmatprep.subr.mxu0 0.0
        %5395 = vmatpush1.msra.mxu0 0.0
        %5396 = vmatprep.subr.mxu0 0.0
        %5397 = vmatpush1.msra.mxu0 0.0
        %5398 = vmatprep.subr.mxu0 0.0
        %5399 = vmatpush1.msra.mxu0 0.0
        %5400 = vmatprep.subr.mxu0 0.0
        %5401 = vmatpush1.msra.mxu0 0.0
        %5402 = vmatprep.subr.mxu0 0.0
        %5403 = vmatpush1.msra.mxu0 0.0
        %5404 = vmatprep.subr.mxu0 0.0
        %5405 = vmatpush1.msra.mxu0 0.0
        %5406 = vmatprep.subr.mxu0 0.0
        %5407 = vmatpush1.msra.mxu0 0.0
        %5408 = vmatprep.subr.mxu0 0.0
        %5409 = vmatpush1.msra.mxu0 0.0
        %5410 = vmatprep.subr.mxu0 0.0
        %5411 = vmatpush1.msra.mxu0 0.0
        %5412 = vmatprep.subr.mxu0 0.0
        %5413 = vmatpush1.msra.mxu0 0.0
        %5414 = vmatprep.subr.mxu0 0.0
        %5415 = vmatpush1.msra.mxu0 0.0
        %5416 = vmatprep.subr.mxu0 0.0
        %5417 = vmatpush1.msra.mxu0 0.0
        %5418 = vmatprep.subr.mxu0 0.0
        %5419 = vmatpush1.msra.mxu0 0.0
        %5420 = vmatprep.subr.mxu0 0.0
        %5421 = vmatpush1.msra.mxu0 0.0
        %5422 = vmatprep.subr.mxu0 0.0
        %5423 = vmatpush1.msra.mxu0 0.0
        %5424 = vmatprep.subr.mxu0 0.0
        %5425 = vmatpush1.msra.mxu0 0.0
        %5426 = vmatprep.subr.mxu0 0.0
        %5427 = vmatpush1.msra.mxu0 0.0
        %5428 = vmatprep.subr.mxu0 0.0
        %5429 = vmatpush1.msra.mxu0 0.0
        %5430 = vmatprep.subr.mxu0 0.0
        %5431 = vmatpush1.msra.mxu0 0.0
        %5432 = vmatprep.subr.mxu0 0.0
        %5433 = vmatpush1.msra.mxu0 0.0
        %5434 = vmatprep.subr.mxu0 0.0
        %5435 = vmatpush1.msra.mxu0 0.0
        %5436 = vmatprep.subr.mxu0 0.0
        %5437 = vmatpush1.msra.mxu0 0.0
        %5438 = vmatprep.subr.mxu0 0.0
        %5439 = vmatpush1.msra.mxu0 0.0
        %5440 = vmatprep.subr.mxu0 0.0
        %5441 = vmatpush1.msra.mxu0 0.0
        %5442 = vmatprep.subr.mxu0 0.0
        %5443 = vmatpush1.msra.mxu0 0.0
        %5444 = vmatprep.subr.mxu0 0.0
        %5445 = vmatpush1.msra.mxu0 0.0
        %5446 = vmatprep.subr.mxu0 0.0
        %5447 = vmatpush1.msra.mxu0 0.0
        %5448 = vmatprep.subr.mxu0 0.0
        %5449 = vmatpush1.msra.mxu0 0.0
        %5450 = vmatprep.subr.mxu0 0.0
        %5451 = vmatpush1.msra.mxu0 0.0
        %5452 = vmatprep.subr.mxu0 0.0
        %5453 = vmatpush1.msra.mxu0 0.0
        %5454 = vmatprep.mubr.f32.mxu0 0.0
        %5455 = vmatmul.mubr.f32.gmra.mrb[0].mxu0 %v5388
        %v5456 = vpop.f32.mrb[0].mxu0
        %v5457 = vadd.f32 0.0, %v5456
        %v5458 = vpop.f32.mrb[0].mxu0
        %5459 = vdwg.mxu0
        %v5461 = vsel %vm2155, %v5381, 0
        %5463 = vmatprep.subr.mxu0 0.0
        %5464 = vmatpush1.msra.mxu0 %v5382
        %5465 = vmatprep.subr.mxu0 0.0
        %5466 = vmatpush1.msra.mxu0 %v5383
        %5467 = vmatprep.subr.mxu0 0.0
        %5468 = vmatpush1.msra.mxu0 0.0
        %5469 = vmatprep.subr.mxu0 0.0
        %5470 = vmatpush1.msra.mxu0 0.0
        %5471 = vmatprep.subr.mxu0 0.0
        %5472 = vmatpush1.msra.mxu0 0.0
        %5473 = vmatprep.subr.mxu0 0.0
        %5474 = vmatpush1.msra.mxu0 0.0
        %5475 = vmatprep.subr.mxu0 0.0
        %5476 = vmatpush1.msra.mxu0 0.0
        %5477 = vmatprep.subr.mxu0 0.0
        %5478 = vmatpush1.msra.mxu0 0.0
        %5479 = vmatprep.subr.mxu0 0.0
        %5480 = vmatpush1.msra.mxu0 0.0
        %5481 = vmatprep.subr.mxu0 0.0
        %5482 = vmatpush1.msra.mxu0 0.0
        %5483 = vmatprep.subr.mxu0 0.0
        %5484 = vmatpush1.msra.mxu0 0.0
        %5485 = vmatprep.subr.mxu0 0.0
        %5486 = vmatpush1.msra.mxu0 0.0
        %5487 = vmatprep.subr.mxu0 0.0
        %5488 = vmatpush1.msra.mxu0 0.0
        %5489 = vmatprep.subr.mxu0 0.0
        %5490 = vmatpush1.msra.mxu0 0.0
        %5491 = vmatprep.subr.mxu0 0.0
        %5492 = vmatpush1.msra.mxu0 0.0
        %5493 = vmatprep.subr.mxu0 0.0
        %5494 = vmatpush1.msra.mxu0 0.0
        %5495 = vmatprep.subr.mxu0 0.0
        %5496 = vmatpush1.msra.mxu0 0.0
        %5497 = vmatprep.subr.mxu0 0.0
        %5498 = vmatpush1.msra.mxu0 0.0
        %5499 = vmatprep.subr.mxu0 0.0
        %5500 = vmatpush1.msra.mxu0 0.0
        %5501 = vmatprep.subr.mxu0 0.0
        %5502 = vmatpush1.msra.mxu0 0.0
        %5503 = vmatprep.subr.mxu0 0.0
        %5504 = vmatpush1.msra.mxu0 0.0
        %5505 = vmatprep.subr.mxu0 0.0
        %5506 = vmatpush1.msra.mxu0 0.0
        %5507 = vmatprep.subr.mxu0 0.0
        %5508 = vmatpush1.msra.mxu0 0.0
        %5509 = vmatprep.subr.mxu0 0.0
        %5510 = vmatpush1.msra.mxu0 0.0
        %5511 = vmatprep.subr.mxu0 0.0
        %5512 = vmatpush1.msra.mxu0 0.0
        %5513 = vmatprep.subr.mxu0 0.0
        %5514 = vmatpush1.msra.mxu0 0.0
        %5515 = vmatprep.subr.mxu0 0.0
        %5516 = vmatpush1.msra.mxu0 0.0
        %5517 = vmatprep.subr.mxu0 0.0
        %5518 = vmatpush1.msra.mxu0 0.0
        %5519 = vmatprep.subr.mxu0 0.0
        %5520 = vmatpush1.msra.mxu0 0.0
        %5521 = vmatprep.subr.mxu0 0.0
        %5522 = vmatpush1.msra.mxu0 0.0
        %5523 = vmatprep.subr.mxu0 0.0
        %5524 = vmatpush1.msra.mxu0 0.0
        %5525 = vmatprep.subr.mxu0 0.0
        %5526 = vmatpush1.msra.mxu0 0.0
        %5527 = vmatprep.mubr.f32.mxu0 0.0
        %5528 = vmatmul.mubr.f32.gmra.mrb[0].mxu0 %v5461
        %v5529 = vpop.f32.mrb[0].mxu0
        %v5530 = vadd.f32 %v5457, %v5529
        %v5531 = vpop.f32.mrb[0].mxu0
        %5532 = vdwg.mxu0
        %v5533 = vld [vmem:[#allocation2 + $0x2] sm:$0xff]
        %s5534 = scalar_lea.vmem [#allocation36], 32
        %v5535 = vld [vmem:[%s5534] sm:$0xff]
        %v5536 = vld [vmem:[%s5534 + $0x8] sm:$0xff]
        %v5538 = vsel %vm2155, %v5533, 0
        %5540 = vmatprep.subr.mxu0 0.0
        %5541 = vmatpush1.msra.mxu0 %v5535
        %5542 = vmatprep.subr.mxu0 0.0
        %5543 = vmatpush1.msra.mxu0 %v5536
        %5544 = vmatprep.subr.mxu0 0.0
        %5545 = vmatpush1.msra.mxu0 0.0
        %5546 = vmatprep.subr.mxu0 0.0
        %5547 = vmatpush1.msra.mxu0 0.0
        %5548 = vmatprep.subr.mxu0 0.0
        %5549 = vmatpush1.msra.mxu0 0.0
        %5550 = vmatprep.subr.mxu0 0.0
        %5551 = vmatpush1.msra.mxu0 0.0
        %5552 = vmatprep.subr.mxu0 0.0
        %5553 = vmatpush1.msra.mxu0 0.0
        %5554 = vmatprep.subr.mxu0 0.0
        %5555 = vmatpush1.msra.mxu0 0.0
        %5556 = vmatprep.subr.mxu0 0.0
        %5557 = vmatpush1.msra.mxu0 0.0
        %5558 = vmatprep.subr.mxu0 0.0
        %5559 = vmatpush1.msra.mxu0 0.0
        %5560 = vmatprep.subr.mxu0 0.0
        %5561 = vmatpush1.msra.mxu0 0.0
        %5562 = vmatprep.subr.mxu0 0.0
        %5563 = vmatpush1.msra.mxu0 0.0
        %5564 = vmatprep.subr.mxu0 0.0
        %5565 = vmatpush1.msra.mxu0 0.0
        %5566 = vmatprep.subr.mxu0 0.0
        %5567 = vmatpush1.msra.mxu0 0.0
        %5568 = vmatprep.subr.mxu0 0.0
        %5569 = vmatpush1.msra.mxu0 0.0
        %5570 = vmatprep.subr.mxu0 0.0
        %5571 = vmatpush1.msra.mxu0 0.0
        %5572 = vmatprep.subr.mxu0 0.0
        %5573 = vmatpush1.msra.mxu0 0.0
        %5574 = vmatprep.subr.mxu0 0.0
        %5575 = vmatpush1.msra.mxu0 0.0
        %5576 = vmatprep.subr.mxu0 0.0
        %5577 = vmatpush1.msra.mxu0 0.0
        %5578 = vmatprep.subr.mxu0 0.0
        %5579 = vmatpush1.msra.mxu0 0.0
        %5580 = vmatprep.subr.mxu0 0.0
        %5581 = vmatpush1.msra.mxu0 0.0
        %5582 = vmatprep.subr.mxu0 0.0
        %5583 = vmatpush1.msra.mxu0 0.0
        %5584 = vmatprep.subr.mxu0 0.0
        %5585 = vmatpush1.msra.mxu0 0.0
        %5586 = vmatprep.subr.mxu0 0.0
        %5587 = vmatpush1.msra.mxu0 0.0
        %5588 = vmatprep.subr.mxu0 0.0
        %5589 = vmatpush1.msra.mxu0 0.0
        %5590 = vmatprep.subr.mxu0 0.0
        %5591 = vmatpush1.msra.mxu0 0.0
        %5592 = vmatprep.subr.mxu0 0.0
        %5593 = vmatpush1.msra.mxu0 0.0
        %5594 = vmatprep.subr.mxu0 0.0
        %5595 = vmatpush1.msra.mxu0 0.0
        %5596 = vmatprep.subr.mxu0 0.0
        %5597 = vmatpush1.msra.mxu0 0.0
        %5598 = vmatprep.subr.mxu0 0.0
        %5599 = vmatpush1.msra.mxu0 0.0
        %5600 = vmatprep.subr.mxu0 0.0
        %5601 = vmatpush1.msra.mxu0 0.0
        %5602 = vmatprep.subr.mxu0 0.0
        %5603 = vmatpush1.msra.mxu0 0.0
        %5604 = vmatprep.mubr.f32.mxu0 0.0
        %5605 = vmatmul.mubr.f32.gmra.mrb[0].mxu0 %v5538
        %v5606 = vpop.f32.mrb[0].mxu0
        %v5607 = vadd.f32 0.0, %v5606
        %v5608 = vpop.f32.mrb[0].mxu0
        %5609 = vdwg.mxu0
        %v5610 = vadd.f32 %v5530, %v5607
        %v5611 = vld [vmem:[#allocation35] sm:$0x1]
        %v5613 = vlaneseq
        %v5614 = vshrl.u32 %v5613, 7
        %v5615 = vsub.s32 0, %v5614
        %v5616 = vrot.slane %v5611, %v5615
        %v5618 = vadd.f32 %v5610, %v5616
        %v5619 = vadd.s32 %v2130, 16
        %v5620 = vadd.s32 %v2130, 24
        %v5621 = vmul.u32 %v2133, 8
        %vm5622 = vcmp.ge.s32.totalorder %v2130, %v5621
        %vm5623 = vcmp.ge.s32.totalorder %v2131, %v5621
        %vm5624 = vcmp.ge.s32.totalorder %v5619, %v5621
        %vm5625 = vcmp.ge.s32.totalorder %v5620, %v5621
        %v5626 = vmul.u32 %v2137, 8
        %vm5627 = vcmp.lt.s32.totalorder %v2130, %v5626
        %vm5628 = vcmp.lt.s32.totalorder %v2131, %v5626
        %vm5629 = vcmp.lt.s32.totalorder %v5619, %v5626
        %vm5630 = vcmp.lt.s32.totalorder %v5620, %v5626
        %vm5631 = vmand %vm5622, %vm5627
        %vm5632 = vmand %vm5623, %vm5628
        %vm5633 = vmand %vm5624, %vm5629
        %vm5634 = vmand %vm5625, %vm5630
        %v5635 = vsel %vm5631, 1, 0
        %v5636 = vsel %vm5632, 1, 0
        %v5637 = vsel %vm5633, 1, 0
        %v5638 = vsel %vm5634, 1, 0
        %v5639 = vcvt.s32.f32 %v5635
        %v5640 = vcvt.s32.f32 %v5636
        %v5641 = vcvt.s32.f32 %v5637
        %v5642 = vcvt.s32.f32 %v5638
        %v5643 = vmul.u32 %v2130, 8
        %vm5644 = vcmp.ge.s32.totalorder %v2133, %v5643
        %v5645 = vmul.u32 %v2149, 8
        %vm5646 = vcmp.lt.s32.totalorder %v2133, %v5645
        %vm5647 = vmand %vm5644, %vm5646
        %v5648 = vsel %vm5647, 1, 0
        %v5649 = vcvt.s32.f32 %v5648
        %v5650 = vsel %vm1848, %v5618, 0.0
        %v5651 = vrot.slane %v5650, 4
        %v5652 = vadd.f32 %v5650, %v5651
        %v5653 = vrot.slane %v5652, 2
        %v5654 = vadd.f32 %v5652, %v5653
        %v5655 = vrot.slane %v5654, 1
        %v5656 = vadd.f32 %v5654, %v5655
        %v5658 = vsel %vm1848, %v5656, 0
        %5660 = vmatprep.subr.mxu0 0.0
        %5661 = vmatpush1.msra.mxu0 %v5639
        %5662 = vmatprep.subr.mxu0 0.0
        %5663 = vmatpush1.msra.mxu0 %v5640
        %5664 = vmatprep.subr.mxu0 0.0
        %5665 = vmatpush1.msra.mxu0 %v5641
        %5666 = vmatprep.subr.mxu0 0.0
        %5667 = vmatpush1.msra.mxu0 %v5642
        %5668 = vmatprep.subr.mxu0 0.0
        %5669 = vmatpush1.msra.mxu0 0.0
        %5670 = vmatprep.subr.mxu0 0.0
        %5671 = vmatpush1.msra.mxu0 0.0
        %5672 = vmatprep.subr.mxu0 0.0
        %5673 = vmatpush1.msra.mxu0 0.0
        %5674 = vmatprep.subr.mxu0 0.0
        %5675 = vmatpush1.msra.mxu0 0.0
        %5676 = vmatprep.subr.mxu0 0.0
        %5677 = vmatpush1.msra.mxu0 0.0
        %5678 = vmatprep.subr.mxu0 0.0
        %5679 = vmatpush1.msra.mxu0 0.0
        %5680 = vmatprep.subr.mxu0 0.0
        %5681 = vmatpush1.msra.mxu0 0.0
        %5682 = vmatprep.subr.mxu0 0.0
        %5683 = vmatpush1.msra.mxu0 0.0
        %5684 = vmatprep.subr.mxu0 0.0
        %5685 = vmatpush1.msra.mxu0 0.0
        %5686 = vmatprep.subr.mxu0 0.0
        %5687 = vmatpush1.msra.mxu0 0.0
        %5688 = vmatprep.subr.mxu0 0.0
        %5689 = vmatpush1.msra.mxu0 0.0
        %5690 = vmatprep.subr.mxu0 0.0
        %5691 = vmatpush1.msra.mxu0 0.0
        %5692 = vmatprep.subr.mxu0 0.0
        %5693 = vmatpush1.msra.mxu0 0.0
        %5694 = vmatprep.subr.mxu0 0.0
        %5695 = vmatpush1.msra.mxu0 0.0
        %5696 = vmatprep.subr.mxu0 0.0
        %5697 = vmatpush1.msra.mxu0 0.0
        %5698 = vmatprep.subr.mxu0 0.0
        %5699 = vmatpush1.msra.mxu0 0.0
        %5700 = vmatprep.subr.mxu0 0.0
        %5701 = vmatpush1.msra.mxu0 0.0
        %5702 = vmatprep.subr.mxu0 0.0
        %5703 = vmatpush1.msra.mxu0 0.0
        %5704 = vmatprep.subr.mxu0 0.0
        %5705 = vmatpush1.msra.mxu0 0.0
        %5706 = vmatprep.subr.mxu0 0.0
        %5707 = vmatpush1.msra.mxu0 0.0
        %5708 = vmatprep.subr.mxu0 0.0
        %5709 = vmatpush1.msra.mxu0 0.0
        %5710 = vmatprep.subr.mxu0 0.0
        %5711 = vmatpush1.msra.mxu0 0.0
        %5712 = vmatprep.subr.mxu0 0.0
        %5713 = vmatpush1.msra.mxu0 0.0
        %5714 = vmatprep.subr.mxu0 0.0
        %5715 = vmatpush1.msra.mxu0 0.0
        %5716 = vmatprep.subr.mxu0 0.0
        %5717 = vmatpush1.msra.mxu0 0.0
        %5718 = vmatprep.subr.mxu0 0.0
        %5719 = vmatpush1.msra.mxu0 0.0
        %5720 = vmatprep.subr.mxu0 0.0
        %5721 = vmatpush1.msra.mxu0 0.0
        %5722 = vmatprep.subr.mxu0 0.0
        %5723 = vmatpush1.msra.mxu0 0.0
        %5724 = vmatprep.mubr.f32.mxu0 0.0
        %5725 = vmatmul.mubr.f32.gmra.mrb[0].mxu0 %v5658
        %v5726 = vpop.f32.mrb[0].mxu0
        %v5727 = vadd.f32 0.0, %v5726
        %v5728 = vpop.f32.mrb[0].mxu0
        %5729 = vdwg.mxu0
        %v5730 = vmul.f32 %v5727, 0.015625
        %v5732 = vsel %vm1853, %v5730, 0
        %v5735 = vsel %vm1867, %v5649, 0
        %5737 = vmatprep.subr.mxu0 0.0
        %5738 = vmatpush1.msra.mxu0 %v5735
        %5739 = vmatprep.subr.mxu0 0.0
        %5740 = vmatpush1.msra.mxu0 0.0
        %5741 = vmatprep.subr.mxu0 0.0
        %5742 = vmatpush1.msra.mxu0 0.0
        %5743 = vmatprep.subr.mxu0 0.0
        %5744 = vmatpush1.msra.mxu0 0.0
        %5745 = vmatprep.subr.mxu0 0.0
        %5746 = vmatpush1.msra.mxu0 0.0
        %5747 = vmatprep.subr.mxu0 0.0
        %5748 = vmatpush1.msra.mxu0 0.0
        %5749 = vmatprep.subr.mxu0 0.0
        %5750 = vmatpush1.msra.mxu0 0.0
        %5751 = vmatprep.subr.mxu0 0.0
        %5752 = vmatpush1.msra.mxu0 0.0
        %5753 = vmatprep.subr.mxu0 0.0
        %5754 = vmatpush1.msra.mxu0 0.0
        %5755 = vmatprep.subr.mxu0 0.0
        %5756 = vmatpush1.msra.mxu0 0.0
        %5757 = vmatprep.subr.mxu0 0.0
        %5758 = vmatpush1.msra.mxu0 0.0
        %5759 = vmatprep.subr.mxu0 0.0
        %5760 = vmatpush1.msra.mxu0 0.0
        %5761 = vmatprep.subr.mxu0 0.0
        %5762 = vmatpush1.msra.mxu0 0.0
        %5763 = vmatprep.subr.mxu0 0.0
        %5764 = vmatpush1.msra.mxu0 0.0
        %5765 = vmatprep.subr.mxu0 0.0
        %5766 = vmatpush1.msra.mxu0 0.0
        %5767 = vmatprep.subr.mxu0 0.0
        %5768 = vmatpush1.msra.mxu0 0.0
        %5769 = vmatprep.subr.mxu0 0.0
        %5770 = vmatpush1.msra.mxu0 0.0
        %5771 = vmatprep.subr.mxu0 0.0
        %5772 = vmatpush1.msra.mxu0 0.0
        %5773 = vmatprep.subr.mxu0 0.0
        %5774 = vmatpush1.msra.mxu0 0.0
        %5775 = vmatprep.subr.mxu0 0.0
        %5776 = vmatpush1.msra.mxu0 0.0
        %5777 = vmatprep.subr.mxu0 0.0
        %5778 = vmatpush1.msra.mxu0 0.0
        %5779 = vmatprep.subr.mxu0 0.0
        %5780 = vmatpush1.msra.mxu0 0.0
        %5781 = vmatprep.subr.mxu0 0.0
        %5782 = vmatpush1.msra.mxu0 0.0
        %5783 = vmatprep.subr.mxu0 0.0
        %5784 = vmatpush1.msra.mxu0 0.0
        %5785 = vmatprep.subr.mxu0 0.0
        %5786 = vmatpush1.msra.mxu0 0.0
        %5787 = vmatprep.subr.mxu0 0.0
        %5788 = vmatpush1.msra.mxu0 0.0
        %5789 = vmatprep.subr.mxu0 0.0
        %5790 = vmatpush1.msra.mxu0 0.0
        %5791 = vmatprep.subr.mxu0 0.0
        %5792 = vmatpush1.msra.mxu0 0.0
        %5793 = vmatprep.subr.mxu0 0.0
        %5794 = vmatpush1.msra.mxu0 0.0
        %5795 = vmatprep.subr.mxu0 0.0
        %5796 = vmatpush1.msra.mxu0 0.0
        %5797 = vmatprep.subr.mxu0 0.0
        %5798 = vmatpush1.msra.mxu0 0.0
        %5799 = vmatprep.subr.mxu0 0.0
        %5800 = vmatpush1.msra.mxu0 0.0
        %5801 = vmatprep.mubr.f32.mxu0 0.0
        %5802 = vmatmul.mubr.f32.gmra.mrb[0].mxu0 %v5732
        %v5803 = vpop.f32.mrb[0].mxu0
        %v5804 = vadd.f32 0.0, %v5803
        %v5805 = vpop.f32.mrb[0].mxu0
        %5806 = vdwg.mxu0
        %v5807 = vlaneseq
        %v5808 = vshrl.u32 %v5807, 7
        %v5809 = vsub.s32 0, %v5808
        %v5810 = vrot.slane %v5804, %v5809
        %v5811 = vsub.f32 %v5618, %v5810
        %v5812 = vmul.f32 %v5811, %v5811
        %v5813 = vsel %vm1848, %v5812, 0.0
        %v5814 = vrot.slane %v5813, 4
        %v5815 = vadd.f32 %v5813, %v5814
        %v5816 = vrot.slane %v5815, 2
        %v5817 = vadd.f32 %v5815, %v5816
        %v5818 = vrot.slane %v5817, 1
        %v5819 = vadd.f32 %v5817, %v5818
        %v5821 = vsel %vm1848, %v5819, 0
        %5823 = vmatprep.subr.mxu0 0.0
        %5824 = vmatpush1.msra.mxu0 %v5639
        %5825 = vmatprep.subr.mxu0 0.0
        %5826 = vmatpush1.msra.mxu0 %v5640
        %5827 = vmatprep.subr.mxu0 0.0
        %5828 = vmatpush1.msra.mxu0 %v5641
        %5829 = vmatprep.subr.mxu0 0.0
        %5830 = vmatpush1.msra.mxu0 %v5642
        %5831 = vmatprep.subr.mxu0 0.0
        %5832 = vmatpush1.msra.mxu0 0.0
        %5833 = vmatprep.subr.mxu0 0.0
        %5834 = vmatpush1.msra.mxu0 0.0
        %5835 = vmatprep.subr.mxu0 0.0
        %5836 = vmatpush1.msra.mxu0 0.0
        %5837 = vmatprep.subr.mxu0 0.0
        %5838 = vmatpush1.msra.mxu0 0.0
        %5839 = vmatprep.subr.mxu0 0.0
        %5840 = vmatpush1.msra.mxu0 0.0
        %5841 = vmatprep.subr.mxu0 0.0
        %5842 = vmatpush1.msra.mxu0 0.0
        %5843 = vmatprep.subr.mxu0 0.0
        %5844 = vmatpush1.msra.mxu0 0.0
        %5845 = vmatprep.subr.mxu0 0.0
        %5846 = vmatpush1.msra.mxu0 0.0
        %5847 = vmatprep.subr.mxu0 0.0
        %5848 = vmatpush1.msra.mxu0 0.0
        %5849 = vmatprep.subr.mxu0 0.0
        %5850 = vmatpush1.msra.mxu0 0.0
        %5851 = vmatprep.subr.mxu0 0.0
        %5852 = vmatpush1.msra.mxu0 0.0
        %5853 = vmatprep.subr.mxu0 0.0
        %5854 = vmatpush1.msra.mxu0 0.0
        %5855 = vmatprep.subr.mxu0 0.0
        %5856 = vmatpush1.msra.mxu0 0.0
        %5857 = vmatprep.subr.mxu0 0.0
        %5858 = vmatpush1.msra.mxu0 0.0
        %5859 = vmatprep.subr.mxu0 0.0
        %5860 = vmatpush1.msra.mxu0 0.0
        %5861 = vmatprep.subr.mxu0 0.0
        %5862 = vmatpush1.msra.mxu0 0.0
        %5863 = vmatprep.subr.mxu0 0.0
        %5864 = vmatpush1.msra.mxu0 0.0
        %5865 = vmatprep.subr.mxu0 0.0
        %5866 = vmatpush1.msra.mxu0 0.0
        %5867 = vmatprep.subr.mxu0 0.0
        %5868 = vmatpush1.msra.mxu0 0.0
        %5869 = vmatprep.subr.mxu0 0.0
        %5870 = vmatpush1.msra.mxu0 0.0
        %5871 = vmatprep.subr.mxu0 0.0
        %5872 = vmatpush1.msra.mxu0 0.0
        %5873 = vmatprep.subr.mxu0 0.0
        %5874 = vmatpush1.msra.mxu0 0.0
        %5875 = vmatprep.subr.mxu0 0.0
        %5876 = vmatpush1.msra.mxu0 0.0
        %5877 = vmatprep.subr.mxu0 0.0
        %5878 = vmatpush1.msra.mxu0 0.0
        %5879 = vmatprep.subr.mxu0 0.0
        %5880 = vmatpush1.msra.mxu0 0.0
        %5881 = vmatprep.subr.mxu0 0.0
        %5882 = vmatpush1.msra.mxu0 0.0
        %5883 = vmatprep.subr.mxu0 0.0
        %5884 = vmatpush1.msra.mxu0 0.0
        %5885 = vmatprep.subr.mxu0 0.0
        %5886 = vmatpush1.msra.mxu0 0.0
        %5887 = vmatprep.mubr.f32.mxu0 0.0
        %5888 = vmatmul.mubr.f32.gmra.mrb[0].mxu0 %v5821
        %v5889 = vpop.f32.mrb[0].mxu0
        %v5890 = vadd.f32 0.0, %v5889
        %v5891 = vpop.f32.mrb[0].mxu0
        %5892 = vdwg.mxu0
        %v5893 = vmul.f32 %v5890, 0.015625
        %v5894 = vmax.f32 %v5893, 0.0
        %v5896 = vsel %vm1853, %v5894, 0
        %5898 = vmatprep.subr.mxu0 0.0
        %5899 = vmatpush1.msra.mxu0 %v5735
        %5900 = vmatprep.subr.mxu0 0.0
        %5901 = vmatpush1.msra.mxu0 0.0
        %5902 = vmatprep.subr.mxu0 0.0
        %5903 = vmatpush1.msra.mxu0 0.0
        %5904 = vmatprep.subr.mxu0 0.0
        %5905 = vmatpush1.msra.mxu0 0.0
        %5906 = vmatprep.subr.mxu0 0.0
        %5907 = vmatpush1.msra.mxu0 0.0
        %5908 = vmatprep.subr.mxu0 0.0
        %5909 = vmatpush1.msra.mxu0 0.0
        %5910 = vmatprep.subr.mxu0 0.0
        %5911 = vmatpush1.msra.mxu0 0.0
        %5912 = vmatprep.subr.mxu0 0.0
        %5913 = vmatpush1.msra.mxu0 0.0
        %5914 = vmatprep.subr.mxu0 0.0
        %5915 = vmatpush1.msra.mxu0 0.0
        %5916 = vmatprep.subr.mxu0 0.0
        %5917 = vmatpush1.msra.mxu0 0.0
        %5918 = vmatprep.subr.mxu0 0.0
        %5919 = vmatpush1.msra.mxu0 0.0
        %5920 = vmatprep.subr.mxu0 0.0
        %5921 = vmatpush1.msra.mxu0 0.0
        %5922 = vmatprep.subr.mxu0 0.0
        %5923 = vmatpush1.msra.mxu0 0.0
        %5924 = vmatprep.subr.mxu0 0.0
        %5925 = vmatpush1.msra.mxu0 0.0
        %5926 = vmatprep.subr.mxu0 0.0
        %5927 = vmatpush1.msra.mxu0 0.0
        %5928 = vmatprep.subr.mxu0 0.0
        %5929 = vmatpush1.msra.mxu0 0.0
        %5930 = vmatprep.subr.mxu0 0.0
        %5931 = vmatpush1.msra.mxu0 0.0
        %5932 = vmatprep.subr.mxu0 0.0
        %5933 = vmatpush1.msra.mxu0 0.0
        %5934 = vmatprep.subr.mxu0 0.0
        %5935 = vmatpush1.msra.mxu0 0.0
        %5936 = vmatprep.subr.mxu0 0.0
        %5937 = vmatpush1.msra.mxu0 0.0
        %5938 = vmatprep.subr.mxu0 0.0
        %5939 = vmatpush1.msra.mxu0 0.0
        %5940 = vmatprep.subr.mxu0 0.0
        %5941 = vmatpush1.msra.mxu0 0.0
        %5942 = vmatprep.subr.mxu0 0.0
        %5943 = vmatpush1.msra.mxu0 0.0
        %5944 = vmatprep.subr.mxu0 0.0
        %5945 = vmatpush1.msra.mxu0 0.0
        %5946 = vmatprep.subr.mxu0 0.0
        %5947 = vmatpush1.msra.mxu0 0.0
        %5948 = vmatprep.subr.mxu0 0.0
        %5949 = vmatpush1.msra.mxu0 0.0
        %5950 = vmatprep.subr.mxu0 0.0
        %5951 = vmatpush1.msra.mxu0 0.0
        %5952 = vmatprep.subr.mxu0 0.0
        %5953 = vmatpush1.msra.mxu0 0.0
        %5954 = vmatprep.subr.mxu0 0.0
        %5955 = vmatpush1.msra.mxu0 0.0
        %5956 = vmatprep.subr.mxu0 0.0
        %5957 = vmatpush1.msra.mxu0 0.0
        %5958 = vmatprep.subr.mxu0 0.0
        %5959 = vmatpush1.msra.mxu0 0.0
        %5960 = vmatprep.subr.mxu0 0.0
        %5961 = vmatpush1.msra.mxu0 0.0
        %5962 = vmatprep.mubr.f32.mxu0 0.0
        %5963 = vmatmul.mubr.f32.gmra.mrb[0].mxu0 %v5896
        %v5964 = vpop.f32.mrb[0].mxu0
        %v5965 = vadd.f32 1e-06, %v5964
        %v5966 = vpop.f32.mrb[0].mxu0
        %5967 = vdwg.mxu0
        %v5968 = vrsqrt.pop %v5965
        %v5969 = vlaneseq
        %v5970 = vshrl.u32 %v5969, 7
        %v5971 = vsub.s32 0, %v5970
        %v5972 = vrot.slane %v5968, %v5971
        %v5973 = vmul.f32 %v5811, %v5972
        %v5974 = vld [vmem:[%s65] sm:$0x1]
        %v5976 = vlaneseq
        %v5977 = vshrl.u32 %v5976, 7
        %v5978 = vsub.s32 0, %v5977
        %v5979 = vrot.slane %v5974, %v5978
        %v5981 = vmul.f32 %v5973, %v5979
        %v5982 = vld [vmem:[#allocation45] sm:$0x1]
        %v5984 = vlaneseq
        %v5985 = vshrl.u32 %v5984, 7
        %v5986 = vsub.s32 0, %v5985
        %v5987 = vrot.slane %v5982, %v5986
        %v5989 = vadd.f32 %v5981, %v5987
        %v5990 = vxor.u32 %v5989, 2147483648
        %v5991 = vmul.f32 %v5990, 1.442695
        %v5992 = vpow.pop %v5991
        %v5993 = vadd.f32 %v5992, 1.0
        %v5994 = vrcp.pop %v5993
        %v5995 = vmul.f32 1.0, %v5994
        %v5996 = vmul.f32 %v5989, %v5995
        %5997 = vst.msk [vmem:[#allocation2] sm:$0xff] %vm1848, 0.0
        %5998 = vst.msk [vmem:[#allocation2 + $0x8] sm:$0xff] %vm1848, 0.0
        %5999 = vst.msk [vmem:[#allocation2 + $0x10] sm:$0x3] %vm1851, 0.0
        %6000 = vst.msk [vmem:[#allocation2 + $0x1] sm:$0xff] %vm1848, %v5996
        %v6001 = vld [vmem:[#allocation2] sm:$0xff]
        %v6002 = vld [vmem:[%s53] sm:$0xff]
        %v6003 = vld [vmem:[%s53 + $0x8] sm:$0xff]
        %v6004 = vld [vmem:[%s53 + $0x10] sm:$0xff]
        %v6005 = vld [vmem:[%s53 + $0x18] sm:$0xff]
        %s6006 = scalar_lea.vmem %s53, 32
        %v6007 = vld [vmem:[%s6006] sm:$0xff]
        %v6008 = vld [vmem:[%s6006 + $0x8] sm:$0xff]
        %v6009 = vld [vmem:[%s6006 + $0x10] sm:$0xff]
        %v6010 = vld [vmem:[%s6006 + $0x18] sm:$0xff]
        %v6012 = vsel %vm1848, %v5996, 0
        %6014 = vmatprep.subr.mxu0 0.0
        %6015 = vmatpush1.msra.mxu0 %v6007
        %6016 = vmatprep.subr.mxu0 0.0
        %6017 = vmatpush1.msra.mxu0 %v6008
        %6018 = vmatprep.subr.mxu0 0.0
        %6019 = vmatpush1.msra.mxu0 %v6009
        %6020 = vmatprep.subr.mxu0 0.0
        %6021 = vmatpush1.msra.mxu0 %v6010
        %6022 = vmatprep.subr.mxu0 0.0
        %6023 = vmatpush1.msra.mxu0 0.0
        %6024 = vmatprep.subr.mxu0 0.0
        %6025 = vmatpush1.msra.mxu0 0.0
        %6026 = vmatprep.subr.mxu0 0.0
        %6027 = vmatpush1.msra.mxu0 0.0
        %6028 = vmatprep.subr.mxu0 0.0
        %6029 = vmatpush1.msra.mxu0 0.0
        %6030 = vmatprep.subr.mxu0 0.0
        %6031 = vmatpush1.msra.mxu0 0.0
        %6032 = vmatprep.subr.mxu0 0.0
        %6033 = vmatpush1.msra.mxu0 0.0
        %6034 = vmatprep.subr.mxu0 0.0
        %6035 = vmatpush1.msra.mxu0 0.0
        %6036 = vmatprep.subr.mxu0 0.0
        %6037 = vmatpush1.msra.mxu0 0.0
        %6038 = vmatprep.subr.mxu0 0.0
        %6039 = vmatpush1.msra.mxu0 0.0
        %6040 = vmatprep.subr.mxu0 0.0
        %6041 = vmatpush1.msra.mxu0 0.0
        %6042 = vmatprep.subr.mxu0 0.0
        %6043 = vmatpush1.msra.mxu0 0.0
        %6044 = vmatprep.subr.mxu0 0.0
        %6045 = vmatpush1.msra.mxu0 0.0
        %6046 = vmatprep.subr.mxu0 0.0
        %6047 = vmatpush1.msra.mxu0 0.0
        %6048 = vmatprep.subr.mxu0 0.0
        %6049 = vmatpush1.msra.mxu0 0.0
        %6050 = vmatprep.subr.mxu0 0.0
        %6051 = vmatpush1.msra.mxu0 0.0
        %6052 = vmatprep.subr.mxu0 0.0
        %6053 = vmatpush1.msra.mxu0 0.0
        %6054 = vmatprep.subr.mxu0 0.0
        %6055 = vmatpush1.msra.mxu0 0.0
        %6056 = vmatprep.subr.mxu0 0.0
        %6057 = vmatpush1.msra.mxu0 0.0
        %6058 = vmatprep.subr.mxu0 0.0
        %6059 = vmatpush1.msra.mxu0 0.0
        %6060 = vmatprep.subr.mxu0 0.0
        %6061 = vmatpush1.msra.mxu0 0.0
        %6062 = vmatprep.subr.mxu0 0.0
        %6063 = vmatpush1.msra.mxu0 0.0
        %6064 = vmatprep.subr.mxu0 0.0
        %6065 = vmatpush1.msra.mxu0 0.0
        %6066 = vmatprep.subr.mxu0 0.0
        %6067 = vmatpush1.msra.mxu0 0.0
        %6068 = vmatprep.subr.mxu0 0.0
        %6069 = vmatpush1.msra.mxu0 0.0
        %6070 = vmatprep.subr.mxu0 0.0
        %6071 = vmatpush1.msra.mxu0 0.0
        %6072 = vmatprep.subr.mxu0 0.0
        %6073 = vmatpush1.msra.mxu0 0.0
        %6074 = vmatprep.subr.mxu0 0.0
        %6075 = vmatpush1.msra.mxu0 0.0
        %6076 = vmatprep.subr.mxu0 0.0
        %6077 = vmatpush1.msra.mxu0 0.0
        %6078 = vmatprep.mubr.f32.mxu0 0.0
        %6079 = vmatmul.mubr.f32.gmra.mrb[0].mxu0 %v6012
        %v6080 = vpop.f32.mrb[0].mxu0
        %v6081 = vadd.f32 0.0, %v6080
        %v6082 = vpop.f32.mrb[0].mxu0
        %6083 = vdwg.mxu0
        %v6085 = vsel %vm1848, %v6001, 0
        %6087 = vmatprep.subr.mxu0 0.0
        %6088 = vmatpush1.msra.mxu0 %v6002
        %6089 = vmatprep.subr.mxu0 0.0
        %6090 = vmatpush1.msra.mxu0 %v6003
        %6091 = vmatprep.subr.mxu0 0.0
        %6092 = vmatpush1.msra.mxu0 %v6004
        %6093 = vmatprep.subr.mxu0 0.0
        %6094 = vmatpush1.msra.mxu0 %v6005
        %6095 = vmatprep.subr.mxu0 0.0
        %6096 = vmatpush1.msra.mxu0 0.0
        %6097 = vmatprep.subr.mxu0 0.0
        %6098 = vmatpush1.msra.mxu0 0.0
        %6099 = vmatprep.subr.mxu0 0.0
        %6100 = vmatpush1.msra.mxu0 0.0
        %6101 = vmatprep.subr.mxu0 0.0
        %6102 = vmatpush1.msra.mxu0 0.0
        %6103 = vmatprep.subr.mxu0 0.0
        %6104 = vmatpush1.msra.mxu0 0.0
        %6105 = vmatprep.subr.mxu0 0.0
        %6106 = vmatpush1.msra.mxu0 0.0
        %6107 = vmatprep.subr.mxu0 0.0
        %6108 = vmatpush1.msra.mxu0 0.0
        %6109 = vmatprep.subr.mxu0 0.0
        %6110 = vmatpush1.msra.mxu0 0.0
        %6111 = vmatprep.subr.mxu0 0.0
        %6112 = vmatpush1.msra.mxu0 0.0
        %6113 = vmatprep.subr.mxu0 0.0
        %6114 = vmatpush1.msra.mxu0 0.0
        %6115 = vmatprep.subr.mxu0 0.0
        %6116 = vmatpush1.msra.mxu0 0.0
        %6117 = vmatprep.subr.mxu0 0.0
        %6118 = vmatpush1.msra.mxu0 0.0
        %6119 = vmatprep.subr.mxu0 0.0
        %6120 = vmatpush1.msra.mxu0 0.0
        %6121 = vmatprep.subr.mxu0 0.0
        %6122 = vmatpush1.msra.mxu0 0.0
        %6123 = vmatprep.subr.mxu0 0.0
        %6124 = vmatpush1.msra.mxu0 0.0
        %6125 = vmatprep.subr.mxu0 0.0
        %6126 = vmatpush1.msra.mxu0 0.0
        %6127 = vmatprep.subr.mxu0 0.0
        %6128 = vmatpush1.msra.mxu0 0.0
        %6129 = vmatprep.subr.mxu0 0.0
        %6130 = vmatpush1.msra.mxu0 0.0
        %6131 = vmatprep.subr.mxu0 0.0
        %6132 = vmatpush1.msra.mxu0 0.0
        %6133 = vmatprep.subr.mxu0 0.0
        %6134 = vmatpush1.msra.mxu0 0.0
        %6135 = vmatprep.subr.mxu0 0.0
        %6136 = vmatpush1.msra.mxu0 0.0
        %6137 = vmatprep.subr.mxu0 0.0
        %6138 = vmatpush1.msra.mxu0 0.0
        %6139 = vmatprep.subr.mxu0 0.0
        %6140 = vmatpush1.msra.mxu0 0.0
        %6141 = vmatprep.subr.mxu0 0.0
        %6142 = vmatpush1.msra.mxu0 0.0
        %6143 = vmatprep.subr.mxu0 0.0
        %6144 = vmatpush1.msra.mxu0 0.0
        %6145 = vmatprep.subr.mxu0 0.0
        %6146 = vmatpush1.msra.mxu0 0.0
        %6147 = vmatprep.subr.mxu0 0.0
        %6148 = vmatpush1.msra.mxu0 0.0
        %6149 = vmatprep.subr.mxu0 0.0
        %6150 = vmatpush1.msra.mxu0 0.0
        %6151 = vmatprep.mubr.f32.mxu0 0.0
        %6152 = vmatmul.mubr.f32.gmra.mrb[0].mxu0 %v6085
        %v6153 = vpop.f32.mrb[0].mxu0
        %v6154 = vadd.f32 %v6081, %v6153
        %v6155 = vpop.f32.mrb[0].mxu0
        %6156 = vdwg.mxu0
        %v6157 = vld [vmem:[#allocation2 + $0x2] sm:$0xff]
        %s6158 = scalar_lea.vmem %s53, 64
        %v6159 = vld [vmem:[%s6158] sm:$0xff]
        %v6160 = vld [vmem:[%s6158 + $0x8] sm:$0xff]
        %v6161 = vld [vmem:[%s6158 + $0x10] sm:$0xff]
        %v6162 = vld [vmem:[%s6158 + $0x18] sm:$0xff]
        %v6164 = vsel %vm1848, %v6157, 0
        %6166 = vmatprep.subr.mxu0 0.0
        %6167 = vmatpush1.msra.mxu0 %v6159
        %6168 = vmatprep.subr.mxu0 0.0
        %6169 = vmatpush1.msra.mxu0 %v6160
        %6170 = vmatprep.subr.mxu0 0.0
        %6171 = vmatpush1.msra.mxu0 %v6161
        %6172 = vmatprep.subr.mxu0 0.0
        %6173 = vmatpush1.msra.mxu0 %v6162
        %6174 = vmatprep.subr.mxu0 0.0
        %6175 = vmatpush1.msra.mxu0 0.0
        %6176 = vmatprep.subr.mxu0 0.0
        %6177 = vmatpush1.msra.mxu0 0.0
        %6178 = vmatprep.subr.mxu0 0.0
        %6179 = vmatpush1.msra.mxu0 0.0
        %6180 = vmatprep.subr.mxu0 0.0
        %6181 = vmatpush1.msra.mxu0 0.0
        %6182 = vmatprep.subr.mxu0 0.0
        %6183 = vmatpush1.msra.mxu0 0.0
        %6184 = vmatprep.subr.mxu0 0.0
        %6185 = vmatpush1.msra.mxu0 0.0
        %6186 = vmatprep.subr.mxu0 0.0
        %6187 = vmatpush1.msra.mxu0 0.0
        %6188 = vmatprep.subr.mxu0 0.0
        %6189 = vmatpush1.msra.mxu0 0.0
        %6190 = vmatprep.subr.mxu0 0.0
        %6191 = vmatpush1.msra.mxu0 0.0
        %6192 = vmatprep.subr.mxu0 0.0
        %6193 = vmatpush1.msra.mxu0 0.0
        %6194 = vmatprep.subr.mxu0 0.0
        %6195 = vmatpush1.msra.mxu0 0.0
        %6196 = vmatprep.subr.mxu0 0.0
        %6197 = vmatpush1.msra.mxu0 0.0
        %6198 = vmatprep.subr.mxu0 0.0
        %6199 = vmatpush1.msra.mxu0 0.0
        %6200 = vmatprep.subr.mxu0 0.0
        %6201 = vmatpush1.msra.mxu0 0.0
        %6202 = vmatprep.subr.mxu0 0.0
        %6203 = vmatpush1.msra.mxu0 0.0
        %6204 = vmatprep.subr.mxu0 0.0
        %6205 = vmatpush1.msra.mxu0 0.0
        %6206 = vmatprep.subr.mxu0 0.0
        %6207 = vmatpush1.msra.mxu0 0.0
        %6208 = vmatprep.subr.mxu0 0.0
        %6209 = vmatpush1.msra.mxu0 0.0
        %6210 = vmatprep.subr.mxu0 0.0
        %6211 = vmatpush1.msra.mxu0 0.0
        %6212 = vmatprep.subr.mxu0 0.0
        %6213 = vmatpush1.msra.mxu0 0.0
        %6214 = vmatprep.subr.mxu0 0.0
        %6215 = vmatpush1.msra.mxu0 0.0
        %6216 = vmatprep.subr.mxu0 0.0
        %6217 = vmatpush1.msra.mxu0 0.0
        %6218 = vmatprep.subr.mxu0 0.0
        %6219 = vmatpush1.msra.mxu0 0.0
        %6220 = vmatprep.subr.mxu0 0.0
        %6221 = vmatpush1.msra.mxu0 0.0
        %6222 = vmatprep.subr.mxu0 0.0
        %6223 = vmatpush1.msra.mxu0 0.0
        %6224 = vmatprep.subr.mxu0 0.0
        %6225 = vmatpush1.msra.mxu0 0.0
        %6226 = vmatprep.subr.mxu0 0.0
        %6227 = vmatpush1.msra.mxu0 0.0
        %6228 = vmatprep.subr.mxu0 0.0
        %6229 = vmatpush1.msra.mxu0 0.0
        %6230 = vmatprep.mubr.f32.mxu0 0.0
        %6231 = vmatmul.mubr.f32.gmra.mrb[0].mxu0 %v6164
        %v6232 = vpop.f32.mrb[0].mxu0
        %v6233 = vadd.f32 0.0, %v6232
        %v6234 = vpop.f32.mrb[0].mxu0
        %6235 = vdwg.mxu0
        %v6236 = vadd.f32 %v6154, %v6233
        %v6237 = vld [vmem:[#allocation38] sm:$0x1]
        %v6239 = vlaneseq
        %v6240 = vshrl.u32 %v6239, 7
        %v6241 = vsub.s32 0, %v6240
        %v6242 = vrot.slane %v6237, %v6241
        %v6244 = vadd.f32 %v6236, %v6242
        %v6245 = vld [vmem:[#allocation41] sm:$0xff]
        %v6246 = vld [vmem:[#allocation41 + $0x8] sm:$0xff]
        %v6247 = vld [vmem:[#allocation39] sm:$0x1]
        %v6249 = vlaneseq
        %v6250 = vshrl.u32 %v6249, 7
        %v6251 = vsub.s32 0, %v6250
        %v6252 = vrot.slane %v6247, %v6251
        %v6255 = vsel %vm2155, %v5030, 0
        %6257 = vmatprep.subr.mxu0 0.0
        %6258 = vmatpush1.msra.mxu0 %v6245
        %6259 = vmatprep.subr.mxu0 0.0
        %6260 = vmatpush1.msra.mxu0 %v6246
        %6261 = vmatprep.subr.mxu0 0.0
        %6262 = vmatpush1.msra.mxu0 0.0
        %6263 = vmatprep.subr.mxu0 0.0
        %6264 = vmatpush1.msra.mxu0 0.0
        %6265 = vmatprep.subr.mxu0 0.0
        %6266 = vmatpush1.msra.mxu0 0.0
        %6267 = vmatprep.subr.mxu0 0.0
        %6268 = vmatpush1.msra.mxu0 0.0
        %6269 = vmatprep.subr.mxu0 0.0
        %6270 = vmatpush1.msra.mxu0 0.0
        %6271 = vmatprep.subr.mxu0 0.0
        %6272 = vmatpush1.msra.mxu0 0.0
        %6273 = vmatprep.subr.mxu0 0.0
        %6274 = vmatpush1.msra.mxu0 0.0
        %6275 = vmatprep.subr.mxu0 0.0
        %6276 = vmatpush1.msra.mxu0 0.0
        %6277 = vmatprep.subr.mxu0 0.0
        %6278 = vmatpush1.msra.mxu0 0.0
        %6279 = vmatprep.subr.mxu0 0.0
        %6280 = vmatpush1.msra.mxu0 0.0
        %6281 = vmatprep.subr.mxu0 0.0
        %6282 = vmatpush1.msra.mxu0 0.0
        %6283 = vmatprep.subr.mxu0 0.0
        %6284 = vmatpush1.msra.mxu0 0.0
        %6285 = vmatprep.subr.mxu0 0.0
        %6286 = vmatpush1.msra.mxu0 0.0
        %6287 = vmatprep.subr.mxu0 0.0
        %6288 = vmatpush1.msra.mxu0 0.0
        %6289 = vmatprep.subr.mxu0 0.0
        %6290 = vmatpush1.msra.mxu0 0.0
        %6291 = vmatprep.subr.mxu0 0.0
        %6292 = vmatpush1.msra.mxu0 0.0
        %6293 = vmatprep.subr.mxu0 0.0
        %6294 = vmatpush1.msra.mxu0 0.0
        %6295 = vmatprep.subr.mxu0 0.0
        %6296 = vmatpush1.msra.mxu0 0.0
        %6297 = vmatprep.subr.mxu0 0.0
        %6298 = vmatpush1.msra.mxu0 0.0
        %6299 = vmatprep.subr.mxu0 0.0
        %6300 = vmatpush1.msra.mxu0 0.0
        %6301 = vmatprep.subr.mxu0 0.0
        %6302 = vmatpush1.msra.mxu0 0.0
        %6303 = vmatprep.subr.mxu0 0.0
        %6304 = vmatpush1.msra.mxu0 0.0
        %6305 = vmatprep.subr.mxu0 0.0
        %6306 = vmatpush1.msra.mxu0 0.0
        %6307 = vmatprep.subr.mxu0 0.0
        %6308 = vmatpush1.msra.mxu0 0.0
        %6309 = vmatprep.subr.mxu0 0.0
        %6310 = vmatpush1.msra.mxu0 0.0
        %6311 = vmatprep.subr.mxu0 0.0
        %6312 = vmatpush1.msra.mxu0 0.0
        %6313 = vmatprep.subr.mxu0 0.0
        %6314 = vmatpush1.msra.mxu0 0.0
        %6315 = vmatprep.subr.mxu0 0.0
        %6316 = vmatpush1.msra.mxu0 0.0
        %6317 = vmatprep.subr.mxu0 0.0
        %6318 = vmatpush1.msra.mxu0 0.0
        %6319 = vmatprep.subr.mxu0 0.0
        %6320 = vmatpush1.msra.mxu0 0.0
        %6321 = vmatprep.mubr.f32.mxu0 0.0
        %6322 = vmatmul.mubr.f32.gmra.mrb[0].mxu0 %v6255
        %v6323 = vpop.f32.mrb[0].mxu0
        %v6324 = vadd.f32 %v6252, %v6323
        %v6325 = vpop.f32.mrb[0].mxu0
        %6326 = vdwg.mxu0
        %v6327 = vadd.f32 %v6324, %v6244
        %v6328 = vsel %vm1848, %v6327, 0.0
        %v6329 = vrot.slane %v6328, 4
        %v6330 = vadd.f32 %v6328, %v6329
        %v6331 = vrot.slane %v6330, 2
        %v6332 = vadd.f32 %v6330, %v6331
        %v6333 = vrot.slane %v6332, 1
        %v6334 = vadd.f32 %v6332, %v6333
        %v6336 = vsel %vm1848, %v6334, 0
        %6338 = vmatprep.subr.mxu0 0.0
        %6339 = vmatpush1.msra.mxu0 %v5639
        %6340 = vmatprep.subr.mxu0 0.0
        %6341 = vmatpush1.msra.mxu0 %v5640
        %6342 = vmatprep.subr.mxu0 0.0
        %6343 = vmatpush1.msra.mxu0 %v5641
        %6344 = vmatprep.subr.mxu0 0.0
        %6345 = vmatpush1.msra.mxu0 %v5642
        %6346 = vmatprep.subr.mxu0 0.0
        %6347 = vmatpush1.msra.mxu0 0.0
        %6348 = vmatprep.subr.mxu0 0.0
        %6349 = vmatpush1.msra.mxu0 0.0
        %6350 = vmatprep.subr.mxu0 0.0
        %6351 = vmatpush1.msra.mxu0 0.0
        %6352 = vmatprep.subr.mxu0 0.0
        %6353 = vmatpush1.msra.mxu0 0.0
        %6354 = vmatprep.subr.mxu0 0.0
        %6355 = vmatpush1.msra.mxu0 0.0
        %6356 = vmatprep.subr.mxu0 0.0
        %6357 = vmatpush1.msra.mxu0 0.0
        %6358 = vmatprep.subr.mxu0 0.0
        %6359 = vmatpush1.msra.mxu0 0.0
        %6360 = vmatprep.subr.mxu0 0.0
        %6361 = vmatpush1.msra.mxu0 0.0
        %6362 = vmatprep.subr.mxu0 0.0
        %6363 = vmatpush1.msra.mxu0 0.0
        %6364 = vmatprep.subr.mxu0 0.0
        %6365 = vmatpush1.msra.mxu0 0.0
        %6366 = vmatprep.subr.mxu0 0.0
        %6367 = vmatpush1.msra.mxu0 0.0
        %6368 = vmatprep.subr.mxu0 0.0
        %6369 = vmatpush1.msra.mxu0 0.0
        %6370 = vmatprep.subr.mxu0 0.0
        %6371 = vmatpush1.msra.mxu0 0.0
        %6372 = vmatprep.subr.mxu0 0.0
        %6373 = vmatpush1.msra.mxu0 0.0
        %6374 = vmatprep.subr.mxu0 0.0
        %6375 = vmatpush1.msra.mxu0 0.0
        %6376 = vmatprep.subr.mxu0 0.0
        %6377 = vmatpush1.msra.mxu0 0.0
        %6378 = vmatprep.subr.mxu0 0.0
        %6379 = vmatpush1.msra.mxu0 0.0
        %6380 = vmatprep.subr.mxu0 0.0
        %6381 = vmatpush1.msra.mxu0 0.0
        %6382 = vmatprep.subr.mxu0 0.0
        %6383 = vmatpush1.msra.mxu0 0.0
        %6384 = vmatprep.subr.mxu0 0.0
        %6385 = vmatpush1.msra.mxu0 0.0
        %6386 = vmatprep.subr.mxu0 0.0
        %6387 = vmatpush1.msra.mxu0 0.0
        %6388 = vmatprep.subr.mxu0 0.0
        %6389 = vmatpush1.msra.mxu0 0.0
        %6390 = vmatprep.subr.mxu0 0.0
        %6391 = vmatpush1.msra.mxu0 0.0
        %6392 = vmatprep.subr.mxu0 0.0
        %6393 = vmatpush1.msra.mxu0 0.0
        %6394 = vmatprep.subr.mxu0 0.0
        %6395 = vmatpush1.msra.mxu0 0.0
        %6396 = vmatprep.subr.mxu0 0.0
        %6397 = vmatpush1.msra.mxu0 0.0
        %6398 = vmatprep.subr.mxu0 0.0
        %6399 = vmatpush1.msra.mxu0 0.0
        %6400 = vmatprep.subr.mxu0 0.0
        %6401 = vmatpush1.msra.mxu0 0.0
        %6402 = vmatprep.mubr.f32.mxu0 0.0
        %6403 = vmatmul.mubr.f32.gmra.mrb[0].mxu0 %v6336
        %v6404 = vpop.f32.mrb[0].mxu0
        %v6405 = vadd.f32 0.0, %v6404
        %v6406 = vpop.f32.mrb[0].mxu0
        %6407 = vdwg.mxu0
        %v6408 = vmul.f32 %v6405, 0.015625
        %v6410 = vsel %vm1853, %v6408, 0
        %6412 = vmatprep.subr.mxu0 0.0
        %6413 = vmatpush1.msra.mxu0 %v5735
        %6414 = vmatprep.subr.mxu0 0.0
        %6415 = vmatpush1.msra.mxu0 0.0
        %6416 = vmatprep.subr.mxu0 0.0
        %6417 = vmatpush1.msra.mxu0 0.0
        %6418 = vmatprep.subr.mxu0 0.0
        %6419 = vmatpush1.msra.mxu0 0.0
        %6420 = vmatprep.subr.mxu0 0.0
        %6421 = vmatpush1.msra.mxu0 0.0
        %6422 = vmatprep.subr.mxu0 0.0
        %6423 = vmatpush1.msra.mxu0 0.0
        %6424 = vmatprep.subr.mxu0 0.0
        %6425 = vmatpush1.msra.mxu0 0.0
        %6426 = vmatprep.subr.mxu0 0.0
        %6427 = vmatpush1.msra.mxu0 0.0
        %6428 = vmatprep.subr.mxu0 0.0
        %6429 = vmatpush1.msra.mxu0 0.0
        %6430 = vmatprep.subr.mxu0 0.0
        %6431 = vmatpush1.msra.mxu0 0.0
        %6432 = vmatprep.subr.mxu0 0.0
        %6433 = vmatpush1.msra.mxu0 0.0
        %6434 = vmatprep.subr.mxu0 0.0
        %6435 = vmatpush1.msra.mxu0 0.0
        %6436 = vmatprep.subr.mxu0 0.0
        %6437 = vmatpush1.msra.mxu0 0.0
        %6438 = vmatprep.subr.mxu0 0.0
        %6439 = vmatpush1.msra.mxu0 0.0
        %6440 = vmatprep.subr.mxu0 0.0
        %6441 = vmatpush1.msra.mxu0 0.0
        %6442 = vmatprep.subr.mxu0 0.0
        %6443 = vmatpush1.msra.mxu0 0.0
        %6444 = vmatprep.subr.mxu0 0.0
        %6445 = vmatpush1.msra.mxu0 0.0
        %6446 = vmatprep.subr.mxu0 0.0
        %6447 = vmatpush1.msra.mxu0 0.0
        %6448 = vmatprep.subr.mxu0 0.0
        %6449 = vmatpush1.msra.mxu0 0.0
        %6450 = vmatprep.subr.mxu0 0.0
        %6451 = vmatpush1.msra.mxu0 0.0
        %6452 = vmatprep.subr.mxu0 0.0
        %6453 = vmatpush1.msra.mxu0 0.0
        %6454 = vmatprep.subr.mxu0 0.0
        %6455 = vmatpush1.msra.mxu0 0.0
        %6456 = vmatprep.subr.mxu0 0.0
        %6457 = vmatpush1.msra.mxu0 0.0
        %6458 = vmatprep.subr.mxu0 0.0
        %6459 = vmatpush1.msra.mxu0 0.0
        %6460 = vmatprep.subr.mxu0 0.0
        %6461 = vmatpush1.msra.mxu0 0.0
        %6462 = vmatprep.subr.mxu0 0.0
        %6463 = vmatpush1.msra.mxu0 0.0
        %6464 = vmatprep.subr.mxu0 0.0
        %6465 = vmatpush1.msra.mxu0 0.0
        %6466 = vmatprep.subr.mxu0 0.0
        %6467 = vmatpush1.msra.mxu0 0.0
        %6468 = vmatprep.subr.mxu0 0.0
        %6469 = vmatpush1.msra.mxu0 0.0
        %6470 = vmatprep.subr.mxu0 0.0
        %6471 = vmatpush1.msra.mxu0 0.0
        %6472 = vmatprep.subr.mxu0 0.0
        %6473 = vmatpush1.msra.mxu0 0.0
        %6474 = vmatprep.subr.mxu0 0.0
        %6475 = vmatpush1.msra.mxu0 0.0
        %6476 = vmatprep.mubr.f32.mxu0 0.0
        %6477 = vmatmul.mubr.f32.gmra.mrb[0].mxu0 %v6410
        %v6478 = vpop.f32.mrb[0].mxu0
        %v6479 = vadd.f32 0.0, %v6478
        %v6480 = vpop.f32.mrb[0].mxu0
        %6481 = vdwg.mxu0
        %v6482 = vlaneseq
        %v6483 = vshrl.u32 %v6482, 7
        %v6484 = vsub.s32 0, %v6483
        %v6485 = vrot.slane %v6479, %v6484
        %v6486 = vsub.f32 %v6327, %v6485
        %v6487 = vmul.f32 %v6486, %v6486
        %v6488 = vsel %vm1848, %v6487, 0.0
        %v6489 = vrot.slane %v6488, 4
        %v6490 = vadd.f32 %v6488, %v6489
        %v6491 = vrot.slane %v6490, 2
        %v6492 = vadd.f32 %v6490, %v6491
        %v6493 = vrot.slane %v6492, 1
        %v6494 = vadd.f32 %v6492, %v6493
        %v6496 = vsel %vm1848, %v6494, 0
        %6498 = vmatprep.subr.mxu0 0.0
        %6499 = vmatpush1.msra.mxu0 %v5639
        %6500 = vmatprep.subr.mxu0 0.0
        %6501 = vmatpush1.msra.mxu0 %v5640
        %6502 = vmatprep.subr.mxu0 0.0
        %6503 = vmatpush1.msra.mxu0 %v5641
        %6504 = vmatprep.subr.mxu0 0.0
        %6505 = vmatpush1.msra.mxu0 %v5642
        %6506 = vmatprep.subr.mxu0 0.0
        %6507 = vmatpush1.msra.mxu0 0.0
        %6508 = vmatprep.subr.mxu0 0.0
        %6509 = vmatpush1.msra.mxu0 0.0
        %6510 = vmatprep.subr.mxu0 0.0
        %6511 = vmatpush1.msra.mxu0 0.0
        %6512 = vmatprep.subr.mxu0 0.0
        %6513 = vmatpush1.msra.mxu0 0.0
        %6514 = vmatprep.subr.mxu0 0.0
        %6515 = vmatpush1.msra.mxu0 0.0
        %6516 = vmatprep.subr.mxu0 0.0
        %6517 = vmatpush1.msra.mxu0 0.0
        %6518 = vmatprep.subr.mxu0 0.0
        %6519 = vmatpush1.msra.mxu0 0.0
        %6520 = vmatprep.subr.mxu0 0.0
        %6521 = vmatpush1.msra.mxu0 0.0
        %6522 = vmatprep.subr.mxu0 0.0
        %6523 = vmatpush1.msra.mxu0 0.0
        %6524 = vmatprep.subr.mxu0 0.0
        %6525 = vmatpush1.msra.mxu0 0.0
        %6526 = vmatprep.subr.mxu0 0.0
        %6527 = vmatpush1.msra.mxu0 0.0
        %6528 = vmatprep.subr.mxu0 0.0
        %6529 = vmatpush1.msra.mxu0 0.0
        %6530 = vmatprep.subr.mxu0 0.0
        %6531 = vmatpush1.msra.mxu0 0.0
        %6532 = vmatprep.subr.mxu0 0.0
        %6533 = vmatpush1.msra.mxu0 0.0
        %6534 = vmatprep.subr.mxu0 0.0
        %6535 = vmatpush1.msra.mxu0 0.0
        %6536 = vmatprep.subr.mxu0 0.0
        %6537 = vmatpush1.msra.mxu0 0.0
        %6538 = vmatprep.subr.mxu0 0.0
        %6539 = vmatpush1.msra.mxu0 0.0
        %6540 = vmatprep.subr.mxu0 0.0
        %6541 = vmatpush1.msra.mxu0 0.0
        %6542 = vmatprep.subr.mxu0 0.0
        %6543 = vmatpush1.msra.mxu0 0.0
        %6544 = vmatprep.subr.mxu0 0.0
        %6545 = vmatpush1.msra.mxu0 0.0
        %6546 = vmatprep.subr.mxu0 0.0
        %6547 = vmatpush1.msra.mxu0 0.0
        %6548 = vmatprep.subr.mxu0 0.0
        %6549 = vmatpush1.msra.mxu0 0.0
        %6550 = vmatprep.subr.mxu0 0.0
        %6551 = vmatpush1.msra.mxu0 0.0
        %6552 = vmatprep.subr.mxu0 0.0
        %6553 = vmatpush1.msra.mxu0 0.0
        %6554 = vmatprep.subr.mxu0 0.0
        %6555 = vmatpush1.msra.mxu0 0.0
        %6556 = vmatprep.subr.mxu0 0.0
        %6557 = vmatpush1.msra.mxu0 0.0
        %6558 = vmatprep.subr.mxu0 0.0
        %6559 = vmatpush1.msra.mxu0 0.0
        %6560 = vmatprep.subr.mxu0 0.0
        %6561 = vmatpush1.msra.mxu0 0.0
        %6562 = vmatprep.mubr.f32.mxu0 0.0
        %6563 = vmatmul.mubr.f32.gmra.mrb[0].mxu0 %v6496
        %v6564 = vpop.f32.mrb[0].mxu0
        %v6565 = vadd.f32 0.0, %v6564
        %v6566 = vpop.f32.mrb[0].mxu0
        %6567 = vdwg.mxu0
        %v6568 = vmul.f32 %v6565, 0.015625
        %v6569 = vmax.f32 %v6568, 0.0
        %v6571 = vsel %vm1853, %v6569, 0
        %6573 = vmatprep.subr.mxu0 0.0
        %6574 = vmatpush1.msra.mxu0 %v5735
        %6575 = vmatprep.subr.mxu0 0.0
        %6576 = vmatpush1.msra.mxu0 0.0
        %6577 = vmatprep.subr.mxu0 0.0
        %6578 = vmatpush1.msra.mxu0 0.0
        %6579 = vmatprep.subr.mxu0 0.0
        %6580 = vmatpush1.msra.mxu0 0.0
        %6581 = vmatprep.subr.mxu0 0.0
        %6582 = vmatpush1.msra.mxu0 0.0
        %6583 = vmatprep.subr.mxu0 0.0
        %6584 = vmatpush1.msra.mxu0 0.0
        %6585 = vmatprep.subr.mxu0 0.0
        %6586 = vmatpush1.msra.mxu0 0.0
        %6587 = vmatprep.subr.mxu0 0.0
        %6588 = vmatpush1.msra.mxu0 0.0
        %6589 = vmatprep.subr.mxu0 0.0
        %6590 = vmatpush1.msra.mxu0 0.0
        %6591 = vmatprep.subr.mxu0 0.0
        %6592 = vmatpush1.msra.mxu0 0.0
        %6593 = vmatprep.subr.mxu0 0.0
        %6594 = vmatpush1.msra.mxu0 0.0
        %6595 = vmatprep.subr.mxu0 0.0
        %6596 = vmatpush1.msra.mxu0 0.0
        %6597 = vmatprep.subr.mxu0 0.0
        %6598 = vmatpush1.msra.mxu0 0.0
        %6599 = vmatprep.subr.mxu0 0.0
        %6600 = vmatpush1.msra.mxu0 0.0
        %6601 = vmatprep.subr.mxu0 0.0
        %6602 = vmatpush1.msra.mxu0 0.0
        %6603 = vmatprep.subr.mxu0 0.0
        %6604 = vmatpush1.msra.mxu0 0.0
        %6605 = vmatprep.subr.mxu0 0.0
        %6606 = vmatpush1.msra.mxu0 0.0
        %6607 = vmatprep.subr.mxu0 0.0
        %6608 = vmatpush1.msra.mxu0 0.0
        %6609 = vmatprep.subr.mxu0 0.0
        %6610 = vmatpush1.msra.mxu0 0.0
        %6611 = vmatprep.subr.mxu0 0.0
        %6612 = vmatpush1.msra.mxu0 0.0
        %6613 = vmatprep.subr.mxu0 0.0
        %6614 = vmatpush1.msra.mxu0 0.0
        %6615 = vmatprep.subr.mxu0 0.0
        %6616 = vmatpush1.msra.mxu0 0.0
        %6617 = vmatprep.subr.mxu0 0.0
        %6618 = vmatpush1.msra.mxu0 0.0
        %6619 = vmatprep.subr.mxu0 0.0
        %6620 = vmatpush1.msra.mxu0 0.0
        %6621 = vmatprep.subr.mxu0 0.0
        %6622 = vmatpush1.msra.mxu0 0.0
        %6623 = vmatprep.subr.mxu0 0.0
        %6624 = vmatpush1.msra.mxu0 0.0
        %6625 = vmatprep.subr.mxu0 0.0
        %6626 = vmatpush1.msra.mxu0 0.0
        %6627 = vmatprep.subr.mxu0 0.0
        %6628 = vmatpush1.msra.mxu0 0.0
        %6629 = vmatprep.subr.mxu0 0.0
        %6630 = vmatpush1.msra.mxu0 0.0
        %6631 = vmatprep.subr.mxu0 0.0
        %6632 = vmatpush1.msra.mxu0 0.0
        %6633 = vmatprep.subr.mxu0 0.0
        %6634 = vmatpush1.msra.mxu0 0.0
        %6635 = vmatprep.subr.mxu0 0.0
        %6636 = vmatpush1.msra.mxu0 0.0
        %6637 = vmatprep.mubr.f32.mxu0 0.0
        %6638 = vmatmul.mubr.f32.gmra.mrb[0].mxu0 %v6571
        %v6639 = vpop.f32.mrb[0].mxu0
        %v6640 = vadd.f32 1e-06, %v6639
        %v6641 = vpop.f32.mrb[0].mxu0
        %6642 = vdwg.mxu0
        %v6643 = vrsqrt.pop %v6640
        %v6644 = vlaneseq
        %v6645 = vshrl.u32 %v6644, 7
        %v6646 = vsub.s32 0, %v6645
        %v6647 = vrot.slane %v6643, %v6646
        %v6648 = vmul.f32 %v6486, %v6647
        %v6649 = vld [vmem:[#allocation53] sm:$0x1]
        %v6651 = vlaneseq
        %v6652 = vshrl.u32 %v6651, 7
        %v6653 = vsub.s32 0, %v6652
        %v6654 = vrot.slane %v6649, %v6653
        %v6656 = vmul.f32 %v6648, %v6654
        %v6657 = vld [vmem:[#allocation51] sm:$0x1]
        %v6659 = vlaneseq
        %v6660 = vshrl.u32 %v6659, 7
        %v6661 = vsub.s32 0, %v6660
        %v6662 = vrot.slane %v6657, %v6661
        %v6664 = vadd.f32 %v6656, %v6662
        %v6665 = vxor.u32 %v6664, 2147483648
        %v6666 = vmul.f32 %v6665, 1.442695
        %v6667 = vpow.pop %v6666
        %v6668 = vadd.f32 %v6667, 1.0
        %v6669 = vrcp.pop %v6668
        %v6670 = vmul.f32 1.0, %v6669
        %v6671 = vmul.f32 %v6664, %v6670
        %6672 = vst.msk [vmem:[#allocation2] sm:$0xff] %vm1848, 0.0
        %6673 = vst.msk [vmem:[#allocation2 + $0x8] sm:$0xff] %vm1848, 0.0
        %6674 = vst.msk [vmem:[#allocation2 + $0x10] sm:$0x3] %vm1851, 0.0
        %6675 = vst.msk [vmem:[#allocation2 + $0x1] sm:$0xff] %vm1848, %v6671
        %v6676 = vld [vmem:[#allocation2] sm:$0xff]
        %v6677 = vld [vmem:[#allocation47] sm:$0xff]
        %v6678 = vld [vmem:[#allocation47 + $0x8] sm:$0xff]
        %v6679 = vld [vmem:[#allocation47 + $0x10] sm:$0xff]
        %v6680 = vld [vmem:[#allocation47 + $0x18] sm:$0xff]
        %s6681 = scalar_lea.vmem [#allocation47], 32
        %v6682 = vld [vmem:[%s6681] sm:$0xff]
        %v6683 = vld [vmem:[%s6681 + $0x8] sm:$0xff]
        %v6684 = vld [vmem:[%s6681 + $0x10] sm:$0xff]
        %v6685 = vld [vmem:[%s6681 + $0x18] sm:$0xff]
        %v6687 = vsel %vm1848, %v6671, 0
        %6689 = vmatprep.subr.mxu0 0.0
        %6690 = vmatpush1.msra.mxu0 %v6682
        %6691 = vmatprep.subr.mxu0 0.0
        %6692 = vmatpush1.msra.mxu0 %v6683
        %6693 = vmatprep.subr.mxu0 0.0
        %6694 = vmatpush1.msra.mxu0 %v6684
        %6695 = vmatprep.subr.mxu0 0.0
        %6696 = vmatpush1.msra.mxu0 %v6685
        %6697 = vmatprep.subr.mxu0 0.0
        %6698 = vmatpush1.msra.mxu0 0.0
        %6699 = vmatprep.subr.mxu0 0.0
        %6700 = vmatpush1.msra.mxu0 0.0
        %6701 = vmatprep.subr.mxu0 0.0
        %6702 = vmatpush1.msra.mxu0 0.0
        %6703 = vmatprep.subr.mxu0 0.0
        %6704 = vmatpush1.msra.mxu0 0.0
        %6705 = vmatprep.subr.mxu0 0.0
        %6706 = vmatpush1.msra.mxu0 0.0
        %6707 = vmatprep.subr.mxu0 0.0
        %6708 = vmatpush1.msra.mxu0 0.0
        %6709 = vmatprep.subr.mxu0 0.0
        %6710 = vmatpush1.msra.mxu0 0.0
        %6711 = vmatprep.subr.mxu0 0.0
        %6712 = vmatpush1.msra.mxu0 0.0
        %6713 = vmatprep.subr.mxu0 0.0
        %6714 = vmatpush1.msra.mxu0 0.0
        %6715 = vmatprep.subr.mxu0 0.0
        %6716 = vmatpush1.msra.mxu0 0.0
        %6717 = vmatprep.subr.mxu0 0.0
        %6718 = vmatpush1.msra.mxu0 0.0
        %6719 = vmatprep.subr.mxu0 0.0
        %6720 = vmatpush1.msra.mxu0 0.0
        %6721 = vmatprep.subr.mxu0 0.0
        %6722 = vmatpush1.msra.mxu0 0.0
        %6723 = vmatprep.subr.mxu0 0.0
        %6724 = vmatpush1.msra.mxu0 0.0
        %6725 = vmatprep.subr.mxu0 0.0
        %6726 = vmatpush1.msra.mxu0 0.0
        %6727 = vmatprep.subr.mxu0 0.0
        %6728 = vmatpush1.msra.mxu0 0.0
        %6729 = vmatprep.subr.mxu0 0.0
        %6730 = vmatpush1.msra.mxu0 0.0
        %6731 = vmatprep.subr.mxu0 0.0
        %6732 = vmatpush1.msra.mxu0 0.0
        %6733 = vmatprep.subr.mxu0 0.0
        %6734 = vmatpush1.msra.mxu0 0.0
        %6735 = vmatprep.subr.mxu0 0.0
        %6736 = vmatpush1.msra.mxu0 0.0
        %6737 = vmatprep.subr.mxu0 0.0
        %6738 = vmatpush1.msra.mxu0 0.0
        %6739 = vmatprep.subr.mxu0 0.0
        %6740 = vmatpush1.msra.mxu0 0.0
        %6741 = vmatprep.subr.mxu0 0.0
        %6742 = vmatpush1.msra.mxu0 0.0
        %6743 = vmatprep.subr.mxu0 0.0
        %6744 = vmatpush1.msra.mxu0 0.0
        %6745 = vmatprep.subr.mxu0 0.0
        %6746 = vmatpush1.msra.mxu0 0.0
        %6747 = vmatprep.subr.mxu0 0.0
        %6748 = vmatpush1.msra.mxu0 0.0
        %6749 = vmatprep.subr.mxu0 0.0
        %6750 = vmatpush1.msra.mxu0 0.0
        %6751 = vmatprep.subr.mxu0 0.0
        %6752 = vmatpush1.msra.mxu0 0.0
        %6753 = vmatprep.mubr.f32.mxu0 0.0
        %6754 = vmatmul.mubr.f32.gmra.mrb[0].mxu0 %v6687
        %v6755 = vpop.f32.mrb[0].mxu0
        %v6756 = vadd.f32 0.0, %v6755
        %v6757 = vpop.f32.mrb[0].mxu0
        %6758 = vdwg.mxu0
        %v6760 = vsel %vm1848, %v6676, 0
        %6762 = vmatprep.subr.mxu0 0.0
        %6763 = vmatpush1.msra.mxu0 %v6677
        %6764 = vmatprep.subr.mxu0 0.0
        %6765 = vmatpush1.msra.mxu0 %v6678
        %6766 = vmatprep.subr.mxu0 0.0
        %6767 = vmatpush1.msra.mxu0 %v6679
        %6768 = vmatprep.subr.mxu0 0.0
        %6769 = vmatpush1.msra.mxu0 %v6680
        %6770 = vmatprep.subr.mxu0 0.0
        %6771 = vmatpush1.msra.mxu0 0.0
        %6772 = vmatprep.subr.mxu0 0.0
        %6773 = vmatpush1.msra.mxu0 0.0
        %6774 = vmatprep.subr.mxu0 0.0
        %6775 = vmatpush1.msra.mxu0 0.0
        %6776 = vmatprep.subr.mxu0 0.0
        %6777 = vmatpush1.msra.mxu0 0.0
        %6778 = vmatprep.subr.mxu0 0.0
        %6779 = vmatpush1.msra.mxu0 0.0
        %6780 = vmatprep.subr.mxu0 0.0
        %6781 = vmatpush1.msra.mxu0 0.0
        %6782 = vmatprep.subr.mxu0 0.0
        %6783 = vmatpush1.msra.mxu0 0.0
        %6784 = vmatprep.subr.mxu0 0.0
        %6785 = vmatpush1.msra.mxu0 0.0
        %6786 = vmatprep.subr.mxu0 0.0
        %6787 = vmatpush1.msra.mxu0 0.0
        %6788 = vmatprep.subr.mxu0 0.0
        %6789 = vmatpush1.msra.mxu0 0.0
        %6790 = vmatprep.subr.mxu0 0.0
        %6791 = vmatpush1.msra.mxu0 0.0
        %6792 = vmatprep.subr.mxu0 0.0
        %6793 = vmatpush1.msra.mxu0 0.0
        %6794 = vmatprep.subr.mxu0 0.0
        %6795 = vmatpush1.msra.mxu0 0.0
        %6796 = vmatprep.subr.mxu0 0.0
        %6797 = vmatpush1.msra.mxu0 0.0
        %6798 = vmatprep.subr.mxu0 0.0
        %6799 = vmatpush1.msra.mxu0 0.0
        %6800 = vmatprep.subr.mxu0 0.0
        %6801 = vmatpush1.msra.mxu0 0.0
        %6802 = vmatprep.subr.mxu0 0.0
        %6803 = vmatpush1.msra.mxu0 0.0
        %6804 = vmatprep.subr.mxu0 0.0
        %6805 = vmatpush1.msra.mxu0 0.0
        %6806 = vmatprep.subr.mxu0 0.0
        %6807 = vmatpush1.msra.mxu0 0.0
        %6808 = vmatprep.subr.mxu0 0.0
        %6809 = vmatpush1.msra.mxu0 0.0
        %6810 = vmatprep.subr.mxu0 0.0
        %6811 = vmatpush1.msra.mxu0 0.0
        %6812 = vmatprep.subr.mxu0 0.0
        %6813 = vmatpush1.msra.mxu0 0.0
        %6814 = vmatprep.subr.mxu0 0.0
        %6815 = vmatpush1.msra.mxu0 0.0
        %6816 = vmatprep.subr.mxu0 0.0
        %6817 = vmatpush1.msra.mxu0 0.0
        %6818 = vmatprep.subr.mxu0 0.0
        %6819 = vmatpush1.msra.mxu0 0.0
        %6820 = vmatprep.subr.mxu0 0.0
        %6821 = vmatpush1.msra.mxu0 0.0
        %6822 = vmatprep.subr.mxu0 0.0
        %6823 = vmatpush1.msra.mxu0 0.0
        %6824 = vmatprep.subr.mxu0 0.0
        %6825 = vmatpush1.msra.mxu0 0.0
        %6826 = vmatprep.mubr.f32.mxu0 0.0
        %6827 = vmatmul.mubr.f32.gmra.mrb[0].mxu0 %v6760
        %v6828 = vpop.f32.mrb[0].mxu0
        %v6829 = vadd.f32 %v6756, %v6828
        %v6830 = vpop.f32.mrb[0].mxu0
        %6831 = vdwg.mxu0
        %v6832 = vld [vmem:[#allocation2 + $0x2] sm:$0xff]
        %s6833 = scalar_lea.vmem [#allocation47], 64
        %v6834 = vld [vmem:[%s6833] sm:$0xff]
        %v6835 = vld [vmem:[%s6833 + $0x8] sm:$0xff]
        %v6836 = vld [vmem:[%s6833 + $0x10] sm:$0xff]
        %v6837 = vld [vmem:[%s6833 + $0x18] sm:$0xff]
        %v6839 = vsel %vm1848, %v6832, 0
        %6841 = vmatprep.subr.mxu0 0.0
        %6842 = vmatpush1.msra.mxu0 %v6834
        %6843 = vmatprep.subr.mxu0 0.0
        %6844 = vmatpush1.msra.mxu0 %v6835
        %6845 = vmatprep.subr.mxu0 0.0
        %6846 = vmatpush1.msra.mxu0 %v6836
        %6847 = vmatprep.subr.mxu0 0.0
        %6848 = vmatpush1.msra.mxu0 %v6837
        %6849 = vmatprep.subr.mxu0 0.0
        %6850 = vmatpush1.msra.mxu0 0.0
        %6851 = vmatprep.subr.mxu0 0.0
        %6852 = vmatpush1.msra.mxu0 0.0
        %6853 = vmatprep.subr.mxu0 0.0
        %6854 = vmatpush1.msra.mxu0 0.0
        %6855 = vmatprep.subr.mxu0 0.0
        %6856 = vmatpush1.msra.mxu0 0.0
        %6857 = vmatprep.subr.mxu0 0.0
        %6858 = vmatpush1.msra.mxu0 0.0
        %6859 = vmatprep.subr.mxu0 0.0
        %6860 = vmatpush1.msra.mxu0 0.0
        %6861 = vmatprep.subr.mxu0 0.0
        %6862 = vmatpush1.msra.mxu0 0.0
        %6863 = vmatprep.subr.mxu0 0.0
        %6864 = vmatpush1.msra.mxu0 0.0
        %6865 = vmatprep.subr.mxu0 0.0
        %6866 = vmatpush1.msra.mxu0 0.0
        %6867 = vmatprep.subr.mxu0 0.0
        %6868 = vmatpush1.msra.mxu0 0.0
        %6869 = vmatprep.subr.mxu0 0.0
        %6870 = vmatpush1.msra.mxu0 0.0
        %6871 = vmatprep.subr.mxu0 0.0
        %6872 = vmatpush1.msra.mxu0 0.0
        %6873 = vmatprep.subr.mxu0 0.0
        %6874 = vmatpush1.msra.mxu0 0.0
        %6875 = vmatprep.subr.mxu0 0.0
        %6876 = vmatpush1.msra.mxu0 0.0
        %6877 = vmatprep.subr.mxu0 0.0
        %6878 = vmatpush1.msra.mxu0 0.0
        %6879 = vmatprep.subr.mxu0 0.0
        %6880 = vmatpush1.msra.mxu0 0.0
        %6881 = vmatprep.subr.mxu0 0.0
        %6882 = vmatpush1.msra.mxu0 0.0
        %6883 = vmatprep.subr.mxu0 0.0
        %6884 = vmatpush1.msra.mxu0 0.0
        %6885 = vmatprep.subr.mxu0 0.0
        %6886 = vmatpush1.msra.mxu0 0.0
        %6887 = vmatprep.subr.mxu0 0.0
        %6888 = vmatpush1.msra.mxu0 0.0
        %6889 = vmatprep.subr.mxu0 0.0
        %6890 = vmatpush1.msra.mxu0 0.0
        %6891 = vmatprep.subr.mxu0 0.0
        %6892 = vmatpush1.msra.mxu0 0.0
        %6893 = vmatprep.subr.mxu0 0.0
        %6894 = vmatpush1.msra.mxu0 0.0
        %6895 = vmatprep.subr.mxu0 0.0
        %6896 = vmatpush1.msra.mxu0 0.0
        %6897 = vmatprep.subr.mxu0 0.0
        %6898 = vmatpush1.msra.mxu0 0.0
        %6899 = vmatprep.subr.mxu0 0.0
        %6900 = vmatpush1.msra.mxu0 0.0
        %6901 = vmatprep.subr.mxu0 0.0
        %6902 = vmatpush1.msra.mxu0 0.0
        %6903 = vmatprep.subr.mxu0 0.0
        %6904 = vmatpush1.msra.mxu0 0.0
        %6905 = vmatprep.mubr.f32.mxu0 0.0
        %6906 = vmatmul.mubr.f32.gmra.mrb[0].mxu0 %v6839
        %v6907 = vpop.f32.mrb[0].mxu0
        %v6908 = vadd.f32 0.0, %v6907
        %v6909 = vpop.f32.mrb[0].mxu0
        %6910 = vdwg.mxu0
        %v6911 = vadd.f32 %v6829, %v6908
        %v6912 = vld [vmem:[%s67] sm:$0x1]
        %v6914 = vlaneseq
        %v6915 = vshrl.u32 %v6914, 7
        %v6916 = vsub.s32 0, %v6915
        %v6917 = vrot.slane %v6912, %v6916
        %v6919 = vadd.f32 %v6911, %v6917
        %v6920 = vsel %vm1848, %v6919, 0.0
        %v6921 = vrot.slane %v6920, 4
        %v6922 = vadd.f32 %v6920, %v6921
        %v6923 = vrot.slane %v6922, 2
        %v6924 = vadd.f32 %v6922, %v6923
        %v6925 = vrot.slane %v6924, 1
        %v6926 = vadd.f32 %v6924, %v6925
        %v6928 = vsel %vm1848, %v6926, 0
        %6930 = vmatprep.subr.mxu0 0.0
        %6931 = vmatpush1.msra.mxu0 %v5639
        %6932 = vmatprep.subr.mxu0 0.0
        %6933 = vmatpush1.msra.mxu0 %v5640
        %6934 = vmatprep.subr.mxu0 0.0
        %6935 = vmatpush1.msra.mxu0 %v5641
        %6936 = vmatprep.subr.mxu0 0.0
        %6937 = vmatpush1.msra.mxu0 %v5642
        %6938 = vmatprep.subr.mxu0 0.0
        %6939 = vmatpush1.msra.mxu0 0.0
        %6940 = vmatprep.subr.mxu0 0.0
        %6941 = vmatpush1.msra.mxu0 0.0
        %6942 = vmatprep.subr.mxu0 0.0
        %6943 = vmatpush1.msra.mxu0 0.0
        %6944 = vmatprep.subr.mxu0 0.0
        %6945 = vmatpush1.msra.mxu0 0.0
        %6946 = vmatprep.subr.mxu0 0.0
        %6947 = vmatpush1.msra.mxu0 0.0
        %6948 = vmatprep.subr.mxu0 0.0
        %6949 = vmatpush1.msra.mxu0 0.0
        %6950 = vmatprep.subr.mxu0 0.0
        %6951 = vmatpush1.msra.mxu0 0.0
        %6952 = vmatprep.subr.mxu0 0.0
        %6953 = vmatpush1.msra.mxu0 0.0
        %6954 = vmatprep.subr.mxu0 0.0
        %6955 = vmatpush1.msra.mxu0 0.0
        %6956 = vmatprep.subr.mxu0 0.0
        %6957 = vmatpush1.msra.mxu0 0.0
        %6958 = vmatprep.subr.mxu0 0.0
        %6959 = vmatpush1.msra.mxu0 0.0
        %6960 = vmatprep.subr.mxu0 0.0
        %6961 = vmatpush1.msra.mxu0 0.0
        %6962 = vmatprep.subr.mxu0 0.0
        %6963 = vmatpush1.msra.mxu0 0.0
        %6964 = vmatprep.subr.mxu0 0.0
        %6965 = vmatpush1.msra.mxu0 0.0
        %6966 = vmatprep.subr.mxu0 0.0
        %6967 = vmatpush1.msra.mxu0 0.0
        %6968 = vmatprep.subr.mxu0 0.0
        %6969 = vmatpush1.msra.mxu0 0.0
        %6970 = vmatprep.subr.mxu0 0.0
        %6971 = vmatpush1.msra.mxu0 0.0
        %6972 = vmatprep.subr.mxu0 0.0
        %6973 = vmatpush1.msra.mxu0 0.0
        %6974 = vmatprep.subr.mxu0 0.0
        %6975 = vmatpush1.msra.mxu0 0.0
        %6976 = vmatprep.subr.mxu0 0.0
        %6977 = vmatpush1.msra.mxu0 0.0
        %6978 = vmatprep.subr.mxu0 0.0
        %6979 = vmatpush1.msra.mxu0 0.0
        %6980 = vmatprep.subr.mxu0 0.0
        %6981 = vmatpush1.msra.mxu0 0.0
        %6982 = vmatprep.subr.mxu0 0.0
        %6983 = vmatpush1.msra.mxu0 0.0
        %6984 = vmatprep.subr.mxu0 0.0
        %6985 = vmatpush1.msra.mxu0 0.0
        %6986 = vmatprep.subr.mxu0 0.0
        %6987 = vmatpush1.msra.mxu0 0.0
        %6988 = vmatprep.subr.mxu0 0.0
        %6989 = vmatpush1.msra.mxu0 0.0
        %6990 = vmatprep.subr.mxu0 0.0
        %6991 = vmatpush1.msra.mxu0 0.0
        %6992 = vmatprep.subr.mxu0 0.0
        %6993 = vmatpush1.msra.mxu0 0.0
        %6994 = vmatprep.mubr.f32.mxu0 0.0
        %6995 = vmatmul.mubr.f32.gmra.mrb[0].mxu0 %v6928
        %v6996 = vpop.f32.mrb[0].mxu0
        %v6997 = vadd.f32 0.0, %v6996
        %v6998 = vpop.f32.mrb[0].mxu0
        %6999 = vdwg.mxu0
        %v7000 = vmul.f32 %v6997, 0.015625
        %v7002 = vsel %vm1853, %v7000, 0
        %7004 = vmatprep.subr.mxu0 0.0
        %7005 = vmatpush1.msra.mxu0 %v5735
        %7006 = vmatprep.subr.mxu0 0.0
        %7007 = vmatpush1.msra.mxu0 0.0
        %7008 = vmatprep.subr.mxu0 0.0
        %7009 = vmatpush1.msra.mxu0 0.0
        %7010 = vmatprep.subr.mxu0 0.0
        %7011 = vmatpush1.msra.mxu0 0.0
        %7012 = vmatprep.subr.mxu0 0.0
        %7013 = vmatpush1.msra.mxu0 0.0
        %7014 = vmatprep.subr.mxu0 0.0
        %7015 = vmatpush1.msra.mxu0 0.0
        %7016 = vmatprep.subr.mxu0 0.0
        %7017 = vmatpush1.msra.mxu0 0.0
        %7018 = vmatprep.subr.mxu0 0.0
        %7019 = vmatpush1.msra.mxu0 0.0
        %7020 = vmatprep.subr.mxu0 0.0
        %7021 = vmatpush1.msra.mxu0 0.0
        %7022 = vmatprep.subr.mxu0 0.0
        %7023 = vmatpush1.msra.mxu0 0.0
        %7024 = vmatprep.subr.mxu0 0.0
        %7025 = vmatpush1.msra.mxu0 0.0
        %7026 = vmatprep.subr.mxu0 0.0
        %7027 = vmatpush1.msra.mxu0 0.0
        %7028 = vmatprep.subr.mxu0 0.0
        %7029 = vmatpush1.msra.mxu0 0.0
        %7030 = vmatprep.subr.mxu0 0.0
        %7031 = vmatpush1.msra.mxu0 0.0
        %7032 = vmatprep.subr.mxu0 0.0
        %7033 = vmatpush1.msra.mxu0 0.0
        %7034 = vmatprep.subr.mxu0 0.0
        %7035 = vmatpush1.msra.mxu0 0.0
        %7036 = vmatprep.subr.mxu0 0.0
        %7037 = vmatpush1.msra.mxu0 0.0
        %7038 = vmatprep.subr.mxu0 0.0
        %7039 = vmatpush1.msra.mxu0 0.0
        %7040 = vmatprep.subr.mxu0 0.0
        %7041 = vmatpush1.msra.mxu0 0.0
        %7042 = vmatprep.subr.mxu0 0.0
        %7043 = vmatpush1.msra.mxu0 0.0
        %7044 = vmatprep.subr.mxu0 0.0
        %7045 = vmatpush1.msra.mxu0 0.0
        %7046 = vmatprep.subr.mxu0 0.0
        %7047 = vmatpush1.msra.mxu0 0.0
        %7048 = vmatprep.subr.mxu0 0.0
        %7049 = vmatpush1.msra.mxu0 0.0
        %7050 = vmatprep.subr.mxu0 0.0
        %7051 = vmatpush1.msra.mxu0 0.0
        %7052 = vmatprep.subr.mxu0 0.0
        %7053 = vmatpush1.msra.mxu0 0.0
        %7054 = vmatprep.subr.mxu0 0.0
        %7055 = vmatpush1.msra.mxu0 0.0
        %7056 = vmatprep.subr.mxu0 0.0
        %7057 = vmatpush1.msra.mxu0 0.0
        %7058 = vmatprep.subr.mxu0 0.0
        %7059 = vmatpush1.msra.mxu0 0.0
        %7060 = vmatprep.subr.mxu0 0.0
        %7061 = vmatpush1.msra.mxu0 0.0
        %7062 = vmatprep.subr.mxu0 0.0
        %7063 = vmatpush1.msra.mxu0 0.0
        %7064 = vmatprep.subr.mxu0 0.0
        %7065 = vmatpush1.msra.mxu0 0.0
        %7066 = vmatprep.subr.mxu0 0.0
        %7067 = vmatpush1.msra.mxu0 0.0
        %7068 = vmatprep.mubr.f32.mxu0 0.0
        %7069 = vmatmul.mubr.f32.gmra.mrb[0].mxu0 %v7002
        %v7070 = vpop.f32.mrb[0].mxu0
        %v7071 = vadd.f32 0.0, %v7070
        %v7072 = vpop.f32.mrb[0].mxu0
        %7073 = vdwg.mxu0
        %v7074 = vlaneseq
        %v7075 = vshrl.u32 %v7074, 7
        %v7076 = vsub.s32 0, %v7075
        %v7077 = vrot.slane %v7071, %v7076
        %v7078 = vsub.f32 %v6919, %v7077
        %v7079 = vmul.f32 %v7078, %v7078
        %v7080 = vsel %vm1848, %v7079, 0.0
        %v7081 = vrot.slane %v7080, 4
        %v7082 = vadd.f32 %v7080, %v7081
        %v7083 = vrot.slane %v7082, 2
        %v7084 = vadd.f32 %v7082, %v7083
        %v7085 = vrot.slane %v7084, 1
        %v7086 = vadd.f32 %v7084, %v7085
        %v7088 = vsel %vm1848, %v7086, 0
        %7090 = vmatprep.subr.mxu0 0.0
        %7091 = vmatpush1.msra.mxu0 %v5639
        %7092 = vmatprep.subr.mxu0 0.0
        %7093 = vmatpush1.msra.mxu0 %v5640
        %7094 = vmatprep.subr.mxu0 0.0
        %7095 = vmatpush1.msra.mxu0 %v5641
        %7096 = vmatprep.subr.mxu0 0.0
        %7097 = vmatpush1.msra.mxu0 %v5642
        %7098 = vmatprep.subr.mxu0 0.0
        %7099 = vmatpush1.msra.mxu0 0.0
        %7100 = vmatprep.subr.mxu0 0.0
        %7101 = vmatpush1.msra.mxu0 0.0
        %7102 = vmatprep.subr.mxu0 0.0
        %7103 = vmatpush1.msra.mxu0 0.0
        %7104 = vmatprep.subr.mxu0 0.0
        %7105 = vmatpush1.msra.mxu0 0.0
        %7106 = vmatprep.subr.mxu0 0.0
        %7107 = vmatpush1.msra.mxu0 0.0
        %7108 = vmatprep.subr.mxu0 0.0
        %7109 = vmatpush1.msra.mxu0 0.0
        %7110 = vmatprep.subr.mxu0 0.0
        %7111 = vmatpush1.msra.mxu0 0.0
        %7112 = vmatprep.subr.mxu0 0.0
        %7113 = vmatpush1.msra.mxu0 0.0
        %7114 = vmatprep.subr.mxu0 0.0
        %7115 = vmatpush1.msra.mxu0 0.0
        %7116 = vmatprep.subr.mxu0 0.0
        %7117 = vmatpush1.msra.mxu0 0.0
        %7118 = vmatprep.subr.mxu0 0.0
        %7119 = vmatpush1.msra.mxu0 0.0
        %7120 = vmatprep.subr.mxu0 0.0
        %7121 = vmatpush1.msra.mxu0 0.0
        %7122 = vmatprep.subr.mxu0 0.0
        %7123 = vmatpush1.msra.mxu0 0.0
        %7124 = vmatprep.subr.mxu0 0.0
        %7125 = vmatpush1.msra.mxu0 0.0
        %7126 = vmatprep.subr.mxu0 0.0
        %7127 = vmatpush1.msra.mxu0 0.0
        %7128 = vmatprep.subr.mxu0 0.0
        %7129 = vmatpush1.msra.mxu0 0.0
        %7130 = vmatprep.subr.mxu0 0.0
        %7131 = vmatpush1.msra.mxu0 0.0
        %7132 = vmatprep.subr.mxu0 0.0
        %7133 = vmatpush1.msra.mxu0 0.0
        %7134 = vmatprep.subr.mxu0 0.0
        %7135 = vmatpush1.msra.mxu0 0.0
        %7136 = vmatprep.subr.mxu0 0.0
        %7137 = vmatpush1.msra.mxu0 0.0
        %7138 = vmatprep.subr.mxu0 0.0
        %7139 = vmatpush1.msra.mxu0 0.0
        %7140 = vmatprep.subr.mxu0 0.0
        %7141 = vmatpush1.msra.mxu0 0.0
        %7142 = vmatprep.subr.mxu0 0.0
        %7143 = vmatpush1.msra.mxu0 0.0
        %7144 = vmatprep.subr.mxu0 0.0
        %7145 = vmatpush1.msra.mxu0 0.0
        %7146 = vmatprep.subr.mxu0 0.0
        %7147 = vmatpush1.msra.mxu0 0.0
        %7148 = vmatprep.subr.mxu0 0.0
        %7149 = vmatpush1.msra.mxu0 0.0
        %7150 = vmatprep.subr.mxu0 0.0
        %7151 = vmatpush1.msra.mxu0 0.0
        %7152 = vmatprep.subr.mxu0 0.0
        %7153 = vmatpush1.msra.mxu0 0.0
        %7154 = vmatprep.mubr.f32.mxu0 0.0
        %7155 = vmatmul.mubr.f32.gmra.mrb[0].mxu0 %v7088
        %v7156 = vpop.f32.mrb[0].mxu0
        %v7157 = vadd.f32 0.0, %v7156
        %v7158 = vpop.f32.mrb[0].mxu0
        %7159 = vdwg.mxu0
        %v7160 = vmul.f32 %v7157, 0.015625
        %v7161 = vmax.f32 %v7160, 0.0
        %v7163 = vsel %vm1853, %v7161, 0
        %7165 = vmatprep.subr.mxu0 0.0
        %7166 = vmatpush1.msra.mxu0 %v5735
        %7167 = vmatprep.subr.mxu0 0.0
        %7168 = vmatpush1.msra.mxu0 0.0
        %7169 = vmatprep.subr.mxu0 0.0
        %7170 = vmatpush1.msra.mxu0 0.0
        %7171 = vmatprep.subr.mxu0 0.0
        %7172 = vmatpush1.msra.mxu0 0.0
        %7173 = vmatprep.subr.mxu0 0.0
        %7174 = vmatpush1.msra.mxu0 0.0
        %7175 = vmatprep.subr.mxu0 0.0
        %7176 = vmatpush1.msra.mxu0 0.0
        %7177 = vmatprep.subr.mxu0 0.0
        %7178 = vmatpush1.msra.mxu0 0.0
        %7179 = vmatprep.subr.mxu0 0.0
        %7180 = vmatpush1.msra.mxu0 0.0
        %7181 = vmatprep.subr.mxu0 0.0
        %7182 = vmatpush1.msra.mxu0 0.0
        %7183 = vmatprep.subr.mxu0 0.0
        %7184 = vmatpush1.msra.mxu0 0.0
        %7185 = vmatprep.subr.mxu0 0.0
        %7186 = vmatpush1.msra.mxu0 0.0
        %7187 = vmatprep.subr.mxu0 0.0
        %7188 = vmatpush1.msra.mxu0 0.0
        %7189 = vmatprep.subr.mxu0 0.0
        %7190 = vmatpush1.msra.mxu0 0.0
        %7191 = vmatprep.subr.mxu0 0.0
        %7192 = vmatpush1.msra.mxu0 0.0
        %7193 = vmatprep.subr.mxu0 0.0
        %7194 = vmatpush1.msra.mxu0 0.0
        %7195 = vmatprep.subr.mxu0 0.0
        %7196 = vmatpush1.msra.mxu0 0.0
        %7197 = vmatprep.subr.mxu0 0.0
        %7198 = vmatpush1.msra.mxu0 0.0
        %7199 = vmatprep.subr.mxu0 0.0
        %7200 = vmatpush1.msra.mxu0 0.0
        %7201 = vmatprep.subr.mxu0 0.0
        %7202 = vmatpush1.msra.mxu0 0.0
        %7203 = vmatprep.subr.mxu0 0.0
        %7204 = vmatpush1.msra.mxu0 0.0
        %7205 = vmatprep.subr.mxu0 0.0
        %7206 = vmatpush1.msra.mxu0 0.0
        %7207 = vmatprep.subr.mxu0 0.0
        %7208 = vmatpush1.msra.mxu0 0.0
        %7209 = vmatprep.subr.mxu0 0.0
        %7210 = vmatpush1.msra.mxu0 0.0
        %7211 = vmatprep.subr.mxu0 0.0
        %7212 = vmatpush1.msra.mxu0 0.0
        %7213 = vmatprep.subr.mxu0 0.0
        %7214 = vmatpush1.msra.mxu0 0.0
        %7215 = vmatprep.subr.mxu0 0.0
        %7216 = vmatpush1.msra.mxu0 0.0
        %7217 = vmatprep.subr.mxu0 0.0
        %7218 = vmatpush1.msra.mxu0 0.0
        %7219 = vmatprep.subr.mxu0 0.0
        %7220 = vmatpush1.msra.mxu0 0.0
        %7221 = vmatprep.subr.mxu0 0.0
        %7222 = vmatpush1.msra.mxu0 0.0
        %7223 = vmatprep.subr.mxu0 0.0
        %7224 = vmatpush1.msra.mxu0 0.0
        %7225 = vmatprep.subr.mxu0 0.0
        %7226 = vmatpush1.msra.mxu0 0.0
        %7227 = vmatprep.subr.mxu0 0.0
        %7228 = vmatpush1.msra.mxu0 0.0
        %7229 = vmatprep.mubr.f32.mxu0 0.0
        %7230 = vmatmul.mubr.f32.gmra.mrb[0].mxu0 %v7163
        %v7231 = vpop.f32.mrb[0].mxu0
        %v7232 = vadd.f32 1e-06, %v7231
        %v7233 = vpop.f32.mrb[0].mxu0
        %7234 = vdwg.mxu0
        %v7235 = vrsqrt.pop %v7232
        %v7236 = vlaneseq
        %v7237 = vshrl.u32 %v7236, 7
        %v7238 = vsub.s32 0, %v7237
        %v7239 = vrot.slane %v7235, %v7238
        %v7240 = vmul.f32 %v7078, %v7239
        %v7241 = vld [vmem:[#allocation56] sm:$0x1]
        %v7243 = vlaneseq
        %v7244 = vshrl.u32 %v7243, 7
        %v7245 = vsub.s32 0, %v7244
        %v7246 = vrot.slane %v7241, %v7245
        %v7248 = vmul.f32 %v7240, %v7246
        %v7249 = vld [vmem:[#allocation54] sm:$0x1]
        %v7251 = vlaneseq
        %v7252 = vshrl.u32 %v7251, 7
        %v7253 = vsub.s32 0, %v7252
        %v7254 = vrot.slane %v7249, %v7253
        %v7256 = vadd.f32 %v7248, %v7254
        %v7257 = vxor.u32 %v7256, 2147483648
        %v7258 = vmul.f32 %v7257, 1.442695
        %v7259 = vpow.pop %v7258
        %v7260 = vadd.f32 %v7259, 1.0
        %v7261 = vrcp.pop %v7260
        %v7262 = vmul.f32 1.0, %v7261
        %v7263 = vmul.f32 %v7256, %v7262
        %7264 = vst.msk [vmem:[#allocation2] sm:$0xff] %vm1848, 0.0
        %7265 = vst.msk [vmem:[#allocation2 + $0x8] sm:$0xff] %vm1848, 0.0
        %7266 = vst.msk [vmem:[#allocation2 + $0x10] sm:$0x3] %vm1851, 0.0
        %7267 = vst.msk [vmem:[#allocation2 + $0x1] sm:$0xff] %vm1848, %v7263
        %v7268 = vld [vmem:[#allocation2] sm:$0xff]
        %v7269 = vld [vmem:[#allocation50] sm:$0xff]
        %v7270 = vld [vmem:[#allocation50 + $0x8] sm:$0xff]
        %v7271 = vld [vmem:[#allocation50 + $0x10] sm:$0xff]
        %v7272 = vld [vmem:[#allocation50 + $0x18] sm:$0xff]
        %s7273 = scalar_lea.vmem [#allocation50], 32
        %v7274 = vld [vmem:[%s7273] sm:$0xff]
        %v7275 = vld [vmem:[%s7273 + $0x8] sm:$0xff]
        %v7276 = vld [vmem:[%s7273 + $0x10] sm:$0xff]
        %v7277 = vld [vmem:[%s7273 + $0x18] sm:$0xff]
        %v7279 = vsel %vm1848, %v7263, 0
        %7281 = vmatprep.subr.mxu0 0.0
        %7282 = vmatpush1.msra.mxu0 %v7274
        %7283 = vmatprep.subr.mxu0 0.0
        %7284 = vmatpush1.msra.mxu0 %v7275
        %7285 = vmatprep.subr.mxu0 0.0
        %7286 = vmatpush1.msra.mxu0 %v7276
        %7287 = vmatprep.subr.mxu0 0.0
        %7288 = vmatpush1.msra.mxu0 %v7277
        %7289 = vmatprep.subr.mxu0 0.0
        %7290 = vmatpush1.msra.mxu0 0.0
        %7291 = vmatprep.subr.mxu0 0.0
        %7292 = vmatpush1.msra.mxu0 0.0
        %7293 = vmatprep.subr.mxu0 0.0
        %7294 = vmatpush1.msra.mxu0 0.0
        %7295 = vmatprep.subr.mxu0 0.0
        %7296 = vmatpush1.msra.mxu0 0.0
        %7297 = vmatprep.subr.mxu0 0.0
        %7298 = vmatpush1.msra.mxu0 0.0
        %7299 = vmatprep.subr.mxu0 0.0
        %7300 = vmatpush1.msra.mxu0 0.0
        %7301 = vmatprep.subr.mxu0 0.0
        %7302 = vmatpush1.msra.mxu0 0.0
        %7303 = vmatprep.subr.mxu0 0.0
        %7304 = vmatpush1.msra.mxu0 0.0
        %7305 = vmatprep.subr.mxu0 0.0
        %7306 = vmatpush1.msra.mxu0 0.0
        %7307 = vmatprep.subr.mxu0 0.0
        %7308 = vmatpush1.msra.mxu0 0.0
        %7309 = vmatprep.subr.mxu0 0.0
        %7310 = vmatpush1.msra.mxu0 0.0
        %7311 = vmatprep.subr.mxu0 0.0
        %7312 = vmatpush1.msra.mxu0 0.0
        %7313 = vmatprep.subr.mxu0 0.0
        %7314 = vmatpush1.msra.mxu0 0.0
        %7315 = vmatprep.subr.mxu0 0.0
        %7316 = vmatpush1.msra.mxu0 0.0
        %7317 = vmatprep.subr.mxu0 0.0
        %7318 = vmatpush1.msra.mxu0 0.0
        %7319 = vmatprep.subr.mxu0 0.0
        %7320 = vmatpush1.msra.mxu0 0.0
        %7321 = vmatprep.subr.mxu0 0.0
        %7322 = vmatpush1.msra.mxu0 0.0
        %7323 = vmatprep.subr.mxu0 0.0
        %7324 = vmatpush1.msra.mxu0 0.0
        %7325 = vmatprep.subr.mxu0 0.0
        %7326 = vmatpush1.msra.mxu0 0.0
        %7327 = vmatprep.subr.mxu0 0.0
        %7328 = vmatpush1.msra.mxu0 0.0
        %7329 = vmatprep.subr.mxu0 0.0
        %7330 = vmatpush1.msra.mxu0 0.0
        %7331 = vmatprep.subr.mxu0 0.0
        %7332 = vmatpush1.msra.mxu0 0.0
        %7333 = vmatprep.subr.mxu0 0.0
        %7334 = vmatpush1.msra.mxu0 0.0
        %7335 = vmatprep.subr.mxu0 0.0
        %7336 = vmatpush1.msra.mxu0 0.0
        %7337 = vmatprep.subr.mxu0 0.0
        %7338 = vmatpush1.msra.mxu0 0.0
        %7339 = vmatprep.subr.mxu0 0.0
        %7340 = vmatpush1.msra.mxu0 0.0
        %7341 = vmatprep.subr.mxu0 0.0
        %7342 = vmatpush1.msra.mxu0 0.0
        %7343 = vmatprep.subr.mxu0 0.0
        %7344 = vmatpush1.msra.mxu0 0.0
        %7345 = vmatprep.mubr.f32.mxu0 0.0
        %7346 = vmatmul.mubr.f32.gmra.mrb[0].mxu0 %v7279
        %v7347 = vpop.f32.mrb[0].mxu0
        %v7348 = vadd.f32 0.0, %v7347
        %v7349 = vpop.f32.mrb[0].mxu0
        %7350 = vdwg.mxu0
        %v7352 = vsel %vm1848, %v7268, 0
        %7354 = vmatprep.subr.mxu0 0.0
        %7355 = vmatpush1.msra.mxu0 %v7269
        %7356 = vmatprep.subr.mxu0 0.0
        %7357 = vmatpush1.msra.mxu0 %v7270
        %7358 = vmatprep.subr.mxu0 0.0
        %7359 = vmatpush1.msra.mxu0 %v7271
        %7360 = vmatprep.subr.mxu0 0.0
        %7361 = vmatpush1.msra.mxu0 %v7272
        %7362 = vmatprep.subr.mxu0 0.0
        %7363 = vmatpush1.msra.mxu0 0.0
        %7364 = vmatprep.subr.mxu0 0.0
        %7365 = vmatpush1.msra.mxu0 0.0
        %7366 = vmatprep.subr.mxu0 0.0
        %7367 = vmatpush1.msra.mxu0 0.0
        %7368 = vmatprep.subr.mxu0 0.0
        %7369 = vmatpush1.msra.mxu0 0.0
        %7370 = vmatprep.subr.mxu0 0.0
        %7371 = vmatpush1.msra.mxu0 0.0
        %7372 = vmatprep.subr.mxu0 0.0
        %7373 = vmatpush1.msra.mxu0 0.0
        %7374 = vmatprep.subr.mxu0 0.0
        %7375 = vmatpush1.msra.mxu0 0.0
        %7376 = vmatprep.subr.mxu0 0.0
        %7377 = vmatpush1.msra.mxu0 0.0
        %7378 = vmatprep.subr.mxu0 0.0
        %7379 = vmatpush1.msra.mxu0 0.0
        %7380 = vmatprep.subr.mxu0 0.0
        %7381 = vmatpush1.msra.mxu0 0.0
        %7382 = vmatprep.subr.mxu0 0.0
        %7383 = vmatpush1.msra.mxu0 0.0
        %7384 = vmatprep.subr.mxu0 0.0
        %7385 = vmatpush1.msra.mxu0 0.0
        %7386 = vmatprep.subr.mxu0 0.0
        %7387 = vmatpush1.msra.mxu0 0.0
        %7388 = vmatprep.subr.mxu0 0.0
        %7389 = vmatpush1.msra.mxu0 0.0
        %7390 = vmatprep.subr.mxu0 0.0
        %7391 = vmatpush1.msra.mxu0 0.0
        %7392 = vmatprep.subr.mxu0 0.0
        %7393 = vmatpush1.msra.mxu0 0.0
        %7394 = vmatprep.subr.mxu0 0.0
        %7395 = vmatpush1.msra.mxu0 0.0
        %7396 = vmatprep.subr.mxu0 0.0
        %7397 = vmatpush1.msra.mxu0 0.0
        %7398 = vmatprep.subr.mxu0 0.0
        %7399 = vmatpush1.msra.mxu0 0.0
        %7400 = vmatprep.subr.mxu0 0.0
        %7401 = vmatpush1.msra.mxu0 0.0
        %7402 = vmatprep.subr.mxu0 0.0
        %7403 = vmatpush1.msra.mxu0 0.0
        %7404 = vmatprep.subr.mxu0 0.0
        %7405 = vmatpush1.msra.mxu0 0.0
        %7406 = vmatprep.subr.mxu0 0.0
        %7407 = vmatpush1.msra.mxu0 0.0
        %7408 = vmatprep.subr.mxu0 0.0
        %7409 = vmatpush1.msra.mxu0 0.0
        %7410 = vmatprep.subr.mxu0 0.0
        %7411 = vmatpush1.msra.mxu0 0.0
        %7412 = vmatprep.subr.mxu0 0.0
        %7413 = vmatpush1.msra.mxu0 0.0
        %7414 = vmatprep.subr.mxu0 0.0
        %7415 = vmatpush1.msra.mxu0 0.0
        %7416 = vmatprep.subr.mxu0 0.0
        %7417 = vmatpush1.msra.mxu0 0.0
        %7418 = vmatprep.mubr.f32.mxu0 0.0
        %7419 = vmatmul.mubr.f32.gmra.mrb[0].mxu0 %v7352
        %v7420 = vpop.f32.mrb[0].mxu0
        %v7421 = vadd.f32 %v7348, %v7420
        %v7422 = vpop.f32.mrb[0].mxu0
        %7423 = vdwg.mxu0
        %v7424 = vld [vmem:[#allocation2 + $0x2] sm:$0xff]
        %s7425 = scalar_lea.vmem [#allocation50], 64
        %v7426 = vld [vmem:[%s7425] sm:$0xff]
        %v7427 = vld [vmem:[%s7425 + $0x8] sm:$0xff]
        %v7428 = vld [vmem:[%s7425 + $0x10] sm:$0xff]
        %v7429 = vld [vmem:[%s7425 + $0x18] sm:$0xff]
        %v7431 = vsel %vm1848, %v7424, 0
        %7433 = vmatprep.subr.mxu0 0.0
        %7434 = vmatpush1.msra.mxu0 %v7426
        %7435 = vmatprep.subr.mxu0 0.0
        %7436 = vmatpush1.msra.mxu0 %v7427
        %7437 = vmatprep.subr.mxu0 0.0
        %7438 = vmatpush1.msra.mxu0 %v7428
        %7439 = vmatprep.subr.mxu0 0.0
        %7440 = vmatpush1.msra.mxu0 %v7429
        %7441 = vmatprep.subr.mxu0 0.0
        %7442 = vmatpush1.msra.mxu0 0.0
        %7443 = vmatprep.subr.mxu0 0.0
        %7444 = vmatpush1.msra.mxu0 0.0
        %7445 = vmatprep.subr.mxu0 0.0
        %7446 = vmatpush1.msra.mxu0 0.0
        %7447 = vmatprep.subr.mxu0 0.0
        %7448 = vmatpush1.msra.mxu0 0.0
        %7449 = vmatprep.subr.mxu0 0.0
        %7450 = vmatpush1.msra.mxu0 0.0
        %7451 = vmatprep.subr.mxu0 0.0
        %7452 = vmatpush1.msra.mxu0 0.0
        %7453 = vmatprep.subr.mxu0 0.0
        %7454 = vmatpush1.msra.mxu0 0.0
        %7455 = vmatprep.subr.mxu0 0.0
        %7456 = vmatpush1.msra.mxu0 0.0
        %7457 = vmatprep.subr.mxu0 0.0
        %7458 = vmatpush1.msra.mxu0 0.0
        %7459 = vmatprep.subr.mxu0 0.0
        %7460 = vmatpush1.msra.mxu0 0.0
        %7461 = vmatprep.subr.mxu0 0.0
        %7462 = vmatpush1.msra.mxu0 0.0
        %7463 = vmatprep.subr.mxu0 0.0
        %7464 = vmatpush1.msra.mxu0 0.0
        %7465 = vmatprep.subr.mxu0 0.0
        %7466 = vmatpush1.msra.mxu0 0.0
        %7467 = vmatprep.subr.mxu0 0.0
        %7468 = vmatpush1.msra.mxu0 0.0
        %7469 = vmatprep.subr.mxu0 0.0
        %7470 = vmatpush1.msra.mxu0 0.0
        %7471 = vmatprep.subr.mxu0 0.0
        %7472 = vmatpush1.msra.mxu0 0.0
        %7473 = vmatprep.subr.mxu0 0.0
        %7474 = vmatpush1.msra.mxu0 0.0
        %7475 = vmatprep.subr.mxu0 0.0
        %7476 = vmatpush1.msra.mxu0 0.0
        %7477 = vmatprep.subr.mxu0 0.0
        %7478 = vmatpush1.msra.mxu0 0.0
        %7479 = vmatprep.subr.mxu0 0.0
        %7480 = vmatpush1.msra.mxu0 0.0
        %7481 = vmatprep.subr.mxu0 0.0
        %7482 = vmatpush1.msra.mxu0 0.0
        %7483 = vmatprep.subr.mxu0 0.0
        %7484 = vmatpush1.msra.mxu0 0.0
        %7485 = vmatprep.subr.mxu0 0.0
        %7486 = vmatpush1.msra.mxu0 0.0
        %7487 = vmatprep.subr.mxu0 0.0
        %7488 = vmatpush1.msra.mxu0 0.0
        %7489 = vmatprep.subr.mxu0 0.0
        %7490 = vmatpush1.msra.mxu0 0.0
        %7491 = vmatprep.subr.mxu0 0.0
        %7492 = vmatpush1.msra.mxu0 0.0
        %7493 = vmatprep.subr.mxu0 0.0
        %7494 = vmatpush1.msra.mxu0 0.0
        %7495 = vmatprep.subr.mxu0 0.0
        %7496 = vmatpush1.msra.mxu0 0.0
        %7497 = vmatprep.mubr.f32.mxu0 0.0
        %7498 = vmatmul.mubr.f32.gmra.mrb[0].mxu0 %v7431
        %v7499 = vpop.f32.mrb[0].mxu0
        %v7500 = vadd.f32 0.0, %v7499
        %v7501 = vpop.f32.mrb[0].mxu0
        %7502 = vdwg.mxu0
        %v7503 = vadd.f32 %v7421, %v7500
        %v7504 = vld [vmem:[#allocation48] sm:$0x1]
        %v7506 = vlaneseq
        %v7507 = vshrl.u32 %v7506, 7
        %v7508 = vsub.s32 0, %v7507
        %v7509 = vrot.slane %v7504, %v7508
        %v7511 = vadd.f32 %v7503, %v7509
        %v7512 = vadd.f32 %v6327, %v7511
        %v7513 = vld [vmem:[%s9] sm:$0xff]
        %v7514 = vld [vmem:[%s9 + $0x8] sm:$0xff]
        %v7515 = vld [vmem:[%s9 + $0x10] sm:$0xff]
        %v7516 = vld [vmem:[%s9 + $0x18] sm:$0xff]
        %v7517 = vld [vmem:[#allocation6] sm:$0x1]
        %v7519 = vlaneseq
        %v7520 = vshrl.u32 %v7519, 7
        %v7521 = vsub.s32 0, %v7520
        %v7522 = vrot.slane %v7517, %v7521
        %v7525 = vsel %vm1848, %v7512, 0
        %7527 = vmatprep.subr.mxu0 0.0
        %7528 = vmatpush1.msra.mxu0 %v7513
        %7529 = vmatprep.subr.mxu0 0.0
        %7530 = vmatpush1.msra.mxu0 %v7514
        %7531 = vmatprep.subr.mxu0 0.0
        %7532 = vmatpush1.msra.mxu0 %v7515
        %7533 = vmatprep.subr.mxu0 0.0
        %7534 = vmatpush1.msra.mxu0 %v7516
        %7535 = vmatprep.subr.mxu0 0.0
        %7536 = vmatpush1.msra.mxu0 0.0
        %7537 = vmatprep.subr.mxu0 0.0
        %7538 = vmatpush1.msra.mxu0 0.0
        %7539 = vmatprep.subr.mxu0 0.0
        %7540 = vmatpush1.msra.mxu0 0.0
        %7541 = vmatprep.subr.mxu0 0.0
        %7542 = vmatpush1.msra.mxu0 0.0
        %7543 = vmatprep.subr.mxu0 0.0
        %7544 = vmatpush1.msra.mxu0 0.0
        %7545 = vmatprep.subr.mxu0 0.0
        %7546 = vmatpush1.msra.mxu0 0.0
        %7547 = vmatprep.subr.mxu0 0.0
        %7548 = vmatpush1.msra.mxu0 0.0
        %7549 = vmatprep.subr.mxu0 0.0
        %7550 = vmatpush1.msra.mxu0 0.0
        %7551 = vmatprep.subr.mxu0 0.0
        %7552 = vmatpush1.msra.mxu0 0.0
        %7553 = vmatprep.subr.mxu0 0.0
        %7554 = vmatpush1.msra.mxu0 0.0
        %7555 = vmatprep.subr.mxu0 0.0
        %7556 = vmatpush1.msra.mxu0 0.0
        %7557 = vmatprep.subr.mxu0 0.0
        %7558 = vmatpush1.msra.mxu0 0.0
        %7559 = vmatprep.subr.mxu0 0.0
        %7560 = vmatpush1.msra.mxu0 0.0
        %7561 = vmatprep.subr.mxu0 0.0
        %7562 = vmatpush1.msra.mxu0 0.0
        %7563 = vmatprep.subr.mxu0 0.0
        %7564 = vmatpush1.msra.mxu0 0.0
        %7565 = vmatprep.subr.mxu0 0.0
        %7566 = vmatpush1.msra.mxu0 0.0
        %7567 = vmatprep.subr.mxu0 0.0
        %7568 = vmatpush1.msra.mxu0 0.0
        %7569 = vmatprep.subr.mxu0 0.0
        %7570 = vmatpush1.msra.mxu0 0.0
        %7571 = vmatprep.subr.mxu0 0.0
        %7572 = vmatpush1.msra.mxu0 0.0
        %7573 = vmatprep.subr.mxu0 0.0
        %7574 = vmatpush1.msra.mxu0 0.0
        %7575 = vmatprep.subr.mxu0 0.0
        %7576 = vmatpush1.msra.mxu0 0.0
        %7577 = vmatprep.subr.mxu0 0.0
        %7578 = vmatpush1.msra.mxu0 0.0
        %7579 = vmatprep.subr.mxu0 0.0
        %7580 = vmatpush1.msra.mxu0 0.0
        %7581 = vmatprep.subr.mxu0 0.0
        %7582 = vmatpush1.msra.mxu0 0.0
        %7583 = vmatprep.subr.mxu0 0.0
        %7584 = vmatpush1.msra.mxu0 0.0
        %7585 = vmatprep.subr.mxu0 0.0
        %7586 = vmatpush1.msra.mxu0 0.0
        %7587 = vmatprep.subr.mxu0 0.0
        %7588 = vmatpush1.msra.mxu0 0.0
        %7589 = vmatprep.subr.mxu0 0.0
        %7590 = vmatpush1.msra.mxu0 0.0
        %7591 = vmatprep.mubr.f32.mxu0 0.0
        %7592 = vmatmul.mubr.f32.gmra.mrb[0].mxu0 %v7525
        %v7593 = vpop.f32.mrb[0].mxu0
        %v7594 = vadd.f32 %v7522, %v7593
        %v7595 = vpop.f32.mrb[0].mxu0
        %7596 = vdwg.mxu0
        %7597 = vst.msk [vmem:[#allocation2] sm:$0xff] %vm1848, %v7594
        %v7598 = vld [vmem:[#allocation2 + $0x1] sm:$0x7f]
        %v7599 = vld [vmem:[#allocation2] sm:$0x7f]
        %v7600 = vsub.f32 %v7598, %v7599
        %v7601 = vld [vmem:[%s85] sm:$0xff]
        %v7602 = vld [vmem:[%s85 + $0x8] sm:$0xff]
        %v7603 = vld [vmem:[%s85 + $0x10] sm:$0xff]
        %v7604 = vld [vmem:[%s85 + $0x18] sm:$0xff]
        %v7605 = vld [vmem:[%s83] sm:$0x1]
        %v7607 = vlaneseq
        %v7608 = vshrl.u32 %v7607, 7
        %v7609 = vsub.s32 0, %v7608
        %v7610 = vrot.slane %v7605, %v7609
        %v7613 = vsel %vm1848, %v7594, 0
        %7615 = vmatprep.subr.mxu0 0.0
        %7616 = vmatpush1.msra.mxu0 %v7601
        %7617 = vmatprep.subr.mxu0 0.0
        %7618 = vmatpush1.msra.mxu0 %v7602
        %7619 = vmatprep.subr.mxu0 0.0
        %7620 = vmatpush1.msra.mxu0 %v7603
        %7621 = vmatprep.subr.mxu0 0.0
        %7622 = vmatpush1.msra.mxu0 %v7604
        %7623 = vmatprep.subr.mxu0 0.0
        %7624 = vmatpush1.msra.mxu0 0.0
        %7625 = vmatprep.subr.mxu0 0.0
        %7626 = vmatpush1.msra.mxu0 0.0
        %7627 = vmatprep.subr.mxu0 0.0
        %7628 = vmatpush1.msra.mxu0 0.0
        %7629 = vmatprep.subr.mxu0 0.0
        %7630 = vmatpush1.msra.mxu0 0.0
        %7631 = vmatprep.subr.mxu0 0.0
        %7632 = vmatpush1.msra.mxu0 0.0
        %7633 = vmatprep.subr.mxu0 0.0
        %7634 = vmatpush1.msra.mxu0 0.0
        %7635 = vmatprep.subr.mxu0 0.0
        %7636 = vmatpush1.msra.mxu0 0.0
        %7637 = vmatprep.subr.mxu0 0.0
        %7638 = vmatpush1.msra.mxu0 0.0
        %7639 = vmatprep.subr.mxu0 0.0
        %7640 = vmatpush1.msra.mxu0 0.0
        %7641 = vmatprep.subr.mxu0 0.0
        %7642 = vmatpush1.msra.mxu0 0.0
        %7643 = vmatprep.subr.mxu0 0.0
        %7644 = vmatpush1.msra.mxu0 0.0
        %7645 = vmatprep.subr.mxu0 0.0
        %7646 = vmatpush1.msra.mxu0 0.0
        %7647 = vmatprep.subr.mxu0 0.0
        %7648 = vmatpush1.msra.mxu0 0.0
        %7649 = vmatprep.subr.mxu0 0.0
        %7650 = vmatpush1.msra.mxu0 0.0
        %7651 = vmatprep.subr.mxu0 0.0
        %7652 = vmatpush1.msra.mxu0 0.0
        %7653 = vmatprep.subr.mxu0 0.0
        %7654 = vmatpush1.msra.mxu0 0.0
        %7655 = vmatprep.subr.mxu0 0.0
        %7656 = vmatpush1.msra.mxu0 0.0
        %7657 = vmatprep.subr.mxu0 0.0
        %7658 = vmatpush1.msra.mxu0 0.0
        %7659 = vmatprep.subr.mxu0 0.0
        %7660 = vmatpush1.msra.mxu0 0.0
        %7661 = vmatprep.subr.mxu0 0.0
        %7662 = vmatpush1.msra.mxu0 0.0
        %7663 = vmatprep.subr.mxu0 0.0
        %7664 = vmatpush1.msra.mxu0 0.0
        %7665 = vmatprep.subr.mxu0 0.0
        %7666 = vmatpush1.msra.mxu0 0.0
        %7667 = vmatprep.subr.mxu0 0.0
        %7668 = vmatpush1.msra.mxu0 0.0
        %7669 = vmatprep.subr.mxu0 0.0
        %7670 = vmatpush1.msra.mxu0 0.0
        %7671 = vmatprep.subr.mxu0 0.0
        %7672 = vmatpush1.msra.mxu0 0.0
        %7673 = vmatprep.subr.mxu0 0.0
        %7674 = vmatpush1.msra.mxu0 0.0
        %7675 = vmatprep.subr.mxu0 0.0
        %7676 = vmatpush1.msra.mxu0 0.0
        %7677 = vmatprep.subr.mxu0 0.0
        %7678 = vmatpush1.msra.mxu0 0.0
        %7679 = vmatprep.mubr.f32.mxu0 0.0
        %7680 = vmatmul.mubr.f32.gmra.mrb[0].mxu0 %v7613
        %v7681 = vpop.f32.mrb[0].mxu0
        %v7682 = vadd.f32 %v7610, %v7681
        %v7683 = vpop.f32.mrb[0].mxu0
        %7684 = vdwg.mxu0
        %7685 = vst.msk [vmem:[%s1830] sm:$0xff] %vm1848, %v7682
        %v7686 = vld [vmem:[%s89] sm:$0xff]
        %v7687 = vld [vmem:[%s89 + $0x8] sm:$0xff]
        %v7688 = vld [vmem:[%s89 + $0x10] sm:$0xff]
        %v7689 = vld [vmem:[%s89 + $0x18] sm:$0xff]
        %v7690 = vld [vmem:[%s87] sm:$0x1]
        %v7692 = vlaneseq
        %v7693 = vshrl.u32 %v7692, 7
        %v7694 = vsub.s32 0, %v7693
        %v7695 = vrot.slane %v7690, %v7694
        %v7698 = vsel %vm1848, %v7600, 0
        %7700 = vmatprep.subr.mxu0 0.0
        %7701 = vmatpush1.msra.mxu0 %v7686
        %7702 = vmatprep.subr.mxu0 0.0
        %7703 = vmatpush1.msra.mxu0 %v7687
        %7704 = vmatprep.subr.mxu0 0.0
        %7705 = vmatpush1.msra.mxu0 %v7688
        %7706 = vmatprep.subr.mxu0 0.0
        %7707 = vmatpush1.msra.mxu0 %v7689
        %7708 = vmatprep.subr.mxu0 0.0
        %7709 = vmatpush1.msra.mxu0 0.0
        %7710 = vmatprep.subr.mxu0 0.0
        %7711 = vmatpush1.msra.mxu0 0.0
        %7712 = vmatprep.subr.mxu0 0.0
        %7713 = vmatpush1.msra.mxu0 0.0
        %7714 = vmatprep.subr.mxu0 0.0
        %7715 = vmatpush1.msra.mxu0 0.0
        %7716 = vmatprep.subr.mxu0 0.0
        %7717 = vmatpush1.msra.mxu0 0.0
        %7718 = vmatprep.subr.mxu0 0.0
        %7719 = vmatpush1.msra.mxu0 0.0
        %7720 = vmatprep.subr.mxu0 0.0
        %7721 = vmatpush1.msra.mxu0 0.0
        %7722 = vmatprep.subr.mxu0 0.0
        %7723 = vmatpush1.msra.mxu0 0.0
        %7724 = vmatprep.subr.mxu0 0.0
        %7725 = vmatpush1.msra.mxu0 0.0
        %7726 = vmatprep.subr.mxu0 0.0
        %7727 = vmatpush1.msra.mxu0 0.0
        %7728 = vmatprep.subr.mxu0 0.0
        %7729 = vmatpush1.msra.mxu0 0.0
        %7730 = vmatprep.subr.mxu0 0.0
        %7731 = vmatpush1.msra.mxu0 0.0
        %7732 = vmatprep.subr.mxu0 0.0
        %7733 = vmatpush1.msra.mxu0 0.0
        %7734 = vmatprep.subr.mxu0 0.0
        %7735 = vmatpush1.msra.mxu0 0.0
        %7736 = vmatprep.subr.mxu0 0.0
        %7737 = vmatpush1.msra.mxu0 0.0
        %7738 = vmatprep.subr.mxu0 0.0
        %7739 = vmatpush1.msra.mxu0 0.0
        %7740 = vmatprep.subr.mxu0 0.0
        %7741 = vmatpush1.msra.mxu0 0.0
        %7742 = vmatprep.subr.mxu0 0.0
        %7743 = vmatpush1.msra.mxu0 0.0
        %7744 = vmatprep.subr.mxu0 0.0
        %7745 = vmatpush1.msra.mxu0 0.0
        %7746 = vmatprep.subr.mxu0 0.0
        %7747 = vmatpush1.msra.mxu0 0.0
        %7748 = vmatprep.subr.mxu0 0.0
        %7749 = vmatpush1.msra.mxu0 0.0
        %7750 = vmatprep.subr.mxu0 0.0
        %7751 = vmatpush1.msra.mxu0 0.0
        %7752 = vmatprep.subr.mxu0 0.0
        %7753 = vmatpush1.msra.mxu0 0.0
        %7754 = vmatprep.subr.mxu0 0.0
        %7755 = vmatpush1.msra.mxu0 0.0
        %7756 = vmatprep.subr.mxu0 0.0
        %7757 = vmatpush1.msra.mxu0 0.0
        %7758 = vmatprep.subr.mxu0 0.0
        %7759 = vmatpush1.msra.mxu0 0.0
        %7760 = vmatprep.subr.mxu0 0.0
        %7761 = vmatpush1.msra.mxu0 0.0
        %7762 = vmatprep.subr.mxu0 0.0
        %7763 = vmatpush1.msra.mxu0 0.0
        %7764 = vmatprep.mubr.f32.mxu0 0.0
        %7765 = vmatmul.mubr.f32.gmra.mrb[0].mxu0 %v7698
        %v7766 = vpop.f32.mrb[0].mxu0
        %v7767 = vadd.f32 %v7695, %v7766
        %v7768 = vpop.f32.mrb[0].mxu0
        %7769 = vdwg.mxu0
        %vm7770 = vcmask 260096
        %7771 = vst.msk [vmem:[%s1845] sm:$0x7f] %vm7770, %v7767
        %s7772 = sand.u32 %s1084, 1
        %s7773 = scalar_lea.sflag [#allocation5], %s7772
        %s7774 = sand.u32 %s1084, 1
        %s7775 = smul.addr %s7774, 8
        %s7776 = scalar_lea.vmem [#allocation57], %s7775
        %p7777 = scmp.lt.s32.totalorder %s126, 1
        %s7778 = scalar_select %p7777, %s126, 1
        %s7779 = smul.addr %s7778, 8
        %s7780 = scalar_lea.vmem %s93, %s7779
        // Predicated region
        $region341: #{encoder1diff_forward.1} parent=199 // pred_check
          %p7781 = pneg %p1094
        $region342: #{encoder1diff_forward.1} parent=199 // pred_check_branch
          %7783 = sbr.rel (%p7781) target = $region344
        $region343: #{encoder1diff_forward.1} parent=199 // pred_region
          %s7785 = ssub.s32 128, 128
          %7786 = vsyncadd %s7773, %s7785
          %s7787 = smul.addr %s126, 128
          %s7788 = scalar_lea.hbm %s91, %s7787
          %s7790 = sshll.u32 %s7776, 4
          %s7791 = int_to_ptr.vmem [resolvable:$true] %s7790
          %7793 = dma.vmem_to_hbm [thread:$0]  %s7791, 128, %s7788, %s7773
        $region344: #{encoder1diff_forward.1} parent=199 // pred_fallthru
          _
        // Predicated region
        $region345: #{encoder1diff_forward.1} parent=199 // pred_check
          %p7794 = pneg %p1120
        $region346: #{encoder1diff_forward.1} parent=199 // pred_check_branch
          %7796 = sbr.rel (%p7794) target = $region348
        $region347: #{encoder1diff_forward.1} parent=199 // pred_region
          _
        $region348: #{encoder1diff_forward.1} parent=199 // pred_fallthru
          _
      $region200: #{encoder1diff_forward.1} parent=5 // pred_fallthru
        _
      %p7797 = scmp.le.s32.totalorder 2, %s121
      // Predicated region
      $region349: #{encoder1diff_forward.1} parent=5 // pred_check
        %p7798 = pneg %p7797
      $region350: #{encoder1diff_forward.1} parent=5 // pred_check_branch
        %7800 = sbr.rel (%p7798) target = $region352
      $region351: #{encoder1diff_forward.1} parent=5 // pred_region
        %s7801 = ssub.s32 %s121, 2
        // Predicated region
        $region353: #{encoder1diff_forward.1} parent=351 // pred_check
          %p7802 = pneg %p1100
        $region354: #{encoder1diff_forward.1} parent=351 // pred_check_branch
          %7804 = sbr.rel (%p7802) target = $region356
        $region355: #{encoder1diff_forward.1} parent=351 // pred_region
          %s7805 = sand.u32 %s1085, 1
          %s7806 = scalar_lea.sflag [#allocation5], %s7805
          %s7807 = sand.u32 %s1085, 1
          %s7808 = smul.addr %s7807, 8
          %s7809 = scalar_lea.vmem [#allocation57], %s7808
          %7810 = dma.done %s7806, 128
        $region356: #{encoder1diff_forward.1} parent=351 // pred_fallthru
          _
        // Predicated region
        $region357: #{encoder1diff_forward.1} parent=351 // pred_check
          %p7811 = pneg %p1126
        $region358: #{encoder1diff_forward.1} parent=351 // pred_check_branch
          %7813 = sbr.rel (%p7811) target = $region360
        $region359: #{encoder1diff_forward.1} parent=351 // pred_region
          %p7814 = scmp.lt.s32.totalorder %s127, 1
          %s7815 = scalar_select %p7814, %s127, 1
          %s7816 = smul.addr %s7815, 8
          %s7817 = scalar_lea.vmem %s93, %s7816
        $region360: #{encoder1diff_forward.1} parent=351 // pred_fallthru
          _
      $region352: #{encoder1diff_forward.1} parent=5 // pred_fallthru
        _
    $region6: #{encoder1diff_forward.1} parent=1 // loop_footer
      %s125 = sadd.s32 1, %s121
    $region7: #{encoder1diff_forward.1} parent=1 // loop_footer_branch
      %120 = sbr.rel target = $region3
    $region8: #{encoder1diff_forward.1} parent=1 // loop_exit
      _
    %7818 = vsyncpa [#allocation4], 1
    %s7819 = scalar_lea.sflag [#allocation4], 1
    %7820 = vsyncpa %s7819, 1
    %7821 = vsyncpa [#allocation7], 1
    %7822 = vsyncpa [#allocation10], 1
    %7823 = vsyncpa [#allocation13], 1
    %7824 = vsyncpa [#allocation16], 1
    %7825 = vsyncpa [#allocation19], 1
    %7826 = vsyncpa [#allocation22], 1
    %7827 = vsyncpa [#allocation25], 1
    %7828 = vsyncpa [#allocation28], 1
    %7829 = vsyncpa [#allocation31], 1
    %7830 = vsyncpa [#allocation34], 1
    %7831 = vsyncpa [#allocation37], 1
    %7832 = vsyncpa [#allocation40], 1
    %7833 = vsyncpa [#allocation43], 1
    %7834 = vsyncpa [#allocation46], 1
    %7835 = vsyncpa [#allocation49], 1
    %7836 = vsyncpa [#allocation52], 1
    %7837 = vsyncpa [#allocation55], 1
    %7838 = vsyncpa [#allocation5], 1
    %s7839 = scalar_lea.sflag [#allocation5], 1
    %7840 = vsyncpa %s7839, 1

</llo_original>
